<compile_context>
chip_gen: v5e
topology: v5e:2x2
jax: 0.10.0
libtpu: 0.0.40
codegen_flags: <defaults>
</compile_context>

<pallas_src>
import math
import functools

import jax
import jax.numpy as jnp
from jax import lax
from jax.experimental import pallas as pl
from jax.experimental.pallas import tpu as pltpu


def _embedding_kernel(ids_ref, lut_ref, out_ref, *, scale):
    # ids_ref: (1, T, 1) int32 token ids for this tile (VMEM)
    # lut_ref: (Vp, D) f32 embedding table, resident across all grid steps
    # out_ref: (T, D) f32 output tile
    ids = ids_ref[0]                                   # (T, 1) int32
    T = out_ref.shape[0]
    Vp = lut_ref.shape[0]

    # One-hot selection matrix built on the VPU, gather done on the MXU.
    col = lax.broadcasted_iota(jnp.int32, (T, Vp), 1)  # column index per lane
    onehot = (col == ids).astype(lut_ref.dtype)        # (T, Vp)

    emb = jnp.dot(
        onehot,
        lut_ref[...],
        preferred_element_type=jnp.float32,
        precision=lax.Precision.HIGHEST,               # exact f32 row selection
    )
    out_ref[...] = (emb * scale).astype(out_ref.dtype)


def embeddings_forward(x, lut, *, token_tile=128):
    """x: (B, S) int token ids, lut: (vocab, d_model) f32 -> (B, S, d_model) f32."""
    vocab, d_model = lut.shape
    B, S = x.shape
    N = B * S
    scale = math.sqrt(d_model)

    # Pad the vocab axis (lane axis of the one-hot) to a multiple of 128 with
    # zero rows; valid ids never select the padded rows.
    Vp = ((vocab + 127) // 128) * 128
    lut_p = lut if Vp == vocab else jnp.pad(lut, ((0, Vp - vocab), (0, 0)))

    # Clamp ids (safety) and pad the token count up to a multiple of the tile.
    T = token_tile
    Np = ((N + T - 1) // T) * T
    ids = jnp.clip(x.reshape(N).astype(jnp.int32), 0, vocab - 1)
    ids = jnp.pad(ids, (0, Np - N))
    ids3 = ids.reshape(Np // T, T, 1)                  # (num_tiles, T, 1)
    num_tiles = Np // T

    out_flat = pl.pallas_call(
        functools.partial(_embedding_kernel, scale=scale),
        out_shape=jax.ShapeDtypeStruct((Np, d_model), jnp.float32),
        grid_spec=pltpu.PrefetchScalarGridSpec(
            num_scalar_prefetch=0,
            grid=(num_tiles,),
            in_specs=[
                # Token-id tile for this grid step.
                pl.BlockSpec((1, T, 1), lambda i: (i, 0, 0)),
                # Whole LUT, same block every step -> fetched once, VMEM-resident.
                pl.BlockSpec((Vp, d_model), lambda i: (0, 0)),
            ],
            out_specs=pl.BlockSpec((T, d_model), lambda i: (i, 0)),
        ),
        compiler_params=pltpu.CompilerParams(
            dimension_semantics=("parallel",),  # independent tiles -> both TCs on v7x
        ),
    )(ids3, lut_p)

    return out_flat[:N].reshape(B, S, d_model)


if __name__ == "__main__":
    # Shapes consistent with the module spec: vocab=1435, d_model=128 (docstring
    # "测试128"), small batch/sequence.
    d_model = 128
    vocab = 1435
    B, S = 2, 8

    key = jax.random.PRNGKey(0)
    k_lut, k_ids = jax.random.split(key)

    # nn.Embedding default init is N(0, 1).
    lut = jax.random.normal(k_lut, (vocab, d_model), dtype=jnp.float32)
    x = jax.random.randint(k_ids, (B, S), 0, vocab, dtype=jnp.int32)

    out = embeddings_forward(x, lut)
    out = jax.block_until_ready(out)

    # Reference: lut[x] * sqrt(d_model)
    ref = jnp.take(lut, x, axis=0) * math.sqrt(d_model)
    assert out.shape == (B, S, d_model)
    assert jnp.allclose(out, ref, atol=1e-4, rtol=1e-4)

    print("KERNEL_OK")
</pallas_src>

<mosaic_0001>
module attributes {stable_mosaic.version = 11 : i64} {
  func.func @_embedding_kernel(%arg0: i32, %arg1: memref<1x128x1xi32, #tpu.memory_space<vmem>>, %arg2: memref<1536x128xf32, #tpu.memory_space<vmem>>, %arg3: memref<128x128xf32, #tpu.memory_space<vmem>>) attributes {dimension_semantics = [#tpu.dimension_semantics<parallel>], iteration_bounds = array<i64: 1>, scalar_prefetch = 0 : i64, scratch_operands = 0 : i64, tpu.core_type = #tpu.core_type<tc>, window_params = [{transform_indices = @transform_0, window_bounds = array<i64: 1, 128, 1>}, {pipeline_mode = #tpu.pipeline_mode<synchronous>, transform_indices = @transform_1, window_bounds = array<i64: 1536, 128>}, {transform_indices = @transform_2, window_bounds = array<i64: 128, 128>}]} {
    %c0 = arith.constant 0 : index
    %c0_0 = arith.constant 0 : index
    %c0_1 = arith.constant 0 : index
    %0 = vector.load %arg1[%c0, %c0_0, %c0_1] : memref<1x128x1xi32, #tpu.memory_space<vmem>>, vector<1x128x1xi32>
    %1 = vector.shape_cast %0 : vector<1x128x1xi32> to vector<128x1xi32>
    %2 = tpu.iota {dimensions = array<i32: 1>} : vector<128x1536xi32>
    %3 = vector.broadcast %1 : vector<128x1xi32> to vector<128x1536xi32>
    %4 = arith.cmpi eq, %2, %3 : vector<128x1536xi32>
    %5 = arith.extui %4 : vector<128x1536xi1> to vector<128x1536xi32>
    %6 = arith.sitofp %5 : vector<128x1536xi32> to vector<128x1536xf32>
    %c0_2 = arith.constant 0 : index
    %c0_3 = arith.constant 0 : index
    %7 = vector.load %arg2[%c0_2, %c0_3] : memref<1536x128xf32, #tpu.memory_space<vmem>>, vector<1536x128xf32>
    %cst = arith.constant dense<0.000000e+00> : vector<128x128xf32>
    %8 = tpu.matmul %6, %7, %cst {dimension_numbers = #tpu.dot_dimension_numbers<[1], [0], [0], [1], [0, 0, 1, 1], [], []>, precision = #tpu.contract_precision<fp32>} : vector<128x1536xf32>, vector<1536x128xf32>, vector<128x128xf32> -> vector<128x128xf32>
    %cst_4 = arith.constant 11.3137083 : f32
    %9 = vector.broadcast %cst_4 : f32 to vector<128x128xf32>
    %10 = arith.mulf %8, %9 : vector<128x128xf32>
    %c0_5 = arith.constant 0 : index
    %c0_6 = arith.constant 0 : index
    %11 = vector.load %arg3[%c0_5, %c0_6] : memref<128x128xf32, #tpu.memory_space<vmem>>, vector<128x128xf32>
    tpu.vector_store %arg3[%c0_5, %c0_6], %10 {strides = array<i32>} : memref<128x128xf32, #tpu.memory_space<vmem>>, vector<128x128xf32>,
    return
  }
  func.func @transform_0(%arg0: i32) -> (i32, i32, i32) {
    %c0_i32 = arith.constant 0 : i32
    %c0_i32_0 = arith.constant 0 : i32
    %c0_i32_1 = arith.constant 0 : i32
    return %arg0, %c0_i32, %c0_i32_0 : i32, i32, i32
  }
  func.func @transform_1(%arg0: i32) -> (i32, i32) {
    %c0_i32 = arith.constant 0 : i32
    %c0_i32_0 = arith.constant 0 : i32
    %c0_i32_1 = arith.constant 0 : i32
    return %c0_i32, %c0_i32_0 : i32, i32
  }
  func.func @transform_2(%arg0: i32) -> (i32, i32) {
    %c0_i32 = arith.constant 0 : i32
    %c0_i32_0 = arith.constant 0 : i32
    return %arg0, %c0_i32 : i32, i32
  }
}

</mosaic_0001>

<llo_original>
// kernel: tpu_custom_call.1
$region0: #{tpu_custom_call.1}
  #allocation0 [shape = 'u32[]', space=smem, size = 0x4, offset = 0x4, fixed_abs, tag = 'smem constant byte address 0x4 - core index']
  #allocation1 [shape = 'u32[72,128]{1,0:T(1,128)}', space=vmem, size = 0x9000, scoped, tag = 'internal scratch']
  %s0 = inlined_call_operand.vmem [shape: s32[1,128,1], index: 0, kind: input, shape index: {}]
  %s1 = inlined_call_operand.hbm [shape: f32[1536,128], index: 1, kind: input, shape index: {}]
  %s2 = inlined_call_operand.hbm [shape: f32[128,128], index: 2, kind: output, shape index: {}]
  %s3 = sld [smem:[#allocation0]]
  $region22: #{tpu_custom_call.1} parent=0
    _
  %s5 = ssub.s32 1, %s3
  %s6 = scalar_select 0, %s5, %s3
  $region1: #{tpu_custom_call.1} parent=0
    #allocation2 [shape = 'u8[786432]{0}', space=vmem, size = 0xc0000, scoped, tag = 'input window, operand 1, single buffered']
    #allocation3 [shape = 's32[1]{0}', space=sflag, size = 0x4, scoped, tag = 'scoped memory for tpu_custom_call.1']
    #allocation4 [shape = 's32[1]{0}', space=sflag, size = 0x4, scoped, tag = 'scoped memory for tpu_custom_call.1']
    #allocation5 [shape = 'u8[65536]{0}', space=vmem, size = 0x10000, scoped, tag = 'output window, operand 0, single buffered']
    %7 = vsyncpa [#allocation3], 0
    %8 = vsyncpa [#allocation4], 0
    // Predicated region
    $region2: #{tpu_custom_call.1} parent=1 // pred_check
      _
    $region3: #{tpu_custom_call.1} parent=1 // pred_check_branch
      %10 = sbr.rel (0) target = $region5
    $region4: #{tpu_custom_call.1} parent=1 // pred_region
      _
    $region5: #{tpu_custom_call.1} parent=1 // pred_fallthru
      _
    // Predicated region
    $region6: #{tpu_custom_call.1} parent=1 // pred_check
      _
    $region7: #{tpu_custom_call.1} parent=1 // pred_check_branch
      %12 = sbr.rel (0) target = $region9
    $region8: #{tpu_custom_call.1} parent=1 // pred_region
      %14 = vsyncadd [#allocation3], 0
      %s15 = sshll.u32 %s1, 4
      %s16 = int_to_ptr.hbm [resolvable:$true] %s15
      %s17 = sshll.u32 [#allocation2], 4
      %s18 = int_to_ptr.vmem [resolvable:$true] %s17
      %23 = dma.hbm_to_vmem [thread:$0]  %s16, 24576, %s18, [#allocation3], 128, 128, 8
    $region9: #{tpu_custom_call.1} parent=1 // pred_fallthru
      _
    // Predicated region
    $region10: #{tpu_custom_call.1} parent=1 // pred_check
      _
    $region11: #{tpu_custom_call.1} parent=1 // pred_check_branch
      %25 = sbr.rel (0) target = $region13
    $region12: #{tpu_custom_call.1} parent=1 // pred_region
      %27 = dma.done [#allocation3], 24576
    $region13: #{tpu_custom_call.1} parent=1 // pred_fallthru
      _
    %v28 = vld [vmem:[%s0] sm:$0xff]
    %v29 = vld [vmem:[%s0 + $0x8] sm:$0xff]
    %v30 = vld [vmem:[%s0 + $0x10] sm:$0xff]
    %v31 = vld [vmem:[%s0 + $0x18] sm:$0xff]
    %v32 = vld [vmem:[%s0 + $0x20] sm:$0xff]
    %v33 = vld [vmem:[%s0 + $0x28] sm:$0xff]
    %v34 = vld [vmem:[%s0 + $0x30] sm:$0xff]
    %v35 = vld [vmem:[%s0 + $0x38] sm:$0xff]
    %v36 = vld [vmem:[%s0 + $0x40] sm:$0xff]
    %v37 = vld [vmem:[%s0 + $0x48] sm:$0xff]
    %v38 = vld [vmem:[%s0 + $0x50] sm:$0xff]
    %v39 = vld [vmem:[%s0 + $0x58] sm:$0xff]
    %v40 = vld [vmem:[%s0 + $0x60] sm:$0xff]
    %v41 = vld [vmem:[%s0 + $0x68] sm:$0xff]
    %v42 = vld [vmem:[%s0 + $0x70] sm:$0xff]
    %v43 = vld [vmem:[%s0 + $0x78] sm:$0xff]
    %v44 = vlaneseq
    %v45 = vand.u32 %v44, 127
    %v46 = vadd.s32 %v45, 128
    %v47 = vadd.s32 %v45, 256
    %v48 = vadd.s32 %v45, 384
    %v49 = vadd.s32 %v45, 512
    %v50 = vadd.s32 %v45, 640
    %v51 = vadd.s32 %v45, 768
    %v52 = vadd.s32 %v45, 896
    %v53 = vadd.s32 %v45, 1024
    %v54 = vadd.s32 %v45, 1152
    %v55 = vadd.s32 %v45, 1280
    %v56 = vadd.s32 %v45, 1408
    %57 = vset.pattern.permute.xlu0 0
    %58 = vperm.xlu0 %57, %v28
    %v59 = vpop.permute.xlu0 %58
    %60 = vset.pattern.permute.xlu0 0
    %61 = vperm.xlu0 %60, %v29
    %v62 = vpop.permute.xlu0 %61
    %63 = vset.pattern.permute.xlu0 0
    %64 = vperm.xlu0 %63, %v30
    %v65 = vpop.permute.xlu0 %64
    %66 = vset.pattern.permute.xlu0 0
    %67 = vperm.xlu0 %66, %v31
    %v68 = vpop.permute.xlu0 %67
    %69 = vset.pattern.permute.xlu0 0
    %70 = vperm.xlu0 %69, %v32
    %v71 = vpop.permute.xlu0 %70
    %72 = vset.pattern.permute.xlu0 0
    %73 = vperm.xlu0 %72, %v33
    %v74 = vpop.permute.xlu0 %73
    %75 = vset.pattern.permute.xlu0 0
    %76 = vperm.xlu0 %75, %v34
    %v77 = vpop.permute.xlu0 %76
    %78 = vset.pattern.permute.xlu0 0
    %79 = vperm.xlu0 %78, %v35
    %v80 = vpop.permute.xlu0 %79
    %81 = vset.pattern.permute.xlu0 0
    %82 = vperm.xlu0 %81, %v36
    %v83 = vpop.permute.xlu0 %82
    %84 = vset.pattern.permute.xlu0 0
    %85 = vperm.xlu0 %84, %v37
    %v86 = vpop.permute.xlu0 %85
    %87 = vset.pattern.permute.xlu0 0
    %88 = vperm.xlu0 %87, %v38
    %v89 = vpop.permute.xlu0 %88
    %90 = vset.pattern.permute.xlu0 0
    %91 = vperm.xlu0 %90, %v39
    %v92 = vpop.permute.xlu0 %91
    %93 = vset.pattern.permute.xlu0 0
    %94 = vperm.xlu0 %93, %v40
    %v95 = vpop.permute.xlu0 %94
    %96 = vset.pattern.permute.xlu0 0
    %97 = vperm.xlu0 %96, %v41
    %v98 = vpop.permute.xlu0 %97
    %99 = vset.pattern.permute.xlu0 0
    %100 = vperm.xlu0 %99, %v42
    %v101 = vpop.permute.xlu0 %100
    %102 = vset.pattern.permute.xlu0 0
    %103 = vperm.xlu0 %102, %v43
    %v104 = vpop.permute.xlu0 %103
    %vm105 = vcmp.eq.s32.totalorder %v45, %v59
    %vm106 = vcmp.eq.s32.totalorder %v46, %v59
    %vm107 = vcmp.eq.s32.totalorder %v47, %v59
    %vm108 = vcmp.eq.s32.totalorder %v48, %v59
    %vm109 = vcmp.eq.s32.totalorder %v49, %v59
    %vm110 = vcmp.eq.s32.totalorder %v50, %v59
    %vm111 = vcmp.eq.s32.totalorder %v51, %v59
    %vm112 = vcmp.eq.s32.totalorder %v52, %v59
    %vm113 = vcmp.eq.s32.totalorder %v53, %v59
    %vm114 = vcmp.eq.s32.totalorder %v54, %v59
    %vm115 = vcmp.eq.s32.totalorder %v55, %v59
    %vm116 = vcmp.eq.s32.totalorder %v56, %v59
    %vm117 = vcmp.eq.s32.totalorder %v45, %v62
    %vm118 = vcmp.eq.s32.totalorder %v46, %v62
    %vm119 = vcmp.eq.s32.totalorder %v47, %v62
    %vm120 = vcmp.eq.s32.totalorder %v48, %v62
    %vm121 = vcmp.eq.s32.totalorder %v49, %v62
    %vm122 = vcmp.eq.s32.totalorder %v50, %v62
    %vm123 = vcmp.eq.s32.totalorder %v51, %v62
    %vm124 = vcmp.eq.s32.totalorder %v52, %v62
    %vm125 = vcmp.eq.s32.totalorder %v53, %v62
    %vm126 = vcmp.eq.s32.totalorder %v54, %v62
    %vm127 = vcmp.eq.s32.totalorder %v55, %v62
    %vm128 = vcmp.eq.s32.totalorder %v56, %v62
    %vm129 = vcmp.eq.s32.totalorder %v45, %v65
    %vm130 = vcmp.eq.s32.totalorder %v46, %v65
    %vm131 = vcmp.eq.s32.totalorder %v47, %v65
    %vm132 = vcmp.eq.s32.totalorder %v48, %v65
    %vm133 = vcmp.eq.s32.totalorder %v49, %v65
    %vm134 = vcmp.eq.s32.totalorder %v50, %v65
    %vm135 = vcmp.eq.s32.totalorder %v51, %v65
    %vm136 = vcmp.eq.s32.totalorder %v52, %v65
    %vm137 = vcmp.eq.s32.totalorder %v53, %v65
    %vm138 = vcmp.eq.s32.totalorder %v54, %v65
    %vm139 = vcmp.eq.s32.totalorder %v55, %v65
    %vm140 = vcmp.eq.s32.totalorder %v56, %v65
    %vm141 = vcmp.eq.s32.totalorder %v45, %v68
    %vm142 = vcmp.eq.s32.totalorder %v46, %v68
    %vm143 = vcmp.eq.s32.totalorder %v47, %v68
    %vm144 = vcmp.eq.s32.totalorder %v48, %v68
    %vm145 = vcmp.eq.s32.totalorder %v49, %v68
    %vm146 = vcmp.eq.s32.totalorder %v50, %v68
    %vm147 = vcmp.eq.s32.totalorder %v51, %v68
    %vm148 = vcmp.eq.s32.totalorder %v52, %v68
    %vm149 = vcmp.eq.s32.totalorder %v53, %v68
    %vm150 = vcmp.eq.s32.totalorder %v54, %v68
    %vm151 = vcmp.eq.s32.totalorder %v55, %v68
    %vm152 = vcmp.eq.s32.totalorder %v56, %v68
    %vm153 = vcmp.eq.s32.totalorder %v45, %v71
    %vm154 = vcmp.eq.s32.totalorder %v46, %v71
    %vm155 = vcmp.eq.s32.totalorder %v47, %v71
    %vm156 = vcmp.eq.s32.totalorder %v48, %v71
    %vm157 = vcmp.eq.s32.totalorder %v49, %v71
    %vm158 = vcmp.eq.s32.totalorder %v50, %v71
    %vm159 = vcmp.eq.s32.totalorder %v51, %v71
    %vm160 = vcmp.eq.s32.totalorder %v52, %v71
    %vm161 = vcmp.eq.s32.totalorder %v53, %v71
    %vm162 = vcmp.eq.s32.totalorder %v54, %v71
    %vm163 = vcmp.eq.s32.totalorder %v55, %v71
    %vm164 = vcmp.eq.s32.totalorder %v56, %v71
    %vm165 = vcmp.eq.s32.totalorder %v45, %v74
    %vm166 = vcmp.eq.s32.totalorder %v46, %v74
    %vm167 = vcmp.eq.s32.totalorder %v47, %v74
    %vm168 = vcmp.eq.s32.totalorder %v48, %v74
    %vm169 = vcmp.eq.s32.totalorder %v49, %v74
    %vm170 = vcmp.eq.s32.totalorder %v50, %v74
    %vm171 = vcmp.eq.s32.totalorder %v51, %v74
    %vm172 = vcmp.eq.s32.totalorder %v52, %v74
    %vm173 = vcmp.eq.s32.totalorder %v53, %v74
    %vm174 = vcmp.eq.s32.totalorder %v54, %v74
    %vm175 = vcmp.eq.s32.totalorder %v55, %v74
    %vm176 = vcmp.eq.s32.totalorder %v56, %v74
    %vm177 = vcmp.eq.s32.totalorder %v45, %v77
    %vm178 = vcmp.eq.s32.totalorder %v46, %v77
    %vm179 = vcmp.eq.s32.totalorder %v47, %v77
    %vm180 = vcmp.eq.s32.totalorder %v48, %v77
    %vm181 = vcmp.eq.s32.totalorder %v49, %v77
    %vm182 = vcmp.eq.s32.totalorder %v50, %v77
    %vm183 = vcmp.eq.s32.totalorder %v51, %v77
    %vm184 = vcmp.eq.s32.totalorder %v52, %v77
    %vm185 = vcmp.eq.s32.totalorder %v53, %v77
    %vm186 = vcmp.eq.s32.totalorder %v54, %v77
    %vm187 = vcmp.eq.s32.totalorder %v55, %v77
    %vm188 = vcmp.eq.s32.totalorder %v56, %v77
    %vm189 = vcmp.eq.s32.totalorder %v45, %v80
    %vm190 = vcmp.eq.s32.totalorder %v46, %v80
    %vm191 = vcmp.eq.s32.totalorder %v47, %v80
    %vm192 = vcmp.eq.s32.totalorder %v48, %v80
    %vm193 = vcmp.eq.s32.totalorder %v49, %v80
    %vm194 = vcmp.eq.s32.totalorder %v50, %v80
    %vm195 = vcmp.eq.s32.totalorder %v51, %v80
    %vm196 = vcmp.eq.s32.totalorder %v52, %v80
    %vm197 = vcmp.eq.s32.totalorder %v53, %v80
    %vm198 = vcmp.eq.s32.totalorder %v54, %v80
    %vm199 = vcmp.eq.s32.totalorder %v55, %v80
    %vm200 = vcmp.eq.s32.totalorder %v56, %v80
    %vm201 = vcmp.eq.s32.totalorder %v45, %v83
    %vm202 = vcmp.eq.s32.totalorder %v46, %v83
    %vm203 = vcmp.eq.s32.totalorder %v47, %v83
    %vm204 = vcmp.eq.s32.totalorder %v48, %v83
    %vm205 = vcmp.eq.s32.totalorder %v49, %v83
    %vm206 = vcmp.eq.s32.totalorder %v50, %v83
    %vm207 = vcmp.eq.s32.totalorder %v51, %v83
    %vm208 = vcmp.eq.s32.totalorder %v52, %v83
    %vm209 = vcmp.eq.s32.totalorder %v53, %v83
    %vm210 = vcmp.eq.s32.totalorder %v54, %v83
    %vm211 = vcmp.eq.s32.totalorder %v55, %v83
    %vm212 = vcmp.eq.s32.totalorder %v56, %v83
    %vm213 = vcmp.eq.s32.totalorder %v45, %v86
    %vm214 = vcmp.eq.s32.totalorder %v46, %v86
    %vm215 = vcmp.eq.s32.totalorder %v47, %v86
    %vm216 = vcmp.eq.s32.totalorder %v48, %v86
    %vm217 = vcmp.eq.s32.totalorder %v49, %v86
    %vm218 = vcmp.eq.s32.totalorder %v50, %v86
    %vm219 = vcmp.eq.s32.totalorder %v51, %v86
    %vm220 = vcmp.eq.s32.totalorder %v52, %v86
    %vm221 = vcmp.eq.s32.totalorder %v53, %v86
    %vm222 = vcmp.eq.s32.totalorder %v54, %v86
    %vm223 = vcmp.eq.s32.totalorder %v55, %v86
    %vm224 = vcmp.eq.s32.totalorder %v56, %v86
    %vm225 = vcmp.eq.s32.totalorder %v45, %v89
    %vm226 = vcmp.eq.s32.totalorder %v46, %v89
    %vm227 = vcmp.eq.s32.totalorder %v47, %v89
    %vm228 = vcmp.eq.s32.totalorder %v48, %v89
    %vm229 = vcmp.eq.s32.totalorder %v49, %v89
    %vm230 = vcmp.eq.s32.totalorder %v50, %v89
    %vm231 = vcmp.eq.s32.totalorder %v51, %v89
    %vm232 = vcmp.eq.s32.totalorder %v52, %v89
    %vm233 = vcmp.eq.s32.totalorder %v53, %v89
    %vm234 = vcmp.eq.s32.totalorder %v54, %v89
    %vm235 = vcmp.eq.s32.totalorder %v55, %v89
    %vm236 = vcmp.eq.s32.totalorder %v56, %v89
    %vm237 = vcmp.eq.s32.totalorder %v45, %v92
    %vm238 = vcmp.eq.s32.totalorder %v46, %v92
    %vm239 = vcmp.eq.s32.totalorder %v47, %v92
    %vm240 = vcmp.eq.s32.totalorder %v48, %v92
    %vm241 = vcmp.eq.s32.totalorder %v49, %v92
    %vm242 = vcmp.eq.s32.totalorder %v50, %v92
    %vm243 = vcmp.eq.s32.totalorder %v51, %v92
    %vm244 = vcmp.eq.s32.totalorder %v52, %v92
    %vm245 = vcmp.eq.s32.totalorder %v53, %v92
    %vm246 = vcmp.eq.s32.totalorder %v54, %v92
    %vm247 = vcmp.eq.s32.totalorder %v55, %v92
    %vm248 = vcmp.eq.s32.totalorder %v56, %v92
    %vm249 = vcmp.eq.s32.totalorder %v45, %v95
    %vm250 = vcmp.eq.s32.totalorder %v46, %v95
    %vm251 = vcmp.eq.s32.totalorder %v47, %v95
    %vm252 = vcmp.eq.s32.totalorder %v48, %v95
    %vm253 = vcmp.eq.s32.totalorder %v49, %v95
    %vm254 = vcmp.eq.s32.totalorder %v50, %v95
    %vm255 = vcmp.eq.s32.totalorder %v51, %v95
    %vm256 = vcmp.eq.s32.totalorder %v52, %v95
    %vm257 = vcmp.eq.s32.totalorder %v53, %v95
    %vm258 = vcmp.eq.s32.totalorder %v54, %v95
    %vm259 = vcmp.eq.s32.totalorder %v55, %v95
    %vm260 = vcmp.eq.s32.totalorder %v56, %v95
    %vm261 = vcmp.eq.s32.totalorder %v45, %v98
    %vm262 = vcmp.eq.s32.totalorder %v46, %v98
    %vm263 = vcmp.eq.s32.totalorder %v47, %v98
    %vm264 = vcmp.eq.s32.totalorder %v48, %v98
    %vm265 = vcmp.eq.s32.totalorder %v49, %v98
    %vm266 = vcmp.eq.s32.totalorder %v50, %v98
    %vm267 = vcmp.eq.s32.totalorder %v51, %v98
    %vm268 = vcmp.eq.s32.totalorder %v52, %v98
    %vm269 = vcmp.eq.s32.totalorder %v53, %v98
    %vm270 = vcmp.eq.s32.totalorder %v54, %v98
    %vm271 = vcmp.eq.s32.totalorder %v55, %v98
    %vm272 = vcmp.eq.s32.totalorder %v56, %v98
    %vm273 = vcmp.eq.s32.totalorder %v45, %v101
    %vm274 = vcmp.eq.s32.totalorder %v46, %v101
    %vm275 = vcmp.eq.s32.totalorder %v47, %v101
    %vm276 = vcmp.eq.s32.totalorder %v48, %v101
    %vm277 = vcmp.eq.s32.totalorder %v49, %v101
    %vm278 = vcmp.eq.s32.totalorder %v50, %v101
    %vm279 = vcmp.eq.s32.totalorder %v51, %v101
    %vm280 = vcmp.eq.s32.totalorder %v52, %v101
    %vm281 = vcmp.eq.s32.totalorder %v53, %v101
    %vm282 = vcmp.eq.s32.totalorder %v54, %v101
    %vm283 = vcmp.eq.s32.totalorder %v55, %v101
    %vm284 = vcmp.eq.s32.totalorder %v56, %v101
    %vm285 = vcmp.eq.s32.totalorder %v45, %v104
    %vm286 = vcmp.eq.s32.totalorder %v46, %v104
    %vm287 = vcmp.eq.s32.totalorder %v47, %v104
    %vm288 = vcmp.eq.s32.totalorder %v48, %v104
    %vm289 = vcmp.eq.s32.totalorder %v49, %v104
    %vm290 = vcmp.eq.s32.totalorder %v50, %v104
    %vm291 = vcmp.eq.s32.totalorder %v51, %v104
    %vm292 = vcmp.eq.s32.totalorder %v52, %v104
    %vm293 = vcmp.eq.s32.totalorder %v53, %v104
    %vm294 = vcmp.eq.s32.totalorder %v54, %v104
    %vm295 = vcmp.eq.s32.totalorder %v55, %v104
    %vm296 = vcmp.eq.s32.totalorder %v56, %v104
    %v297 = vsel %vm105, 1, 0
    %v298 = vsel %vm106, 1, 0
    %v299 = vsel %vm107, 1, 0
    %v300 = vsel %vm108, 1, 0
    %v301 = vsel %vm109, 1, 0
    %v302 = vsel %vm110, 1, 0
    %v303 = vsel %vm111, 1, 0
    %v304 = vsel %vm112, 1, 0
    %v305 = vsel %vm113, 1, 0
    %v306 = vsel %vm114, 1, 0
    %v307 = vsel %vm115, 1, 0
    %v308 = vsel %vm116, 1, 0
    %v309 = vsel %vm117, 1, 0
    %v310 = vsel %vm118, 1, 0
    %v311 = vsel %vm119, 1, 0
    %v312 = vsel %vm120, 1, 0
    %v313 = vsel %vm121, 1, 0
    %v314 = vsel %vm122, 1, 0
    %v315 = vsel %vm123, 1, 0
    %v316 = vsel %vm124, 1, 0
    %v317 = vsel %vm125, 1, 0
    %v318 = vsel %vm126, 1, 0
    %v319 = vsel %vm127, 1, 0
    %v320 = vsel %vm128, 1, 0
    %v321 = vsel %vm129, 1, 0
    %v322 = vsel %vm130, 1, 0
    %v323 = vsel %vm131, 1, 0
    %v324 = vsel %vm132, 1, 0
    %v325 = vsel %vm133, 1, 0
    %v326 = vsel %vm134, 1, 0
    %v327 = vsel %vm135, 1, 0
    %v328 = vsel %vm136, 1, 0
    %v329 = vsel %vm137, 1, 0
    %v330 = vsel %vm138, 1, 0
    %v331 = vsel %vm139, 1, 0
    %v332 = vsel %vm140, 1, 0
    %v333 = vsel %vm141, 1, 0
    %v334 = vsel %vm142, 1, 0
    %v335 = vsel %vm143, 1, 0
    %v336 = vsel %vm144, 1, 0
    %v337 = vsel %vm145, 1, 0
    %v338 = vsel %vm146, 1, 0
    %v339 = vsel %vm147, 1, 0
    %v340 = vsel %vm148, 1, 0
    %v341 = vsel %vm149, 1, 0
    %v342 = vsel %vm150, 1, 0
    %v343 = vsel %vm151, 1, 0
    %v344 = vsel %vm152, 1, 0
    %v345 = vsel %vm153, 1, 0
    %v346 = vsel %vm154, 1, 0
    %v347 = vsel %vm155, 1, 0
    %v348 = vsel %vm156, 1, 0
    %v349 = vsel %vm157, 1, 0
    %v350 = vsel %vm158, 1, 0
    %v351 = vsel %vm159, 1, 0
    %v352 = vsel %vm160, 1, 0
    %v353 = vsel %vm161, 1, 0
    %v354 = vsel %vm162, 1, 0
    %v355 = vsel %vm163, 1, 0
    %v356 = vsel %vm164, 1, 0
    %v357 = vsel %vm165, 1, 0
    %v358 = vsel %vm166, 1, 0
    %v359 = vsel %vm167, 1, 0
    %v360 = vsel %vm168, 1, 0
    %v361 = vsel %vm169, 1, 0
    %v362 = vsel %vm170, 1, 0
    %v363 = vsel %vm171, 1, 0
    %v364 = vsel %vm172, 1, 0
    %v365 = vsel %vm173, 1, 0
    %v366 = vsel %vm174, 1, 0
    %v367 = vsel %vm175, 1, 0
    %v368 = vsel %vm176, 1, 0
    %v369 = vsel %vm177, 1, 0
    %v370 = vsel %vm178, 1, 0
    %v371 = vsel %vm179, 1, 0
    %v372 = vsel %vm180, 1, 0
    %v373 = vsel %vm181, 1, 0
    %v374 = vsel %vm182, 1, 0
    %v375 = vsel %vm183, 1, 0
    %v376 = vsel %vm184, 1, 0
    %v377 = vsel %vm185, 1, 0
    %v378 = vsel %vm186, 1, 0
    %v379 = vsel %vm187, 1, 0
    %v380 = vsel %vm188, 1, 0
    %v381 = vsel %vm189, 1, 0
    %v382 = vsel %vm190, 1, 0
    %v383 = vsel %vm191, 1, 0
    %v384 = vsel %vm192, 1, 0
    %v385 = vsel %vm193, 1, 0
    %v386 = vsel %vm194, 1, 0
    %v387 = vsel %vm195, 1, 0
    %v388 = vsel %vm196, 1, 0
    %v389 = vsel %vm197, 1, 0
    %v390 = vsel %vm198, 1, 0
    %v391 = vsel %vm199, 1, 0
    %v392 = vsel %vm200, 1, 0
    %v393 = vsel %vm201, 1, 0
    %v394 = vsel %vm202, 1, 0
    %v395 = vsel %vm203, 1, 0
    %v396 = vsel %vm204, 1, 0
    %v397 = vsel %vm205, 1, 0
    %v398 = vsel %vm206, 1, 0
    %v399 = vsel %vm207, 1, 0
    %v400 = vsel %vm208, 1, 0
    %v401 = vsel %vm209, 1, 0
    %v402 = vsel %vm210, 1, 0
    %v403 = vsel %vm211, 1, 0
    %v404 = vsel %vm212, 1, 0
    %v405 = vsel %vm213, 1, 0
    %v406 = vsel %vm214, 1, 0
    %v407 = vsel %vm215, 1, 0
    %v408 = vsel %vm216, 1, 0
    %v409 = vsel %vm217, 1, 0
    %v410 = vsel %vm218, 1, 0
    %v411 = vsel %vm219, 1, 0
    %v412 = vsel %vm220, 1, 0
    %v413 = vsel %vm221, 1, 0
    %v414 = vsel %vm222, 1, 0
    %v415 = vsel %vm223, 1, 0
    %v416 = vsel %vm224, 1, 0
    %v417 = vsel %vm225, 1, 0
    %v418 = vsel %vm226, 1, 0
    %v419 = vsel %vm227, 1, 0
    %v420 = vsel %vm228, 1, 0
    %v421 = vsel %vm229, 1, 0
    %v422 = vsel %vm230, 1, 0
    %v423 = vsel %vm231, 1, 0
    %v424 = vsel %vm232, 1, 0
    %v425 = vsel %vm233, 1, 0
    %v426 = vsel %vm234, 1, 0
    %v427 = vsel %vm235, 1, 0
    %v428 = vsel %vm236, 1, 0
    %v429 = vsel %vm237, 1, 0
    %v430 = vsel %vm238, 1, 0
    %v431 = vsel %vm239, 1, 0
    %v432 = vsel %vm240, 1, 0
    %v433 = vsel %vm241, 1, 0
    %v434 = vsel %vm242, 1, 0
    %v435 = vsel %vm243, 1, 0
    %v436 = vsel %vm244, 1, 0
    %v437 = vsel %vm245, 1, 0
    %v438 = vsel %vm246, 1, 0
    %v439 = vsel %vm247, 1, 0
    %v440 = vsel %vm248, 1, 0
    %v441 = vsel %vm249, 1, 0
    %v442 = vsel %vm250, 1, 0
    %v443 = vsel %vm251, 1, 0
    %v444 = vsel %vm252, 1, 0
    %v445 = vsel %vm253, 1, 0
    %v446 = vsel %vm254, 1, 0
    %v447 = vsel %vm255, 1, 0
    %v448 = vsel %vm256, 1, 0
    %v449 = vsel %vm257, 1, 0
    %v450 = vsel %vm258, 1, 0
    %v451 = vsel %vm259, 1, 0
    %v452 = vsel %vm260, 1, 0
    %v453 = vsel %vm261, 1, 0
    %v454 = vsel %vm262, 1, 0
    %v455 = vsel %vm263, 1, 0
    %v456 = vsel %vm264, 1, 0
    %v457 = vsel %vm265, 1, 0
    %v458 = vsel %vm266, 1, 0
    %v459 = vsel %vm267, 1, 0
    %v460 = vsel %vm268, 1, 0
    %v461 = vsel %vm269, 1, 0
    %v462 = vsel %vm270, 1, 0
    %v463 = vsel %vm271, 1, 0
    %v464 = vsel %vm272, 1, 0
    %v465 = vsel %vm273, 1, 0
    %v466 = vsel %vm274, 1, 0
    %v467 = vsel %vm275, 1, 0
    %v468 = vsel %vm276, 1, 0
    %v469 = vsel %vm277, 1, 0
    %v470 = vsel %vm278, 1, 0
    %v471 = vsel %vm279, 1, 0
    %v472 = vsel %vm280, 1, 0
    %v473 = vsel %vm281, 1, 0
    %v474 = vsel %vm282, 1, 0
    %v475 = vsel %vm283, 1, 0
    %v476 = vsel %vm284, 1, 0
    %v477 = vsel %vm285, 1, 0
    %v478 = vsel %vm286, 1, 0
    %v479 = vsel %vm287, 1, 0
    %v480 = vsel %vm288, 1, 0
    %v481 = vsel %vm289, 1, 0
    %v482 = vsel %vm290, 1, 0
    %v483 = vsel %vm291, 1, 0
    %v484 = vsel %vm292, 1, 0
    %v485 = vsel %vm293, 1, 0
    %v486 = vsel %vm294, 1, 0
    %v487 = vsel %vm295, 1, 0
    %v488 = vsel %vm296, 1, 0
    %v489 = vcvt.s32.f32 %v297
    %v490 = vcvt.s32.f32 %v298
    %v491 = vcvt.s32.f32 %v299
    %v492 = vcvt.s32.f32 %v300
    %v493 = vcvt.s32.f32 %v301
    %v494 = vcvt.s32.f32 %v302
    %v495 = vcvt.s32.f32 %v303
    %v496 = vcvt.s32.f32 %v304
    %v497 = vcvt.s32.f32 %v305
    %v498 = vcvt.s32.f32 %v306
    %v499 = vcvt.s32.f32 %v307
    %v500 = vcvt.s32.f32 %v308
    %v501 = vcvt.s32.f32 %v309
    %v502 = vcvt.s32.f32 %v310
    %v503 = vcvt.s32.f32 %v311
    %v504 = vcvt.s32.f32 %v312
    %v505 = vcvt.s32.f32 %v313
    %v506 = vcvt.s32.f32 %v314
    %v507 = vcvt.s32.f32 %v315
    %v508 = vcvt.s32.f32 %v316
    %v509 = vcvt.s32.f32 %v317
    %v510 = vcvt.s32.f32 %v318
    %v511 = vcvt.s32.f32 %v319
    %v512 = vcvt.s32.f32 %v320
    %v513 = vcvt.s32.f32 %v321
    %v514 = vcvt.s32.f32 %v322
    %v515 = vcvt.s32.f32 %v323
    %v516 = vcvt.s32.f32 %v324
    %v517 = vcvt.s32.f32 %v325
    %v518 = vcvt.s32.f32 %v326
    %v519 = vcvt.s32.f32 %v327
    %v520 = vcvt.s32.f32 %v328
    %v521 = vcvt.s32.f32 %v329
    %v522 = vcvt.s32.f32 %v330
    %v523 = vcvt.s32.f32 %v331
    %v524 = vcvt.s32.f32 %v332
    %v525 = vcvt.s32.f32 %v333
    %v526 = vcvt.s32.f32 %v334
    %v527 = vcvt.s32.f32 %v335
    %v528 = vcvt.s32.f32 %v336
    %v529 = vcvt.s32.f32 %v337
    %v530 = vcvt.s32.f32 %v338
    %v531 = vcvt.s32.f32 %v339
    %v532 = vcvt.s32.f32 %v340
    %v533 = vcvt.s32.f32 %v341
    %v534 = vcvt.s32.f32 %v342
    %v535 = vcvt.s32.f32 %v343
    %v536 = vcvt.s32.f32 %v344
    %v537 = vcvt.s32.f32 %v345
    %v538 = vcvt.s32.f32 %v346
    %v539 = vcvt.s32.f32 %v347
    %v540 = vcvt.s32.f32 %v348
    %v541 = vcvt.s32.f32 %v349
    %v542 = vcvt.s32.f32 %v350
    %v543 = vcvt.s32.f32 %v351
    %v544 = vcvt.s32.f32 %v352
    %v545 = vcvt.s32.f32 %v353
    %v546 = vcvt.s32.f32 %v354
    %v547 = vcvt.s32.f32 %v355
    %v548 = vcvt.s32.f32 %v356
    %v549 = vcvt.s32.f32 %v357
    %v550 = vcvt.s32.f32 %v358
    %v551 = vcvt.s32.f32 %v359
    %v552 = vcvt.s32.f32 %v360
    %v553 = vcvt.s32.f32 %v361
    %v554 = vcvt.s32.f32 %v362
    %v555 = vcvt.s32.f32 %v363
    %v556 = vcvt.s32.f32 %v364
    %v557 = vcvt.s32.f32 %v365
    %v558 = vcvt.s32.f32 %v366
    %v559 = vcvt.s32.f32 %v367
    %v560 = vcvt.s32.f32 %v368
    %v561 = vcvt.s32.f32 %v369
    %v562 = vcvt.s32.f32 %v370
    %v563 = vcvt.s32.f32 %v371
    %v564 = vcvt.s32.f32 %v372
    %v565 = vcvt.s32.f32 %v373
    %v566 = vcvt.s32.f32 %v374
    %v567 = vcvt.s32.f32 %v375
    %v568 = vcvt.s32.f32 %v376
    %v569 = vcvt.s32.f32 %v377
    %v570 = vcvt.s32.f32 %v378
    %v571 = vcvt.s32.f32 %v379
    %v572 = vcvt.s32.f32 %v380
    %v573 = vcvt.s32.f32 %v381
    %v574 = vcvt.s32.f32 %v382
    %v575 = vcvt.s32.f32 %v383
    %v576 = vcvt.s32.f32 %v384
    %v577 = vcvt.s32.f32 %v385
    %v578 = vcvt.s32.f32 %v386
    %v579 = vcvt.s32.f32 %v387
    %v580 = vcvt.s32.f32 %v388
    %v581 = vcvt.s32.f32 %v389
    %v582 = vcvt.s32.f32 %v390
    %v583 = vcvt.s32.f32 %v391
    %v584 = vcvt.s32.f32 %v392
    %v585 = vcvt.s32.f32 %v393
    %v586 = vcvt.s32.f32 %v394
    %v587 = vcvt.s32.f32 %v395
    %v588 = vcvt.s32.f32 %v396
    %v589 = vcvt.s32.f32 %v397
    %v590 = vcvt.s32.f32 %v398
    %v591 = vcvt.s32.f32 %v399
    %v592 = vcvt.s32.f32 %v400
    %v593 = vcvt.s32.f32 %v401
    %v594 = vcvt.s32.f32 %v402
    %v595 = vcvt.s32.f32 %v403
    %v596 = vcvt.s32.f32 %v404
    %v597 = vcvt.s32.f32 %v405
    %v598 = vcvt.s32.f32 %v406
    %v599 = vcvt.s32.f32 %v407
    %v600 = vcvt.s32.f32 %v408
    %v601 = vcvt.s32.f32 %v409
    %v602 = vcvt.s32.f32 %v410
    %v603 = vcvt.s32.f32 %v411
    %v604 = vcvt.s32.f32 %v412
    %v605 = vcvt.s32.f32 %v413
    %v606 = vcvt.s32.f32 %v414
    %v607 = vcvt.s32.f32 %v415
    %v608 = vcvt.s32.f32 %v416
    %v609 = vcvt.s32.f32 %v417
    %v610 = vcvt.s32.f32 %v418
    %v611 = vcvt.s32.f32 %v419
    %v612 = vcvt.s32.f32 %v420
    %v613 = vcvt.s32.f32 %v421
    %v614 = vcvt.s32.f32 %v422
    %v615 = vcvt.s32.f32 %v423
    %v616 = vcvt.s32.f32 %v424
    %v617 = vcvt.s32.f32 %v425
    %v618 = vcvt.s32.f32 %v426
    %v619 = vcvt.s32.f32 %v427
    %v620 = vcvt.s32.f32 %v428
    %v621 = vcvt.s32.f32 %v429
    %v622 = vcvt.s32.f32 %v430
    %v623 = vcvt.s32.f32 %v431
    %v624 = vcvt.s32.f32 %v432
    %v625 = vcvt.s32.f32 %v433
    %v626 = vcvt.s32.f32 %v434
    %v627 = vcvt.s32.f32 %v435
    %v628 = vcvt.s32.f32 %v436
    %v629 = vcvt.s32.f32 %v437
    %v630 = vcvt.s32.f32 %v438
    %v631 = vcvt.s32.f32 %v439
    %v632 = vcvt.s32.f32 %v440
    %v633 = vcvt.s32.f32 %v441
    %v634 = vcvt.s32.f32 %v442
    %v635 = vcvt.s32.f32 %v443
    %v636 = vcvt.s32.f32 %v444
    %v637 = vcvt.s32.f32 %v445
    %v638 = vcvt.s32.f32 %v446
    %v639 = vcvt.s32.f32 %v447
    %v640 = vcvt.s32.f32 %v448
    %v641 = vcvt.s32.f32 %v449
    %v642 = vcvt.s32.f32 %v450
    %v643 = vcvt.s32.f32 %v451
    %v644 = vcvt.s32.f32 %v452
    %v645 = vcvt.s32.f32 %v453
    %v646 = vcvt.s32.f32 %v454
    %v647 = vcvt.s32.f32 %v455
    %v648 = vcvt.s32.f32 %v456
    %v649 = vcvt.s32.f32 %v457
    %v650 = vcvt.s32.f32 %v458
    %v651 = vcvt.s32.f32 %v459
    %v652 = vcvt.s32.f32 %v460
    %v653 = vcvt.s32.f32 %v461
    %v654 = vcvt.s32.f32 %v462
    %v655 = vcvt.s32.f32 %v463
    %v656 = vcvt.s32.f32 %v464
    %v657 = vcvt.s32.f32 %v465
    %v658 = vcvt.s32.f32 %v466
    %v659 = vcvt.s32.f32 %v467
    %v660 = vcvt.s32.f32 %v468
    %v661 = vcvt.s32.f32 %v469
    %v662 = vcvt.s32.f32 %v470
    %v663 = vcvt.s32.f32 %v471
    %v664 = vcvt.s32.f32 %v472
    %v665 = vcvt.s32.f32 %v473
    %v666 = vcvt.s32.f32 %v474
    %v667 = vcvt.s32.f32 %v475
    %v668 = vcvt.s32.f32 %v476
    %v669 = vcvt.s32.f32 %v477
    %v670 = vcvt.s32.f32 %v478
    %v671 = vcvt.s32.f32 %v479
    %v672 = vcvt.s32.f32 %v480
    %v673 = vcvt.s32.f32 %v481
    %v674 = vcvt.s32.f32 %v482
    %v675 = vcvt.s32.f32 %v483
    %v676 = vcvt.s32.f32 %v484
    %v677 = vcvt.s32.f32 %v485
    %v678 = vcvt.s32.f32 %v486
    %v679 = vcvt.s32.f32 %v487
    %v680 = vcvt.s32.f32 %v488
    %v681 = vld [vmem:[#allocation2] sm:$0xff]
    %v682 = vld [vmem:[#allocation2 + $0x8] sm:$0xff]
    %v683 = vld [vmem:[#allocation2 + $0x10] sm:$0xff]
    %v684 = vld [vmem:[#allocation2 + $0x18] sm:$0xff]
    %v685 = vld [vmem:[#allocation2 + $0x20] sm:$0xff]
    %v686 = vld [vmem:[#allocation2 + $0x28] sm:$0xff]
    %v687 = vld [vmem:[#allocation2 + $0x30] sm:$0xff]
    %v688 = vld [vmem:[#allocation2 + $0x38] sm:$0xff]
    %v689 = vld [vmem:[#allocation2 + $0x40] sm:$0xff]
    %v690 = vld [vmem:[#allocation2 + $0x48] sm:$0xff]
    %v691 = vld [vmem:[#allocation2 + $0x50] sm:$0xff]
    %v692 = vld [vmem:[#allocation2 + $0x58] sm:$0xff]
    %v693 = vld [vmem:[#allocation2 + $0x60] sm:$0xff]
    %v694 = vld [vmem:[#allocation2 + $0x68] sm:$0xff]
    %v695 = vld [vmem:[#allocation2 + $0x70] sm:$0xff]
    %v696 = vld [vmem:[#allocation2 + $0x78] sm:$0xff]
    %v697 = vld [vmem:[#allocation2 + $0x80] sm:$0xff]
    %v698 = vld [vmem:[#allocation2 + $0x88] sm:$0xff]
    %v699 = vld [vmem:[#allocation2 + $0x90] sm:$0xff]
    %v700 = vld [vmem:[#allocation2 + $0x98] sm:$0xff]
    %v701 = vld [vmem:[#allocation2 + $0xa0] sm:$0xff]
    %v702 = vld [vmem:[#allocation2 + $0xa8] sm:$0xff]
    %v703 = vld [vmem:[#allocation2 + $0xb0] sm:$0xff]
    %v704 = vld [vmem:[#allocation2 + $0xb8] sm:$0xff]
    %v705 = vld [vmem:[#allocation2 + $0xc0] sm:$0xff]
    %v706 = vld [vmem:[#allocation2 + $0xc8] sm:$0xff]
    %v707 = vld [vmem:[#allocation2 + $0xd0] sm:$0xff]
    %v708 = vld [vmem:[#allocation2 + $0xd8] sm:$0xff]
    %v709 = vld [vmem:[#allocation2 + $0xe0] sm:$0xff]
    %v710 = vld [vmem:[#allocation2 + $0xe8] sm:$0xff]
    %v711 = vld [vmem:[#allocation2 + $0xf0] sm:$0xff]
    %v712 = vld [vmem:[#allocation2 + $0xf8] sm:$0xff]
    %v713 = vld [vmem:[#allocation2 + $0x100] sm:$0xff]
    %v714 = vld [vmem:[#allocation2 + $0x108] sm:$0xff]
    %v715 = vld [vmem:[#allocation2 + $0x110] sm:$0xff]
    %v716 = vld [vmem:[#allocation2 + $0x118] sm:$0xff]
    %v717 = vld [vmem:[#allocation2 + $0x120] sm:$0xff]
    %v718 = vld [vmem:[#allocation2 + $0x128] sm:$0xff]
    %v719 = vld [vmem:[#allocation2 + $0x130] sm:$0xff]
    %v720 = vld [vmem:[#allocation2 + $0x138] sm:$0xff]
    %v721 = vld [vmem:[#allocation2 + $0x140] sm:$0xff]
    %v722 = vld [vmem:[#allocation2 + $0x148] sm:$0xff]
    %v723 = vld [vmem:[#allocation2 + $0x150] sm:$0xff]
    %v724 = vld [vmem:[#allocation2 + $0x158] sm:$0xff]
    %v725 = vld [vmem:[#allocation2 + $0x160] sm:$0xff]
    %v726 = vld [vmem:[#allocation2 + $0x168] sm:$0xff]
    %v727 = vld [vmem:[#allocation2 + $0x170] sm:$0xff]
    %v728 = vld [vmem:[#allocation2 + $0x178] sm:$0xff]
    %v729 = vld [vmem:[#allocation2 + $0x180] sm:$0xff]
    %v730 = vld [vmem:[#allocation2 + $0x188] sm:$0xff]
    %v731 = vld [vmem:[#allocation2 + $0x190] sm:$0xff]
    %v732 = vld [vmem:[#allocation2 + $0x198] sm:$0xff]
    %v733 = vld [vmem:[#allocation2 + $0x1a0] sm:$0xff]
    %v734 = vld [vmem:[#allocation2 + $0x1a8] sm:$0xff]
    %v735 = vld [vmem:[#allocation2 + $0x1b0] sm:$0xff]
    %v736 = vld [vmem:[#allocation2 + $0x1b8] sm:$0xff]
    %v737 = vld [vmem:[#allocation2 + $0x1c0] sm:$0xff]
    %v738 = vld [vmem:[#allocation2 + $0x1c8] sm:$0xff]
    %v739 = vld [vmem:[#allocation2 + $0x1d0] sm:$0xff]
    %v740 = vld [vmem:[#allocation2 + $0x1d8] sm:$0xff]
    %v741 = vld [vmem:[#allocation2 + $0x1e0] sm:$0xff]
    %v742 = vld [vmem:[#allocation2 + $0x1e8] sm:$0xff]
    %v743 = vld [vmem:[#allocation2 + $0x1f0] sm:$0xff]
    %v744 = vld [vmem:[#allocation2 + $0x1f8] sm:$0xff]
    %v745 = vld [vmem:[#allocation2 + $0x200] sm:$0xff]
    %v746 = vld [vmem:[#allocation2 + $0x208] sm:$0xff]
    %v747 = vld [vmem:[#allocation2 + $0x210] sm:$0xff]
    %v748 = vld [vmem:[#allocation2 + $0x218] sm:$0xff]
    %v749 = vld [vmem:[#allocation2 + $0x220] sm:$0xff]
    %v750 = vld [vmem:[#allocation2 + $0x228] sm:$0xff]
    %v751 = vld [vmem:[#allocation2 + $0x230] sm:$0xff]
    %v752 = vld [vmem:[#allocation2 + $0x238] sm:$0xff]
    %v753 = vld [vmem:[#allocation2 + $0x240] sm:$0xff]
    %v754 = vld [vmem:[#allocation2 + $0x248] sm:$0xff]
    %v755 = vld [vmem:[#allocation2 + $0x250] sm:$0xff]
    %v756 = vld [vmem:[#allocation2 + $0x258] sm:$0xff]
    %v757 = vld [vmem:[#allocation2 + $0x260] sm:$0xff]
    %v758 = vld [vmem:[#allocation2 + $0x268] sm:$0xff]
    %v759 = vld [vmem:[#allocation2 + $0x270] sm:$0xff]
    %v760 = vld [vmem:[#allocation2 + $0x278] sm:$0xff]
    %v761 = vld [vmem:[#allocation2 + $0x280] sm:$0xff]
    %v762 = vld [vmem:[#allocation2 + $0x288] sm:$0xff]
    %v763 = vld [vmem:[#allocation2 + $0x290] sm:$0xff]
    %v764 = vld [vmem:[#allocation2 + $0x298] sm:$0xff]
    %v765 = vld [vmem:[#allocation2 + $0x2a0] sm:$0xff]
    %v766 = vld [vmem:[#allocation2 + $0x2a8] sm:$0xff]
    %v767 = vld [vmem:[#allocation2 + $0x2b0] sm:$0xff]
    %v768 = vld [vmem:[#allocation2 + $0x2b8] sm:$0xff]
    %v769 = vld [vmem:[#allocation2 + $0x2c0] sm:$0xff]
    %v770 = vld [vmem:[#allocation2 + $0x2c8] sm:$0xff]
    %v771 = vld [vmem:[#allocation2 + $0x2d0] sm:$0xff]
    %v772 = vld [vmem:[#allocation2 + $0x2d8] sm:$0xff]
    %v773 = vld [vmem:[#allocation2 + $0x2e0] sm:$0xff]
    %v774 = vld [vmem:[#allocation2 + $0x2e8] sm:$0xff]
    %v775 = vld [vmem:[#allocation2 + $0x2f0] sm:$0xff]
    %v776 = vld [vmem:[#allocation2 + $0x2f8] sm:$0xff]
    %v777 = vld [vmem:[#allocation2 + $0x300] sm:$0xff]
    %v778 = vld [vmem:[#allocation2 + $0x308] sm:$0xff]
    %v779 = vld [vmem:[#allocation2 + $0x310] sm:$0xff]
    %v780 = vld [vmem:[#allocation2 + $0x318] sm:$0xff]
    %v781 = vld [vmem:[#allocation2 + $0x320] sm:$0xff]
    %v782 = vld [vmem:[#allocation2 + $0x328] sm:$0xff]
    %v783 = vld [vmem:[#allocation2 + $0x330] sm:$0xff]
    %v784 = vld [vmem:[#allocation2 + $0x338] sm:$0xff]
    %v785 = vld [vmem:[#allocation2 + $0x340] sm:$0xff]
    %v786 = vld [vmem:[#allocation2 + $0x348] sm:$0xff]
    %v787 = vld [vmem:[#allocation2 + $0x350] sm:$0xff]
    %v788 = vld [vmem:[#allocation2 + $0x358] sm:$0xff]
    %v789 = vld [vmem:[#allocation2 + $0x360] sm:$0xff]
    %v790 = vld [vmem:[#allocation2 + $0x368] sm:$0xff]
    %v791 = vld [vmem:[#allocation2 + $0x370] sm:$0xff]
    %v792 = vld [vmem:[#allocation2 + $0x378] sm:$0xff]
    %v793 = vld [vmem:[#allocation2 + $0x380] sm:$0xff]
    %v794 = vld [vmem:[#allocation2 + $0x388] sm:$0xff]
    %v795 = vld [vmem:[#allocation2 + $0x390] sm:$0xff]
    %v796 = vld [vmem:[#allocation2 + $0x398] sm:$0xff]
    %v797 = vld [vmem:[#allocation2 + $0x3a0] sm:$0xff]
    %v798 = vld [vmem:[#allocation2 + $0x3a8] sm:$0xff]
    %v799 = vld [vmem:[#allocation2 + $0x3b0] sm:$0xff]
    %v800 = vld [vmem:[#allocation2 + $0x3b8] sm:$0xff]
    %v801 = vld [vmem:[#allocation2 + $0x3c0] sm:$0xff]
    %v802 = vld [vmem:[#allocation2 + $0x3c8] sm:$0xff]
    %v803 = vld [vmem:[#allocation2 + $0x3d0] sm:$0xff]
    %v804 = vld [vmem:[#allocation2 + $0x3d8] sm:$0xff]
    %v805 = vld [vmem:[#allocation2 + $0x3e0] sm:$0xff]
    %v806 = vld [vmem:[#allocation2 + $0x3e8] sm:$0xff]
    %v807 = vld [vmem:[#allocation2 + $0x3f0] sm:$0xff]
    %v808 = vld [vmem:[#allocation2 + $0x3f8] sm:$0xff]
    %v809 = vld [vmem:[#allocation2 + $0x400] sm:$0xff]
    %v810 = vld [vmem:[#allocation2 + $0x408] sm:$0xff]
    %v811 = vld [vmem:[#allocation2 + $0x410] sm:$0xff]
    %v812 = vld [vmem:[#allocation2 + $0x418] sm:$0xff]
    %v813 = vld [vmem:[#allocation2 + $0x420] sm:$0xff]
    %v814 = vld [vmem:[#allocation2 + $0x428] sm:$0xff]
    %v815 = vld [vmem:[#allocation2 + $0x430] sm:$0xff]
    %v816 = vld [vmem:[#allocation2 + $0x438] sm:$0xff]
    %v817 = vld [vmem:[#allocation2 + $0x440] sm:$0xff]
    %v818 = vld [vmem:[#allocation2 + $0x448] sm:$0xff]
    %v819 = vld [vmem:[#allocation2 + $0x450] sm:$0xff]
    %v820 = vld [vmem:[#allocation2 + $0x458] sm:$0xff]
    %v821 = vld [vmem:[#allocation2 + $0x460] sm:$0xff]
    %v822 = vld [vmem:[#allocation2 + $0x468] sm:$0xff]
    %v823 = vld [vmem:[#allocation2 + $0x470] sm:$0xff]
    %v824 = vld [vmem:[#allocation2 + $0x478] sm:$0xff]
    %v825 = vld [vmem:[#allocation2 + $0x480] sm:$0xff]
    %v826 = vld [vmem:[#allocation2 + $0x488] sm:$0xff]
    %v827 = vld [vmem:[#allocation2 + $0x490] sm:$0xff]
    %v828 = vld [vmem:[#allocation2 + $0x498] sm:$0xff]
    %v829 = vld [vmem:[#allocation2 + $0x4a0] sm:$0xff]
    %v830 = vld [vmem:[#allocation2 + $0x4a8] sm:$0xff]
    %v831 = vld [vmem:[#allocation2 + $0x4b0] sm:$0xff]
    %v832 = vld [vmem:[#allocation2 + $0x4b8] sm:$0xff]
    %v833 = vld [vmem:[#allocation2 + $0x4c0] sm:$0xff]
    %v834 = vld [vmem:[#allocation2 + $0x4c8] sm:$0xff]
    %v835 = vld [vmem:[#allocation2 + $0x4d0] sm:$0xff]
    %v836 = vld [vmem:[#allocation2 + $0x4d8] sm:$0xff]
    %v837 = vld [vmem:[#allocation2 + $0x4e0] sm:$0xff]
    %v838 = vld [vmem:[#allocation2 + $0x4e8] sm:$0xff]
    %v839 = vld [vmem:[#allocation2 + $0x4f0] sm:$0xff]
    %v840 = vld [vmem:[#allocation2 + $0x4f8] sm:$0xff]
    %v841 = vld [vmem:[#allocation2 + $0x500] sm:$0xff]
    %v842 = vld [vmem:[#allocation2 + $0x508] sm:$0xff]
    %v843 = vld [vmem:[#allocation2 + $0x510] sm:$0xff]
    %v844 = vld [vmem:[#allocation2 + $0x518] sm:$0xff]
    %v845 = vld [vmem:[#allocation2 + $0x520] sm:$0xff]
    %v846 = vld [vmem:[#allocation2 + $0x528] sm:$0xff]
    %v847 = vld [vmem:[#allocation2 + $0x530] sm:$0xff]
    %v848 = vld [vmem:[#allocation2 + $0x538] sm:$0xff]
    %v849 = vld [vmem:[#allocation2 + $0x540] sm:$0xff]
    %v850 = vld [vmem:[#allocation2 + $0x548] sm:$0xff]
    %v851 = vld [vmem:[#allocation2 + $0x550] sm:$0xff]
    %v852 = vld [vmem:[#allocation2 + $0x558] sm:$0xff]
    %v853 = vld [vmem:[#allocation2 + $0x560] sm:$0xff]
    %v854 = vld [vmem:[#allocation2 + $0x568] sm:$0xff]
    %v855 = vld [vmem:[#allocation2 + $0x570] sm:$0xff]
    %v856 = vld [vmem:[#allocation2 + $0x578] sm:$0xff]
    %v857 = vld [vmem:[#allocation2 + $0x580] sm:$0xff]
    %v858 = vld [vmem:[#allocation2 + $0x588] sm:$0xff]
    %v859 = vld [vmem:[#allocation2 + $0x590] sm:$0xff]
    %v860 = vld [vmem:[#allocation2 + $0x598] sm:$0xff]
    %v861 = vld [vmem:[#allocation2 + $0x5a0] sm:$0xff]
    %v862 = vld [vmem:[#allocation2 + $0x5a8] sm:$0xff]
    %v863 = vld [vmem:[#allocation2 + $0x5b0] sm:$0xff]
    %v864 = vld [vmem:[#allocation2 + $0x5b8] sm:$0xff]
    %v865 = vld [vmem:[#allocation2 + $0x5c0] sm:$0xff]
    %v866 = vld [vmem:[#allocation2 + $0x5c8] sm:$0xff]
    %v867 = vld [vmem:[#allocation2 + $0x5d0] sm:$0xff]
    %v868 = vld [vmem:[#allocation2 + $0x5d8] sm:$0xff]
    %v869 = vld [vmem:[#allocation2 + $0x5e0] sm:$0xff]
    %v870 = vld [vmem:[#allocation2 + $0x5e8] sm:$0xff]
    %v871 = vld [vmem:[#allocation2 + $0x5f0] sm:$0xff]
    %v872 = vld [vmem:[#allocation2 + $0x5f8] sm:$0xff]
    %v873 = vand.u32 %v696, 4294901760
    %874 = vmatpush.msra.mxu0 %v873
    %v875 = vand.u32 %v695, 4294901760
    %876 = vmatpush.msra.mxu0 %v875
    %v877 = vand.u32 %v694, 4294901760
    %878 = vmatpush.msra.mxu0 %v877
    %v879 = vand.u32 %v693, 4294901760
    %880 = vmatpush.msra.mxu0 %v879
    %v881 = vand.u32 %v692, 4294901760
    %882 = vmatpush.msra.mxu0 %v881
    %v883 = vand.u32 %v691, 4294901760
    %884 = vmatpush.msra.mxu0 %v883
    %v885 = vand.u32 %v690, 4294901760
    %886 = vmatpush.msra.mxu0 %v885
    %v887 = vand.u32 %v689, 4294901760
    %888 = vmatpush.msra.mxu0 %v887
    %v889 = vand.u32 %v688, 4294901760
    %890 = vmatpush.msra.mxu0 %v889
    %v891 = vand.u32 %v687, 4294901760
    %892 = vmatpush.msra.mxu0 %v891
    %v893 = vand.u32 %v686, 4294901760
    %894 = vmatpush.msra.mxu0 %v893
    %v895 = vand.u32 %v685, 4294901760
    %896 = vmatpush.msra.mxu0 %v895
    %v897 = vand.u32 %v684, 4294901760
    %898 = vmatpush.msra.mxu0 %v897
    %v899 = vand.u32 %v683, 4294901760
    %900 = vmatpush.msra.mxu0 %v899
    %v901 = vand.u32 %v682, 4294901760
    %902 = vmatpush.msra.mxu0 %v901
    %v903 = vand.u32 %v681, 4294901760
    %904 = vmatpush.msra.mxu0 %v903
    %v905 = vand.u32 %v489, 4294901760
    %v906 = vsub.f32 %v489, %v905
    %v907 = vand.u32 %v906, 4294901760
    %v908 = vsub.f32 %v906, %v907
    %v909 = vand.u32 %v908, 4294901760
    %910 = vmatmul.f32.gmra.mxu0 %v909
    %v911 = vpop.f32.mrf.mxu0
    %v912 = vadd.f32 0.0, %v911
    %v913 = vand.u32 %v501, 4294901760
    %v914 = vsub.f32 %v501, %v913
    %v915 = vand.u32 %v914, 4294901760
    %v916 = vsub.f32 %v914, %v915
    %v917 = vand.u32 %v916, 4294901760
    %918 = vmatmul.f32.gmra.mxu0 %v917
    %v919 = vpop.f32.mrf.mxu0
    %v920 = vadd.f32 0.0, %v919
    %v921 = vand.u32 %v513, 4294901760
    %v922 = vsub.f32 %v513, %v921
    %v923 = vand.u32 %v922, 4294901760
    %v924 = vsub.f32 %v922, %v923
    %v925 = vand.u32 %v924, 4294901760
    %926 = vmatmul.f32.gmra.mxu0 %v925
    %v927 = vpop.f32.mrf.mxu0
    %v928 = vadd.f32 0.0, %v927
    %v929 = vand.u32 %v525, 4294901760
    %v930 = vsub.f32 %v525, %v929
    %v931 = vand.u32 %v930, 4294901760
    %v932 = vsub.f32 %v930, %v931
    %v933 = vand.u32 %v932, 4294901760
    %934 = vmatmul.f32.gmra.mxu0 %v933
    %v935 = vpop.f32.mrf.mxu0
    %v936 = vadd.f32 0.0, %v935
    %v937 = vand.u32 %v537, 4294901760
    %v938 = vsub.f32 %v537, %v937
    %v939 = vand.u32 %v938, 4294901760
    %v940 = vsub.f32 %v938, %v939
    %v941 = vand.u32 %v940, 4294901760
    %942 = vmatmul.f32.gmra.mxu0 %v941
    %v943 = vpop.f32.mrf.mxu0
    %v944 = vadd.f32 0.0, %v943
    %v945 = vand.u32 %v549, 4294901760
    %v946 = vsub.f32 %v549, %v945
    %v947 = vand.u32 %v946, 4294901760
    %v948 = vsub.f32 %v946, %v947
    %v949 = vand.u32 %v948, 4294901760
    %950 = vmatmul.f32.gmra.mxu0 %v949
    %v951 = vpop.f32.mrf.mxu0
    %v952 = vadd.f32 0.0, %v951
    %v953 = vand.u32 %v561, 4294901760
    %v954 = vsub.f32 %v561, %v953
    %v955 = vand.u32 %v954, 4294901760
    %v956 = vsub.f32 %v954, %v955
    %v957 = vand.u32 %v956, 4294901760
    %958 = vmatmul.f32.gmra.mxu0 %v957
    %v959 = vpop.f32.mrf.mxu0
    %v960 = vadd.f32 0.0, %v959
    %v961 = vand.u32 %v573, 4294901760
    %v962 = vsub.f32 %v573, %v961
    %v963 = vand.u32 %v962, 4294901760
    %v964 = vsub.f32 %v962, %v963
    %v965 = vand.u32 %v964, 4294901760
    %966 = vmatmul.f32.gmra.mxu0 %v965
    %v967 = vpop.f32.mrf.mxu0
    %v968 = vadd.f32 0.0, %v967
    %v969 = vand.u32 %v585, 4294901760
    %v970 = vsub.f32 %v585, %v969
    %v971 = vand.u32 %v970, 4294901760
    %v972 = vsub.f32 %v970, %v971
    %v973 = vand.u32 %v972, 4294901760
    %974 = vmatmul.f32.gmra.mxu0 %v973
    %v975 = vpop.f32.mrf.mxu0
    %v976 = vadd.f32 0.0, %v975
    %v977 = vand.u32 %v597, 4294901760
    %v978 = vsub.f32 %v597, %v977
    %v979 = vand.u32 %v978, 4294901760
    %v980 = vsub.f32 %v978, %v979
    %v981 = vand.u32 %v980, 4294901760
    %982 = vmatmul.f32.gmra.mxu0 %v981
    %v983 = vpop.f32.mrf.mxu0
    %v984 = vadd.f32 0.0, %v983
    %v985 = vand.u32 %v609, 4294901760
    %v986 = vsub.f32 %v609, %v985
    %v987 = vand.u32 %v986, 4294901760
    %v988 = vsub.f32 %v986, %v987
    %v989 = vand.u32 %v988, 4294901760
    %990 = vmatmul.f32.gmra.mxu0 %v989
    %v991 = vpop.f32.mrf.mxu0
    %v992 = vadd.f32 0.0, %v991
    %v993 = vand.u32 %v621, 4294901760
    %v994 = vsub.f32 %v621, %v993
    %v995 = vand.u32 %v994, 4294901760
    %v996 = vsub.f32 %v994, %v995
    %v997 = vand.u32 %v996, 4294901760
    %998 = vmatmul.f32.gmra.mxu0 %v997
    %v999 = vpop.f32.mrf.mxu0
    %v1000 = vadd.f32 0.0, %v999
    %v1001 = vand.u32 %v633, 4294901760
    %v1002 = vsub.f32 %v633, %v1001
    %v1003 = vand.u32 %v1002, 4294901760
    %v1004 = vsub.f32 %v1002, %v1003
    %v1005 = vand.u32 %v1004, 4294901760
    %1006 = vmatmul.f32.gmra.mxu0 %v1005
    %v1007 = vpop.f32.mrf.mxu0
    %v1008 = vadd.f32 0.0, %v1007
    %v1009 = vand.u32 %v645, 4294901760
    %v1010 = vsub.f32 %v645, %v1009
    %v1011 = vand.u32 %v1010, 4294901760
    %v1012 = vsub.f32 %v1010, %v1011
    %v1013 = vand.u32 %v1012, 4294901760
    %1014 = vmatmul.f32.gmra.mxu0 %v1013
    %v1015 = vpop.f32.mrf.mxu0
    %v1016 = vadd.f32 0.0, %v1015
    %v1017 = vand.u32 %v657, 4294901760
    %v1018 = vsub.f32 %v657, %v1017
    %v1019 = vand.u32 %v1018, 4294901760
    %v1020 = vsub.f32 %v1018, %v1019
    %v1021 = vand.u32 %v1020, 4294901760
    %1022 = vmatmul.f32.gmra.mxu0 %v1021
    %v1023 = vpop.f32.mrf.mxu0
    %v1024 = vadd.f32 0.0, %v1023
    %v1025 = vand.u32 %v669, 4294901760
    %v1026 = vsub.f32 %v669, %v1025
    %v1027 = vand.u32 %v1026, 4294901760
    %v1028 = vsub.f32 %v1026, %v1027
    %v1029 = vand.u32 %v1028, 4294901760
    %1030 = vmatmul.f32.gmra.mxu0 %v1029
    %v1031 = vpop.f32.mrf.mxu0
    %v1032 = vadd.f32 0.0, %v1031
    %1033 = vdwg.mxu0
    %v1034 = vand.u32 %v696, 4294901760
    %v1035 = vsub.f32 %v696, %v1034
    %v1036 = vand.u32 %v1035, 4294901760
    %v1037 = vsub.f32 %v1035, %v1036
    %v1038 = vand.u32 %v1037, 4294901760
    %1039 = vmatpush.msra.mxu0 %v1038
    %v1040 = vand.u32 %v695, 4294901760
    %v1041 = vsub.f32 %v695, %v1040
    %v1042 = vand.u32 %v1041, 4294901760
    %v1043 = vsub.f32 %v1041, %v1042
    %v1044 = vand.u32 %v1043, 4294901760
    %1045 = vmatpush.msra.mxu0 %v1044
    %v1046 = vand.u32 %v694, 4294901760
    %v1047 = vsub.f32 %v694, %v1046
    %v1048 = vand.u32 %v1047, 4294901760
    %v1049 = vsub.f32 %v1047, %v1048
    %v1050 = vand.u32 %v1049, 4294901760
    %1051 = vmatpush.msra.mxu0 %v1050
    %v1052 = vand.u32 %v693, 4294901760
    %v1053 = vsub.f32 %v693, %v1052
    %v1054 = vand.u32 %v1053, 4294901760
    %v1055 = vsub.f32 %v1053, %v1054
    %v1056 = vand.u32 %v1055, 4294901760
    %1057 = vmatpush.msra.mxu0 %v1056
    %v1058 = vand.u32 %v692, 4294901760
    %v1059 = vsub.f32 %v692, %v1058
    %v1060 = vand.u32 %v1059, 4294901760
    %v1061 = vsub.f32 %v1059, %v1060
    %v1062 = vand.u32 %v1061, 4294901760
    %1063 = vmatpush.msra.mxu0 %v1062
    %v1064 = vand.u32 %v691, 4294901760
    %v1065 = vsub.f32 %v691, %v1064
    %v1066 = vand.u32 %v1065, 4294901760
    %v1067 = vsub.f32 %v1065, %v1066
    %v1068 = vand.u32 %v1067, 4294901760
    %1069 = vmatpush.msra.mxu0 %v1068
    %v1070 = vand.u32 %v690, 4294901760
    %v1071 = vsub.f32 %v690, %v1070
    %v1072 = vand.u32 %v1071, 4294901760
    %v1073 = vsub.f32 %v1071, %v1072
    %v1074 = vand.u32 %v1073, 4294901760
    %1075 = vmatpush.msra.mxu0 %v1074
    %v1076 = vand.u32 %v689, 4294901760
    %v1077 = vsub.f32 %v689, %v1076
    %v1078 = vand.u32 %v1077, 4294901760
    %v1079 = vsub.f32 %v1077, %v1078
    %v1080 = vand.u32 %v1079, 4294901760
    %1081 = vmatpush.msra.mxu0 %v1080
    %v1082 = vand.u32 %v688, 4294901760
    %v1083 = vsub.f32 %v688, %v1082
    %v1084 = vand.u32 %v1083, 4294901760
    %v1085 = vsub.f32 %v1083, %v1084
    %v1086 = vand.u32 %v1085, 4294901760
    %1087 = vmatpush.msra.mxu0 %v1086
    %v1088 = vand.u32 %v687, 4294901760
    %v1089 = vsub.f32 %v687, %v1088
    %v1090 = vand.u32 %v1089, 4294901760
    %v1091 = vsub.f32 %v1089, %v1090
    %v1092 = vand.u32 %v1091, 4294901760
    %1093 = vmatpush.msra.mxu0 %v1092
    %v1094 = vand.u32 %v686, 4294901760
    %v1095 = vsub.f32 %v686, %v1094
    %v1096 = vand.u32 %v1095, 4294901760
    %v1097 = vsub.f32 %v1095, %v1096
    %v1098 = vand.u32 %v1097, 4294901760
    %1099 = vmatpush.msra.mxu0 %v1098
    %v1100 = vand.u32 %v685, 4294901760
    %v1101 = vsub.f32 %v685, %v1100
    %v1102 = vand.u32 %v1101, 4294901760
    %v1103 = vsub.f32 %v1101, %v1102
    %v1104 = vand.u32 %v1103, 4294901760
    %1105 = vmatpush.msra.mxu0 %v1104
    %v1106 = vand.u32 %v684, 4294901760
    %v1107 = vsub.f32 %v684, %v1106
    %v1108 = vand.u32 %v1107, 4294901760
    %v1109 = vsub.f32 %v1107, %v1108
    %v1110 = vand.u32 %v1109, 4294901760
    %1111 = vmatpush.msra.mxu0 %v1110
    %v1112 = vand.u32 %v683, 4294901760
    %v1113 = vsub.f32 %v683, %v1112
    %v1114 = vand.u32 %v1113, 4294901760
    %v1115 = vsub.f32 %v1113, %v1114
    %v1116 = vand.u32 %v1115, 4294901760
    %1117 = vmatpush.msra.mxu0 %v1116
    %v1118 = vand.u32 %v682, 4294901760
    %v1119 = vsub.f32 %v682, %v1118
    %v1120 = vand.u32 %v1119, 4294901760
    %v1121 = vsub.f32 %v1119, %v1120
    %v1122 = vand.u32 %v1121, 4294901760
    %1123 = vmatpush.msra.mxu0 %v1122
    %v1124 = vand.u32 %v681, 4294901760
    %v1125 = vsub.f32 %v681, %v1124
    %v1126 = vand.u32 %v1125, 4294901760
    %v1127 = vsub.f32 %v1125, %v1126
    %v1128 = vand.u32 %v1127, 4294901760
    %1129 = vmatpush.msra.mxu0 %v1128
    %v1130 = vand.u32 %v489, 4294901760
    %1131 = vmatmul.f32.gmra.mxu0 %v1130
    %v1132 = vpop.f32.mrf.mxu0
    %v1133 = vadd.f32 %v912, %v1132
    %v1134 = vand.u32 %v501, 4294901760
    %1135 = vmatmul.f32.gmra.mxu0 %v1134
    %v1136 = vpop.f32.mrf.mxu0
    %v1137 = vadd.f32 %v920, %v1136
    %v1138 = vand.u32 %v513, 4294901760
    %1139 = vmatmul.f32.gmra.mxu0 %v1138
    %v1140 = vpop.f32.mrf.mxu0
    %v1141 = vadd.f32 %v928, %v1140
    %v1142 = vand.u32 %v525, 4294901760
    %1143 = vmatmul.f32.gmra.mxu0 %v1142
    %v1144 = vpop.f32.mrf.mxu0
    %v1145 = vadd.f32 %v936, %v1144
    %v1146 = vand.u32 %v537, 4294901760
    %1147 = vmatmul.f32.gmra.mxu0 %v1146
    %v1148 = vpop.f32.mrf.mxu0
    %v1149 = vadd.f32 %v944, %v1148
    %v1150 = vand.u32 %v549, 4294901760
    %1151 = vmatmul.f32.gmra.mxu0 %v1150
    %v1152 = vpop.f32.mrf.mxu0
    %v1153 = vadd.f32 %v952, %v1152
    %v1154 = vand.u32 %v561, 4294901760
    %1155 = vmatmul.f32.gmra.mxu0 %v1154
    %v1156 = vpop.f32.mrf.mxu0
    %v1157 = vadd.f32 %v960, %v1156
    %v1158 = vand.u32 %v573, 4294901760
    %1159 = vmatmul.f32.gmra.mxu0 %v1158
    %v1160 = vpop.f32.mrf.mxu0
    %v1161 = vadd.f32 %v968, %v1160
    %v1162 = vand.u32 %v585, 4294901760
    %1163 = vmatmul.f32.gmra.mxu0 %v1162
    %v1164 = vpop.f32.mrf.mxu0
    %v1165 = vadd.f32 %v976, %v1164
    %v1166 = vand.u32 %v597, 4294901760
    %1167 = vmatmul.f32.gmra.mxu0 %v1166
    %v1168 = vpop.f32.mrf.mxu0
    %v1169 = vadd.f32 %v984, %v1168
    %v1170 = vand.u32 %v609, 4294901760
    %1171 = vmatmul.f32.gmra.mxu0 %v1170
    %v1172 = vpop.f32.mrf.mxu0
    %v1173 = vadd.f32 %v992, %v1172
    %v1174 = vand.u32 %v621, 4294901760
    %1175 = vmatmul.f32.gmra.mxu0 %v1174
    %v1176 = vpop.f32.mrf.mxu0
    %v1177 = vadd.f32 %v1000, %v1176
    %v1178 = vand.u32 %v633, 4294901760
    %1179 = vmatmul.f32.gmra.mxu0 %v1178
    %v1180 = vpop.f32.mrf.mxu0
    %v1181 = vadd.f32 %v1008, %v1180
    %v1182 = vand.u32 %v645, 4294901760
    %1183 = vmatmul.f32.gmra.mxu0 %v1182
    %v1184 = vpop.f32.mrf.mxu0
    %v1185 = vadd.f32 %v1016, %v1184
    %v1186 = vand.u32 %v657, 4294901760
    %1187 = vmatmul.f32.gmra.mxu0 %v1186
    %v1188 = vpop.f32.mrf.mxu0
    %v1189 = vadd.f32 %v1024, %v1188
    %v1190 = vand.u32 %v669, 4294901760
    %1191 = vmatmul.f32.gmra.mxu0 %v1190
    %v1192 = vpop.f32.mrf.mxu0
    %v1193 = vadd.f32 %v1032, %v1192
    %1194 = vdwg.mxu0
    %v1195 = vand.u32 %v696, 4294901760
    %v1196 = vsub.f32 %v696, %v1195
    %1197 = vmatpush.msra.mxu0 %v1196
    %v1198 = vand.u32 %v695, 4294901760
    %v1199 = vsub.f32 %v695, %v1198
    %1200 = vmatpush.msra.mxu0 %v1199
    %v1201 = vand.u32 %v694, 4294901760
    %v1202 = vsub.f32 %v694, %v1201
    %1203 = vmatpush.msra.mxu0 %v1202
    %v1204 = vand.u32 %v693, 4294901760
    %v1205 = vsub.f32 %v693, %v1204
    %1206 = vmatpush.msra.mxu0 %v1205
    %v1207 = vand.u32 %v692, 4294901760
    %v1208 = vsub.f32 %v692, %v1207
    %1209 = vmatpush.msra.mxu0 %v1208
    %v1210 = vand.u32 %v691, 4294901760
    %v1211 = vsub.f32 %v691, %v1210
    %1212 = vmatpush.msra.mxu0 %v1211
    %v1213 = vand.u32 %v690, 4294901760
    %v1214 = vsub.f32 %v690, %v1213
    %1215 = vmatpush.msra.mxu0 %v1214
    %v1216 = vand.u32 %v689, 4294901760
    %v1217 = vsub.f32 %v689, %v1216
    %1218 = vmatpush.msra.mxu0 %v1217
    %v1219 = vand.u32 %v688, 4294901760
    %v1220 = vsub.f32 %v688, %v1219
    %1221 = vmatpush.msra.mxu0 %v1220
    %v1222 = vand.u32 %v687, 4294901760
    %v1223 = vsub.f32 %v687, %v1222
    %1224 = vmatpush.msra.mxu0 %v1223
    %v1225 = vand.u32 %v686, 4294901760
    %v1226 = vsub.f32 %v686, %v1225
    %1227 = vmatpush.msra.mxu0 %v1226
    %v1228 = vand.u32 %v685, 4294901760
    %v1229 = vsub.f32 %v685, %v1228
    %1230 = vmatpush.msra.mxu0 %v1229
    %v1231 = vand.u32 %v684, 4294901760
    %v1232 = vsub.f32 %v684, %v1231
    %1233 = vmatpush.msra.mxu0 %v1232
    %v1234 = vand.u32 %v683, 4294901760
    %v1235 = vsub.f32 %v683, %v1234
    %1236 = vmatpush.msra.mxu0 %v1235
    %v1237 = vand.u32 %v682, 4294901760
    %v1238 = vsub.f32 %v682, %v1237
    %1239 = vmatpush.msra.mxu0 %v1238
    %v1240 = vand.u32 %v681, 4294901760
    %v1241 = vsub.f32 %v681, %v1240
    %1242 = vmatpush.msra.mxu0 %v1241
    %v1243 = vand.u32 %v489, 4294901760
    %v1244 = vsub.f32 %v489, %v1243
    %1245 = vmatmul.f32.gmra.mxu0 %v1244
    %v1246 = vpop.f32.mrf.mxu0
    %v1247 = vadd.f32 %v1133, %v1246
    %v1248 = vand.u32 %v501, 4294901760
    %v1249 = vsub.f32 %v501, %v1248
    %1250 = vmatmul.f32.gmra.mxu0 %v1249
    %v1251 = vpop.f32.mrf.mxu0
    %v1252 = vadd.f32 %v1137, %v1251
    %v1253 = vand.u32 %v513, 4294901760
    %v1254 = vsub.f32 %v513, %v1253
    %1255 = vmatmul.f32.gmra.mxu0 %v1254
    %v1256 = vpop.f32.mrf.mxu0
    %v1257 = vadd.f32 %v1141, %v1256
    %v1258 = vand.u32 %v525, 4294901760
    %v1259 = vsub.f32 %v525, %v1258
    %1260 = vmatmul.f32.gmra.mxu0 %v1259
    %v1261 = vpop.f32.mrf.mxu0
    %v1262 = vadd.f32 %v1145, %v1261
    %v1263 = vand.u32 %v537, 4294901760
    %v1264 = vsub.f32 %v537, %v1263
    %1265 = vmatmul.f32.gmra.mxu0 %v1264
    %v1266 = vpop.f32.mrf.mxu0
    %v1267 = vadd.f32 %v1149, %v1266
    %v1268 = vand.u32 %v549, 4294901760
    %v1269 = vsub.f32 %v549, %v1268
    %1270 = vmatmul.f32.gmra.mxu0 %v1269
    %v1271 = vpop.f32.mrf.mxu0
    %v1272 = vadd.f32 %v1153, %v1271
    %v1273 = vand.u32 %v561, 4294901760
    %v1274 = vsub.f32 %v561, %v1273
    %1275 = vmatmul.f32.gmra.mxu0 %v1274
    %v1276 = vpop.f32.mrf.mxu0
    %v1277 = vadd.f32 %v1157, %v1276
    %v1278 = vand.u32 %v573, 4294901760
    %v1279 = vsub.f32 %v573, %v1278
    %1280 = vmatmul.f32.gmra.mxu0 %v1279
    %v1281 = vpop.f32.mrf.mxu0
    %v1282 = vadd.f32 %v1161, %v1281
    %v1283 = vand.u32 %v585, 4294901760
    %v1284 = vsub.f32 %v585, %v1283
    %1285 = vmatmul.f32.gmra.mxu0 %v1284
    %v1286 = vpop.f32.mrf.mxu0
    %v1287 = vadd.f32 %v1165, %v1286
    %v1288 = vand.u32 %v597, 4294901760
    %v1289 = vsub.f32 %v597, %v1288
    %1290 = vmatmul.f32.gmra.mxu0 %v1289
    %v1291 = vpop.f32.mrf.mxu0
    %v1292 = vadd.f32 %v1169, %v1291
    %v1293 = vand.u32 %v609, 4294901760
    %v1294 = vsub.f32 %v609, %v1293
    %1295 = vmatmul.f32.gmra.mxu0 %v1294
    %v1296 = vpop.f32.mrf.mxu0
    %v1297 = vadd.f32 %v1173, %v1296
    %v1298 = vand.u32 %v621, 4294901760
    %v1299 = vsub.f32 %v621, %v1298
    %1300 = vmatmul.f32.gmra.mxu0 %v1299
    %v1301 = vpop.f32.mrf.mxu0
    %v1302 = vadd.f32 %v1177, %v1301
    %v1303 = vand.u32 %v633, 4294901760
    %v1304 = vsub.f32 %v633, %v1303
    %1305 = vmatmul.f32.gmra.mxu0 %v1304
    %v1306 = vpop.f32.mrf.mxu0
    %v1307 = vadd.f32 %v1181, %v1306
    %v1308 = vand.u32 %v645, 4294901760
    %v1309 = vsub.f32 %v645, %v1308
    %1310 = vmatmul.f32.gmra.mxu0 %v1309
    %v1311 = vpop.f32.mrf.mxu0
    %v1312 = vadd.f32 %v1185, %v1311
    %v1313 = vand.u32 %v657, 4294901760
    %v1314 = vsub.f32 %v657, %v1313
    %1315 = vmatmul.f32.gmra.mxu0 %v1314
    %v1316 = vpop.f32.mrf.mxu0
    %v1317 = vadd.f32 %v1189, %v1316
    %v1318 = vand.u32 %v669, 4294901760
    %v1319 = vsub.f32 %v669, %v1318
    %1320 = vmatmul.f32.gmra.mxu0 %v1319
    %v1321 = vpop.f32.mrf.mxu0
    %v1322 = vadd.f32 %v1193, %v1321
    %1323 = vdwg.mxu0
    %v1324 = vand.u32 %v696, 4294901760
    %1325 = vmatpush.msra.mxu0 %v1324
    %v1326 = vand.u32 %v695, 4294901760
    %1327 = vmatpush.msra.mxu0 %v1326
    %v1328 = vand.u32 %v694, 4294901760
    %1329 = vmatpush.msra.mxu0 %v1328
    %v1330 = vand.u32 %v693, 4294901760
    %1331 = vmatpush.msra.mxu0 %v1330
    %v1332 = vand.u32 %v692, 4294901760
    %1333 = vmatpush.msra.mxu0 %v1332
    %v1334 = vand.u32 %v691, 4294901760
    %1335 = vmatpush.msra.mxu0 %v1334
    %v1336 = vand.u32 %v690, 4294901760
    %1337 = vmatpush.msra.mxu0 %v1336
    %v1338 = vand.u32 %v689, 4294901760
    %1339 = vmatpush.msra.mxu0 %v1338
    %v1340 = vand.u32 %v688, 4294901760
    %1341 = vmatpush.msra.mxu0 %v1340
    %v1342 = vand.u32 %v687, 4294901760
    %1343 = vmatpush.msra.mxu0 %v1342
    %v1344 = vand.u32 %v686, 4294901760
    %1345 = vmatpush.msra.mxu0 %v1344
    %v1346 = vand.u32 %v685, 4294901760
    %1347 = vmatpush.msra.mxu0 %v1346
    %v1348 = vand.u32 %v684, 4294901760
    %1349 = vmatpush.msra.mxu0 %v1348
    %v1350 = vand.u32 %v683, 4294901760
    %1351 = vmatpush.msra.mxu0 %v1350
    %v1352 = vand.u32 %v682, 4294901760
    %1353 = vmatpush.msra.mxu0 %v1352
    %v1354 = vand.u32 %v681, 4294901760
    %1355 = vmatpush.msra.mxu0 %v1354
    %v1356 = vand.u32 %v489, 4294901760
    %v1357 = vsub.f32 %v489, %v1356
    %v1358 = vand.u32 %v1357, 4294901760
    %1359 = vmatmul.f32.gmra.mxu0 %v1358
    %v1360 = vpop.f32.mrf.mxu0
    %v1361 = vadd.f32 %v1247, %v1360
    %v1362 = vand.u32 %v501, 4294901760
    %v1363 = vsub.f32 %v501, %v1362
    %v1364 = vand.u32 %v1363, 4294901760
    %1365 = vmatmul.f32.gmra.mxu0 %v1364
    %v1366 = vpop.f32.mrf.mxu0
    %v1367 = vadd.f32 %v1252, %v1366
    %v1368 = vand.u32 %v513, 4294901760
    %v1369 = vsub.f32 %v513, %v1368
    %v1370 = vand.u32 %v1369, 4294901760
    %1371 = vmatmul.f32.gmra.mxu0 %v1370
    %v1372 = vpop.f32.mrf.mxu0
    %v1373 = vadd.f32 %v1257, %v1372
    %v1374 = vand.u32 %v525, 4294901760
    %v1375 = vsub.f32 %v525, %v1374
    %v1376 = vand.u32 %v1375, 4294901760
    %1377 = vmatmul.f32.gmra.mxu0 %v1376
    %v1378 = vpop.f32.mrf.mxu0
    %v1379 = vadd.f32 %v1262, %v1378
    %v1380 = vand.u32 %v537, 4294901760
    %v1381 = vsub.f32 %v537, %v1380
    %v1382 = vand.u32 %v1381, 4294901760
    %1383 = vmatmul.f32.gmra.mxu0 %v1382
    %v1384 = vpop.f32.mrf.mxu0
    %v1385 = vadd.f32 %v1267, %v1384
    %v1386 = vand.u32 %v549, 4294901760
    %v1387 = vsub.f32 %v549, %v1386
    %v1388 = vand.u32 %v1387, 4294901760
    %1389 = vmatmul.f32.gmra.mxu0 %v1388
    %v1390 = vpop.f32.mrf.mxu0
    %v1391 = vadd.f32 %v1272, %v1390
    %v1392 = vand.u32 %v561, 4294901760
    %v1393 = vsub.f32 %v561, %v1392
    %v1394 = vand.u32 %v1393, 4294901760
    %1395 = vmatmul.f32.gmra.mxu0 %v1394
    %v1396 = vpop.f32.mrf.mxu0
    %v1397 = vadd.f32 %v1277, %v1396
    %v1398 = vand.u32 %v573, 4294901760
    %v1399 = vsub.f32 %v573, %v1398
    %v1400 = vand.u32 %v1399, 4294901760
    %1401 = vmatmul.f32.gmra.mxu0 %v1400
    %v1402 = vpop.f32.mrf.mxu0
    %v1403 = vadd.f32 %v1282, %v1402
    %v1404 = vand.u32 %v585, 4294901760
    %v1405 = vsub.f32 %v585, %v1404
    %v1406 = vand.u32 %v1405, 4294901760
    %1407 = vmatmul.f32.gmra.mxu0 %v1406
    %v1408 = vpop.f32.mrf.mxu0
    %v1409 = vadd.f32 %v1287, %v1408
    %v1410 = vand.u32 %v597, 4294901760
    %v1411 = vsub.f32 %v597, %v1410
    %v1412 = vand.u32 %v1411, 4294901760
    %1413 = vmatmul.f32.gmra.mxu0 %v1412
    %v1414 = vpop.f32.mrf.mxu0
    %v1415 = vadd.f32 %v1292, %v1414
    %v1416 = vand.u32 %v609, 4294901760
    %v1417 = vsub.f32 %v609, %v1416
    %v1418 = vand.u32 %v1417, 4294901760
    %1419 = vmatmul.f32.gmra.mxu0 %v1418
    %v1420 = vpop.f32.mrf.mxu0
    %v1421 = vadd.f32 %v1297, %v1420
    %v1422 = vand.u32 %v621, 4294901760
    %v1423 = vsub.f32 %v621, %v1422
    %v1424 = vand.u32 %v1423, 4294901760
    %1425 = vmatmul.f32.gmra.mxu0 %v1424
    %v1426 = vpop.f32.mrf.mxu0
    %v1427 = vadd.f32 %v1302, %v1426
    %v1428 = vand.u32 %v633, 4294901760
    %v1429 = vsub.f32 %v633, %v1428
    %v1430 = vand.u32 %v1429, 4294901760
    %1431 = vmatmul.f32.gmra.mxu0 %v1430
    %v1432 = vpop.f32.mrf.mxu0
    %v1433 = vadd.f32 %v1307, %v1432
    %v1434 = vand.u32 %v645, 4294901760
    %v1435 = vsub.f32 %v645, %v1434
    %v1436 = vand.u32 %v1435, 4294901760
    %1437 = vmatmul.f32.gmra.mxu0 %v1436
    %v1438 = vpop.f32.mrf.mxu0
    %v1439 = vadd.f32 %v1312, %v1438
    %v1440 = vand.u32 %v657, 4294901760
    %v1441 = vsub.f32 %v657, %v1440
    %v1442 = vand.u32 %v1441, 4294901760
    %1443 = vmatmul.f32.gmra.mxu0 %v1442
    %v1444 = vpop.f32.mrf.mxu0
    %v1445 = vadd.f32 %v1317, %v1444
    %v1446 = vand.u32 %v669, 4294901760
    %v1447 = vsub.f32 %v669, %v1446
    %v1448 = vand.u32 %v1447, 4294901760
    %1449 = vmatmul.f32.gmra.mxu0 %v1448
    %v1450 = vpop.f32.mrf.mxu0
    %v1451 = vadd.f32 %v1322, %v1450
    %1452 = vdwg.mxu0
    %v1453 = vand.u32 %v696, 4294901760
    %v1454 = vsub.f32 %v696, %v1453
    %v1455 = vand.u32 %v1454, 4294901760
    %1456 = vmatpush.msra.mxu0 %v1455
    %v1457 = vand.u32 %v695, 4294901760
    %v1458 = vsub.f32 %v695, %v1457
    %v1459 = vand.u32 %v1458, 4294901760
    %1460 = vmatpush.msra.mxu0 %v1459
    %v1461 = vand.u32 %v694, 4294901760
    %v1462 = vsub.f32 %v694, %v1461
    %v1463 = vand.u32 %v1462, 4294901760
    %1464 = vmatpush.msra.mxu0 %v1463
    %v1465 = vand.u32 %v693, 4294901760
    %v1466 = vsub.f32 %v693, %v1465
    %v1467 = vand.u32 %v1466, 4294901760
    %1468 = vmatpush.msra.mxu0 %v1467
    %v1469 = vand.u32 %v692, 4294901760
    %v1470 = vsub.f32 %v692, %v1469
    %v1471 = vand.u32 %v1470, 4294901760
    %1472 = vmatpush.msra.mxu0 %v1471
    %v1473 = vand.u32 %v691, 4294901760
    %v1474 = vsub.f32 %v691, %v1473
    %v1475 = vand.u32 %v1474, 4294901760
    %1476 = vmatpush.msra.mxu0 %v1475
    %v1477 = vand.u32 %v690, 4294901760
    %v1478 = vsub.f32 %v690, %v1477
    %v1479 = vand.u32 %v1478, 4294901760
    %1480 = vmatpush.msra.mxu0 %v1479
    %v1481 = vand.u32 %v689, 4294901760
    %v1482 = vsub.f32 %v689, %v1481
    %v1483 = vand.u32 %v1482, 4294901760
    %1484 = vmatpush.msra.mxu0 %v1483
    %v1485 = vand.u32 %v688, 4294901760
    %v1486 = vsub.f32 %v688, %v1485
    %v1487 = vand.u32 %v1486, 4294901760
    %1488 = vmatpush.msra.mxu0 %v1487
    %v1489 = vand.u32 %v687, 4294901760
    %v1490 = vsub.f32 %v687, %v1489
    %v1491 = vand.u32 %v1490, 4294901760
    %1492 = vmatpush.msra.mxu0 %v1491
    %v1493 = vand.u32 %v686, 4294901760
    %v1494 = vsub.f32 %v686, %v1493
    %v1495 = vand.u32 %v1494, 4294901760
    %1496 = vmatpush.msra.mxu0 %v1495
    %v1497 = vand.u32 %v685, 4294901760
    %v1498 = vsub.f32 %v685, %v1497
    %v1499 = vand.u32 %v1498, 4294901760
    %1500 = vmatpush.msra.mxu0 %v1499
    %v1501 = vand.u32 %v684, 4294901760
    %v1502 = vsub.f32 %v684, %v1501
    %v1503 = vand.u32 %v1502, 4294901760
    %1504 = vmatpush.msra.mxu0 %v1503
    %v1505 = vand.u32 %v683, 4294901760
    %v1506 = vsub.f32 %v683, %v1505
    %v1507 = vand.u32 %v1506, 4294901760
    %1508 = vmatpush.msra.mxu0 %v1507
    %v1509 = vand.u32 %v682, 4294901760
    %v1510 = vsub.f32 %v682, %v1509
    %v1511 = vand.u32 %v1510, 4294901760
    %1512 = vmatpush.msra.mxu0 %v1511
    %v1513 = vand.u32 %v681, 4294901760
    %v1514 = vsub.f32 %v681, %v1513
    %v1515 = vand.u32 %v1514, 4294901760
    %1516 = vmatpush.msra.mxu0 %v1515
    %v1517 = vand.u32 %v489, 4294901760
    %1518 = vmatmul.f32.gmra.mxu0 %v1517
    %v1519 = vpop.f32.mrf.mxu0
    %v1520 = vadd.f32 %v1361, %v1519
    %v1521 = vand.u32 %v501, 4294901760
    %1522 = vmatmul.f32.gmra.mxu0 %v1521
    %v1523 = vpop.f32.mrf.mxu0
    %v1524 = vadd.f32 %v1367, %v1523
    %v1525 = vand.u32 %v513, 4294901760
    %1526 = vmatmul.f32.gmra.mxu0 %v1525
    %v1527 = vpop.f32.mrf.mxu0
    %v1528 = vadd.f32 %v1373, %v1527
    %v1529 = vand.u32 %v525, 4294901760
    %1530 = vmatmul.f32.gmra.mxu0 %v1529
    %v1531 = vpop.f32.mrf.mxu0
    %v1532 = vadd.f32 %v1379, %v1531
    %v1533 = vand.u32 %v537, 4294901760
    %1534 = vmatmul.f32.gmra.mxu0 %v1533
    %v1535 = vpop.f32.mrf.mxu0
    %v1536 = vadd.f32 %v1385, %v1535
    %v1537 = vand.u32 %v549, 4294901760
    %1538 = vmatmul.f32.gmra.mxu0 %v1537
    %v1539 = vpop.f32.mrf.mxu0
    %v1540 = vadd.f32 %v1391, %v1539
    %v1541 = vand.u32 %v561, 4294901760
    %1542 = vmatmul.f32.gmra.mxu0 %v1541
    %v1543 = vpop.f32.mrf.mxu0
    %v1544 = vadd.f32 %v1397, %v1543
    %v1545 = vand.u32 %v573, 4294901760
    %1546 = vmatmul.f32.gmra.mxu0 %v1545
    %v1547 = vpop.f32.mrf.mxu0
    %v1548 = vadd.f32 %v1403, %v1547
    %v1549 = vand.u32 %v585, 4294901760
    %1550 = vmatmul.f32.gmra.mxu0 %v1549
    %v1551 = vpop.f32.mrf.mxu0
    %v1552 = vadd.f32 %v1409, %v1551
    %v1553 = vand.u32 %v597, 4294901760
    %1554 = vmatmul.f32.gmra.mxu0 %v1553
    %v1555 = vpop.f32.mrf.mxu0
    %v1556 = vadd.f32 %v1415, %v1555
    %v1557 = vand.u32 %v609, 4294901760
    %1558 = vmatmul.f32.gmra.mxu0 %v1557
    %v1559 = vpop.f32.mrf.mxu0
    %v1560 = vadd.f32 %v1421, %v1559
    %v1561 = vand.u32 %v621, 4294901760
    %1562 = vmatmul.f32.gmra.mxu0 %v1561
    %v1563 = vpop.f32.mrf.mxu0
    %v1564 = vadd.f32 %v1427, %v1563
    %v1565 = vand.u32 %v633, 4294901760
    %1566 = vmatmul.f32.gmra.mxu0 %v1565
    %v1567 = vpop.f32.mrf.mxu0
    %v1568 = vadd.f32 %v1433, %v1567
    %v1569 = vand.u32 %v645, 4294901760
    %1570 = vmatmul.f32.gmra.mxu0 %v1569
    %v1571 = vpop.f32.mrf.mxu0
    %v1572 = vadd.f32 %v1439, %v1571
    %v1573 = vand.u32 %v657, 4294901760
    %1574 = vmatmul.f32.gmra.mxu0 %v1573
    %v1575 = vpop.f32.mrf.mxu0
    %v1576 = vadd.f32 %v1445, %v1575
    %v1577 = vand.u32 %v669, 4294901760
    %1578 = vmatmul.f32.gmra.mxu0 %v1577
    %v1579 = vpop.f32.mrf.mxu0
    %v1580 = vadd.f32 %v1451, %v1579
    %1581 = vdwg.mxu0
    %v1582 = vand.u32 %v696, 4294901760
    %1583 = vmatpush.msra.mxu0 %v1582
    %v1584 = vand.u32 %v695, 4294901760
    %1585 = vmatpush.msra.mxu0 %v1584
    %v1586 = vand.u32 %v694, 4294901760
    %1587 = vmatpush.msra.mxu0 %v1586
    %v1588 = vand.u32 %v693, 4294901760
    %1589 = vmatpush.msra.mxu0 %v1588
    %v1590 = vand.u32 %v692, 4294901760
    %1591 = vmatpush.msra.mxu0 %v1590
    %v1592 = vand.u32 %v691, 4294901760
    %1593 = vmatpush.msra.mxu0 %v1592
    %v1594 = vand.u32 %v690, 4294901760
    %1595 = vmatpush.msra.mxu0 %v1594
    %v1596 = vand.u32 %v689, 4294901760
    %1597 = vmatpush.msra.mxu0 %v1596
    %v1598 = vand.u32 %v688, 4294901760
    %1599 = vmatpush.msra.mxu0 %v1598
    %v1600 = vand.u32 %v687, 4294901760
    %1601 = vmatpush.msra.mxu0 %v1600
    %v1602 = vand.u32 %v686, 4294901760
    %1603 = vmatpush.msra.mxu0 %v1602
    %v1604 = vand.u32 %v685, 4294901760
    %1605 = vmatpush.msra.mxu0 %v1604
    %v1606 = vand.u32 %v684, 4294901760
    %1607 = vmatpush.msra.mxu0 %v1606
    %v1608 = vand.u32 %v683, 4294901760
    %1609 = vmatpush.msra.mxu0 %v1608
    %v1610 = vand.u32 %v682, 4294901760
    %1611 = vmatpush.msra.mxu0 %v1610
    %v1612 = vand.u32 %v681, 4294901760
    %1613 = vmatpush.msra.mxu0 %v1612
    %v1614 = vand.u32 %v489, 4294901760
    %1615 = vmatmul.f32.gmra.mxu0 %v1614
    %v1616 = vpop.f32.mrf.mxu0
    %v1617 = vadd.f32 %v1520, %v1616
    %v1618 = vand.u32 %v501, 4294901760
    %1619 = vmatmul.f32.gmra.mxu0 %v1618
    %v1620 = vpop.f32.mrf.mxu0
    %v1621 = vadd.f32 %v1524, %v1620
    %v1622 = vand.u32 %v513, 4294901760
    %1623 = vmatmul.f32.gmra.mxu0 %v1622
    %v1624 = vpop.f32.mrf.mxu0
    %v1625 = vadd.f32 %v1528, %v1624
    %v1626 = vand.u32 %v525, 4294901760
    %1627 = vmatmul.f32.gmra.mxu0 %v1626
    %v1628 = vpop.f32.mrf.mxu0
    %v1629 = vadd.f32 %v1532, %v1628
    %v1630 = vand.u32 %v537, 4294901760
    %1631 = vmatmul.f32.gmra.mxu0 %v1630
    %v1632 = vpop.f32.mrf.mxu0
    %v1633 = vadd.f32 %v1536, %v1632
    %v1634 = vand.u32 %v549, 4294901760
    %1635 = vmatmul.f32.gmra.mxu0 %v1634
    %v1636 = vpop.f32.mrf.mxu0
    %v1637 = vadd.f32 %v1540, %v1636
    %v1638 = vand.u32 %v561, 4294901760
    %1639 = vmatmul.f32.gmra.mxu0 %v1638
    %v1640 = vpop.f32.mrf.mxu0
    %v1641 = vadd.f32 %v1544, %v1640
    %v1642 = vand.u32 %v573, 4294901760
    %1643 = vmatmul.f32.gmra.mxu0 %v1642
    %v1644 = vpop.f32.mrf.mxu0
    %v1645 = vadd.f32 %v1548, %v1644
    %v1646 = vand.u32 %v585, 4294901760
    %1647 = vmatmul.f32.gmra.mxu0 %v1646
    %v1648 = vpop.f32.mrf.mxu0
    %v1649 = vadd.f32 %v1552, %v1648
    %v1650 = vand.u32 %v597, 4294901760
    %1651 = vmatmul.f32.gmra.mxu0 %v1650
    %v1652 = vpop.f32.mrf.mxu0
    %v1653 = vadd.f32 %v1556, %v1652
    %v1654 = vand.u32 %v609, 4294901760
    %1655 = vmatmul.f32.gmra.mxu0 %v1654
    %v1656 = vpop.f32.mrf.mxu0
    %v1657 = vadd.f32 %v1560, %v1656
    %v1658 = vand.u32 %v621, 4294901760
    %1659 = vmatmul.f32.gmra.mxu0 %v1658
    %v1660 = vpop.f32.mrf.mxu0
    %v1661 = vadd.f32 %v1564, %v1660
    %v1662 = vand.u32 %v633, 4294901760
    %1663 = vmatmul.f32.gmra.mxu0 %v1662
    %v1664 = vpop.f32.mrf.mxu0
    %v1665 = vadd.f32 %v1568, %v1664
    %v1666 = vand.u32 %v645, 4294901760
    %1667 = vmatmul.f32.gmra.mxu0 %v1666
    %v1668 = vpop.f32.mrf.mxu0
    %v1669 = vadd.f32 %v1572, %v1668
    %v1670 = vand.u32 %v657, 4294901760
    %1671 = vmatmul.f32.gmra.mxu0 %v1670
    %v1672 = vpop.f32.mrf.mxu0
    %v1673 = vadd.f32 %v1576, %v1672
    %v1674 = vand.u32 %v669, 4294901760
    %1675 = vmatmul.f32.gmra.mxu0 %v1674
    %v1676 = vpop.f32.mrf.mxu0
    %v1677 = vadd.f32 %v1580, %v1676
    %1678 = vdwg.mxu0
    %v1679 = vand.u32 %v712, 4294901760
    %1680 = vmatpush.msra.mxu0 %v1679
    %v1681 = vand.u32 %v711, 4294901760
    %1682 = vmatpush.msra.mxu0 %v1681
    %v1683 = vand.u32 %v710, 4294901760
    %1684 = vmatpush.msra.mxu0 %v1683
    %v1685 = vand.u32 %v709, 4294901760
    %1686 = vmatpush.msra.mxu0 %v1685
    %v1687 = vand.u32 %v708, 4294901760
    %1688 = vmatpush.msra.mxu0 %v1687
    %v1689 = vand.u32 %v707, 4294901760
    %1690 = vmatpush.msra.mxu0 %v1689
    %v1691 = vand.u32 %v706, 4294901760
    %1692 = vmatpush.msra.mxu0 %v1691
    %v1693 = vand.u32 %v705, 4294901760
    %1694 = vmatpush.msra.mxu0 %v1693
    %v1695 = vand.u32 %v704, 4294901760
    %1696 = vmatpush.msra.mxu0 %v1695
    %v1697 = vand.u32 %v703, 4294901760
    %1698 = vmatpush.msra.mxu0 %v1697
    %v1699 = vand.u32 %v702, 4294901760
    %1700 = vmatpush.msra.mxu0 %v1699
    %v1701 = vand.u32 %v701, 4294901760
    %1702 = vmatpush.msra.mxu0 %v1701
    %v1703 = vand.u32 %v700, 4294901760
    %1704 = vmatpush.msra.mxu0 %v1703
    %v1705 = vand.u32 %v699, 4294901760
    %1706 = vmatpush.msra.mxu0 %v1705
    %v1707 = vand.u32 %v698, 4294901760
    %1708 = vmatpush.msra.mxu0 %v1707
    %v1709 = vand.u32 %v697, 4294901760
    %1710 = vmatpush.msra.mxu0 %v1709
    %v1711 = vand.u32 %v490, 4294901760
    %v1712 = vsub.f32 %v490, %v1711
    %v1713 = vand.u32 %v1712, 4294901760
    %v1714 = vsub.f32 %v1712, %v1713
    %v1715 = vand.u32 %v1714, 4294901760
    %1716 = vmatmul.f32.gmra.mxu0 %v1715
    %v1717 = vpop.f32.mrf.mxu0
    %v1718 = vadd.f32 %v1617, %v1717
    %v1719 = vand.u32 %v502, 4294901760
    %v1720 = vsub.f32 %v502, %v1719
    %v1721 = vand.u32 %v1720, 4294901760
    %v1722 = vsub.f32 %v1720, %v1721
    %v1723 = vand.u32 %v1722, 4294901760
    %1724 = vmatmul.f32.gmra.mxu0 %v1723
    %v1725 = vpop.f32.mrf.mxu0
    %v1726 = vadd.f32 %v1621, %v1725
    %v1727 = vand.u32 %v514, 4294901760
    %v1728 = vsub.f32 %v514, %v1727
    %v1729 = vand.u32 %v1728, 4294901760
    %v1730 = vsub.f32 %v1728, %v1729
    %v1731 = vand.u32 %v1730, 4294901760
    %1732 = vmatmul.f32.gmra.mxu0 %v1731
    %v1733 = vpop.f32.mrf.mxu0
    %v1734 = vadd.f32 %v1625, %v1733
    %v1735 = vand.u32 %v526, 4294901760
    %v1736 = vsub.f32 %v526, %v1735
    %v1737 = vand.u32 %v1736, 4294901760
    %v1738 = vsub.f32 %v1736, %v1737
    %v1739 = vand.u32 %v1738, 4294901760
    %1740 = vmatmul.f32.gmra.mxu0 %v1739
    %v1741 = vpop.f32.mrf.mxu0
    %v1742 = vadd.f32 %v1629, %v1741
    %v1743 = vand.u32 %v538, 4294901760
    %v1744 = vsub.f32 %v538, %v1743
    %v1745 = vand.u32 %v1744, 4294901760
    %v1746 = vsub.f32 %v1744, %v1745
    %v1747 = vand.u32 %v1746, 4294901760
    %1748 = vmatmul.f32.gmra.mxu0 %v1747
    %v1749 = vpop.f32.mrf.mxu0
    %v1750 = vadd.f32 %v1633, %v1749
    %v1751 = vand.u32 %v550, 4294901760
    %v1752 = vsub.f32 %v550, %v1751
    %v1753 = vand.u32 %v1752, 4294901760
    %v1754 = vsub.f32 %v1752, %v1753
    %v1755 = vand.u32 %v1754, 4294901760
    %1756 = vmatmul.f32.gmra.mxu0 %v1755
    %v1757 = vpop.f32.mrf.mxu0
    %v1758 = vadd.f32 %v1637, %v1757
    %v1759 = vand.u32 %v562, 4294901760
    %v1760 = vsub.f32 %v562, %v1759
    %v1761 = vand.u32 %v1760, 4294901760
    %v1762 = vsub.f32 %v1760, %v1761
    %v1763 = vand.u32 %v1762, 4294901760
    %1764 = vmatmul.f32.gmra.mxu0 %v1763
    %v1765 = vpop.f32.mrf.mxu0
    %v1766 = vadd.f32 %v1641, %v1765
    %v1767 = vand.u32 %v574, 4294901760
    %v1768 = vsub.f32 %v574, %v1767
    %v1769 = vand.u32 %v1768, 4294901760
    %v1770 = vsub.f32 %v1768, %v1769
    %v1771 = vand.u32 %v1770, 4294901760
    %1772 = vmatmul.f32.gmra.mxu0 %v1771
    %v1773 = vpop.f32.mrf.mxu0
    %v1774 = vadd.f32 %v1645, %v1773
    %v1775 = vand.u32 %v586, 4294901760
    %v1776 = vsub.f32 %v586, %v1775
    %v1777 = vand.u32 %v1776, 4294901760
    %v1778 = vsub.f32 %v1776, %v1777
    %v1779 = vand.u32 %v1778, 4294901760
    %1780 = vmatmul.f32.gmra.mxu0 %v1779
    %v1781 = vpop.f32.mrf.mxu0
    %v1782 = vadd.f32 %v1649, %v1781
    %v1783 = vand.u32 %v598, 4294901760
    %v1784 = vsub.f32 %v598, %v1783
    %v1785 = vand.u32 %v1784, 4294901760
    %v1786 = vsub.f32 %v1784, %v1785
    %v1787 = vand.u32 %v1786, 4294901760
    %1788 = vmatmul.f32.gmra.mxu0 %v1787
    %v1789 = vpop.f32.mrf.mxu0
    %v1790 = vadd.f32 %v1653, %v1789
    %v1791 = vand.u32 %v610, 4294901760
    %v1792 = vsub.f32 %v610, %v1791
    %v1793 = vand.u32 %v1792, 4294901760
    %v1794 = vsub.f32 %v1792, %v1793
    %v1795 = vand.u32 %v1794, 4294901760
    %1796 = vmatmul.f32.gmra.mxu0 %v1795
    %v1797 = vpop.f32.mrf.mxu0
    %v1798 = vadd.f32 %v1657, %v1797
    %v1799 = vand.u32 %v622, 4294901760
    %v1800 = vsub.f32 %v622, %v1799
    %v1801 = vand.u32 %v1800, 4294901760
    %v1802 = vsub.f32 %v1800, %v1801
    %v1803 = vand.u32 %v1802, 4294901760
    %1804 = vmatmul.f32.gmra.mxu0 %v1803
    %v1805 = vpop.f32.mrf.mxu0
    %v1806 = vadd.f32 %v1661, %v1805
    %v1807 = vand.u32 %v634, 4294901760
    %v1808 = vsub.f32 %v634, %v1807
    %v1809 = vand.u32 %v1808, 4294901760
    %v1810 = vsub.f32 %v1808, %v1809
    %v1811 = vand.u32 %v1810, 4294901760
    %1812 = vmatmul.f32.gmra.mxu0 %v1811
    %v1813 = vpop.f32.mrf.mxu0
    %v1814 = vadd.f32 %v1665, %v1813
    %v1815 = vand.u32 %v646, 4294901760
    %v1816 = vsub.f32 %v646, %v1815
    %v1817 = vand.u32 %v1816, 4294901760
    %v1818 = vsub.f32 %v1816, %v1817
    %v1819 = vand.u32 %v1818, 4294901760
    %1820 = vmatmul.f32.gmra.mxu0 %v1819
    %v1821 = vpop.f32.mrf.mxu0
    %v1822 = vadd.f32 %v1669, %v1821
    %v1823 = vand.u32 %v658, 4294901760
    %v1824 = vsub.f32 %v658, %v1823
    %v1825 = vand.u32 %v1824, 4294901760
    %v1826 = vsub.f32 %v1824, %v1825
    %v1827 = vand.u32 %v1826, 4294901760
    %1828 = vmatmul.f32.gmra.mxu0 %v1827
    %v1829 = vpop.f32.mrf.mxu0
    %v1830 = vadd.f32 %v1673, %v1829
    %v1831 = vand.u32 %v670, 4294901760
    %v1832 = vsub.f32 %v670, %v1831
    %v1833 = vand.u32 %v1832, 4294901760
    %v1834 = vsub.f32 %v1832, %v1833
    %v1835 = vand.u32 %v1834, 4294901760
    %1836 = vmatmul.f32.gmra.mxu0 %v1835
    %v1837 = vpop.f32.mrf.mxu0
    %v1838 = vadd.f32 %v1677, %v1837
    %1839 = vdwg.mxu0
    %v1840 = vand.u32 %v712, 4294901760
    %v1841 = vsub.f32 %v712, %v1840
    %v1842 = vand.u32 %v1841, 4294901760
    %v1843 = vsub.f32 %v1841, %v1842
    %v1844 = vand.u32 %v1843, 4294901760
    %1845 = vmatpush.msra.mxu0 %v1844
    %v1846 = vand.u32 %v711, 4294901760
    %v1847 = vsub.f32 %v711, %v1846
    %v1848 = vand.u32 %v1847, 4294901760
    %v1849 = vsub.f32 %v1847, %v1848
    %v1850 = vand.u32 %v1849, 4294901760
    %1851 = vmatpush.msra.mxu0 %v1850
    %v1852 = vand.u32 %v710, 4294901760
    %v1853 = vsub.f32 %v710, %v1852
    %v1854 = vand.u32 %v1853, 4294901760
    %v1855 = vsub.f32 %v1853, %v1854
    %v1856 = vand.u32 %v1855, 4294901760
    %1857 = vmatpush.msra.mxu0 %v1856
    %v1858 = vand.u32 %v709, 4294901760
    %v1859 = vsub.f32 %v709, %v1858
    %v1860 = vand.u32 %v1859, 4294901760
    %v1861 = vsub.f32 %v1859, %v1860
    %v1862 = vand.u32 %v1861, 4294901760
    %1863 = vmatpush.msra.mxu0 %v1862
    %v1864 = vand.u32 %v708, 4294901760
    %v1865 = vsub.f32 %v708, %v1864
    %v1866 = vand.u32 %v1865, 4294901760
    %v1867 = vsub.f32 %v1865, %v1866
    %v1868 = vand.u32 %v1867, 4294901760
    %1869 = vmatpush.msra.mxu0 %v1868
    %v1870 = vand.u32 %v707, 4294901760
    %v1871 = vsub.f32 %v707, %v1870
    %v1872 = vand.u32 %v1871, 4294901760
    %v1873 = vsub.f32 %v1871, %v1872
    %v1874 = vand.u32 %v1873, 4294901760
    %1875 = vmatpush.msra.mxu0 %v1874
    %v1876 = vand.u32 %v706, 4294901760
    %v1877 = vsub.f32 %v706, %v1876
    %v1878 = vand.u32 %v1877, 4294901760
    %v1879 = vsub.f32 %v1877, %v1878
    %v1880 = vand.u32 %v1879, 4294901760
    %1881 = vmatpush.msra.mxu0 %v1880
    %v1882 = vand.u32 %v705, 4294901760
    %v1883 = vsub.f32 %v705, %v1882
    %v1884 = vand.u32 %v1883, 4294901760
    %v1885 = vsub.f32 %v1883, %v1884
    %v1886 = vand.u32 %v1885, 4294901760
    %1887 = vmatpush.msra.mxu0 %v1886
    %v1888 = vand.u32 %v704, 4294901760
    %v1889 = vsub.f32 %v704, %v1888
    %v1890 = vand.u32 %v1889, 4294901760
    %v1891 = vsub.f32 %v1889, %v1890
    %v1892 = vand.u32 %v1891, 4294901760
    %1893 = vmatpush.msra.mxu0 %v1892
    %v1894 = vand.u32 %v703, 4294901760
    %v1895 = vsub.f32 %v703, %v1894
    %v1896 = vand.u32 %v1895, 4294901760
    %v1897 = vsub.f32 %v1895, %v1896
    %v1898 = vand.u32 %v1897, 4294901760
    %1899 = vmatpush.msra.mxu0 %v1898
    %v1900 = vand.u32 %v702, 4294901760
    %v1901 = vsub.f32 %v702, %v1900
    %v1902 = vand.u32 %v1901, 4294901760
    %v1903 = vsub.f32 %v1901, %v1902
    %v1904 = vand.u32 %v1903, 4294901760
    %1905 = vmatpush.msra.mxu0 %v1904
    %v1906 = vand.u32 %v701, 4294901760
    %v1907 = vsub.f32 %v701, %v1906
    %v1908 = vand.u32 %v1907, 4294901760
    %v1909 = vsub.f32 %v1907, %v1908
    %v1910 = vand.u32 %v1909, 4294901760
    %1911 = vmatpush.msra.mxu0 %v1910
    %v1912 = vand.u32 %v700, 4294901760
    %v1913 = vsub.f32 %v700, %v1912
    %v1914 = vand.u32 %v1913, 4294901760
    %v1915 = vsub.f32 %v1913, %v1914
    %v1916 = vand.u32 %v1915, 4294901760
    %1917 = vmatpush.msra.mxu0 %v1916
    %v1918 = vand.u32 %v699, 4294901760
    %v1919 = vsub.f32 %v699, %v1918
    %v1920 = vand.u32 %v1919, 4294901760
    %v1921 = vsub.f32 %v1919, %v1920
    %v1922 = vand.u32 %v1921, 4294901760
    %1923 = vmatpush.msra.mxu0 %v1922
    %v1924 = vand.u32 %v698, 4294901760
    %v1925 = vsub.f32 %v698, %v1924
    %v1926 = vand.u32 %v1925, 4294901760
    %v1927 = vsub.f32 %v1925, %v1926
    %v1928 = vand.u32 %v1927, 4294901760
    %1929 = vmatpush.msra.mxu0 %v1928
    %v1930 = vand.u32 %v697, 4294901760
    %v1931 = vsub.f32 %v697, %v1930
    %v1932 = vand.u32 %v1931, 4294901760
    %v1933 = vsub.f32 %v1931, %v1932
    %v1934 = vand.u32 %v1933, 4294901760
    %1935 = vmatpush.msra.mxu0 %v1934
    %v1936 = vand.u32 %v490, 4294901760
    %1937 = vmatmul.f32.gmra.mxu0 %v1936
    %v1938 = vpop.f32.mrf.mxu0
    %v1939 = vadd.f32 %v1718, %v1938
    %v1940 = vand.u32 %v502, 4294901760
    %1941 = vmatmul.f32.gmra.mxu0 %v1940
    %v1942 = vpop.f32.mrf.mxu0
    %v1943 = vadd.f32 %v1726, %v1942
    %v1944 = vand.u32 %v514, 4294901760
    %1945 = vmatmul.f32.gmra.mxu0 %v1944
    %v1946 = vpop.f32.mrf.mxu0
    %v1947 = vadd.f32 %v1734, %v1946
    %v1948 = vand.u32 %v526, 4294901760
    %1949 = vmatmul.f32.gmra.mxu0 %v1948
    %v1950 = vpop.f32.mrf.mxu0
    %v1951 = vadd.f32 %v1742, %v1950
    %v1952 = vand.u32 %v538, 4294901760
    %1953 = vmatmul.f32.gmra.mxu0 %v1952
    %v1954 = vpop.f32.mrf.mxu0
    %v1955 = vadd.f32 %v1750, %v1954
    %v1956 = vand.u32 %v550, 4294901760
    %1957 = vmatmul.f32.gmra.mxu0 %v1956
    %v1958 = vpop.f32.mrf.mxu0
    %v1959 = vadd.f32 %v1758, %v1958
    %v1960 = vand.u32 %v562, 4294901760
    %1961 = vmatmul.f32.gmra.mxu0 %v1960
    %v1962 = vpop.f32.mrf.mxu0
    %v1963 = vadd.f32 %v1766, %v1962
    %v1964 = vand.u32 %v574, 4294901760
    %1965 = vmatmul.f32.gmra.mxu0 %v1964
    %v1966 = vpop.f32.mrf.mxu0
    %v1967 = vadd.f32 %v1774, %v1966
    %v1968 = vand.u32 %v586, 4294901760
    %1969 = vmatmul.f32.gmra.mxu0 %v1968
    %v1970 = vpop.f32.mrf.mxu0
    %v1971 = vadd.f32 %v1782, %v1970
    %v1972 = vand.u32 %v598, 4294901760
    %1973 = vmatmul.f32.gmra.mxu0 %v1972
    %v1974 = vpop.f32.mrf.mxu0
    %v1975 = vadd.f32 %v1790, %v1974
    %v1976 = vand.u32 %v610, 4294901760
    %1977 = vmatmul.f32.gmra.mxu0 %v1976
    %v1978 = vpop.f32.mrf.mxu0
    %v1979 = vadd.f32 %v1798, %v1978
    %v1980 = vand.u32 %v622, 4294901760
    %1981 = vmatmul.f32.gmra.mxu0 %v1980
    %v1982 = vpop.f32.mrf.mxu0
    %v1983 = vadd.f32 %v1806, %v1982
    %v1984 = vand.u32 %v634, 4294901760
    %1985 = vmatmul.f32.gmra.mxu0 %v1984
    %v1986 = vpop.f32.mrf.mxu0
    %v1987 = vadd.f32 %v1814, %v1986
    %v1988 = vand.u32 %v646, 4294901760
    %1989 = vmatmul.f32.gmra.mxu0 %v1988
    %v1990 = vpop.f32.mrf.mxu0
    %v1991 = vadd.f32 %v1822, %v1990
    %v1992 = vand.u32 %v658, 4294901760
    %1993 = vmatmul.f32.gmra.mxu0 %v1992
    %v1994 = vpop.f32.mrf.mxu0
    %v1995 = vadd.f32 %v1830, %v1994
    %v1996 = vand.u32 %v670, 4294901760
    %1997 = vmatmul.f32.gmra.mxu0 %v1996
    %v1998 = vpop.f32.mrf.mxu0
    %v1999 = vadd.f32 %v1838, %v1998
    %2000 = vdwg.mxu0
    %v2001 = vand.u32 %v712, 4294901760
    %v2002 = vsub.f32 %v712, %v2001
    %2003 = vmatpush.msra.mxu0 %v2002
    %v2004 = vand.u32 %v711, 4294901760
    %v2005 = vsub.f32 %v711, %v2004
    %2006 = vmatpush.msra.mxu0 %v2005
    %v2007 = vand.u32 %v710, 4294901760
    %v2008 = vsub.f32 %v710, %v2007
    %2009 = vmatpush.msra.mxu0 %v2008
    %v2010 = vand.u32 %v709, 4294901760
    %v2011 = vsub.f32 %v709, %v2010
    %2012 = vmatpush.msra.mxu0 %v2011
    %v2013 = vand.u32 %v708, 4294901760
    %v2014 = vsub.f32 %v708, %v2013
    %2015 = vmatpush.msra.mxu0 %v2014
    %v2016 = vand.u32 %v707, 4294901760
    %v2017 = vsub.f32 %v707, %v2016
    %2018 = vmatpush.msra.mxu0 %v2017
    %v2019 = vand.u32 %v706, 4294901760
    %v2020 = vsub.f32 %v706, %v2019
    %2021 = vmatpush.msra.mxu0 %v2020
    %v2022 = vand.u32 %v705, 4294901760
    %v2023 = vsub.f32 %v705, %v2022
    %2024 = vmatpush.msra.mxu0 %v2023
    %v2025 = vand.u32 %v704, 4294901760
    %v2026 = vsub.f32 %v704, %v2025
    %2027 = vmatpush.msra.mxu0 %v2026
    %v2028 = vand.u32 %v703, 4294901760
    %v2029 = vsub.f32 %v703, %v2028
    %2030 = vmatpush.msra.mxu0 %v2029
    %v2031 = vand.u32 %v702, 4294901760
    %v2032 = vsub.f32 %v702, %v2031
    %2033 = vmatpush.msra.mxu0 %v2032
    %v2034 = vand.u32 %v701, 4294901760
    %v2035 = vsub.f32 %v701, %v2034
    %2036 = vmatpush.msra.mxu0 %v2035
    %v2037 = vand.u32 %v700, 4294901760
    %v2038 = vsub.f32 %v700, %v2037
    %2039 = vmatpush.msra.mxu0 %v2038
    %v2040 = vand.u32 %v699, 4294901760
    %v2041 = vsub.f32 %v699, %v2040
    %2042 = vmatpush.msra.mxu0 %v2041
    %v2043 = vand.u32 %v698, 4294901760
    %v2044 = vsub.f32 %v698, %v2043
    %2045 = vmatpush.msra.mxu0 %v2044
    %v2046 = vand.u32 %v697, 4294901760
    %v2047 = vsub.f32 %v697, %v2046
    %2048 = vmatpush.msra.mxu0 %v2047
    %v2049 = vand.u32 %v490, 4294901760
    %v2050 = vsub.f32 %v490, %v2049
    %2051 = vmatmul.f32.gmra.mxu0 %v2050
    %v2052 = vpop.f32.mrf.mxu0
    %v2053 = vadd.f32 %v1939, %v2052
    %v2054 = vand.u32 %v502, 4294901760
    %v2055 = vsub.f32 %v502, %v2054
    %2056 = vmatmul.f32.gmra.mxu0 %v2055
    %v2057 = vpop.f32.mrf.mxu0
    %v2058 = vadd.f32 %v1943, %v2057
    %v2059 = vand.u32 %v514, 4294901760
    %v2060 = vsub.f32 %v514, %v2059
    %2061 = vmatmul.f32.gmra.mxu0 %v2060
    %v2062 = vpop.f32.mrf.mxu0
    %v2063 = vadd.f32 %v1947, %v2062
    %v2064 = vand.u32 %v526, 4294901760
    %v2065 = vsub.f32 %v526, %v2064
    %2066 = vmatmul.f32.gmra.mxu0 %v2065
    %v2067 = vpop.f32.mrf.mxu0
    %v2068 = vadd.f32 %v1951, %v2067
    %v2069 = vand.u32 %v538, 4294901760
    %v2070 = vsub.f32 %v538, %v2069
    %2071 = vmatmul.f32.gmra.mxu0 %v2070
    %v2072 = vpop.f32.mrf.mxu0
    %v2073 = vadd.f32 %v1955, %v2072
    %v2074 = vand.u32 %v550, 4294901760
    %v2075 = vsub.f32 %v550, %v2074
    %2076 = vmatmul.f32.gmra.mxu0 %v2075
    %v2077 = vpop.f32.mrf.mxu0
    %v2078 = vadd.f32 %v1959, %v2077
    %v2079 = vand.u32 %v562, 4294901760
    %v2080 = vsub.f32 %v562, %v2079
    %2081 = vmatmul.f32.gmra.mxu0 %v2080
    %v2082 = vpop.f32.mrf.mxu0
    %v2083 = vadd.f32 %v1963, %v2082
    %v2084 = vand.u32 %v574, 4294901760
    %v2085 = vsub.f32 %v574, %v2084
    %2086 = vmatmul.f32.gmra.mxu0 %v2085
    %v2087 = vpop.f32.mrf.mxu0
    %v2088 = vadd.f32 %v1967, %v2087
    %v2089 = vand.u32 %v586, 4294901760
    %v2090 = vsub.f32 %v586, %v2089
    %2091 = vmatmul.f32.gmra.mxu0 %v2090
    %v2092 = vpop.f32.mrf.mxu0
    %v2093 = vadd.f32 %v1971, %v2092
    %v2094 = vand.u32 %v598, 4294901760
    %v2095 = vsub.f32 %v598, %v2094
    %2096 = vmatmul.f32.gmra.mxu0 %v2095
    %v2097 = vpop.f32.mrf.mxu0
    %v2098 = vadd.f32 %v1975, %v2097
    %v2099 = vand.u32 %v610, 4294901760
    %v2100 = vsub.f32 %v610, %v2099
    %2101 = vmatmul.f32.gmra.mxu0 %v2100
    %v2102 = vpop.f32.mrf.mxu0
    %v2103 = vadd.f32 %v1979, %v2102
    %v2104 = vand.u32 %v622, 4294901760
    %v2105 = vsub.f32 %v622, %v2104
    %2106 = vmatmul.f32.gmra.mxu0 %v2105
    %v2107 = vpop.f32.mrf.mxu0
    %v2108 = vadd.f32 %v1983, %v2107
    %v2109 = vand.u32 %v634, 4294901760
    %v2110 = vsub.f32 %v634, %v2109
    %2111 = vmatmul.f32.gmra.mxu0 %v2110
    %v2112 = vpop.f32.mrf.mxu0
    %v2113 = vadd.f32 %v1987, %v2112
    %v2114 = vand.u32 %v646, 4294901760
    %v2115 = vsub.f32 %v646, %v2114
    %2116 = vmatmul.f32.gmra.mxu0 %v2115
    %v2117 = vpop.f32.mrf.mxu0
    %v2118 = vadd.f32 %v1991, %v2117
    %v2119 = vand.u32 %v658, 4294901760
    %v2120 = vsub.f32 %v658, %v2119
    %2121 = vmatmul.f32.gmra.mxu0 %v2120
    %v2122 = vpop.f32.mrf.mxu0
    %v2123 = vadd.f32 %v1995, %v2122
    %v2124 = vand.u32 %v670, 4294901760
    %v2125 = vsub.f32 %v670, %v2124
    %2126 = vmatmul.f32.gmra.mxu0 %v2125
    %v2127 = vpop.f32.mrf.mxu0
    %v2128 = vadd.f32 %v1999, %v2127
    %2129 = vdwg.mxu0
    %v2130 = vand.u32 %v712, 4294901760
    %2131 = vmatpush.msra.mxu0 %v2130
    %v2132 = vand.u32 %v711, 4294901760
    %2133 = vmatpush.msra.mxu0 %v2132
    %v2134 = vand.u32 %v710, 4294901760
    %2135 = vmatpush.msra.mxu0 %v2134
    %v2136 = vand.u32 %v709, 4294901760
    %2137 = vmatpush.msra.mxu0 %v2136
    %v2138 = vand.u32 %v708, 4294901760
    %2139 = vmatpush.msra.mxu0 %v2138
    %v2140 = vand.u32 %v707, 4294901760
    %2141 = vmatpush.msra.mxu0 %v2140
    %v2142 = vand.u32 %v706, 4294901760
    %2143 = vmatpush.msra.mxu0 %v2142
    %v2144 = vand.u32 %v705, 4294901760
    %2145 = vmatpush.msra.mxu0 %v2144
    %v2146 = vand.u32 %v704, 4294901760
    %2147 = vmatpush.msra.mxu0 %v2146
    %v2148 = vand.u32 %v703, 4294901760
    %2149 = vmatpush.msra.mxu0 %v2148
    %v2150 = vand.u32 %v702, 4294901760
    %2151 = vmatpush.msra.mxu0 %v2150
    %v2152 = vand.u32 %v701, 4294901760
    %2153 = vmatpush.msra.mxu0 %v2152
    %v2154 = vand.u32 %v700, 4294901760
    %2155 = vmatpush.msra.mxu0 %v2154
    %v2156 = vand.u32 %v699, 4294901760
    %2157 = vmatpush.msra.mxu0 %v2156
    %v2158 = vand.u32 %v698, 4294901760
    %2159 = vmatpush.msra.mxu0 %v2158
    %v2160 = vand.u32 %v697, 4294901760
    %2161 = vmatpush.msra.mxu0 %v2160
    %v2162 = vand.u32 %v490, 4294901760
    %v2163 = vsub.f32 %v490, %v2162
    %v2164 = vand.u32 %v2163, 4294901760
    %2165 = vmatmul.f32.gmra.mxu0 %v2164
    %v2166 = vpop.f32.mrf.mxu0
    %v2167 = vadd.f32 %v2053, %v2166
    %v2168 = vand.u32 %v502, 4294901760
    %v2169 = vsub.f32 %v502, %v2168
    %v2170 = vand.u32 %v2169, 4294901760
    %2171 = vmatmul.f32.gmra.mxu0 %v2170
    %v2172 = vpop.f32.mrf.mxu0
    %v2173 = vadd.f32 %v2058, %v2172
    %v2174 = vand.u32 %v514, 4294901760
    %v2175 = vsub.f32 %v514, %v2174
    %v2176 = vand.u32 %v2175, 4294901760
    %2177 = vmatmul.f32.gmra.mxu0 %v2176
    %v2178 = vpop.f32.mrf.mxu0
    %v2179 = vadd.f32 %v2063, %v2178
    %v2180 = vand.u32 %v526, 4294901760
    %v2181 = vsub.f32 %v526, %v2180
    %v2182 = vand.u32 %v2181, 4294901760
    %2183 = vmatmul.f32.gmra.mxu0 %v2182
    %v2184 = vpop.f32.mrf.mxu0
    %v2185 = vadd.f32 %v2068, %v2184
    %v2186 = vand.u32 %v538, 4294901760
    %v2187 = vsub.f32 %v538, %v2186
    %v2188 = vand.u32 %v2187, 4294901760
    %2189 = vmatmul.f32.gmra.mxu0 %v2188
    %v2190 = vpop.f32.mrf.mxu0
    %v2191 = vadd.f32 %v2073, %v2190
    %v2192 = vand.u32 %v550, 4294901760
    %v2193 = vsub.f32 %v550, %v2192
    %v2194 = vand.u32 %v2193, 4294901760
    %2195 = vmatmul.f32.gmra.mxu0 %v2194
    %v2196 = vpop.f32.mrf.mxu0
    %v2197 = vadd.f32 %v2078, %v2196
    %v2198 = vand.u32 %v562, 4294901760
    %v2199 = vsub.f32 %v562, %v2198
    %v2200 = vand.u32 %v2199, 4294901760
    %2201 = vmatmul.f32.gmra.mxu0 %v2200
    %v2202 = vpop.f32.mrf.mxu0
    %v2203 = vadd.f32 %v2083, %v2202
    %v2204 = vand.u32 %v574, 4294901760
    %v2205 = vsub.f32 %v574, %v2204
    %v2206 = vand.u32 %v2205, 4294901760
    %2207 = vmatmul.f32.gmra.mxu0 %v2206
    %v2208 = vpop.f32.mrf.mxu0
    %v2209 = vadd.f32 %v2088, %v2208
    %v2210 = vand.u32 %v586, 4294901760
    %v2211 = vsub.f32 %v586, %v2210
    %v2212 = vand.u32 %v2211, 4294901760
    %2213 = vmatmul.f32.gmra.mxu0 %v2212
    %v2214 = vpop.f32.mrf.mxu0
    %v2215 = vadd.f32 %v2093, %v2214
    %v2216 = vand.u32 %v598, 4294901760
    %v2217 = vsub.f32 %v598, %v2216
    %v2218 = vand.u32 %v2217, 4294901760
    %2219 = vmatmul.f32.gmra.mxu0 %v2218
    %v2220 = vpop.f32.mrf.mxu0
    %v2221 = vadd.f32 %v2098, %v2220
    %v2222 = vand.u32 %v610, 4294901760
    %v2223 = vsub.f32 %v610, %v2222
    %v2224 = vand.u32 %v2223, 4294901760
    %2225 = vmatmul.f32.gmra.mxu0 %v2224
    %v2226 = vpop.f32.mrf.mxu0
    %v2227 = vadd.f32 %v2103, %v2226
    %v2228 = vand.u32 %v622, 4294901760
    %v2229 = vsub.f32 %v622, %v2228
    %v2230 = vand.u32 %v2229, 4294901760
    %2231 = vmatmul.f32.gmra.mxu0 %v2230
    %v2232 = vpop.f32.mrf.mxu0
    %v2233 = vadd.f32 %v2108, %v2232
    %v2234 = vand.u32 %v634, 4294901760
    %v2235 = vsub.f32 %v634, %v2234
    %v2236 = vand.u32 %v2235, 4294901760
    %2237 = vmatmul.f32.gmra.mxu0 %v2236
    %v2238 = vpop.f32.mrf.mxu0
    %v2239 = vadd.f32 %v2113, %v2238
    %v2240 = vand.u32 %v646, 4294901760
    %v2241 = vsub.f32 %v646, %v2240
    %v2242 = vand.u32 %v2241, 4294901760
    %2243 = vmatmul.f32.gmra.mxu0 %v2242
    %v2244 = vpop.f32.mrf.mxu0
    %v2245 = vadd.f32 %v2118, %v2244
    %v2246 = vand.u32 %v658, 4294901760
    %v2247 = vsub.f32 %v658, %v2246
    %v2248 = vand.u32 %v2247, 4294901760
    %2249 = vmatmul.f32.gmra.mxu0 %v2248
    %v2250 = vpop.f32.mrf.mxu0
    %v2251 = vadd.f32 %v2123, %v2250
    %v2252 = vand.u32 %v670, 4294901760
    %v2253 = vsub.f32 %v670, %v2252
    %v2254 = vand.u32 %v2253, 4294901760
    %2255 = vmatmul.f32.gmra.mxu0 %v2254
    %v2256 = vpop.f32.mrf.mxu0
    %v2257 = vadd.f32 %v2128, %v2256
    %2258 = vdwg.mxu0
    %v2259 = vand.u32 %v712, 4294901760
    %v2260 = vsub.f32 %v712, %v2259
    %v2261 = vand.u32 %v2260, 4294901760
    %2262 = vmatpush.msra.mxu0 %v2261
    %v2263 = vand.u32 %v711, 4294901760
    %v2264 = vsub.f32 %v711, %v2263
    %v2265 = vand.u32 %v2264, 4294901760
    %2266 = vmatpush.msra.mxu0 %v2265
    %v2267 = vand.u32 %v710, 4294901760
    %v2268 = vsub.f32 %v710, %v2267
    %v2269 = vand.u32 %v2268, 4294901760
    %2270 = vmatpush.msra.mxu0 %v2269
    %v2271 = vand.u32 %v709, 4294901760
    %v2272 = vsub.f32 %v709, %v2271
    %v2273 = vand.u32 %v2272, 4294901760
    %2274 = vmatpush.msra.mxu0 %v2273
    %v2275 = vand.u32 %v708, 4294901760
    %v2276 = vsub.f32 %v708, %v2275
    %v2277 = vand.u32 %v2276, 4294901760
    %2278 = vmatpush.msra.mxu0 %v2277
    %v2279 = vand.u32 %v707, 4294901760
    %v2280 = vsub.f32 %v707, %v2279
    %v2281 = vand.u32 %v2280, 4294901760
    %2282 = vmatpush.msra.mxu0 %v2281
    %v2283 = vand.u32 %v706, 4294901760
    %v2284 = vsub.f32 %v706, %v2283
    %v2285 = vand.u32 %v2284, 4294901760
    %2286 = vmatpush.msra.mxu0 %v2285
    %v2287 = vand.u32 %v705, 4294901760
    %v2288 = vsub.f32 %v705, %v2287
    %v2289 = vand.u32 %v2288, 4294901760
    %2290 = vmatpush.msra.mxu0 %v2289
    %v2291 = vand.u32 %v704, 4294901760
    %v2292 = vsub.f32 %v704, %v2291
    %v2293 = vand.u32 %v2292, 4294901760
    %2294 = vmatpush.msra.mxu0 %v2293
    %v2295 = vand.u32 %v703, 4294901760
    %v2296 = vsub.f32 %v703, %v2295
    %v2297 = vand.u32 %v2296, 4294901760
    %2298 = vmatpush.msra.mxu0 %v2297
    %v2299 = vand.u32 %v702, 4294901760
    %v2300 = vsub.f32 %v702, %v2299
    %v2301 = vand.u32 %v2300, 4294901760
    %2302 = vmatpush.msra.mxu0 %v2301
    %v2303 = vand.u32 %v701, 4294901760
    %v2304 = vsub.f32 %v701, %v2303
    %v2305 = vand.u32 %v2304, 4294901760
    %2306 = vmatpush.msra.mxu0 %v2305
    %v2307 = vand.u32 %v700, 4294901760
    %v2308 = vsub.f32 %v700, %v2307
    %v2309 = vand.u32 %v2308, 4294901760
    %2310 = vmatpush.msra.mxu0 %v2309
    %v2311 = vand.u32 %v699, 4294901760
    %v2312 = vsub.f32 %v699, %v2311
    %v2313 = vand.u32 %v2312, 4294901760
    %2314 = vmatpush.msra.mxu0 %v2313
    %v2315 = vand.u32 %v698, 4294901760
    %v2316 = vsub.f32 %v698, %v2315
    %v2317 = vand.u32 %v2316, 4294901760
    %2318 = vmatpush.msra.mxu0 %v2317
    %v2319 = vand.u32 %v697, 4294901760
    %v2320 = vsub.f32 %v697, %v2319
    %v2321 = vand.u32 %v2320, 4294901760
    %2322 = vmatpush.msra.mxu0 %v2321
    %v2323 = vand.u32 %v490, 4294901760
    %2324 = vmatmul.f32.gmra.mxu0 %v2323
    %v2325 = vpop.f32.mrf.mxu0
    %v2326 = vadd.f32 %v2167, %v2325
    %v2327 = vand.u32 %v502, 4294901760
    %2328 = vmatmul.f32.gmra.mxu0 %v2327
    %v2329 = vpop.f32.mrf.mxu0
    %v2330 = vadd.f32 %v2173, %v2329
    %v2331 = vand.u32 %v514, 4294901760
    %2332 = vmatmul.f32.gmra.mxu0 %v2331
    %v2333 = vpop.f32.mrf.mxu0
    %v2334 = vadd.f32 %v2179, %v2333
    %v2335 = vand.u32 %v526, 4294901760
    %2336 = vmatmul.f32.gmra.mxu0 %v2335
    %v2337 = vpop.f32.mrf.mxu0
    %v2338 = vadd.f32 %v2185, %v2337
    %v2339 = vand.u32 %v538, 4294901760
    %2340 = vmatmul.f32.gmra.mxu0 %v2339
    %v2341 = vpop.f32.mrf.mxu0
    %v2342 = vadd.f32 %v2191, %v2341
    %v2343 = vand.u32 %v550, 4294901760
    %2344 = vmatmul.f32.gmra.mxu0 %v2343
    %v2345 = vpop.f32.mrf.mxu0
    %v2346 = vadd.f32 %v2197, %v2345
    %v2347 = vand.u32 %v562, 4294901760
    %2348 = vmatmul.f32.gmra.mxu0 %v2347
    %v2349 = vpop.f32.mrf.mxu0
    %v2350 = vadd.f32 %v2203, %v2349
    %v2351 = vand.u32 %v574, 4294901760
    %2352 = vmatmul.f32.gmra.mxu0 %v2351
    %v2353 = vpop.f32.mrf.mxu0
    %v2354 = vadd.f32 %v2209, %v2353
    %v2355 = vand.u32 %v586, 4294901760
    %2356 = vmatmul.f32.gmra.mxu0 %v2355
    %v2357 = vpop.f32.mrf.mxu0
    %v2358 = vadd.f32 %v2215, %v2357
    %v2359 = vand.u32 %v598, 4294901760
    %2360 = vmatmul.f32.gmra.mxu0 %v2359
    %v2361 = vpop.f32.mrf.mxu0
    %v2362 = vadd.f32 %v2221, %v2361
    %v2363 = vand.u32 %v610, 4294901760
    %2364 = vmatmul.f32.gmra.mxu0 %v2363
    %v2365 = vpop.f32.mrf.mxu0
    %v2366 = vadd.f32 %v2227, %v2365
    %v2367 = vand.u32 %v622, 4294901760
    %2368 = vmatmul.f32.gmra.mxu0 %v2367
    %v2369 = vpop.f32.mrf.mxu0
    %v2370 = vadd.f32 %v2233, %v2369
    %v2371 = vand.u32 %v634, 4294901760
    %2372 = vmatmul.f32.gmra.mxu0 %v2371
    %v2373 = vpop.f32.mrf.mxu0
    %v2374 = vadd.f32 %v2239, %v2373
    %v2375 = vand.u32 %v646, 4294901760
    %2376 = vmatmul.f32.gmra.mxu0 %v2375
    %v2377 = vpop.f32.mrf.mxu0
    %v2378 = vadd.f32 %v2245, %v2377
    %v2379 = vand.u32 %v658, 4294901760
    %2380 = vmatmul.f32.gmra.mxu0 %v2379
    %v2381 = vpop.f32.mrf.mxu0
    %v2382 = vadd.f32 %v2251, %v2381
    %v2383 = vand.u32 %v670, 4294901760
    %2384 = vmatmul.f32.gmra.mxu0 %v2383
    %v2385 = vpop.f32.mrf.mxu0
    %v2386 = vadd.f32 %v2257, %v2385
    %2387 = vdwg.mxu0
    %v2388 = vand.u32 %v712, 4294901760
    %2389 = vmatpush.msra.mxu0 %v2388
    %v2390 = vand.u32 %v711, 4294901760
    %2391 = vmatpush.msra.mxu0 %v2390
    %v2392 = vand.u32 %v710, 4294901760
    %2393 = vmatpush.msra.mxu0 %v2392
    %v2394 = vand.u32 %v709, 4294901760
    %2395 = vmatpush.msra.mxu0 %v2394
    %v2396 = vand.u32 %v708, 4294901760
    %2397 = vmatpush.msra.mxu0 %v2396
    %v2398 = vand.u32 %v707, 4294901760
    %2399 = vmatpush.msra.mxu0 %v2398
    %v2400 = vand.u32 %v706, 4294901760
    %2401 = vmatpush.msra.mxu0 %v2400
    %v2402 = vand.u32 %v705, 4294901760
    %2403 = vmatpush.msra.mxu0 %v2402
    %v2404 = vand.u32 %v704, 4294901760
    %2405 = vmatpush.msra.mxu0 %v2404
    %v2406 = vand.u32 %v703, 4294901760
    %2407 = vmatpush.msra.mxu0 %v2406
    %v2408 = vand.u32 %v702, 4294901760
    %2409 = vmatpush.msra.mxu0 %v2408
    %v2410 = vand.u32 %v701, 4294901760
    %2411 = vmatpush.msra.mxu0 %v2410
    %v2412 = vand.u32 %v700, 4294901760
    %2413 = vmatpush.msra.mxu0 %v2412
    %v2414 = vand.u32 %v699, 4294901760
    %2415 = vmatpush.msra.mxu0 %v2414
    %v2416 = vand.u32 %v698, 4294901760
    %2417 = vmatpush.msra.mxu0 %v2416
    %v2418 = vand.u32 %v697, 4294901760
    %2419 = vmatpush.msra.mxu0 %v2418
    %v2420 = vand.u32 %v490, 4294901760
    %2421 = vmatmul.f32.gmra.mxu0 %v2420
    %v2422 = vpop.f32.mrf.mxu0
    %v2423 = vadd.f32 %v2326, %v2422
    %v2424 = vand.u32 %v502, 4294901760
    %2425 = vmatmul.f32.gmra.mxu0 %v2424
    %v2426 = vpop.f32.mrf.mxu0
    %v2427 = vadd.f32 %v2330, %v2426
    %v2428 = vand.u32 %v514, 4294901760
    %2429 = vmatmul.f32.gmra.mxu0 %v2428
    %v2430 = vpop.f32.mrf.mxu0
    %v2431 = vadd.f32 %v2334, %v2430
    %v2432 = vand.u32 %v526, 4294901760
    %2433 = vmatmul.f32.gmra.mxu0 %v2432
    %v2434 = vpop.f32.mrf.mxu0
    %v2435 = vadd.f32 %v2338, %v2434
    %v2436 = vand.u32 %v538, 4294901760
    %2437 = vmatmul.f32.gmra.mxu0 %v2436
    %v2438 = vpop.f32.mrf.mxu0
    %v2439 = vadd.f32 %v2342, %v2438
    %v2440 = vand.u32 %v550, 4294901760
    %2441 = vmatmul.f32.gmra.mxu0 %v2440
    %v2442 = vpop.f32.mrf.mxu0
    %v2443 = vadd.f32 %v2346, %v2442
    %v2444 = vand.u32 %v562, 4294901760
    %2445 = vmatmul.f32.gmra.mxu0 %v2444
    %v2446 = vpop.f32.mrf.mxu0
    %v2447 = vadd.f32 %v2350, %v2446
    %v2448 = vand.u32 %v574, 4294901760
    %2449 = vmatmul.f32.gmra.mxu0 %v2448
    %v2450 = vpop.f32.mrf.mxu0
    %v2451 = vadd.f32 %v2354, %v2450
    %v2452 = vand.u32 %v586, 4294901760
    %2453 = vmatmul.f32.gmra.mxu0 %v2452
    %v2454 = vpop.f32.mrf.mxu0
    %v2455 = vadd.f32 %v2358, %v2454
    %v2456 = vand.u32 %v598, 4294901760
    %2457 = vmatmul.f32.gmra.mxu0 %v2456
    %v2458 = vpop.f32.mrf.mxu0
    %v2459 = vadd.f32 %v2362, %v2458
    %v2460 = vand.u32 %v610, 4294901760
    %2461 = vmatmul.f32.gmra.mxu0 %v2460
    %v2462 = vpop.f32.mrf.mxu0
    %v2463 = vadd.f32 %v2366, %v2462
    %v2464 = vand.u32 %v622, 4294901760
    %2465 = vmatmul.f32.gmra.mxu0 %v2464
    %v2466 = vpop.f32.mrf.mxu0
    %v2467 = vadd.f32 %v2370, %v2466
    %v2468 = vand.u32 %v634, 4294901760
    %2469 = vmatmul.f32.gmra.mxu0 %v2468
    %v2470 = vpop.f32.mrf.mxu0
    %v2471 = vadd.f32 %v2374, %v2470
    %v2472 = vand.u32 %v646, 4294901760
    %2473 = vmatmul.f32.gmra.mxu0 %v2472
    %v2474 = vpop.f32.mrf.mxu0
    %v2475 = vadd.f32 %v2378, %v2474
    %v2476 = vand.u32 %v658, 4294901760
    %2477 = vmatmul.f32.gmra.mxu0 %v2476
    %v2478 = vpop.f32.mrf.mxu0
    %v2479 = vadd.f32 %v2382, %v2478
    %v2480 = vand.u32 %v670, 4294901760
    %2481 = vmatmul.f32.gmra.mxu0 %v2480
    %v2482 = vpop.f32.mrf.mxu0
    %v2483 = vadd.f32 %v2386, %v2482
    %2484 = vdwg.mxu0
    %v2485 = vand.u32 %v728, 4294901760
    %2486 = vmatpush.msra.mxu0 %v2485
    %v2487 = vand.u32 %v727, 4294901760
    %2488 = vmatpush.msra.mxu0 %v2487
    %v2489 = vand.u32 %v726, 4294901760
    %2490 = vmatpush.msra.mxu0 %v2489
    %v2491 = vand.u32 %v725, 4294901760
    %2492 = vmatpush.msra.mxu0 %v2491
    %v2493 = vand.u32 %v724, 4294901760
    %2494 = vmatpush.msra.mxu0 %v2493
    %v2495 = vand.u32 %v723, 4294901760
    %2496 = vmatpush.msra.mxu0 %v2495
    %v2497 = vand.u32 %v722, 4294901760
    %2498 = vmatpush.msra.mxu0 %v2497
    %v2499 = vand.u32 %v721, 4294901760
    %2500 = vmatpush.msra.mxu0 %v2499
    %v2501 = vand.u32 %v720, 4294901760
    %2502 = vmatpush.msra.mxu0 %v2501
    %v2503 = vand.u32 %v719, 4294901760
    %2504 = vmatpush.msra.mxu0 %v2503
    %v2505 = vand.u32 %v718, 4294901760
    %2506 = vmatpush.msra.mxu0 %v2505
    %v2507 = vand.u32 %v717, 4294901760
    %2508 = vmatpush.msra.mxu0 %v2507
    %v2509 = vand.u32 %v716, 4294901760
    %2510 = vmatpush.msra.mxu0 %v2509
    %v2511 = vand.u32 %v715, 4294901760
    %2512 = vmatpush.msra.mxu0 %v2511
    %v2513 = vand.u32 %v714, 4294901760
    %2514 = vmatpush.msra.mxu0 %v2513
    %v2515 = vand.u32 %v713, 4294901760
    %2516 = vmatpush.msra.mxu0 %v2515
    %v2517 = vand.u32 %v491, 4294901760
    %v2518 = vsub.f32 %v491, %v2517
    %v2519 = vand.u32 %v2518, 4294901760
    %v2520 = vsub.f32 %v2518, %v2519
    %v2521 = vand.u32 %v2520, 4294901760
    %2522 = vmatmul.f32.gmra.mxu0 %v2521
    %v2523 = vpop.f32.mrf.mxu0
    %v2524 = vadd.f32 %v2423, %v2523
    %v2525 = vand.u32 %v503, 4294901760
    %v2526 = vsub.f32 %v503, %v2525
    %v2527 = vand.u32 %v2526, 4294901760
    %v2528 = vsub.f32 %v2526, %v2527
    %v2529 = vand.u32 %v2528, 4294901760
    %2530 = vmatmul.f32.gmra.mxu0 %v2529
    %v2531 = vpop.f32.mrf.mxu0
    %v2532 = vadd.f32 %v2427, %v2531
    %v2533 = vand.u32 %v515, 4294901760
    %v2534 = vsub.f32 %v515, %v2533
    %v2535 = vand.u32 %v2534, 4294901760
    %v2536 = vsub.f32 %v2534, %v2535
    %v2537 = vand.u32 %v2536, 4294901760
    %2538 = vmatmul.f32.gmra.mxu0 %v2537
    %v2539 = vpop.f32.mrf.mxu0
    %v2540 = vadd.f32 %v2431, %v2539
    %v2541 = vand.u32 %v527, 4294901760
    %v2542 = vsub.f32 %v527, %v2541
    %v2543 = vand.u32 %v2542, 4294901760
    %v2544 = vsub.f32 %v2542, %v2543
    %v2545 = vand.u32 %v2544, 4294901760
    %2546 = vmatmul.f32.gmra.mxu0 %v2545
    %v2547 = vpop.f32.mrf.mxu0
    %v2548 = vadd.f32 %v2435, %v2547
    %v2549 = vand.u32 %v539, 4294901760
    %v2550 = vsub.f32 %v539, %v2549
    %v2551 = vand.u32 %v2550, 4294901760
    %v2552 = vsub.f32 %v2550, %v2551
    %v2553 = vand.u32 %v2552, 4294901760
    %2554 = vmatmul.f32.gmra.mxu0 %v2553
    %v2555 = vpop.f32.mrf.mxu0
    %v2556 = vadd.f32 %v2439, %v2555
    %v2557 = vand.u32 %v551, 4294901760
    %v2558 = vsub.f32 %v551, %v2557
    %v2559 = vand.u32 %v2558, 4294901760
    %v2560 = vsub.f32 %v2558, %v2559
    %v2561 = vand.u32 %v2560, 4294901760
    %2562 = vmatmul.f32.gmra.mxu0 %v2561
    %v2563 = vpop.f32.mrf.mxu0
    %v2564 = vadd.f32 %v2443, %v2563
    %v2565 = vand.u32 %v563, 4294901760
    %v2566 = vsub.f32 %v563, %v2565
    %v2567 = vand.u32 %v2566, 4294901760
    %v2568 = vsub.f32 %v2566, %v2567
    %v2569 = vand.u32 %v2568, 4294901760
    %2570 = vmatmul.f32.gmra.mxu0 %v2569
    %v2571 = vpop.f32.mrf.mxu0
    %v2572 = vadd.f32 %v2447, %v2571
    %v2573 = vand.u32 %v575, 4294901760
    %v2574 = vsub.f32 %v575, %v2573
    %v2575 = vand.u32 %v2574, 4294901760
    %v2576 = vsub.f32 %v2574, %v2575
    %v2577 = vand.u32 %v2576, 4294901760
    %2578 = vmatmul.f32.gmra.mxu0 %v2577
    %v2579 = vpop.f32.mrf.mxu0
    %v2580 = vadd.f32 %v2451, %v2579
    %v2581 = vand.u32 %v587, 4294901760
    %v2582 = vsub.f32 %v587, %v2581
    %v2583 = vand.u32 %v2582, 4294901760
    %v2584 = vsub.f32 %v2582, %v2583
    %v2585 = vand.u32 %v2584, 4294901760
    %2586 = vmatmul.f32.gmra.mxu0 %v2585
    %v2587 = vpop.f32.mrf.mxu0
    %v2588 = vadd.f32 %v2455, %v2587
    %v2589 = vand.u32 %v599, 4294901760
    %v2590 = vsub.f32 %v599, %v2589
    %v2591 = vand.u32 %v2590, 4294901760
    %v2592 = vsub.f32 %v2590, %v2591
    %v2593 = vand.u32 %v2592, 4294901760
    %2594 = vmatmul.f32.gmra.mxu0 %v2593
    %v2595 = vpop.f32.mrf.mxu0
    %v2596 = vadd.f32 %v2459, %v2595
    %v2597 = vand.u32 %v611, 4294901760
    %v2598 = vsub.f32 %v611, %v2597
    %v2599 = vand.u32 %v2598, 4294901760
    %v2600 = vsub.f32 %v2598, %v2599
    %v2601 = vand.u32 %v2600, 4294901760
    %2602 = vmatmul.f32.gmra.mxu0 %v2601
    %v2603 = vpop.f32.mrf.mxu0
    %v2604 = vadd.f32 %v2463, %v2603
    %v2605 = vand.u32 %v623, 4294901760
    %v2606 = vsub.f32 %v623, %v2605
    %v2607 = vand.u32 %v2606, 4294901760
    %v2608 = vsub.f32 %v2606, %v2607
    %v2609 = vand.u32 %v2608, 4294901760
    %2610 = vmatmul.f32.gmra.mxu0 %v2609
    %v2611 = vpop.f32.mrf.mxu0
    %v2612 = vadd.f32 %v2467, %v2611
    %v2613 = vand.u32 %v635, 4294901760
    %v2614 = vsub.f32 %v635, %v2613
    %v2615 = vand.u32 %v2614, 4294901760
    %v2616 = vsub.f32 %v2614, %v2615
    %v2617 = vand.u32 %v2616, 4294901760
    %2618 = vmatmul.f32.gmra.mxu0 %v2617
    %v2619 = vpop.f32.mrf.mxu0
    %v2620 = vadd.f32 %v2471, %v2619
    %v2621 = vand.u32 %v647, 4294901760
    %v2622 = vsub.f32 %v647, %v2621
    %v2623 = vand.u32 %v2622, 4294901760
    %v2624 = vsub.f32 %v2622, %v2623
    %v2625 = vand.u32 %v2624, 4294901760
    %2626 = vmatmul.f32.gmra.mxu0 %v2625
    %v2627 = vpop.f32.mrf.mxu0
    %v2628 = vadd.f32 %v2475, %v2627
    %v2629 = vand.u32 %v659, 4294901760
    %v2630 = vsub.f32 %v659, %v2629
    %v2631 = vand.u32 %v2630, 4294901760
    %v2632 = vsub.f32 %v2630, %v2631
    %v2633 = vand.u32 %v2632, 4294901760
    %2634 = vmatmul.f32.gmra.mxu0 %v2633
    %v2635 = vpop.f32.mrf.mxu0
    %v2636 = vadd.f32 %v2479, %v2635
    %v2637 = vand.u32 %v671, 4294901760
    %v2638 = vsub.f32 %v671, %v2637
    %v2639 = vand.u32 %v2638, 4294901760
    %v2640 = vsub.f32 %v2638, %v2639
    %v2641 = vand.u32 %v2640, 4294901760
    %2642 = vmatmul.f32.gmra.mxu0 %v2641
    %v2643 = vpop.f32.mrf.mxu0
    %v2644 = vadd.f32 %v2483, %v2643
    %2645 = vdwg.mxu0
    %v2646 = vand.u32 %v728, 4294901760
    %v2647 = vsub.f32 %v728, %v2646
    %v2648 = vand.u32 %v2647, 4294901760
    %v2649 = vsub.f32 %v2647, %v2648
    %v2650 = vand.u32 %v2649, 4294901760
    %2651 = vmatpush.msra.mxu0 %v2650
    %v2652 = vand.u32 %v727, 4294901760
    %v2653 = vsub.f32 %v727, %v2652
    %v2654 = vand.u32 %v2653, 4294901760
    %v2655 = vsub.f32 %v2653, %v2654
    %v2656 = vand.u32 %v2655, 4294901760
    %2657 = vmatpush.msra.mxu0 %v2656
    %v2658 = vand.u32 %v726, 4294901760
    %v2659 = vsub.f32 %v726, %v2658
    %v2660 = vand.u32 %v2659, 4294901760
    %v2661 = vsub.f32 %v2659, %v2660
    %v2662 = vand.u32 %v2661, 4294901760
    %2663 = vmatpush.msra.mxu0 %v2662
    %v2664 = vand.u32 %v725, 4294901760
    %v2665 = vsub.f32 %v725, %v2664
    %v2666 = vand.u32 %v2665, 4294901760
    %v2667 = vsub.f32 %v2665, %v2666
    %v2668 = vand.u32 %v2667, 4294901760
    %2669 = vmatpush.msra.mxu0 %v2668
    %v2670 = vand.u32 %v724, 4294901760
    %v2671 = vsub.f32 %v724, %v2670
    %v2672 = vand.u32 %v2671, 4294901760
    %v2673 = vsub.f32 %v2671, %v2672
    %v2674 = vand.u32 %v2673, 4294901760
    %2675 = vmatpush.msra.mxu0 %v2674
    %v2676 = vand.u32 %v723, 4294901760
    %v2677 = vsub.f32 %v723, %v2676
    %v2678 = vand.u32 %v2677, 4294901760
    %v2679 = vsub.f32 %v2677, %v2678
    %v2680 = vand.u32 %v2679, 4294901760
    %2681 = vmatpush.msra.mxu0 %v2680
    %v2682 = vand.u32 %v722, 4294901760
    %v2683 = vsub.f32 %v722, %v2682
    %v2684 = vand.u32 %v2683, 4294901760
    %v2685 = vsub.f32 %v2683, %v2684
    %v2686 = vand.u32 %v2685, 4294901760
    %2687 = vmatpush.msra.mxu0 %v2686
    %v2688 = vand.u32 %v721, 4294901760
    %v2689 = vsub.f32 %v721, %v2688
    %v2690 = vand.u32 %v2689, 4294901760
    %v2691 = vsub.f32 %v2689, %v2690
    %v2692 = vand.u32 %v2691, 4294901760
    %2693 = vmatpush.msra.mxu0 %v2692
    %v2694 = vand.u32 %v720, 4294901760
    %v2695 = vsub.f32 %v720, %v2694
    %v2696 = vand.u32 %v2695, 4294901760
    %v2697 = vsub.f32 %v2695, %v2696
    %v2698 = vand.u32 %v2697, 4294901760
    %2699 = vmatpush.msra.mxu0 %v2698
    %v2700 = vand.u32 %v719, 4294901760
    %v2701 = vsub.f32 %v719, %v2700
    %v2702 = vand.u32 %v2701, 4294901760
    %v2703 = vsub.f32 %v2701, %v2702
    %v2704 = vand.u32 %v2703, 4294901760
    %2705 = vmatpush.msra.mxu0 %v2704
    %v2706 = vand.u32 %v718, 4294901760
    %v2707 = vsub.f32 %v718, %v2706
    %v2708 = vand.u32 %v2707, 4294901760
    %v2709 = vsub.f32 %v2707, %v2708
    %v2710 = vand.u32 %v2709, 4294901760
    %2711 = vmatpush.msra.mxu0 %v2710
    %v2712 = vand.u32 %v717, 4294901760
    %v2713 = vsub.f32 %v717, %v2712
    %v2714 = vand.u32 %v2713, 4294901760
    %v2715 = vsub.f32 %v2713, %v2714
    %v2716 = vand.u32 %v2715, 4294901760
    %2717 = vmatpush.msra.mxu0 %v2716
    %v2718 = vand.u32 %v716, 4294901760
    %v2719 = vsub.f32 %v716, %v2718
    %v2720 = vand.u32 %v2719, 4294901760
    %v2721 = vsub.f32 %v2719, %v2720
    %v2722 = vand.u32 %v2721, 4294901760
    %2723 = vmatpush.msra.mxu0 %v2722
    %v2724 = vand.u32 %v715, 4294901760
    %v2725 = vsub.f32 %v715, %v2724
    %v2726 = vand.u32 %v2725, 4294901760
    %v2727 = vsub.f32 %v2725, %v2726
    %v2728 = vand.u32 %v2727, 4294901760
    %2729 = vmatpush.msra.mxu0 %v2728
    %v2730 = vand.u32 %v714, 4294901760
    %v2731 = vsub.f32 %v714, %v2730
    %v2732 = vand.u32 %v2731, 4294901760
    %v2733 = vsub.f32 %v2731, %v2732
    %v2734 = vand.u32 %v2733, 4294901760
    %2735 = vmatpush.msra.mxu0 %v2734
    %v2736 = vand.u32 %v713, 4294901760
    %v2737 = vsub.f32 %v713, %v2736
    %v2738 = vand.u32 %v2737, 4294901760
    %v2739 = vsub.f32 %v2737, %v2738
    %v2740 = vand.u32 %v2739, 4294901760
    %2741 = vmatpush.msra.mxu0 %v2740
    %v2742 = vand.u32 %v491, 4294901760
    %2743 = vmatmul.f32.gmra.mxu0 %v2742
    %v2744 = vpop.f32.mrf.mxu0
    %v2745 = vadd.f32 %v2524, %v2744
    %v2746 = vand.u32 %v503, 4294901760
    %2747 = vmatmul.f32.gmra.mxu0 %v2746
    %v2748 = vpop.f32.mrf.mxu0
    %v2749 = vadd.f32 %v2532, %v2748
    %v2750 = vand.u32 %v515, 4294901760
    %2751 = vmatmul.f32.gmra.mxu0 %v2750
    %v2752 = vpop.f32.mrf.mxu0
    %v2753 = vadd.f32 %v2540, %v2752
    %v2754 = vand.u32 %v527, 4294901760
    %2755 = vmatmul.f32.gmra.mxu0 %v2754
    %v2756 = vpop.f32.mrf.mxu0
    %v2757 = vadd.f32 %v2548, %v2756
    %v2758 = vand.u32 %v539, 4294901760
    %2759 = vmatmul.f32.gmra.mxu0 %v2758
    %v2760 = vpop.f32.mrf.mxu0
    %v2761 = vadd.f32 %v2556, %v2760
    %v2762 = vand.u32 %v551, 4294901760
    %2763 = vmatmul.f32.gmra.mxu0 %v2762
    %v2764 = vpop.f32.mrf.mxu0
    %v2765 = vadd.f32 %v2564, %v2764
    %v2766 = vand.u32 %v563, 4294901760
    %2767 = vmatmul.f32.gmra.mxu0 %v2766
    %v2768 = vpop.f32.mrf.mxu0
    %v2769 = vadd.f32 %v2572, %v2768
    %v2770 = vand.u32 %v575, 4294901760
    %2771 = vmatmul.f32.gmra.mxu0 %v2770
    %v2772 = vpop.f32.mrf.mxu0
    %v2773 = vadd.f32 %v2580, %v2772
    %v2774 = vand.u32 %v587, 4294901760
    %2775 = vmatmul.f32.gmra.mxu0 %v2774
    %v2776 = vpop.f32.mrf.mxu0
    %v2777 = vadd.f32 %v2588, %v2776
    %v2778 = vand.u32 %v599, 4294901760
    %2779 = vmatmul.f32.gmra.mxu0 %v2778
    %v2780 = vpop.f32.mrf.mxu0
    %v2781 = vadd.f32 %v2596, %v2780
    %v2782 = vand.u32 %v611, 4294901760
    %2783 = vmatmul.f32.gmra.mxu0 %v2782
    %v2784 = vpop.f32.mrf.mxu0
    %v2785 = vadd.f32 %v2604, %v2784
    %v2786 = vand.u32 %v623, 4294901760
    %2787 = vmatmul.f32.gmra.mxu0 %v2786
    %v2788 = vpop.f32.mrf.mxu0
    %v2789 = vadd.f32 %v2612, %v2788
    %v2790 = vand.u32 %v635, 4294901760
    %2791 = vmatmul.f32.gmra.mxu0 %v2790
    %v2792 = vpop.f32.mrf.mxu0
    %v2793 = vadd.f32 %v2620, %v2792
    %v2794 = vand.u32 %v647, 4294901760
    %2795 = vmatmul.f32.gmra.mxu0 %v2794
    %v2796 = vpop.f32.mrf.mxu0
    %v2797 = vadd.f32 %v2628, %v2796
    %v2798 = vand.u32 %v659, 4294901760
    %2799 = vmatmul.f32.gmra.mxu0 %v2798
    %v2800 = vpop.f32.mrf.mxu0
    %v2801 = vadd.f32 %v2636, %v2800
    %v2802 = vand.u32 %v671, 4294901760
    %2803 = vmatmul.f32.gmra.mxu0 %v2802
    %v2804 = vpop.f32.mrf.mxu0
    %v2805 = vadd.f32 %v2644, %v2804
    %2806 = vdwg.mxu0
    %v2807 = vand.u32 %v728, 4294901760
    %v2808 = vsub.f32 %v728, %v2807
    %2809 = vmatpush.msra.mxu0 %v2808
    %v2810 = vand.u32 %v727, 4294901760
    %v2811 = vsub.f32 %v727, %v2810
    %2812 = vmatpush.msra.mxu0 %v2811
    %v2813 = vand.u32 %v726, 4294901760
    %v2814 = vsub.f32 %v726, %v2813
    %2815 = vmatpush.msra.mxu0 %v2814
    %v2816 = vand.u32 %v725, 4294901760
    %v2817 = vsub.f32 %v725, %v2816
    %2818 = vmatpush.msra.mxu0 %v2817
    %v2819 = vand.u32 %v724, 4294901760
    %v2820 = vsub.f32 %v724, %v2819
    %2821 = vmatpush.msra.mxu0 %v2820
    %v2822 = vand.u32 %v723, 4294901760
    %v2823 = vsub.f32 %v723, %v2822
    %2824 = vmatpush.msra.mxu0 %v2823
    %v2825 = vand.u32 %v722, 4294901760
    %v2826 = vsub.f32 %v722, %v2825
    %2827 = vmatpush.msra.mxu0 %v2826
    %v2828 = vand.u32 %v721, 4294901760
    %v2829 = vsub.f32 %v721, %v2828
    %2830 = vmatpush.msra.mxu0 %v2829
    %v2831 = vand.u32 %v720, 4294901760
    %v2832 = vsub.f32 %v720, %v2831
    %2833 = vmatpush.msra.mxu0 %v2832
    %v2834 = vand.u32 %v719, 4294901760
    %v2835 = vsub.f32 %v719, %v2834
    %2836 = vmatpush.msra.mxu0 %v2835
    %v2837 = vand.u32 %v718, 4294901760
    %v2838 = vsub.f32 %v718, %v2837
    %2839 = vmatpush.msra.mxu0 %v2838
    %v2840 = vand.u32 %v717, 4294901760
    %v2841 = vsub.f32 %v717, %v2840
    %2842 = vmatpush.msra.mxu0 %v2841
    %v2843 = vand.u32 %v716, 4294901760
    %v2844 = vsub.f32 %v716, %v2843
    %2845 = vmatpush.msra.mxu0 %v2844
    %v2846 = vand.u32 %v715, 4294901760
    %v2847 = vsub.f32 %v715, %v2846
    %2848 = vmatpush.msra.mxu0 %v2847
    %v2849 = vand.u32 %v714, 4294901760
    %v2850 = vsub.f32 %v714, %v2849
    %2851 = vmatpush.msra.mxu0 %v2850
    %v2852 = vand.u32 %v713, 4294901760
    %v2853 = vsub.f32 %v713, %v2852
    %2854 = vmatpush.msra.mxu0 %v2853
    %v2855 = vand.u32 %v491, 4294901760
    %v2856 = vsub.f32 %v491, %v2855
    %2857 = vmatmul.f32.gmra.mxu0 %v2856
    %v2858 = vpop.f32.mrf.mxu0
    %v2859 = vadd.f32 %v2745, %v2858
    %v2860 = vand.u32 %v503, 4294901760
    %v2861 = vsub.f32 %v503, %v2860
    %2862 = vmatmul.f32.gmra.mxu0 %v2861
    %v2863 = vpop.f32.mrf.mxu0
    %v2864 = vadd.f32 %v2749, %v2863
    %v2865 = vand.u32 %v515, 4294901760
    %v2866 = vsub.f32 %v515, %v2865
    %2867 = vmatmul.f32.gmra.mxu0 %v2866
    %v2868 = vpop.f32.mrf.mxu0
    %v2869 = vadd.f32 %v2753, %v2868
    %v2870 = vand.u32 %v527, 4294901760
    %v2871 = vsub.f32 %v527, %v2870
    %2872 = vmatmul.f32.gmra.mxu0 %v2871
    %v2873 = vpop.f32.mrf.mxu0
    %v2874 = vadd.f32 %v2757, %v2873
    %v2875 = vand.u32 %v539, 4294901760
    %v2876 = vsub.f32 %v539, %v2875
    %2877 = vmatmul.f32.gmra.mxu0 %v2876
    %v2878 = vpop.f32.mrf.mxu0
    %v2879 = vadd.f32 %v2761, %v2878
    %v2880 = vand.u32 %v551, 4294901760
    %v2881 = vsub.f32 %v551, %v2880
    %2882 = vmatmul.f32.gmra.mxu0 %v2881
    %v2883 = vpop.f32.mrf.mxu0
    %v2884 = vadd.f32 %v2765, %v2883
    %v2885 = vand.u32 %v563, 4294901760
    %v2886 = vsub.f32 %v563, %v2885
    %2887 = vmatmul.f32.gmra.mxu0 %v2886
    %v2888 = vpop.f32.mrf.mxu0
    %v2889 = vadd.f32 %v2769, %v2888
    %v2890 = vand.u32 %v575, 4294901760
    %v2891 = vsub.f32 %v575, %v2890
    %2892 = vmatmul.f32.gmra.mxu0 %v2891
    %v2893 = vpop.f32.mrf.mxu0
    %v2894 = vadd.f32 %v2773, %v2893
    %v2895 = vand.u32 %v587, 4294901760
    %v2896 = vsub.f32 %v587, %v2895
    %2897 = vmatmul.f32.gmra.mxu0 %v2896
    %v2898 = vpop.f32.mrf.mxu0
    %v2899 = vadd.f32 %v2777, %v2898
    %v2900 = vand.u32 %v599, 4294901760
    %v2901 = vsub.f32 %v599, %v2900
    %2902 = vmatmul.f32.gmra.mxu0 %v2901
    %v2903 = vpop.f32.mrf.mxu0
    %v2904 = vadd.f32 %v2781, %v2903
    %v2905 = vand.u32 %v611, 4294901760
    %v2906 = vsub.f32 %v611, %v2905
    %2907 = vmatmul.f32.gmra.mxu0 %v2906
    %v2908 = vpop.f32.mrf.mxu0
    %v2909 = vadd.f32 %v2785, %v2908
    %v2910 = vand.u32 %v623, 4294901760
    %v2911 = vsub.f32 %v623, %v2910
    %2912 = vmatmul.f32.gmra.mxu0 %v2911
    %v2913 = vpop.f32.mrf.mxu0
    %v2914 = vadd.f32 %v2789, %v2913
    %v2915 = vand.u32 %v635, 4294901760
    %v2916 = vsub.f32 %v635, %v2915
    %2917 = vmatmul.f32.gmra.mxu0 %v2916
    %v2918 = vpop.f32.mrf.mxu0
    %v2919 = vadd.f32 %v2793, %v2918
    %v2920 = vand.u32 %v647, 4294901760
    %v2921 = vsub.f32 %v647, %v2920
    %2922 = vmatmul.f32.gmra.mxu0 %v2921
    %v2923 = vpop.f32.mrf.mxu0
    %v2924 = vadd.f32 %v2797, %v2923
    %v2925 = vand.u32 %v659, 4294901760
    %v2926 = vsub.f32 %v659, %v2925
    %2927 = vmatmul.f32.gmra.mxu0 %v2926
    %v2928 = vpop.f32.mrf.mxu0
    %v2929 = vadd.f32 %v2801, %v2928
    %v2930 = vand.u32 %v671, 4294901760
    %v2931 = vsub.f32 %v671, %v2930
    %2932 = vmatmul.f32.gmra.mxu0 %v2931
    %v2933 = vpop.f32.mrf.mxu0
    %v2934 = vadd.f32 %v2805, %v2933
    %2935 = vdwg.mxu0
    %v2936 = vand.u32 %v728, 4294901760
    %2937 = vmatpush.msra.mxu0 %v2936
    %v2938 = vand.u32 %v727, 4294901760
    %2939 = vmatpush.msra.mxu0 %v2938
    %v2940 = vand.u32 %v726, 4294901760
    %2941 = vmatpush.msra.mxu0 %v2940
    %v2942 = vand.u32 %v725, 4294901760
    %2943 = vmatpush.msra.mxu0 %v2942
    %v2944 = vand.u32 %v724, 4294901760
    %2945 = vmatpush.msra.mxu0 %v2944
    %v2946 = vand.u32 %v723, 4294901760
    %2947 = vmatpush.msra.mxu0 %v2946
    %v2948 = vand.u32 %v722, 4294901760
    %2949 = vmatpush.msra.mxu0 %v2948
    %v2950 = vand.u32 %v721, 4294901760
    %2951 = vmatpush.msra.mxu0 %v2950
    %v2952 = vand.u32 %v720, 4294901760
    %2953 = vmatpush.msra.mxu0 %v2952
    %v2954 = vand.u32 %v719, 4294901760
    %2955 = vmatpush.msra.mxu0 %v2954
    %v2956 = vand.u32 %v718, 4294901760
    %2957 = vmatpush.msra.mxu0 %v2956
    %v2958 = vand.u32 %v717, 4294901760
    %2959 = vmatpush.msra.mxu0 %v2958
    %v2960 = vand.u32 %v716, 4294901760
    %2961 = vmatpush.msra.mxu0 %v2960
    %v2962 = vand.u32 %v715, 4294901760
    %2963 = vmatpush.msra.mxu0 %v2962
    %v2964 = vand.u32 %v714, 4294901760
    %2965 = vmatpush.msra.mxu0 %v2964
    %v2966 = vand.u32 %v713, 4294901760
    %2967 = vmatpush.msra.mxu0 %v2966
    %v2968 = vand.u32 %v491, 4294901760
    %v2969 = vsub.f32 %v491, %v2968
    %v2970 = vand.u32 %v2969, 4294901760
    %2971 = vmatmul.f32.gmra.mxu0 %v2970
    %v2972 = vpop.f32.mrf.mxu0
    %v2973 = vadd.f32 %v2859, %v2972
    %v2974 = vand.u32 %v503, 4294901760
    %v2975 = vsub.f32 %v503, %v2974
    %v2976 = vand.u32 %v2975, 4294901760
    %2977 = vmatmul.f32.gmra.mxu0 %v2976
    %v2978 = vpop.f32.mrf.mxu0
    %v2979 = vadd.f32 %v2864, %v2978
    %v2980 = vand.u32 %v515, 4294901760
    %v2981 = vsub.f32 %v515, %v2980
    %v2982 = vand.u32 %v2981, 4294901760
    %2983 = vmatmul.f32.gmra.mxu0 %v2982
    %v2984 = vpop.f32.mrf.mxu0
    %v2985 = vadd.f32 %v2869, %v2984
    %v2986 = vand.u32 %v527, 4294901760
    %v2987 = vsub.f32 %v527, %v2986
    %v2988 = vand.u32 %v2987, 4294901760
    %2989 = vmatmul.f32.gmra.mxu0 %v2988
    %v2990 = vpop.f32.mrf.mxu0
    %v2991 = vadd.f32 %v2874, %v2990
    %v2992 = vand.u32 %v539, 4294901760
    %v2993 = vsub.f32 %v539, %v2992
    %v2994 = vand.u32 %v2993, 4294901760
    %2995 = vmatmul.f32.gmra.mxu0 %v2994
    %v2996 = vpop.f32.mrf.mxu0
    %v2997 = vadd.f32 %v2879, %v2996
    %v2998 = vand.u32 %v551, 4294901760
    %v2999 = vsub.f32 %v551, %v2998
    %v3000 = vand.u32 %v2999, 4294901760
    %3001 = vmatmul.f32.gmra.mxu0 %v3000
    %v3002 = vpop.f32.mrf.mxu0
    %v3003 = vadd.f32 %v2884, %v3002
    %v3004 = vand.u32 %v563, 4294901760
    %v3005 = vsub.f32 %v563, %v3004
    %v3006 = vand.u32 %v3005, 4294901760
    %3007 = vmatmul.f32.gmra.mxu0 %v3006
    %v3008 = vpop.f32.mrf.mxu0
    %v3009 = vadd.f32 %v2889, %v3008
    %v3010 = vand.u32 %v575, 4294901760
    %v3011 = vsub.f32 %v575, %v3010
    %v3012 = vand.u32 %v3011, 4294901760
    %3013 = vmatmul.f32.gmra.mxu0 %v3012
    %v3014 = vpop.f32.mrf.mxu0
    %v3015 = vadd.f32 %v2894, %v3014
    %v3016 = vand.u32 %v587, 4294901760
    %v3017 = vsub.f32 %v587, %v3016
    %v3018 = vand.u32 %v3017, 4294901760
    %3019 = vmatmul.f32.gmra.mxu0 %v3018
    %v3020 = vpop.f32.mrf.mxu0
    %v3021 = vadd.f32 %v2899, %v3020
    %v3022 = vand.u32 %v599, 4294901760
    %v3023 = vsub.f32 %v599, %v3022
    %v3024 = vand.u32 %v3023, 4294901760
    %3025 = vmatmul.f32.gmra.mxu0 %v3024
    %v3026 = vpop.f32.mrf.mxu0
    %v3027 = vadd.f32 %v2904, %v3026
    %v3028 = vand.u32 %v611, 4294901760
    %v3029 = vsub.f32 %v611, %v3028
    %v3030 = vand.u32 %v3029, 4294901760
    %3031 = vmatmul.f32.gmra.mxu0 %v3030
    %v3032 = vpop.f32.mrf.mxu0
    %v3033 = vadd.f32 %v2909, %v3032
    %v3034 = vand.u32 %v623, 4294901760
    %v3035 = vsub.f32 %v623, %v3034
    %v3036 = vand.u32 %v3035, 4294901760
    %3037 = vmatmul.f32.gmra.mxu0 %v3036
    %v3038 = vpop.f32.mrf.mxu0
    %v3039 = vadd.f32 %v2914, %v3038
    %v3040 = vand.u32 %v635, 4294901760
    %v3041 = vsub.f32 %v635, %v3040
    %v3042 = vand.u32 %v3041, 4294901760
    %3043 = vmatmul.f32.gmra.mxu0 %v3042
    %v3044 = vpop.f32.mrf.mxu0
    %v3045 = vadd.f32 %v2919, %v3044
    %v3046 = vand.u32 %v647, 4294901760
    %v3047 = vsub.f32 %v647, %v3046
    %v3048 = vand.u32 %v3047, 4294901760
    %3049 = vmatmul.f32.gmra.mxu0 %v3048
    %v3050 = vpop.f32.mrf.mxu0
    %v3051 = vadd.f32 %v2924, %v3050
    %v3052 = vand.u32 %v659, 4294901760
    %v3053 = vsub.f32 %v659, %v3052
    %v3054 = vand.u32 %v3053, 4294901760
    %3055 = vmatmul.f32.gmra.mxu0 %v3054
    %v3056 = vpop.f32.mrf.mxu0
    %v3057 = vadd.f32 %v2929, %v3056
    %v3058 = vand.u32 %v671, 4294901760
    %v3059 = vsub.f32 %v671, %v3058
    %v3060 = vand.u32 %v3059, 4294901760
    %3061 = vmatmul.f32.gmra.mxu0 %v3060
    %v3062 = vpop.f32.mrf.mxu0
    %v3063 = vadd.f32 %v2934, %v3062
    %3064 = vdwg.mxu0
    %v3065 = vand.u32 %v728, 4294901760
    %v3066 = vsub.f32 %v728, %v3065
    %v3067 = vand.u32 %v3066, 4294901760
    %3068 = vmatpush.msra.mxu0 %v3067
    %v3069 = vand.u32 %v727, 4294901760
    %v3070 = vsub.f32 %v727, %v3069
    %v3071 = vand.u32 %v3070, 4294901760
    %3072 = vmatpush.msra.mxu0 %v3071
    %v3073 = vand.u32 %v726, 4294901760
    %v3074 = vsub.f32 %v726, %v3073
    %v3075 = vand.u32 %v3074, 4294901760
    %3076 = vmatpush.msra.mxu0 %v3075
    %v3077 = vand.u32 %v725, 4294901760
    %v3078 = vsub.f32 %v725, %v3077
    %v3079 = vand.u32 %v3078, 4294901760
    %3080 = vmatpush.msra.mxu0 %v3079
    %v3081 = vand.u32 %v724, 4294901760
    %v3082 = vsub.f32 %v724, %v3081
    %v3083 = vand.u32 %v3082, 4294901760
    %3084 = vmatpush.msra.mxu0 %v3083
    %v3085 = vand.u32 %v723, 4294901760
    %v3086 = vsub.f32 %v723, %v3085
    %v3087 = vand.u32 %v3086, 4294901760
    %3088 = vmatpush.msra.mxu0 %v3087
    %v3089 = vand.u32 %v722, 4294901760
    %v3090 = vsub.f32 %v722, %v3089
    %v3091 = vand.u32 %v3090, 4294901760
    %3092 = vmatpush.msra.mxu0 %v3091
    %v3093 = vand.u32 %v721, 4294901760
    %v3094 = vsub.f32 %v721, %v3093
    %v3095 = vand.u32 %v3094, 4294901760
    %3096 = vmatpush.msra.mxu0 %v3095
    %v3097 = vand.u32 %v720, 4294901760
    %v3098 = vsub.f32 %v720, %v3097
    %v3099 = vand.u32 %v3098, 4294901760
    %3100 = vmatpush.msra.mxu0 %v3099
    %v3101 = vand.u32 %v719, 4294901760
    %v3102 = vsub.f32 %v719, %v3101
    %v3103 = vand.u32 %v3102, 4294901760
    %3104 = vmatpush.msra.mxu0 %v3103
    %v3105 = vand.u32 %v718, 4294901760
    %v3106 = vsub.f32 %v718, %v3105
    %v3107 = vand.u32 %v3106, 4294901760
    %3108 = vmatpush.msra.mxu0 %v3107
    %v3109 = vand.u32 %v717, 4294901760
    %v3110 = vsub.f32 %v717, %v3109
    %v3111 = vand.u32 %v3110, 4294901760
    %3112 = vmatpush.msra.mxu0 %v3111
    %v3113 = vand.u32 %v716, 4294901760
    %v3114 = vsub.f32 %v716, %v3113
    %v3115 = vand.u32 %v3114, 4294901760
    %3116 = vmatpush.msra.mxu0 %v3115
    %v3117 = vand.u32 %v715, 4294901760
    %v3118 = vsub.f32 %v715, %v3117
    %v3119 = vand.u32 %v3118, 4294901760
    %3120 = vmatpush.msra.mxu0 %v3119
    %v3121 = vand.u32 %v714, 4294901760
    %v3122 = vsub.f32 %v714, %v3121
    %v3123 = vand.u32 %v3122, 4294901760
    %3124 = vmatpush.msra.mxu0 %v3123
    %v3125 = vand.u32 %v713, 4294901760
    %v3126 = vsub.f32 %v713, %v3125
    %v3127 = vand.u32 %v3126, 4294901760
    %3128 = vmatpush.msra.mxu0 %v3127
    %v3129 = vand.u32 %v491, 4294901760
    %3130 = vmatmul.f32.gmra.mxu0 %v3129
    %v3131 = vpop.f32.mrf.mxu0
    %v3132 = vadd.f32 %v2973, %v3131
    %v3133 = vand.u32 %v503, 4294901760
    %3134 = vmatmul.f32.gmra.mxu0 %v3133
    %v3135 = vpop.f32.mrf.mxu0
    %v3136 = vadd.f32 %v2979, %v3135
    %v3137 = vand.u32 %v515, 4294901760
    %3138 = vmatmul.f32.gmra.mxu0 %v3137
    %v3139 = vpop.f32.mrf.mxu0
    %v3140 = vadd.f32 %v2985, %v3139
    %v3141 = vand.u32 %v527, 4294901760
    %3142 = vmatmul.f32.gmra.mxu0 %v3141
    %v3143 = vpop.f32.mrf.mxu0
    %v3144 = vadd.f32 %v2991, %v3143
    %v3145 = vand.u32 %v539, 4294901760
    %3146 = vmatmul.f32.gmra.mxu0 %v3145
    %v3147 = vpop.f32.mrf.mxu0
    %v3148 = vadd.f32 %v2997, %v3147
    %v3149 = vand.u32 %v551, 4294901760
    %3150 = vmatmul.f32.gmra.mxu0 %v3149
    %v3151 = vpop.f32.mrf.mxu0
    %v3152 = vadd.f32 %v3003, %v3151
    %v3153 = vand.u32 %v563, 4294901760
    %3154 = vmatmul.f32.gmra.mxu0 %v3153
    %v3155 = vpop.f32.mrf.mxu0
    %v3156 = vadd.f32 %v3009, %v3155
    %v3157 = vand.u32 %v575, 4294901760
    %3158 = vmatmul.f32.gmra.mxu0 %v3157
    %v3159 = vpop.f32.mrf.mxu0
    %v3160 = vadd.f32 %v3015, %v3159
    %v3161 = vand.u32 %v587, 4294901760
    %3162 = vmatmul.f32.gmra.mxu0 %v3161
    %v3163 = vpop.f32.mrf.mxu0
    %v3164 = vadd.f32 %v3021, %v3163
    %v3165 = vand.u32 %v599, 4294901760
    %3166 = vmatmul.f32.gmra.mxu0 %v3165
    %v3167 = vpop.f32.mrf.mxu0
    %v3168 = vadd.f32 %v3027, %v3167
    %v3169 = vand.u32 %v611, 4294901760
    %3170 = vmatmul.f32.gmra.mxu0 %v3169
    %v3171 = vpop.f32.mrf.mxu0
    %v3172 = vadd.f32 %v3033, %v3171
    %v3173 = vand.u32 %v623, 4294901760
    %3174 = vmatmul.f32.gmra.mxu0 %v3173
    %v3175 = vpop.f32.mrf.mxu0
    %v3176 = vadd.f32 %v3039, %v3175
    %v3177 = vand.u32 %v635, 4294901760
    %3178 = vmatmul.f32.gmra.mxu0 %v3177
    %v3179 = vpop.f32.mrf.mxu0
    %v3180 = vadd.f32 %v3045, %v3179
    %v3181 = vand.u32 %v647, 4294901760
    %3182 = vmatmul.f32.gmra.mxu0 %v3181
    %v3183 = vpop.f32.mrf.mxu0
    %v3184 = vadd.f32 %v3051, %v3183
    %v3185 = vand.u32 %v659, 4294901760
    %3186 = vmatmul.f32.gmra.mxu0 %v3185
    %v3187 = vpop.f32.mrf.mxu0
    %v3188 = vadd.f32 %v3057, %v3187
    %v3189 = vand.u32 %v671, 4294901760
    %3190 = vmatmul.f32.gmra.mxu0 %v3189
    %v3191 = vpop.f32.mrf.mxu0
    %v3192 = vadd.f32 %v3063, %v3191
    %3193 = vdwg.mxu0
    %v3194 = vand.u32 %v728, 4294901760
    %3195 = vmatpush.msra.mxu0 %v3194
    %v3196 = vand.u32 %v727, 4294901760
    %3197 = vmatpush.msra.mxu0 %v3196
    %v3198 = vand.u32 %v726, 4294901760
    %3199 = vmatpush.msra.mxu0 %v3198
    %v3200 = vand.u32 %v725, 4294901760
    %3201 = vmatpush.msra.mxu0 %v3200
    %v3202 = vand.u32 %v724, 4294901760
    %3203 = vmatpush.msra.mxu0 %v3202
    %v3204 = vand.u32 %v723, 4294901760
    %3205 = vmatpush.msra.mxu0 %v3204
    %v3206 = vand.u32 %v722, 4294901760
    %3207 = vmatpush.msra.mxu0 %v3206
    %v3208 = vand.u32 %v721, 4294901760
    %3209 = vmatpush.msra.mxu0 %v3208
    %v3210 = vand.u32 %v720, 4294901760
    %3211 = vmatpush.msra.mxu0 %v3210
    %v3212 = vand.u32 %v719, 4294901760
    %3213 = vmatpush.msra.mxu0 %v3212
    %v3214 = vand.u32 %v718, 4294901760
    %3215 = vmatpush.msra.mxu0 %v3214
    %v3216 = vand.u32 %v717, 4294901760
    %3217 = vmatpush.msra.mxu0 %v3216
    %v3218 = vand.u32 %v716, 4294901760
    %3219 = vmatpush.msra.mxu0 %v3218
    %v3220 = vand.u32 %v715, 4294901760
    %3221 = vmatpush.msra.mxu0 %v3220
    %v3222 = vand.u32 %v714, 4294901760
    %3223 = vmatpush.msra.mxu0 %v3222
    %v3224 = vand.u32 %v713, 4294901760
    %3225 = vmatpush.msra.mxu0 %v3224
    %v3226 = vand.u32 %v491, 4294901760
    %3227 = vmatmul.f32.gmra.mxu0 %v3226
    %v3228 = vpop.f32.mrf.mxu0
    %v3229 = vadd.f32 %v3132, %v3228
    %v3230 = vand.u32 %v503, 4294901760
    %3231 = vmatmul.f32.gmra.mxu0 %v3230
    %v3232 = vpop.f32.mrf.mxu0
    %v3233 = vadd.f32 %v3136, %v3232
    %v3234 = vand.u32 %v515, 4294901760
    %3235 = vmatmul.f32.gmra.mxu0 %v3234
    %v3236 = vpop.f32.mrf.mxu0
    %v3237 = vadd.f32 %v3140, %v3236
    %v3238 = vand.u32 %v527, 4294901760
    %3239 = vmatmul.f32.gmra.mxu0 %v3238
    %v3240 = vpop.f32.mrf.mxu0
    %v3241 = vadd.f32 %v3144, %v3240
    %v3242 = vand.u32 %v539, 4294901760
    %3243 = vmatmul.f32.gmra.mxu0 %v3242
    %v3244 = vpop.f32.mrf.mxu0
    %v3245 = vadd.f32 %v3148, %v3244
    %v3246 = vand.u32 %v551, 4294901760
    %3247 = vmatmul.f32.gmra.mxu0 %v3246
    %v3248 = vpop.f32.mrf.mxu0
    %v3249 = vadd.f32 %v3152, %v3248
    %v3250 = vand.u32 %v563, 4294901760
    %3251 = vmatmul.f32.gmra.mxu0 %v3250
    %v3252 = vpop.f32.mrf.mxu0
    %v3253 = vadd.f32 %v3156, %v3252
    %v3254 = vand.u32 %v575, 4294901760
    %3255 = vmatmul.f32.gmra.mxu0 %v3254
    %v3256 = vpop.f32.mrf.mxu0
    %v3257 = vadd.f32 %v3160, %v3256
    %v3258 = vand.u32 %v587, 4294901760
    %3259 = vmatmul.f32.gmra.mxu0 %v3258
    %v3260 = vpop.f32.mrf.mxu0
    %v3261 = vadd.f32 %v3164, %v3260
    %v3262 = vand.u32 %v599, 4294901760
    %3263 = vmatmul.f32.gmra.mxu0 %v3262
    %v3264 = vpop.f32.mrf.mxu0
    %v3265 = vadd.f32 %v3168, %v3264
    %v3266 = vand.u32 %v611, 4294901760
    %3267 = vmatmul.f32.gmra.mxu0 %v3266
    %v3268 = vpop.f32.mrf.mxu0
    %v3269 = vadd.f32 %v3172, %v3268
    %v3270 = vand.u32 %v623, 4294901760
    %3271 = vmatmul.f32.gmra.mxu0 %v3270
    %v3272 = vpop.f32.mrf.mxu0
    %v3273 = vadd.f32 %v3176, %v3272
    %v3274 = vand.u32 %v635, 4294901760
    %3275 = vmatmul.f32.gmra.mxu0 %v3274
    %v3276 = vpop.f32.mrf.mxu0
    %v3277 = vadd.f32 %v3180, %v3276
    %v3278 = vand.u32 %v647, 4294901760
    %3279 = vmatmul.f32.gmra.mxu0 %v3278
    %v3280 = vpop.f32.mrf.mxu0
    %v3281 = vadd.f32 %v3184, %v3280
    %v3282 = vand.u32 %v659, 4294901760
    %3283 = vmatmul.f32.gmra.mxu0 %v3282
    %v3284 = vpop.f32.mrf.mxu0
    %v3285 = vadd.f32 %v3188, %v3284
    %v3286 = vand.u32 %v671, 4294901760
    %3287 = vmatmul.f32.gmra.mxu0 %v3286
    %v3288 = vpop.f32.mrf.mxu0
    %v3289 = vadd.f32 %v3192, %v3288
    %3290 = vdwg.mxu0
    %v3291 = vand.u32 %v744, 4294901760
    %3292 = vmatpush.msra.mxu0 %v3291
    %v3293 = vand.u32 %v743, 4294901760
    %3294 = vmatpush.msra.mxu0 %v3293
    %v3295 = vand.u32 %v742, 4294901760
    %3296 = vmatpush.msra.mxu0 %v3295
    %v3297 = vand.u32 %v741, 4294901760
    %3298 = vmatpush.msra.mxu0 %v3297
    %v3299 = vand.u32 %v740, 4294901760
    %3300 = vmatpush.msra.mxu0 %v3299
    %v3301 = vand.u32 %v739, 4294901760
    %3302 = vmatpush.msra.mxu0 %v3301
    %v3303 = vand.u32 %v738, 4294901760
    %3304 = vmatpush.msra.mxu0 %v3303
    %v3305 = vand.u32 %v737, 4294901760
    %3306 = vmatpush.msra.mxu0 %v3305
    %v3307 = vand.u32 %v736, 4294901760
    %3308 = vmatpush.msra.mxu0 %v3307
    %v3309 = vand.u32 %v735, 4294901760
    %3310 = vmatpush.msra.mxu0 %v3309
    %v3311 = vand.u32 %v734, 4294901760
    %3312 = vmatpush.msra.mxu0 %v3311
    %v3313 = vand.u32 %v733, 4294901760
    %3314 = vmatpush.msra.mxu0 %v3313
    %v3315 = vand.u32 %v732, 4294901760
    %3316 = vmatpush.msra.mxu0 %v3315
    %v3317 = vand.u32 %v731, 4294901760
    %3318 = vmatpush.msra.mxu0 %v3317
    %v3319 = vand.u32 %v730, 4294901760
    %3320 = vmatpush.msra.mxu0 %v3319
    %v3321 = vand.u32 %v729, 4294901760
    %3322 = vmatpush.msra.mxu0 %v3321
    %v3323 = vand.u32 %v492, 4294901760
    %v3324 = vsub.f32 %v492, %v3323
    %v3325 = vand.u32 %v3324, 4294901760
    %v3326 = vsub.f32 %v3324, %v3325
    %v3327 = vand.u32 %v3326, 4294901760
    %3328 = vmatmul.f32.gmra.mxu0 %v3327
    %v3329 = vpop.f32.mrf.mxu0
    %v3330 = vadd.f32 %v3229, %v3329
    %v3331 = vand.u32 %v504, 4294901760
    %v3332 = vsub.f32 %v504, %v3331
    %v3333 = vand.u32 %v3332, 4294901760
    %v3334 = vsub.f32 %v3332, %v3333
    %v3335 = vand.u32 %v3334, 4294901760
    %3336 = vmatmul.f32.gmra.mxu0 %v3335
    %v3337 = vpop.f32.mrf.mxu0
    %v3338 = vadd.f32 %v3233, %v3337
    %v3339 = vand.u32 %v516, 4294901760
    %v3340 = vsub.f32 %v516, %v3339
    %v3341 = vand.u32 %v3340, 4294901760
    %v3342 = vsub.f32 %v3340, %v3341
    %v3343 = vand.u32 %v3342, 4294901760
    %3344 = vmatmul.f32.gmra.mxu0 %v3343
    %v3345 = vpop.f32.mrf.mxu0
    %v3346 = vadd.f32 %v3237, %v3345
    %v3347 = vand.u32 %v528, 4294901760
    %v3348 = vsub.f32 %v528, %v3347
    %v3349 = vand.u32 %v3348, 4294901760
    %v3350 = vsub.f32 %v3348, %v3349
    %v3351 = vand.u32 %v3350, 4294901760
    %3352 = vmatmul.f32.gmra.mxu0 %v3351
    %v3353 = vpop.f32.mrf.mxu0
    %v3354 = vadd.f32 %v3241, %v3353
    %v3355 = vand.u32 %v540, 4294901760
    %v3356 = vsub.f32 %v540, %v3355
    %v3357 = vand.u32 %v3356, 4294901760
    %v3358 = vsub.f32 %v3356, %v3357
    %v3359 = vand.u32 %v3358, 4294901760
    %3360 = vmatmul.f32.gmra.mxu0 %v3359
    %v3361 = vpop.f32.mrf.mxu0
    %v3362 = vadd.f32 %v3245, %v3361
    %v3363 = vand.u32 %v552, 4294901760
    %v3364 = vsub.f32 %v552, %v3363
    %v3365 = vand.u32 %v3364, 4294901760
    %v3366 = vsub.f32 %v3364, %v3365
    %v3367 = vand.u32 %v3366, 4294901760
    %3368 = vmatmul.f32.gmra.mxu0 %v3367
    %v3369 = vpop.f32.mrf.mxu0
    %v3370 = vadd.f32 %v3249, %v3369
    %v3371 = vand.u32 %v564, 4294901760
    %v3372 = vsub.f32 %v564, %v3371
    %v3373 = vand.u32 %v3372, 4294901760
    %v3374 = vsub.f32 %v3372, %v3373
    %v3375 = vand.u32 %v3374, 4294901760
    %3376 = vmatmul.f32.gmra.mxu0 %v3375
    %v3377 = vpop.f32.mrf.mxu0
    %v3378 = vadd.f32 %v3253, %v3377
    %v3379 = vand.u32 %v576, 4294901760
    %v3380 = vsub.f32 %v576, %v3379
    %v3381 = vand.u32 %v3380, 4294901760
    %v3382 = vsub.f32 %v3380, %v3381
    %v3383 = vand.u32 %v3382, 4294901760
    %3384 = vmatmul.f32.gmra.mxu0 %v3383
    %v3385 = vpop.f32.mrf.mxu0
    %v3386 = vadd.f32 %v3257, %v3385
    %v3387 = vand.u32 %v588, 4294901760
    %v3388 = vsub.f32 %v588, %v3387
    %v3389 = vand.u32 %v3388, 4294901760
    %v3390 = vsub.f32 %v3388, %v3389
    %v3391 = vand.u32 %v3390, 4294901760
    %3392 = vmatmul.f32.gmra.mxu0 %v3391
    %v3393 = vpop.f32.mrf.mxu0
    %v3394 = vadd.f32 %v3261, %v3393
    %v3395 = vand.u32 %v600, 4294901760
    %v3396 = vsub.f32 %v600, %v3395
    %v3397 = vand.u32 %v3396, 4294901760
    %v3398 = vsub.f32 %v3396, %v3397
    %v3399 = vand.u32 %v3398, 4294901760
    %3400 = vmatmul.f32.gmra.mxu0 %v3399
    %v3401 = vpop.f32.mrf.mxu0
    %v3402 = vadd.f32 %v3265, %v3401
    %v3403 = vand.u32 %v612, 4294901760
    %v3404 = vsub.f32 %v612, %v3403
    %v3405 = vand.u32 %v3404, 4294901760
    %v3406 = vsub.f32 %v3404, %v3405
    %v3407 = vand.u32 %v3406, 4294901760
    %3408 = vmatmul.f32.gmra.mxu0 %v3407
    %v3409 = vpop.f32.mrf.mxu0
    %v3410 = vadd.f32 %v3269, %v3409
    %v3411 = vand.u32 %v624, 4294901760
    %v3412 = vsub.f32 %v624, %v3411
    %v3413 = vand.u32 %v3412, 4294901760
    %v3414 = vsub.f32 %v3412, %v3413
    %v3415 = vand.u32 %v3414, 4294901760
    %3416 = vmatmul.f32.gmra.mxu0 %v3415
    %v3417 = vpop.f32.mrf.mxu0
    %v3418 = vadd.f32 %v3273, %v3417
    %v3419 = vand.u32 %v636, 4294901760
    %v3420 = vsub.f32 %v636, %v3419
    %v3421 = vand.u32 %v3420, 4294901760
    %v3422 = vsub.f32 %v3420, %v3421
    %v3423 = vand.u32 %v3422, 4294901760
    %3424 = vmatmul.f32.gmra.mxu0 %v3423
    %v3425 = vpop.f32.mrf.mxu0
    %v3426 = vadd.f32 %v3277, %v3425
    %v3427 = vand.u32 %v648, 4294901760
    %v3428 = vsub.f32 %v648, %v3427
    %v3429 = vand.u32 %v3428, 4294901760
    %v3430 = vsub.f32 %v3428, %v3429
    %v3431 = vand.u32 %v3430, 4294901760
    %3432 = vmatmul.f32.gmra.mxu0 %v3431
    %v3433 = vpop.f32.mrf.mxu0
    %v3434 = vadd.f32 %v3281, %v3433
    %v3435 = vand.u32 %v660, 4294901760
    %v3436 = vsub.f32 %v660, %v3435
    %v3437 = vand.u32 %v3436, 4294901760
    %v3438 = vsub.f32 %v3436, %v3437
    %v3439 = vand.u32 %v3438, 4294901760
    %3440 = vmatmul.f32.gmra.mxu0 %v3439
    %v3441 = vpop.f32.mrf.mxu0
    %v3442 = vadd.f32 %v3285, %v3441
    %v3443 = vand.u32 %v672, 4294901760
    %v3444 = vsub.f32 %v672, %v3443
    %v3445 = vand.u32 %v3444, 4294901760
    %v3446 = vsub.f32 %v3444, %v3445
    %v3447 = vand.u32 %v3446, 4294901760
    %3448 = vmatmul.f32.gmra.mxu0 %v3447
    %v3449 = vpop.f32.mrf.mxu0
    %v3450 = vadd.f32 %v3289, %v3449
    %3451 = vdwg.mxu0
    %v3452 = vand.u32 %v744, 4294901760
    %v3453 = vsub.f32 %v744, %v3452
    %v3454 = vand.u32 %v3453, 4294901760
    %v3455 = vsub.f32 %v3453, %v3454
    %v3456 = vand.u32 %v3455, 4294901760
    %3457 = vmatpush.msra.mxu0 %v3456
    %v3458 = vand.u32 %v743, 4294901760
    %v3459 = vsub.f32 %v743, %v3458
    %v3460 = vand.u32 %v3459, 4294901760
    %v3461 = vsub.f32 %v3459, %v3460
    %v3462 = vand.u32 %v3461, 4294901760
    %3463 = vmatpush.msra.mxu0 %v3462
    %v3464 = vand.u32 %v742, 4294901760
    %v3465 = vsub.f32 %v742, %v3464
    %v3466 = vand.u32 %v3465, 4294901760
    %v3467 = vsub.f32 %v3465, %v3466
    %v3468 = vand.u32 %v3467, 4294901760
    %3469 = vmatpush.msra.mxu0 %v3468
    %v3470 = vand.u32 %v741, 4294901760
    %v3471 = vsub.f32 %v741, %v3470
    %v3472 = vand.u32 %v3471, 4294901760
    %v3473 = vsub.f32 %v3471, %v3472
    %v3474 = vand.u32 %v3473, 4294901760
    %3475 = vmatpush.msra.mxu0 %v3474
    %v3476 = vand.u32 %v740, 4294901760
    %v3477 = vsub.f32 %v740, %v3476
    %v3478 = vand.u32 %v3477, 4294901760
    %v3479 = vsub.f32 %v3477, %v3478
    %v3480 = vand.u32 %v3479, 4294901760
    %3481 = vmatpush.msra.mxu0 %v3480
    %v3482 = vand.u32 %v739, 4294901760
    %v3483 = vsub.f32 %v739, %v3482
    %v3484 = vand.u32 %v3483, 4294901760
    %v3485 = vsub.f32 %v3483, %v3484
    %v3486 = vand.u32 %v3485, 4294901760
    %3487 = vmatpush.msra.mxu0 %v3486
    %v3488 = vand.u32 %v738, 4294901760
    %v3489 = vsub.f32 %v738, %v3488
    %v3490 = vand.u32 %v3489, 4294901760
    %v3491 = vsub.f32 %v3489, %v3490
    %v3492 = vand.u32 %v3491, 4294901760
    %3493 = vmatpush.msra.mxu0 %v3492
    %v3494 = vand.u32 %v737, 4294901760
    %v3495 = vsub.f32 %v737, %v3494
    %v3496 = vand.u32 %v3495, 4294901760
    %v3497 = vsub.f32 %v3495, %v3496
    %v3498 = vand.u32 %v3497, 4294901760
    %3499 = vmatpush.msra.mxu0 %v3498
    %v3500 = vand.u32 %v736, 4294901760
    %v3501 = vsub.f32 %v736, %v3500
    %v3502 = vand.u32 %v3501, 4294901760
    %v3503 = vsub.f32 %v3501, %v3502
    %v3504 = vand.u32 %v3503, 4294901760
    %3505 = vmatpush.msra.mxu0 %v3504
    %v3506 = vand.u32 %v735, 4294901760
    %v3507 = vsub.f32 %v735, %v3506
    %v3508 = vand.u32 %v3507, 4294901760
    %v3509 = vsub.f32 %v3507, %v3508
    %v3510 = vand.u32 %v3509, 4294901760
    %3511 = vmatpush.msra.mxu0 %v3510
    %v3512 = vand.u32 %v734, 4294901760
    %v3513 = vsub.f32 %v734, %v3512
    %v3514 = vand.u32 %v3513, 4294901760
    %v3515 = vsub.f32 %v3513, %v3514
    %v3516 = vand.u32 %v3515, 4294901760
    %3517 = vmatpush.msra.mxu0 %v3516
    %v3518 = vand.u32 %v733, 4294901760
    %v3519 = vsub.f32 %v733, %v3518
    %v3520 = vand.u32 %v3519, 4294901760
    %v3521 = vsub.f32 %v3519, %v3520
    %v3522 = vand.u32 %v3521, 4294901760
    %3523 = vmatpush.msra.mxu0 %v3522
    %v3524 = vand.u32 %v732, 4294901760
    %v3525 = vsub.f32 %v732, %v3524
    %v3526 = vand.u32 %v3525, 4294901760
    %v3527 = vsub.f32 %v3525, %v3526
    %v3528 = vand.u32 %v3527, 4294901760
    %3529 = vmatpush.msra.mxu0 %v3528
    %v3530 = vand.u32 %v731, 4294901760
    %v3531 = vsub.f32 %v731, %v3530
    %v3532 = vand.u32 %v3531, 4294901760
    %v3533 = vsub.f32 %v3531, %v3532
    %v3534 = vand.u32 %v3533, 4294901760
    %3535 = vmatpush.msra.mxu0 %v3534
    %v3536 = vand.u32 %v730, 4294901760
    %v3537 = vsub.f32 %v730, %v3536
    %v3538 = vand.u32 %v3537, 4294901760
    %v3539 = vsub.f32 %v3537, %v3538
    %v3540 = vand.u32 %v3539, 4294901760
    %3541 = vmatpush.msra.mxu0 %v3540
    %v3542 = vand.u32 %v729, 4294901760
    %v3543 = vsub.f32 %v729, %v3542
    %v3544 = vand.u32 %v3543, 4294901760
    %v3545 = vsub.f32 %v3543, %v3544
    %v3546 = vand.u32 %v3545, 4294901760
    %3547 = vmatpush.msra.mxu0 %v3546
    %v3548 = vand.u32 %v492, 4294901760
    %3549 = vmatmul.f32.gmra.mxu0 %v3548
    %v3550 = vpop.f32.mrf.mxu0
    %v3551 = vadd.f32 %v3330, %v3550
    %v3552 = vand.u32 %v504, 4294901760
    %3553 = vmatmul.f32.gmra.mxu0 %v3552
    %v3554 = vpop.f32.mrf.mxu0
    %v3555 = vadd.f32 %v3338, %v3554
    %v3556 = vand.u32 %v516, 4294901760
    %3557 = vmatmul.f32.gmra.mxu0 %v3556
    %v3558 = vpop.f32.mrf.mxu0
    %v3559 = vadd.f32 %v3346, %v3558
    %v3560 = vand.u32 %v528, 4294901760
    %3561 = vmatmul.f32.gmra.mxu0 %v3560
    %v3562 = vpop.f32.mrf.mxu0
    %v3563 = vadd.f32 %v3354, %v3562
    %v3564 = vand.u32 %v540, 4294901760
    %3565 = vmatmul.f32.gmra.mxu0 %v3564
    %v3566 = vpop.f32.mrf.mxu0
    %v3567 = vadd.f32 %v3362, %v3566
    %v3568 = vand.u32 %v552, 4294901760
    %3569 = vmatmul.f32.gmra.mxu0 %v3568
    %v3570 = vpop.f32.mrf.mxu0
    %v3571 = vadd.f32 %v3370, %v3570
    %v3572 = vand.u32 %v564, 4294901760
    %3573 = vmatmul.f32.gmra.mxu0 %v3572
    %v3574 = vpop.f32.mrf.mxu0
    %v3575 = vadd.f32 %v3378, %v3574
    %v3576 = vand.u32 %v576, 4294901760
    %3577 = vmatmul.f32.gmra.mxu0 %v3576
    %v3578 = vpop.f32.mrf.mxu0
    %v3579 = vadd.f32 %v3386, %v3578
    %v3580 = vand.u32 %v588, 4294901760
    %3581 = vmatmul.f32.gmra.mxu0 %v3580
    %v3582 = vpop.f32.mrf.mxu0
    %v3583 = vadd.f32 %v3394, %v3582
    %v3584 = vand.u32 %v600, 4294901760
    %3585 = vmatmul.f32.gmra.mxu0 %v3584
    %v3586 = vpop.f32.mrf.mxu0
    %v3587 = vadd.f32 %v3402, %v3586
    %v3588 = vand.u32 %v612, 4294901760
    %3589 = vmatmul.f32.gmra.mxu0 %v3588
    %v3590 = vpop.f32.mrf.mxu0
    %v3591 = vadd.f32 %v3410, %v3590
    %v3592 = vand.u32 %v624, 4294901760
    %3593 = vmatmul.f32.gmra.mxu0 %v3592
    %v3594 = vpop.f32.mrf.mxu0
    %v3595 = vadd.f32 %v3418, %v3594
    %v3596 = vand.u32 %v636, 4294901760
    %3597 = vmatmul.f32.gmra.mxu0 %v3596
    %v3598 = vpop.f32.mrf.mxu0
    %v3599 = vadd.f32 %v3426, %v3598
    %v3600 = vand.u32 %v648, 4294901760
    %3601 = vmatmul.f32.gmra.mxu0 %v3600
    %v3602 = vpop.f32.mrf.mxu0
    %v3603 = vadd.f32 %v3434, %v3602
    %v3604 = vand.u32 %v660, 4294901760
    %3605 = vmatmul.f32.gmra.mxu0 %v3604
    %v3606 = vpop.f32.mrf.mxu0
    %v3607 = vadd.f32 %v3442, %v3606
    %v3608 = vand.u32 %v672, 4294901760
    %3609 = vmatmul.f32.gmra.mxu0 %v3608
    %v3610 = vpop.f32.mrf.mxu0
    %v3611 = vadd.f32 %v3450, %v3610
    %3612 = vdwg.mxu0
    %v3613 = vand.u32 %v744, 4294901760
    %v3614 = vsub.f32 %v744, %v3613
    %3615 = vmatpush.msra.mxu0 %v3614
    %v3616 = vand.u32 %v743, 4294901760
    %v3617 = vsub.f32 %v743, %v3616
    %3618 = vmatpush.msra.mxu0 %v3617
    %v3619 = vand.u32 %v742, 4294901760
    %v3620 = vsub.f32 %v742, %v3619
    %3621 = vmatpush.msra.mxu0 %v3620
    %v3622 = vand.u32 %v741, 4294901760
    %v3623 = vsub.f32 %v741, %v3622
    %3624 = vmatpush.msra.mxu0 %v3623
    %v3625 = vand.u32 %v740, 4294901760
    %v3626 = vsub.f32 %v740, %v3625
    %3627 = vmatpush.msra.mxu0 %v3626
    %v3628 = vand.u32 %v739, 4294901760
    %v3629 = vsub.f32 %v739, %v3628
    %3630 = vmatpush.msra.mxu0 %v3629
    %v3631 = vand.u32 %v738, 4294901760
    %v3632 = vsub.f32 %v738, %v3631
    %3633 = vmatpush.msra.mxu0 %v3632
    %v3634 = vand.u32 %v737, 4294901760
    %v3635 = vsub.f32 %v737, %v3634
    %3636 = vmatpush.msra.mxu0 %v3635
    %v3637 = vand.u32 %v736, 4294901760
    %v3638 = vsub.f32 %v736, %v3637
    %3639 = vmatpush.msra.mxu0 %v3638
    %v3640 = vand.u32 %v735, 4294901760
    %v3641 = vsub.f32 %v735, %v3640
    %3642 = vmatpush.msra.mxu0 %v3641
    %v3643 = vand.u32 %v734, 4294901760
    %v3644 = vsub.f32 %v734, %v3643
    %3645 = vmatpush.msra.mxu0 %v3644
    %v3646 = vand.u32 %v733, 4294901760
    %v3647 = vsub.f32 %v733, %v3646
    %3648 = vmatpush.msra.mxu0 %v3647
    %v3649 = vand.u32 %v732, 4294901760
    %v3650 = vsub.f32 %v732, %v3649
    %3651 = vmatpush.msra.mxu0 %v3650
    %v3652 = vand.u32 %v731, 4294901760
    %v3653 = vsub.f32 %v731, %v3652
    %3654 = vmatpush.msra.mxu0 %v3653
    %v3655 = vand.u32 %v730, 4294901760
    %v3656 = vsub.f32 %v730, %v3655
    %3657 = vmatpush.msra.mxu0 %v3656
    %v3658 = vand.u32 %v729, 4294901760
    %v3659 = vsub.f32 %v729, %v3658
    %3660 = vmatpush.msra.mxu0 %v3659
    %v3661 = vand.u32 %v492, 4294901760
    %v3662 = vsub.f32 %v492, %v3661
    %3663 = vmatmul.f32.gmra.mxu0 %v3662
    %v3664 = vpop.f32.mrf.mxu0
    %v3665 = vadd.f32 %v3551, %v3664
    %v3666 = vand.u32 %v504, 4294901760
    %v3667 = vsub.f32 %v504, %v3666
    %3668 = vmatmul.f32.gmra.mxu0 %v3667
    %v3669 = vpop.f32.mrf.mxu0
    %v3670 = vadd.f32 %v3555, %v3669
    %v3671 = vand.u32 %v516, 4294901760
    %v3672 = vsub.f32 %v516, %v3671
    %3673 = vmatmul.f32.gmra.mxu0 %v3672
    %v3674 = vpop.f32.mrf.mxu0
    %v3675 = vadd.f32 %v3559, %v3674
    %v3676 = vand.u32 %v528, 4294901760
    %v3677 = vsub.f32 %v528, %v3676
    %3678 = vmatmul.f32.gmra.mxu0 %v3677
    %v3679 = vpop.f32.mrf.mxu0
    %v3680 = vadd.f32 %v3563, %v3679
    %v3681 = vand.u32 %v540, 4294901760
    %v3682 = vsub.f32 %v540, %v3681
    %3683 = vmatmul.f32.gmra.mxu0 %v3682
    %v3684 = vpop.f32.mrf.mxu0
    %v3685 = vadd.f32 %v3567, %v3684
    %v3686 = vand.u32 %v552, 4294901760
    %v3687 = vsub.f32 %v552, %v3686
    %3688 = vmatmul.f32.gmra.mxu0 %v3687
    %v3689 = vpop.f32.mrf.mxu0
    %v3690 = vadd.f32 %v3571, %v3689
    %v3691 = vand.u32 %v564, 4294901760
    %v3692 = vsub.f32 %v564, %v3691
    %3693 = vmatmul.f32.gmra.mxu0 %v3692
    %v3694 = vpop.f32.mrf.mxu0
    %v3695 = vadd.f32 %v3575, %v3694
    %v3696 = vand.u32 %v576, 4294901760
    %v3697 = vsub.f32 %v576, %v3696
    %3698 = vmatmul.f32.gmra.mxu0 %v3697
    %v3699 = vpop.f32.mrf.mxu0
    %v3700 = vadd.f32 %v3579, %v3699
    %v3701 = vand.u32 %v588, 4294901760
    %v3702 = vsub.f32 %v588, %v3701
    %3703 = vmatmul.f32.gmra.mxu0 %v3702
    %v3704 = vpop.f32.mrf.mxu0
    %v3705 = vadd.f32 %v3583, %v3704
    %v3706 = vand.u32 %v600, 4294901760
    %v3707 = vsub.f32 %v600, %v3706
    %3708 = vmatmul.f32.gmra.mxu0 %v3707
    %v3709 = vpop.f32.mrf.mxu0
    %v3710 = vadd.f32 %v3587, %v3709
    %v3711 = vand.u32 %v612, 4294901760
    %v3712 = vsub.f32 %v612, %v3711
    %3713 = vmatmul.f32.gmra.mxu0 %v3712
    %v3714 = vpop.f32.mrf.mxu0
    %v3715 = vadd.f32 %v3591, %v3714
    %v3716 = vand.u32 %v624, 4294901760
    %v3717 = vsub.f32 %v624, %v3716
    %3718 = vmatmul.f32.gmra.mxu0 %v3717
    %v3719 = vpop.f32.mrf.mxu0
    %v3720 = vadd.f32 %v3595, %v3719
    %v3721 = vand.u32 %v636, 4294901760
    %v3722 = vsub.f32 %v636, %v3721
    %3723 = vmatmul.f32.gmra.mxu0 %v3722
    %v3724 = vpop.f32.mrf.mxu0
    %v3725 = vadd.f32 %v3599, %v3724
    %v3726 = vand.u32 %v648, 4294901760
    %v3727 = vsub.f32 %v648, %v3726
    %3728 = vmatmul.f32.gmra.mxu0 %v3727
    %v3729 = vpop.f32.mrf.mxu0
    %v3730 = vadd.f32 %v3603, %v3729
    %v3731 = vand.u32 %v660, 4294901760
    %v3732 = vsub.f32 %v660, %v3731
    %3733 = vmatmul.f32.gmra.mxu0 %v3732
    %v3734 = vpop.f32.mrf.mxu0
    %v3735 = vadd.f32 %v3607, %v3734
    %v3736 = vand.u32 %v672, 4294901760
    %v3737 = vsub.f32 %v672, %v3736
    %3738 = vmatmul.f32.gmra.mxu0 %v3737
    %v3739 = vpop.f32.mrf.mxu0
    %v3740 = vadd.f32 %v3611, %v3739
    %3741 = vdwg.mxu0
    %v3742 = vand.u32 %v744, 4294901760
    %3743 = vmatpush.msra.mxu0 %v3742
    %v3744 = vand.u32 %v743, 4294901760
    %3745 = vmatpush.msra.mxu0 %v3744
    %v3746 = vand.u32 %v742, 4294901760
    %3747 = vmatpush.msra.mxu0 %v3746
    %v3748 = vand.u32 %v741, 4294901760
    %3749 = vmatpush.msra.mxu0 %v3748
    %v3750 = vand.u32 %v740, 4294901760
    %3751 = vmatpush.msra.mxu0 %v3750
    %v3752 = vand.u32 %v739, 4294901760
    %3753 = vmatpush.msra.mxu0 %v3752
    %v3754 = vand.u32 %v738, 4294901760
    %3755 = vmatpush.msra.mxu0 %v3754
    %v3756 = vand.u32 %v737, 4294901760
    %3757 = vmatpush.msra.mxu0 %v3756
    %v3758 = vand.u32 %v736, 4294901760
    %3759 = vmatpush.msra.mxu0 %v3758
    %v3760 = vand.u32 %v735, 4294901760
    %3761 = vmatpush.msra.mxu0 %v3760
    %v3762 = vand.u32 %v734, 4294901760
    %3763 = vmatpush.msra.mxu0 %v3762
    %v3764 = vand.u32 %v733, 4294901760
    %3765 = vmatpush.msra.mxu0 %v3764
    %v3766 = vand.u32 %v732, 4294901760
    %3767 = vmatpush.msra.mxu0 %v3766
    %v3768 = vand.u32 %v731, 4294901760
    %3769 = vmatpush.msra.mxu0 %v3768
    %v3770 = vand.u32 %v730, 4294901760
    %3771 = vmatpush.msra.mxu0 %v3770
    %v3772 = vand.u32 %v729, 4294901760
    %3773 = vmatpush.msra.mxu0 %v3772
    %v3774 = vand.u32 %v492, 4294901760
    %v3775 = vsub.f32 %v492, %v3774
    %v3776 = vand.u32 %v3775, 4294901760
    %3777 = vmatmul.f32.gmra.mxu0 %v3776
    %v3778 = vpop.f32.mrf.mxu0
    %v3779 = vadd.f32 %v3665, %v3778
    %v3780 = vand.u32 %v504, 4294901760
    %v3781 = vsub.f32 %v504, %v3780
    %v3782 = vand.u32 %v3781, 4294901760
    %3783 = vmatmul.f32.gmra.mxu0 %v3782
    %v3784 = vpop.f32.mrf.mxu0
    %v3785 = vadd.f32 %v3670, %v3784
    %v3786 = vand.u32 %v516, 4294901760
    %v3787 = vsub.f32 %v516, %v3786
    %v3788 = vand.u32 %v3787, 4294901760
    %3789 = vmatmul.f32.gmra.mxu0 %v3788
    %v3790 = vpop.f32.mrf.mxu0
    %v3791 = vadd.f32 %v3675, %v3790
    %v3792 = vand.u32 %v528, 4294901760
    %v3793 = vsub.f32 %v528, %v3792
    %v3794 = vand.u32 %v3793, 4294901760
    %3795 = vmatmul.f32.gmra.mxu0 %v3794
    %v3796 = vpop.f32.mrf.mxu0
    %v3797 = vadd.f32 %v3680, %v3796
    %v3798 = vand.u32 %v540, 4294901760
    %v3799 = vsub.f32 %v540, %v3798
    %v3800 = vand.u32 %v3799, 4294901760
    %3801 = vmatmul.f32.gmra.mxu0 %v3800
    %v3802 = vpop.f32.mrf.mxu0
    %v3803 = vadd.f32 %v3685, %v3802
    %v3804 = vand.u32 %v552, 4294901760
    %v3805 = vsub.f32 %v552, %v3804
    %v3806 = vand.u32 %v3805, 4294901760
    %3807 = vmatmul.f32.gmra.mxu0 %v3806
    %v3808 = vpop.f32.mrf.mxu0
    %v3809 = vadd.f32 %v3690, %v3808
    %v3810 = vand.u32 %v564, 4294901760
    %v3811 = vsub.f32 %v564, %v3810
    %v3812 = vand.u32 %v3811, 4294901760
    %3813 = vmatmul.f32.gmra.mxu0 %v3812
    %v3814 = vpop.f32.mrf.mxu0
    %v3815 = vadd.f32 %v3695, %v3814
    %v3816 = vand.u32 %v576, 4294901760
    %v3817 = vsub.f32 %v576, %v3816
    %v3818 = vand.u32 %v3817, 4294901760
    %3819 = vmatmul.f32.gmra.mxu0 %v3818
    %v3820 = vpop.f32.mrf.mxu0
    %v3821 = vadd.f32 %v3700, %v3820
    %v3822 = vand.u32 %v588, 4294901760
    %v3823 = vsub.f32 %v588, %v3822
    %v3824 = vand.u32 %v3823, 4294901760
    %3825 = vmatmul.f32.gmra.mxu0 %v3824
    %v3826 = vpop.f32.mrf.mxu0
    %v3827 = vadd.f32 %v3705, %v3826
    %v3828 = vand.u32 %v600, 4294901760
    %v3829 = vsub.f32 %v600, %v3828
    %v3830 = vand.u32 %v3829, 4294901760
    %3831 = vmatmul.f32.gmra.mxu0 %v3830
    %v3832 = vpop.f32.mrf.mxu0
    %v3833 = vadd.f32 %v3710, %v3832
    %v3834 = vand.u32 %v612, 4294901760
    %v3835 = vsub.f32 %v612, %v3834
    %v3836 = vand.u32 %v3835, 4294901760
    %3837 = vmatmul.f32.gmra.mxu0 %v3836
    %v3838 = vpop.f32.mrf.mxu0
    %v3839 = vadd.f32 %v3715, %v3838
    %v3840 = vand.u32 %v624, 4294901760
    %v3841 = vsub.f32 %v624, %v3840
    %v3842 = vand.u32 %v3841, 4294901760
    %3843 = vmatmul.f32.gmra.mxu0 %v3842
    %v3844 = vpop.f32.mrf.mxu0
    %v3845 = vadd.f32 %v3720, %v3844
    %v3846 = vand.u32 %v636, 4294901760
    %v3847 = vsub.f32 %v636, %v3846
    %v3848 = vand.u32 %v3847, 4294901760
    %3849 = vmatmul.f32.gmra.mxu0 %v3848
    %v3850 = vpop.f32.mrf.mxu0
    %v3851 = vadd.f32 %v3725, %v3850
    %v3852 = vand.u32 %v648, 4294901760
    %v3853 = vsub.f32 %v648, %v3852
    %v3854 = vand.u32 %v3853, 4294901760
    %3855 = vmatmul.f32.gmra.mxu0 %v3854
    %v3856 = vpop.f32.mrf.mxu0
    %v3857 = vadd.f32 %v3730, %v3856
    %v3858 = vand.u32 %v660, 4294901760
    %v3859 = vsub.f32 %v660, %v3858
    %v3860 = vand.u32 %v3859, 4294901760
    %3861 = vmatmul.f32.gmra.mxu0 %v3860
    %v3862 = vpop.f32.mrf.mxu0
    %v3863 = vadd.f32 %v3735, %v3862
    %v3864 = vand.u32 %v672, 4294901760
    %v3865 = vsub.f32 %v672, %v3864
    %v3866 = vand.u32 %v3865, 4294901760
    %3867 = vmatmul.f32.gmra.mxu0 %v3866
    %v3868 = vpop.f32.mrf.mxu0
    %v3869 = vadd.f32 %v3740, %v3868
    %3870 = vdwg.mxu0
    %v3871 = vand.u32 %v744, 4294901760
    %v3872 = vsub.f32 %v744, %v3871
    %v3873 = vand.u32 %v3872, 4294901760
    %3874 = vmatpush.msra.mxu0 %v3873
    %v3875 = vand.u32 %v743, 4294901760
    %v3876 = vsub.f32 %v743, %v3875
    %v3877 = vand.u32 %v3876, 4294901760
    %3878 = vmatpush.msra.mxu0 %v3877
    %v3879 = vand.u32 %v742, 4294901760
    %v3880 = vsub.f32 %v742, %v3879
    %v3881 = vand.u32 %v3880, 4294901760
    %3882 = vmatpush.msra.mxu0 %v3881
    %v3883 = vand.u32 %v741, 4294901760
    %v3884 = vsub.f32 %v741, %v3883
    %v3885 = vand.u32 %v3884, 4294901760
    %3886 = vmatpush.msra.mxu0 %v3885
    %v3887 = vand.u32 %v740, 4294901760
    %v3888 = vsub.f32 %v740, %v3887
    %v3889 = vand.u32 %v3888, 4294901760
    %3890 = vmatpush.msra.mxu0 %v3889
    %v3891 = vand.u32 %v739, 4294901760
    %v3892 = vsub.f32 %v739, %v3891
    %v3893 = vand.u32 %v3892, 4294901760
    %3894 = vmatpush.msra.mxu0 %v3893
    %v3895 = vand.u32 %v738, 4294901760
    %v3896 = vsub.f32 %v738, %v3895
    %v3897 = vand.u32 %v3896, 4294901760
    %3898 = vmatpush.msra.mxu0 %v3897
    %v3899 = vand.u32 %v737, 4294901760
    %v3900 = vsub.f32 %v737, %v3899
    %v3901 = vand.u32 %v3900, 4294901760
    %3902 = vmatpush.msra.mxu0 %v3901
    %v3903 = vand.u32 %v736, 4294901760
    %v3904 = vsub.f32 %v736, %v3903
    %v3905 = vand.u32 %v3904, 4294901760
    %3906 = vmatpush.msra.mxu0 %v3905
    %v3907 = vand.u32 %v735, 4294901760
    %v3908 = vsub.f32 %v735, %v3907
    %v3909 = vand.u32 %v3908, 4294901760
    %3910 = vmatpush.msra.mxu0 %v3909
    %v3911 = vand.u32 %v734, 4294901760
    %v3912 = vsub.f32 %v734, %v3911
    %v3913 = vand.u32 %v3912, 4294901760
    %3914 = vmatpush.msra.mxu0 %v3913
    %v3915 = vand.u32 %v733, 4294901760
    %v3916 = vsub.f32 %v733, %v3915
    %v3917 = vand.u32 %v3916, 4294901760
    %3918 = vmatpush.msra.mxu0 %v3917
    %v3919 = vand.u32 %v732, 4294901760
    %v3920 = vsub.f32 %v732, %v3919
    %v3921 = vand.u32 %v3920, 4294901760
    %3922 = vmatpush.msra.mxu0 %v3921
    %v3923 = vand.u32 %v731, 4294901760
    %v3924 = vsub.f32 %v731, %v3923
    %v3925 = vand.u32 %v3924, 4294901760
    %3926 = vmatpush.msra.mxu0 %v3925
    %v3927 = vand.u32 %v730, 4294901760
    %v3928 = vsub.f32 %v730, %v3927
    %v3929 = vand.u32 %v3928, 4294901760
    %3930 = vmatpush.msra.mxu0 %v3929
    %v3931 = vand.u32 %v729, 4294901760
    %v3932 = vsub.f32 %v729, %v3931
    %v3933 = vand.u32 %v3932, 4294901760
    %3934 = vmatpush.msra.mxu0 %v3933
    %v3935 = vand.u32 %v492, 4294901760
    %3936 = vmatmul.f32.gmra.mxu0 %v3935
    %v3937 = vpop.f32.mrf.mxu0
    %v3938 = vadd.f32 %v3779, %v3937
    %v3939 = vand.u32 %v504, 4294901760
    %3940 = vmatmul.f32.gmra.mxu0 %v3939
    %v3941 = vpop.f32.mrf.mxu0
    %v3942 = vadd.f32 %v3785, %v3941
    %v3943 = vand.u32 %v516, 4294901760
    %3944 = vmatmul.f32.gmra.mxu0 %v3943
    %v3945 = vpop.f32.mrf.mxu0
    %v3946 = vadd.f32 %v3791, %v3945
    %v3947 = vand.u32 %v528, 4294901760
    %3948 = vmatmul.f32.gmra.mxu0 %v3947
    %v3949 = vpop.f32.mrf.mxu0
    %v3950 = vadd.f32 %v3797, %v3949
    %v3951 = vand.u32 %v540, 4294901760
    %3952 = vmatmul.f32.gmra.mxu0 %v3951
    %v3953 = vpop.f32.mrf.mxu0
    %v3954 = vadd.f32 %v3803, %v3953
    %v3955 = vand.u32 %v552, 4294901760
    %3956 = vmatmul.f32.gmra.mxu0 %v3955
    %v3957 = vpop.f32.mrf.mxu0
    %v3958 = vadd.f32 %v3809, %v3957
    %v3959 = vand.u32 %v564, 4294901760
    %3960 = vmatmul.f32.gmra.mxu0 %v3959
    %v3961 = vpop.f32.mrf.mxu0
    %v3962 = vadd.f32 %v3815, %v3961
    %v3963 = vand.u32 %v576, 4294901760
    %3964 = vmatmul.f32.gmra.mxu0 %v3963
    %v3965 = vpop.f32.mrf.mxu0
    %v3966 = vadd.f32 %v3821, %v3965
    %v3967 = vand.u32 %v588, 4294901760
    %3968 = vmatmul.f32.gmra.mxu0 %v3967
    %v3969 = vpop.f32.mrf.mxu0
    %v3970 = vadd.f32 %v3827, %v3969
    %v3971 = vand.u32 %v600, 4294901760
    %3972 = vmatmul.f32.gmra.mxu0 %v3971
    %v3973 = vpop.f32.mrf.mxu0
    %v3974 = vadd.f32 %v3833, %v3973
    %v3975 = vand.u32 %v612, 4294901760
    %3976 = vmatmul.f32.gmra.mxu0 %v3975
    %v3977 = vpop.f32.mrf.mxu0
    %v3978 = vadd.f32 %v3839, %v3977
    %v3979 = vand.u32 %v624, 4294901760
    %3980 = vmatmul.f32.gmra.mxu0 %v3979
    %v3981 = vpop.f32.mrf.mxu0
    %v3982 = vadd.f32 %v3845, %v3981
    %v3983 = vand.u32 %v636, 4294901760
    %3984 = vmatmul.f32.gmra.mxu0 %v3983
    %v3985 = vpop.f32.mrf.mxu0
    %v3986 = vadd.f32 %v3851, %v3985
    %v3987 = vand.u32 %v648, 4294901760
    %3988 = vmatmul.f32.gmra.mxu0 %v3987
    %v3989 = vpop.f32.mrf.mxu0
    %v3990 = vadd.f32 %v3857, %v3989
    %v3991 = vand.u32 %v660, 4294901760
    %3992 = vmatmul.f32.gmra.mxu0 %v3991
    %v3993 = vpop.f32.mrf.mxu0
    %v3994 = vadd.f32 %v3863, %v3993
    %v3995 = vand.u32 %v672, 4294901760
    %3996 = vmatmul.f32.gmra.mxu0 %v3995
    %v3997 = vpop.f32.mrf.mxu0
    %v3998 = vadd.f32 %v3869, %v3997
    %3999 = vdwg.mxu0
    %v4000 = vand.u32 %v744, 4294901760
    %4001 = vmatpush.msra.mxu0 %v4000
    %v4002 = vand.u32 %v743, 4294901760
    %4003 = vmatpush.msra.mxu0 %v4002
    %v4004 = vand.u32 %v742, 4294901760
    %4005 = vmatpush.msra.mxu0 %v4004
    %v4006 = vand.u32 %v741, 4294901760
    %4007 = vmatpush.msra.mxu0 %v4006
    %v4008 = vand.u32 %v740, 4294901760
    %4009 = vmatpush.msra.mxu0 %v4008
    %v4010 = vand.u32 %v739, 4294901760
    %4011 = vmatpush.msra.mxu0 %v4010
    %v4012 = vand.u32 %v738, 4294901760
    %4013 = vmatpush.msra.mxu0 %v4012
    %v4014 = vand.u32 %v737, 4294901760
    %4015 = vmatpush.msra.mxu0 %v4014
    %v4016 = vand.u32 %v736, 4294901760
    %4017 = vmatpush.msra.mxu0 %v4016
    %v4018 = vand.u32 %v735, 4294901760
    %4019 = vmatpush.msra.mxu0 %v4018
    %v4020 = vand.u32 %v734, 4294901760
    %4021 = vmatpush.msra.mxu0 %v4020
    %v4022 = vand.u32 %v733, 4294901760
    %4023 = vmatpush.msra.mxu0 %v4022
    %v4024 = vand.u32 %v732, 4294901760
    %4025 = vmatpush.msra.mxu0 %v4024
    %v4026 = vand.u32 %v731, 4294901760
    %4027 = vmatpush.msra.mxu0 %v4026
    %v4028 = vand.u32 %v730, 4294901760
    %4029 = vmatpush.msra.mxu0 %v4028
    %v4030 = vand.u32 %v729, 4294901760
    %4031 = vmatpush.msra.mxu0 %v4030
    %v4032 = vand.u32 %v492, 4294901760
    %4033 = vmatmul.f32.gmra.mxu0 %v4032
    %v4034 = vpop.f32.mrf.mxu0
    %v4035 = vadd.f32 %v3938, %v4034
    %v4036 = vand.u32 %v504, 4294901760
    %4037 = vmatmul.f32.gmra.mxu0 %v4036
    %v4038 = vpop.f32.mrf.mxu0
    %v4039 = vadd.f32 %v3942, %v4038
    %v4040 = vand.u32 %v516, 4294901760
    %4041 = vmatmul.f32.gmra.mxu0 %v4040
    %v4042 = vpop.f32.mrf.mxu0
    %v4043 = vadd.f32 %v3946, %v4042
    %v4044 = vand.u32 %v528, 4294901760
    %4045 = vmatmul.f32.gmra.mxu0 %v4044
    %v4046 = vpop.f32.mrf.mxu0
    %v4047 = vadd.f32 %v3950, %v4046
    %v4048 = vand.u32 %v540, 4294901760
    %4049 = vmatmul.f32.gmra.mxu0 %v4048
    %v4050 = vpop.f32.mrf.mxu0
    %v4051 = vadd.f32 %v3954, %v4050
    %v4052 = vand.u32 %v552, 4294901760
    %4053 = vmatmul.f32.gmra.mxu0 %v4052
    %v4054 = vpop.f32.mrf.mxu0
    %v4055 = vadd.f32 %v3958, %v4054
    %v4056 = vand.u32 %v564, 4294901760
    %4057 = vmatmul.f32.gmra.mxu0 %v4056
    %v4058 = vpop.f32.mrf.mxu0
    %v4059 = vadd.f32 %v3962, %v4058
    %v4060 = vand.u32 %v576, 4294901760
    %4061 = vmatmul.f32.gmra.mxu0 %v4060
    %v4062 = vpop.f32.mrf.mxu0
    %v4063 = vadd.f32 %v3966, %v4062
    %v4064 = vand.u32 %v588, 4294901760
    %4065 = vmatmul.f32.gmra.mxu0 %v4064
    %v4066 = vpop.f32.mrf.mxu0
    %v4067 = vadd.f32 %v3970, %v4066
    %v4068 = vand.u32 %v600, 4294901760
    %4069 = vmatmul.f32.gmra.mxu0 %v4068
    %v4070 = vpop.f32.mrf.mxu0
    %v4071 = vadd.f32 %v3974, %v4070
    %v4072 = vand.u32 %v612, 4294901760
    %4073 = vmatmul.f32.gmra.mxu0 %v4072
    %v4074 = vpop.f32.mrf.mxu0
    %v4075 = vadd.f32 %v3978, %v4074
    %v4076 = vand.u32 %v624, 4294901760
    %4077 = vmatmul.f32.gmra.mxu0 %v4076
    %v4078 = vpop.f32.mrf.mxu0
    %v4079 = vadd.f32 %v3982, %v4078
    %v4080 = vand.u32 %v636, 4294901760
    %4081 = vmatmul.f32.gmra.mxu0 %v4080
    %v4082 = vpop.f32.mrf.mxu0
    %v4083 = vadd.f32 %v3986, %v4082
    %v4084 = vand.u32 %v648, 4294901760
    %4085 = vmatmul.f32.gmra.mxu0 %v4084
    %v4086 = vpop.f32.mrf.mxu0
    %v4087 = vadd.f32 %v3990, %v4086
    %v4088 = vand.u32 %v660, 4294901760
    %4089 = vmatmul.f32.gmra.mxu0 %v4088
    %v4090 = vpop.f32.mrf.mxu0
    %v4091 = vadd.f32 %v3994, %v4090
    %v4092 = vand.u32 %v672, 4294901760
    %4093 = vmatmul.f32.gmra.mxu0 %v4092
    %v4094 = vpop.f32.mrf.mxu0
    %v4095 = vadd.f32 %v3998, %v4094
    %4096 = vdwg.mxu0
    %v4097 = vand.u32 %v760, 4294901760
    %4098 = vmatpush.msra.mxu0 %v4097
    %v4099 = vand.u32 %v759, 4294901760
    %4100 = vmatpush.msra.mxu0 %v4099
    %v4101 = vand.u32 %v758, 4294901760
    %4102 = vmatpush.msra.mxu0 %v4101
    %v4103 = vand.u32 %v757, 4294901760
    %4104 = vmatpush.msra.mxu0 %v4103
    %v4105 = vand.u32 %v756, 4294901760
    %4106 = vmatpush.msra.mxu0 %v4105
    %v4107 = vand.u32 %v755, 4294901760
    %4108 = vmatpush.msra.mxu0 %v4107
    %v4109 = vand.u32 %v754, 4294901760
    %4110 = vmatpush.msra.mxu0 %v4109
    %v4111 = vand.u32 %v753, 4294901760
    %4112 = vmatpush.msra.mxu0 %v4111
    %v4113 = vand.u32 %v752, 4294901760
    %4114 = vmatpush.msra.mxu0 %v4113
    %v4115 = vand.u32 %v751, 4294901760
    %4116 = vmatpush.msra.mxu0 %v4115
    %v4117 = vand.u32 %v750, 4294901760
    %4118 = vmatpush.msra.mxu0 %v4117
    %v4119 = vand.u32 %v749, 4294901760
    %4120 = vmatpush.msra.mxu0 %v4119
    %v4121 = vand.u32 %v748, 4294901760
    %4122 = vmatpush.msra.mxu0 %v4121
    %v4123 = vand.u32 %v747, 4294901760
    %4124 = vmatpush.msra.mxu0 %v4123
    %v4125 = vand.u32 %v746, 4294901760
    %4126 = vmatpush.msra.mxu0 %v4125
    %v4127 = vand.u32 %v745, 4294901760
    %4128 = vmatpush.msra.mxu0 %v4127
    %v4129 = vand.u32 %v493, 4294901760
    %v4130 = vsub.f32 %v493, %v4129
    %v4131 = vand.u32 %v4130, 4294901760
    %v4132 = vsub.f32 %v4130, %v4131
    %v4133 = vand.u32 %v4132, 4294901760
    %4134 = vmatmul.f32.gmra.mxu0 %v4133
    %v4135 = vpop.f32.mrf.mxu0
    %v4136 = vadd.f32 %v4035, %v4135
    %v4137 = vand.u32 %v505, 4294901760
    %v4138 = vsub.f32 %v505, %v4137
    %v4139 = vand.u32 %v4138, 4294901760
    %v4140 = vsub.f32 %v4138, %v4139
    %v4141 = vand.u32 %v4140, 4294901760
    %4142 = vmatmul.f32.gmra.mxu0 %v4141
    %v4143 = vpop.f32.mrf.mxu0
    %v4144 = vadd.f32 %v4039, %v4143
    %v4145 = vand.u32 %v517, 4294901760
    %v4146 = vsub.f32 %v517, %v4145
    %v4147 = vand.u32 %v4146, 4294901760
    %v4148 = vsub.f32 %v4146, %v4147
    %v4149 = vand.u32 %v4148, 4294901760
    %4150 = vmatmul.f32.gmra.mxu0 %v4149
    %v4151 = vpop.f32.mrf.mxu0
    %v4152 = vadd.f32 %v4043, %v4151
    %v4153 = vand.u32 %v529, 4294901760
    %v4154 = vsub.f32 %v529, %v4153
    %v4155 = vand.u32 %v4154, 4294901760
    %v4156 = vsub.f32 %v4154, %v4155
    %v4157 = vand.u32 %v4156, 4294901760
    %4158 = vmatmul.f32.gmra.mxu0 %v4157
    %v4159 = vpop.f32.mrf.mxu0
    %v4160 = vadd.f32 %v4047, %v4159
    %v4161 = vand.u32 %v541, 4294901760
    %v4162 = vsub.f32 %v541, %v4161
    %v4163 = vand.u32 %v4162, 4294901760
    %v4164 = vsub.f32 %v4162, %v4163
    %v4165 = vand.u32 %v4164, 4294901760
    %4166 = vmatmul.f32.gmra.mxu0 %v4165
    %v4167 = vpop.f32.mrf.mxu0
    %v4168 = vadd.f32 %v4051, %v4167
    %v4169 = vand.u32 %v553, 4294901760
    %v4170 = vsub.f32 %v553, %v4169
    %v4171 = vand.u32 %v4170, 4294901760
    %v4172 = vsub.f32 %v4170, %v4171
    %v4173 = vand.u32 %v4172, 4294901760
    %4174 = vmatmul.f32.gmra.mxu0 %v4173
    %v4175 = vpop.f32.mrf.mxu0
    %v4176 = vadd.f32 %v4055, %v4175
    %v4177 = vand.u32 %v565, 4294901760
    %v4178 = vsub.f32 %v565, %v4177
    %v4179 = vand.u32 %v4178, 4294901760
    %v4180 = vsub.f32 %v4178, %v4179
    %v4181 = vand.u32 %v4180, 4294901760
    %4182 = vmatmul.f32.gmra.mxu0 %v4181
    %v4183 = vpop.f32.mrf.mxu0
    %v4184 = vadd.f32 %v4059, %v4183
    %v4185 = vand.u32 %v577, 4294901760
    %v4186 = vsub.f32 %v577, %v4185
    %v4187 = vand.u32 %v4186, 4294901760
    %v4188 = vsub.f32 %v4186, %v4187
    %v4189 = vand.u32 %v4188, 4294901760
    %4190 = vmatmul.f32.gmra.mxu0 %v4189
    %v4191 = vpop.f32.mrf.mxu0
    %v4192 = vadd.f32 %v4063, %v4191
    %v4193 = vand.u32 %v589, 4294901760
    %v4194 = vsub.f32 %v589, %v4193
    %v4195 = vand.u32 %v4194, 4294901760
    %v4196 = vsub.f32 %v4194, %v4195
    %v4197 = vand.u32 %v4196, 4294901760
    %4198 = vmatmul.f32.gmra.mxu0 %v4197
    %v4199 = vpop.f32.mrf.mxu0
    %v4200 = vadd.f32 %v4067, %v4199
    %v4201 = vand.u32 %v601, 4294901760
    %v4202 = vsub.f32 %v601, %v4201
    %v4203 = vand.u32 %v4202, 4294901760
    %v4204 = vsub.f32 %v4202, %v4203
    %v4205 = vand.u32 %v4204, 4294901760
    %4206 = vmatmul.f32.gmra.mxu0 %v4205
    %v4207 = vpop.f32.mrf.mxu0
    %v4208 = vadd.f32 %v4071, %v4207
    %v4209 = vand.u32 %v613, 4294901760
    %v4210 = vsub.f32 %v613, %v4209
    %v4211 = vand.u32 %v4210, 4294901760
    %v4212 = vsub.f32 %v4210, %v4211
    %v4213 = vand.u32 %v4212, 4294901760
    %4214 = vmatmul.f32.gmra.mxu0 %v4213
    %v4215 = vpop.f32.mrf.mxu0
    %v4216 = vadd.f32 %v4075, %v4215
    %v4217 = vand.u32 %v625, 4294901760
    %v4218 = vsub.f32 %v625, %v4217
    %v4219 = vand.u32 %v4218, 4294901760
    %v4220 = vsub.f32 %v4218, %v4219
    %v4221 = vand.u32 %v4220, 4294901760
    %4222 = vmatmul.f32.gmra.mxu0 %v4221
    %v4223 = vpop.f32.mrf.mxu0
    %v4224 = vadd.f32 %v4079, %v4223
    %v4225 = vand.u32 %v637, 4294901760
    %v4226 = vsub.f32 %v637, %v4225
    %v4227 = vand.u32 %v4226, 4294901760
    %v4228 = vsub.f32 %v4226, %v4227
    %v4229 = vand.u32 %v4228, 4294901760
    %4230 = vmatmul.f32.gmra.mxu0 %v4229
    %v4231 = vpop.f32.mrf.mxu0
    %v4232 = vadd.f32 %v4083, %v4231
    %v4233 = vand.u32 %v649, 4294901760
    %v4234 = vsub.f32 %v649, %v4233
    %v4235 = vand.u32 %v4234, 4294901760
    %v4236 = vsub.f32 %v4234, %v4235
    %v4237 = vand.u32 %v4236, 4294901760
    %4238 = vmatmul.f32.gmra.mxu0 %v4237
    %v4239 = vpop.f32.mrf.mxu0
    %v4240 = vadd.f32 %v4087, %v4239
    %v4241 = vand.u32 %v661, 4294901760
    %v4242 = vsub.f32 %v661, %v4241
    %v4243 = vand.u32 %v4242, 4294901760
    %v4244 = vsub.f32 %v4242, %v4243
    %v4245 = vand.u32 %v4244, 4294901760
    %4246 = vmatmul.f32.gmra.mxu0 %v4245
    %v4247 = vpop.f32.mrf.mxu0
    %v4248 = vadd.f32 %v4091, %v4247
    %v4249 = vand.u32 %v673, 4294901760
    %v4250 = vsub.f32 %v673, %v4249
    %v4251 = vand.u32 %v4250, 4294901760
    %v4252 = vsub.f32 %v4250, %v4251
    %v4253 = vand.u32 %v4252, 4294901760
    %4254 = vmatmul.f32.gmra.mxu0 %v4253
    %v4255 = vpop.f32.mrf.mxu0
    %v4256 = vadd.f32 %v4095, %v4255
    %4257 = vdwg.mxu0
    %v4258 = vand.u32 %v760, 4294901760
    %v4259 = vsub.f32 %v760, %v4258
    %v4260 = vand.u32 %v4259, 4294901760
    %v4261 = vsub.f32 %v4259, %v4260
    %v4262 = vand.u32 %v4261, 4294901760
    %4263 = vmatpush.msra.mxu0 %v4262
    %v4264 = vand.u32 %v759, 4294901760
    %v4265 = vsub.f32 %v759, %v4264
    %v4266 = vand.u32 %v4265, 4294901760
    %v4267 = vsub.f32 %v4265, %v4266
    %v4268 = vand.u32 %v4267, 4294901760
    %4269 = vmatpush.msra.mxu0 %v4268
    %v4270 = vand.u32 %v758, 4294901760
    %v4271 = vsub.f32 %v758, %v4270
    %v4272 = vand.u32 %v4271, 4294901760
    %v4273 = vsub.f32 %v4271, %v4272
    %v4274 = vand.u32 %v4273, 4294901760
    %4275 = vmatpush.msra.mxu0 %v4274
    %v4276 = vand.u32 %v757, 4294901760
    %v4277 = vsub.f32 %v757, %v4276
    %v4278 = vand.u32 %v4277, 4294901760
    %v4279 = vsub.f32 %v4277, %v4278
    %v4280 = vand.u32 %v4279, 4294901760
    %4281 = vmatpush.msra.mxu0 %v4280
    %v4282 = vand.u32 %v756, 4294901760
    %v4283 = vsub.f32 %v756, %v4282
    %v4284 = vand.u32 %v4283, 4294901760
    %v4285 = vsub.f32 %v4283, %v4284
    %v4286 = vand.u32 %v4285, 4294901760
    %4287 = vmatpush.msra.mxu0 %v4286
    %v4288 = vand.u32 %v755, 4294901760
    %v4289 = vsub.f32 %v755, %v4288
    %v4290 = vand.u32 %v4289, 4294901760
    %v4291 = vsub.f32 %v4289, %v4290
    %v4292 = vand.u32 %v4291, 4294901760
    %4293 = vmatpush.msra.mxu0 %v4292
    %v4294 = vand.u32 %v754, 4294901760
    %v4295 = vsub.f32 %v754, %v4294
    %v4296 = vand.u32 %v4295, 4294901760
    %v4297 = vsub.f32 %v4295, %v4296
    %v4298 = vand.u32 %v4297, 4294901760
    %4299 = vmatpush.msra.mxu0 %v4298
    %v4300 = vand.u32 %v753, 4294901760
    %v4301 = vsub.f32 %v753, %v4300
    %v4302 = vand.u32 %v4301, 4294901760
    %v4303 = vsub.f32 %v4301, %v4302
    %v4304 = vand.u32 %v4303, 4294901760
    %4305 = vmatpush.msra.mxu0 %v4304
    %v4306 = vand.u32 %v752, 4294901760
    %v4307 = vsub.f32 %v752, %v4306
    %v4308 = vand.u32 %v4307, 4294901760
    %v4309 = vsub.f32 %v4307, %v4308
    %v4310 = vand.u32 %v4309, 4294901760
    %4311 = vmatpush.msra.mxu0 %v4310
    %v4312 = vand.u32 %v751, 4294901760
    %v4313 = vsub.f32 %v751, %v4312
    %v4314 = vand.u32 %v4313, 4294901760
    %v4315 = vsub.f32 %v4313, %v4314
    %v4316 = vand.u32 %v4315, 4294901760
    %4317 = vmatpush.msra.mxu0 %v4316
    %v4318 = vand.u32 %v750, 4294901760
    %v4319 = vsub.f32 %v750, %v4318
    %v4320 = vand.u32 %v4319, 4294901760
    %v4321 = vsub.f32 %v4319, %v4320
    %v4322 = vand.u32 %v4321, 4294901760
    %4323 = vmatpush.msra.mxu0 %v4322
    %v4324 = vand.u32 %v749, 4294901760
    %v4325 = vsub.f32 %v749, %v4324
    %v4326 = vand.u32 %v4325, 4294901760
    %v4327 = vsub.f32 %v4325, %v4326
    %v4328 = vand.u32 %v4327, 4294901760
    %4329 = vmatpush.msra.mxu0 %v4328
    %v4330 = vand.u32 %v748, 4294901760
    %v4331 = vsub.f32 %v748, %v4330
    %v4332 = vand.u32 %v4331, 4294901760
    %v4333 = vsub.f32 %v4331, %v4332
    %v4334 = vand.u32 %v4333, 4294901760
    %4335 = vmatpush.msra.mxu0 %v4334
    %v4336 = vand.u32 %v747, 4294901760
    %v4337 = vsub.f32 %v747, %v4336
    %v4338 = vand.u32 %v4337, 4294901760
    %v4339 = vsub.f32 %v4337, %v4338
    %v4340 = vand.u32 %v4339, 4294901760
    %4341 = vmatpush.msra.mxu0 %v4340
    %v4342 = vand.u32 %v746, 4294901760
    %v4343 = vsub.f32 %v746, %v4342
    %v4344 = vand.u32 %v4343, 4294901760
    %v4345 = vsub.f32 %v4343, %v4344
    %v4346 = vand.u32 %v4345, 4294901760
    %4347 = vmatpush.msra.mxu0 %v4346
    %v4348 = vand.u32 %v745, 4294901760
    %v4349 = vsub.f32 %v745, %v4348
    %v4350 = vand.u32 %v4349, 4294901760
    %v4351 = vsub.f32 %v4349, %v4350
    %v4352 = vand.u32 %v4351, 4294901760
    %4353 = vmatpush.msra.mxu0 %v4352
    %v4354 = vand.u32 %v493, 4294901760
    %4355 = vmatmul.f32.gmra.mxu0 %v4354
    %v4356 = vpop.f32.mrf.mxu0
    %v4357 = vadd.f32 %v4136, %v4356
    %v4358 = vand.u32 %v505, 4294901760
    %4359 = vmatmul.f32.gmra.mxu0 %v4358
    %v4360 = vpop.f32.mrf.mxu0
    %v4361 = vadd.f32 %v4144, %v4360
    %v4362 = vand.u32 %v517, 4294901760
    %4363 = vmatmul.f32.gmra.mxu0 %v4362
    %v4364 = vpop.f32.mrf.mxu0
    %v4365 = vadd.f32 %v4152, %v4364
    %v4366 = vand.u32 %v529, 4294901760
    %4367 = vmatmul.f32.gmra.mxu0 %v4366
    %v4368 = vpop.f32.mrf.mxu0
    %v4369 = vadd.f32 %v4160, %v4368
    %v4370 = vand.u32 %v541, 4294901760
    %4371 = vmatmul.f32.gmra.mxu0 %v4370
    %v4372 = vpop.f32.mrf.mxu0
    %v4373 = vadd.f32 %v4168, %v4372
    %v4374 = vand.u32 %v553, 4294901760
    %4375 = vmatmul.f32.gmra.mxu0 %v4374
    %v4376 = vpop.f32.mrf.mxu0
    %v4377 = vadd.f32 %v4176, %v4376
    %v4378 = vand.u32 %v565, 4294901760
    %4379 = vmatmul.f32.gmra.mxu0 %v4378
    %v4380 = vpop.f32.mrf.mxu0
    %v4381 = vadd.f32 %v4184, %v4380
    %v4382 = vand.u32 %v577, 4294901760
    %4383 = vmatmul.f32.gmra.mxu0 %v4382
    %v4384 = vpop.f32.mrf.mxu0
    %v4385 = vadd.f32 %v4192, %v4384
    %v4386 = vand.u32 %v589, 4294901760
    %4387 = vmatmul.f32.gmra.mxu0 %v4386
    %v4388 = vpop.f32.mrf.mxu0
    %v4389 = vadd.f32 %v4200, %v4388
    %v4390 = vand.u32 %v601, 4294901760
    %4391 = vmatmul.f32.gmra.mxu0 %v4390
    %v4392 = vpop.f32.mrf.mxu0
    %v4393 = vadd.f32 %v4208, %v4392
    %v4394 = vand.u32 %v613, 4294901760
    %4395 = vmatmul.f32.gmra.mxu0 %v4394
    %v4396 = vpop.f32.mrf.mxu0
    %v4397 = vadd.f32 %v4216, %v4396
    %v4398 = vand.u32 %v625, 4294901760
    %4399 = vmatmul.f32.gmra.mxu0 %v4398
    %v4400 = vpop.f32.mrf.mxu0
    %v4401 = vadd.f32 %v4224, %v4400
    %v4402 = vand.u32 %v637, 4294901760
    %4403 = vmatmul.f32.gmra.mxu0 %v4402
    %v4404 = vpop.f32.mrf.mxu0
    %v4405 = vadd.f32 %v4232, %v4404
    %v4406 = vand.u32 %v649, 4294901760
    %4407 = vmatmul.f32.gmra.mxu0 %v4406
    %v4408 = vpop.f32.mrf.mxu0
    %v4409 = vadd.f32 %v4240, %v4408
    %v4410 = vand.u32 %v661, 4294901760
    %4411 = vmatmul.f32.gmra.mxu0 %v4410
    %v4412 = vpop.f32.mrf.mxu0
    %v4413 = vadd.f32 %v4248, %v4412
    %v4414 = vand.u32 %v673, 4294901760
    %4415 = vmatmul.f32.gmra.mxu0 %v4414
    %v4416 = vpop.f32.mrf.mxu0
    %v4417 = vadd.f32 %v4256, %v4416
    %4418 = vdwg.mxu0
    %v4419 = vand.u32 %v760, 4294901760
    %v4420 = vsub.f32 %v760, %v4419
    %4421 = vmatpush.msra.mxu0 %v4420
    %v4422 = vand.u32 %v759, 4294901760
    %v4423 = vsub.f32 %v759, %v4422
    %4424 = vmatpush.msra.mxu0 %v4423
    %v4425 = vand.u32 %v758, 4294901760
    %v4426 = vsub.f32 %v758, %v4425
    %4427 = vmatpush.msra.mxu0 %v4426
    %v4428 = vand.u32 %v757, 4294901760
    %v4429 = vsub.f32 %v757, %v4428
    %4430 = vmatpush.msra.mxu0 %v4429
    %v4431 = vand.u32 %v756, 4294901760
    %v4432 = vsub.f32 %v756, %v4431
    %4433 = vmatpush.msra.mxu0 %v4432
    %v4434 = vand.u32 %v755, 4294901760
    %v4435 = vsub.f32 %v755, %v4434
    %4436 = vmatpush.msra.mxu0 %v4435
    %v4437 = vand.u32 %v754, 4294901760
    %v4438 = vsub.f32 %v754, %v4437
    %4439 = vmatpush.msra.mxu0 %v4438
    %v4440 = vand.u32 %v753, 4294901760
    %v4441 = vsub.f32 %v753, %v4440
    %4442 = vmatpush.msra.mxu0 %v4441
    %v4443 = vand.u32 %v752, 4294901760
    %v4444 = vsub.f32 %v752, %v4443
    %4445 = vmatpush.msra.mxu0 %v4444
    %v4446 = vand.u32 %v751, 4294901760
    %v4447 = vsub.f32 %v751, %v4446
    %4448 = vmatpush.msra.mxu0 %v4447
    %v4449 = vand.u32 %v750, 4294901760
    %v4450 = vsub.f32 %v750, %v4449
    %4451 = vmatpush.msra.mxu0 %v4450
    %v4452 = vand.u32 %v749, 4294901760
    %v4453 = vsub.f32 %v749, %v4452
    %4454 = vmatpush.msra.mxu0 %v4453
    %v4455 = vand.u32 %v748, 4294901760
    %v4456 = vsub.f32 %v748, %v4455
    %4457 = vmatpush.msra.mxu0 %v4456
    %v4458 = vand.u32 %v747, 4294901760
    %v4459 = vsub.f32 %v747, %v4458
    %4460 = vmatpush.msra.mxu0 %v4459
    %v4461 = vand.u32 %v746, 4294901760
    %v4462 = vsub.f32 %v746, %v4461
    %4463 = vmatpush.msra.mxu0 %v4462
    %v4464 = vand.u32 %v745, 4294901760
    %v4465 = vsub.f32 %v745, %v4464
    %4466 = vmatpush.msra.mxu0 %v4465
    %v4467 = vand.u32 %v493, 4294901760
    %v4468 = vsub.f32 %v493, %v4467
    %4469 = vmatmul.f32.gmra.mxu0 %v4468
    %v4470 = vpop.f32.mrf.mxu0
    %v4471 = vadd.f32 %v4357, %v4470
    %v4472 = vand.u32 %v505, 4294901760
    %v4473 = vsub.f32 %v505, %v4472
    %4474 = vmatmul.f32.gmra.mxu0 %v4473
    %v4475 = vpop.f32.mrf.mxu0
    %v4476 = vadd.f32 %v4361, %v4475
    %v4477 = vand.u32 %v517, 4294901760
    %v4478 = vsub.f32 %v517, %v4477
    %4479 = vmatmul.f32.gmra.mxu0 %v4478
    %v4480 = vpop.f32.mrf.mxu0
    %v4481 = vadd.f32 %v4365, %v4480
    %v4482 = vand.u32 %v529, 4294901760
    %v4483 = vsub.f32 %v529, %v4482
    %4484 = vmatmul.f32.gmra.mxu0 %v4483
    %v4485 = vpop.f32.mrf.mxu0
    %v4486 = vadd.f32 %v4369, %v4485
    %v4487 = vand.u32 %v541, 4294901760
    %v4488 = vsub.f32 %v541, %v4487
    %4489 = vmatmul.f32.gmra.mxu0 %v4488
    %v4490 = vpop.f32.mrf.mxu0
    %v4491 = vadd.f32 %v4373, %v4490
    %v4492 = vand.u32 %v553, 4294901760
    %v4493 = vsub.f32 %v553, %v4492
    %4494 = vmatmul.f32.gmra.mxu0 %v4493
    %v4495 = vpop.f32.mrf.mxu0
    %v4496 = vadd.f32 %v4377, %v4495
    %v4497 = vand.u32 %v565, 4294901760
    %v4498 = vsub.f32 %v565, %v4497
    %4499 = vmatmul.f32.gmra.mxu0 %v4498
    %v4500 = vpop.f32.mrf.mxu0
    %v4501 = vadd.f32 %v4381, %v4500
    %v4502 = vand.u32 %v577, 4294901760
    %v4503 = vsub.f32 %v577, %v4502
    %4504 = vmatmul.f32.gmra.mxu0 %v4503
    %v4505 = vpop.f32.mrf.mxu0
    %v4506 = vadd.f32 %v4385, %v4505
    %v4507 = vand.u32 %v589, 4294901760
    %v4508 = vsub.f32 %v589, %v4507
    %4509 = vmatmul.f32.gmra.mxu0 %v4508
    %v4510 = vpop.f32.mrf.mxu0
    %v4511 = vadd.f32 %v4389, %v4510
    %v4512 = vand.u32 %v601, 4294901760
    %v4513 = vsub.f32 %v601, %v4512
    %4514 = vmatmul.f32.gmra.mxu0 %v4513
    %v4515 = vpop.f32.mrf.mxu0
    %v4516 = vadd.f32 %v4393, %v4515
    %v4517 = vand.u32 %v613, 4294901760
    %v4518 = vsub.f32 %v613, %v4517
    %4519 = vmatmul.f32.gmra.mxu0 %v4518
    %v4520 = vpop.f32.mrf.mxu0
    %v4521 = vadd.f32 %v4397, %v4520
    %v4522 = vand.u32 %v625, 4294901760
    %v4523 = vsub.f32 %v625, %v4522
    %4524 = vmatmul.f32.gmra.mxu0 %v4523
    %v4525 = vpop.f32.mrf.mxu0
    %v4526 = vadd.f32 %v4401, %v4525
    %v4527 = vand.u32 %v637, 4294901760
    %v4528 = vsub.f32 %v637, %v4527
    %4529 = vmatmul.f32.gmra.mxu0 %v4528
    %v4530 = vpop.f32.mrf.mxu0
    %v4531 = vadd.f32 %v4405, %v4530
    %v4532 = vand.u32 %v649, 4294901760
    %v4533 = vsub.f32 %v649, %v4532
    %4534 = vmatmul.f32.gmra.mxu0 %v4533
    %v4535 = vpop.f32.mrf.mxu0
    %v4536 = vadd.f32 %v4409, %v4535
    %v4537 = vand.u32 %v661, 4294901760
    %v4538 = vsub.f32 %v661, %v4537
    %4539 = vmatmul.f32.gmra.mxu0 %v4538
    %v4540 = vpop.f32.mrf.mxu0
    %v4541 = vadd.f32 %v4413, %v4540
    %v4542 = vand.u32 %v673, 4294901760
    %v4543 = vsub.f32 %v673, %v4542
    %4544 = vmatmul.f32.gmra.mxu0 %v4543
    %v4545 = vpop.f32.mrf.mxu0
    %v4546 = vadd.f32 %v4417, %v4545
    %4547 = vdwg.mxu0
    %v4548 = vand.u32 %v760, 4294901760
    %4549 = vmatpush.msra.mxu0 %v4548
    %v4550 = vand.u32 %v759, 4294901760
    %4551 = vmatpush.msra.mxu0 %v4550
    %v4552 = vand.u32 %v758, 4294901760
    %4553 = vmatpush.msra.mxu0 %v4552
    %v4554 = vand.u32 %v757, 4294901760
    %4555 = vmatpush.msra.mxu0 %v4554
    %v4556 = vand.u32 %v756, 4294901760
    %4557 = vmatpush.msra.mxu0 %v4556
    %v4558 = vand.u32 %v755, 4294901760
    %4559 = vmatpush.msra.mxu0 %v4558
    %v4560 = vand.u32 %v754, 4294901760
    %4561 = vmatpush.msra.mxu0 %v4560
    %v4562 = vand.u32 %v753, 4294901760
    %4563 = vmatpush.msra.mxu0 %v4562
    %v4564 = vand.u32 %v752, 4294901760
    %4565 = vmatpush.msra.mxu0 %v4564
    %v4566 = vand.u32 %v751, 4294901760
    %4567 = vmatpush.msra.mxu0 %v4566
    %v4568 = vand.u32 %v750, 4294901760
    %4569 = vmatpush.msra.mxu0 %v4568
    %v4570 = vand.u32 %v749, 4294901760
    %4571 = vmatpush.msra.mxu0 %v4570
    %v4572 = vand.u32 %v748, 4294901760
    %4573 = vmatpush.msra.mxu0 %v4572
    %v4574 = vand.u32 %v747, 4294901760
    %4575 = vmatpush.msra.mxu0 %v4574
    %v4576 = vand.u32 %v746, 4294901760
    %4577 = vmatpush.msra.mxu0 %v4576
    %v4578 = vand.u32 %v745, 4294901760
    %4579 = vmatpush.msra.mxu0 %v4578
    %v4580 = vand.u32 %v493, 4294901760
    %v4581 = vsub.f32 %v493, %v4580
    %v4582 = vand.u32 %v4581, 4294901760
    %4583 = vmatmul.f32.gmra.mxu0 %v4582
    %v4584 = vpop.f32.mrf.mxu0
    %v4585 = vadd.f32 %v4471, %v4584
    %v4586 = vand.u32 %v505, 4294901760
    %v4587 = vsub.f32 %v505, %v4586
    %v4588 = vand.u32 %v4587, 4294901760
    %4589 = vmatmul.f32.gmra.mxu0 %v4588
    %v4590 = vpop.f32.mrf.mxu0
    %v4591 = vadd.f32 %v4476, %v4590
    %v4592 = vand.u32 %v517, 4294901760
    %v4593 = vsub.f32 %v517, %v4592
    %v4594 = vand.u32 %v4593, 4294901760
    %4595 = vmatmul.f32.gmra.mxu0 %v4594
    %v4596 = vpop.f32.mrf.mxu0
    %v4597 = vadd.f32 %v4481, %v4596
    %v4598 = vand.u32 %v529, 4294901760
    %v4599 = vsub.f32 %v529, %v4598
    %v4600 = vand.u32 %v4599, 4294901760
    %4601 = vmatmul.f32.gmra.mxu0 %v4600
    %v4602 = vpop.f32.mrf.mxu0
    %v4603 = vadd.f32 %v4486, %v4602
    %v4604 = vand.u32 %v541, 4294901760
    %v4605 = vsub.f32 %v541, %v4604
    %v4606 = vand.u32 %v4605, 4294901760
    %4607 = vmatmul.f32.gmra.mxu0 %v4606
    %v4608 = vpop.f32.mrf.mxu0
    %v4609 = vadd.f32 %v4491, %v4608
    %v4610 = vand.u32 %v553, 4294901760
    %v4611 = vsub.f32 %v553, %v4610
    %v4612 = vand.u32 %v4611, 4294901760
    %4613 = vmatmul.f32.gmra.mxu0 %v4612
    %v4614 = vpop.f32.mrf.mxu0
    %v4615 = vadd.f32 %v4496, %v4614
    %v4616 = vand.u32 %v565, 4294901760
    %v4617 = vsub.f32 %v565, %v4616
    %v4618 = vand.u32 %v4617, 4294901760
    %4619 = vmatmul.f32.gmra.mxu0 %v4618
    %v4620 = vpop.f32.mrf.mxu0
    %v4621 = vadd.f32 %v4501, %v4620
    %v4622 = vand.u32 %v577, 4294901760
    %v4623 = vsub.f32 %v577, %v4622
    %v4624 = vand.u32 %v4623, 4294901760
    %4625 = vmatmul.f32.gmra.mxu0 %v4624
    %v4626 = vpop.f32.mrf.mxu0
    %v4627 = vadd.f32 %v4506, %v4626
    %v4628 = vand.u32 %v589, 4294901760
    %v4629 = vsub.f32 %v589, %v4628
    %v4630 = vand.u32 %v4629, 4294901760
    %4631 = vmatmul.f32.gmra.mxu0 %v4630
    %v4632 = vpop.f32.mrf.mxu0
    %v4633 = vadd.f32 %v4511, %v4632
    %v4634 = vand.u32 %v601, 4294901760
    %v4635 = vsub.f32 %v601, %v4634
    %v4636 = vand.u32 %v4635, 4294901760
    %4637 = vmatmul.f32.gmra.mxu0 %v4636
    %v4638 = vpop.f32.mrf.mxu0
    %v4639 = vadd.f32 %v4516, %v4638
    %v4640 = vand.u32 %v613, 4294901760
    %v4641 = vsub.f32 %v613, %v4640
    %v4642 = vand.u32 %v4641, 4294901760
    %4643 = vmatmul.f32.gmra.mxu0 %v4642
    %v4644 = vpop.f32.mrf.mxu0
    %v4645 = vadd.f32 %v4521, %v4644
    %v4646 = vand.u32 %v625, 4294901760
    %v4647 = vsub.f32 %v625, %v4646
    %v4648 = vand.u32 %v4647, 4294901760
    %4649 = vmatmul.f32.gmra.mxu0 %v4648
    %v4650 = vpop.f32.mrf.mxu0
    %v4651 = vadd.f32 %v4526, %v4650
    %v4652 = vand.u32 %v637, 4294901760
    %v4653 = vsub.f32 %v637, %v4652
    %v4654 = vand.u32 %v4653, 4294901760
    %4655 = vmatmul.f32.gmra.mxu0 %v4654
    %v4656 = vpop.f32.mrf.mxu0
    %v4657 = vadd.f32 %v4531, %v4656
    %v4658 = vand.u32 %v649, 4294901760
    %v4659 = vsub.f32 %v649, %v4658
    %v4660 = vand.u32 %v4659, 4294901760
    %4661 = vmatmul.f32.gmra.mxu0 %v4660
    %v4662 = vpop.f32.mrf.mxu0
    %v4663 = vadd.f32 %v4536, %v4662
    %v4664 = vand.u32 %v661, 4294901760
    %v4665 = vsub.f32 %v661, %v4664
    %v4666 = vand.u32 %v4665, 4294901760
    %4667 = vmatmul.f32.gmra.mxu0 %v4666
    %v4668 = vpop.f32.mrf.mxu0
    %v4669 = vadd.f32 %v4541, %v4668
    %v4670 = vand.u32 %v673, 4294901760
    %v4671 = vsub.f32 %v673, %v4670
    %v4672 = vand.u32 %v4671, 4294901760
    %4673 = vmatmul.f32.gmra.mxu0 %v4672
    %v4674 = vpop.f32.mrf.mxu0
    %v4675 = vadd.f32 %v4546, %v4674
    %4676 = vdwg.mxu0
    %v4677 = vand.u32 %v760, 4294901760
    %v4678 = vsub.f32 %v760, %v4677
    %v4679 = vand.u32 %v4678, 4294901760
    %4680 = vmatpush.msra.mxu0 %v4679
    %v4681 = vand.u32 %v759, 4294901760
    %v4682 = vsub.f32 %v759, %v4681
    %v4683 = vand.u32 %v4682, 4294901760
    %4684 = vmatpush.msra.mxu0 %v4683
    %v4685 = vand.u32 %v758, 4294901760
    %v4686 = vsub.f32 %v758, %v4685
    %v4687 = vand.u32 %v4686, 4294901760
    %4688 = vmatpush.msra.mxu0 %v4687
    %v4689 = vand.u32 %v757, 4294901760
    %v4690 = vsub.f32 %v757, %v4689
    %v4691 = vand.u32 %v4690, 4294901760
    %4692 = vmatpush.msra.mxu0 %v4691
    %v4693 = vand.u32 %v756, 4294901760
    %v4694 = vsub.f32 %v756, %v4693
    %v4695 = vand.u32 %v4694, 4294901760
    %4696 = vmatpush.msra.mxu0 %v4695
    %v4697 = vand.u32 %v755, 4294901760
    %v4698 = vsub.f32 %v755, %v4697
    %v4699 = vand.u32 %v4698, 4294901760
    %4700 = vmatpush.msra.mxu0 %v4699
    %v4701 = vand.u32 %v754, 4294901760
    %v4702 = vsub.f32 %v754, %v4701
    %v4703 = vand.u32 %v4702, 4294901760
    %4704 = vmatpush.msra.mxu0 %v4703
    %v4705 = vand.u32 %v753, 4294901760
    %v4706 = vsub.f32 %v753, %v4705
    %v4707 = vand.u32 %v4706, 4294901760
    %4708 = vmatpush.msra.mxu0 %v4707
    %v4709 = vand.u32 %v752, 4294901760
    %v4710 = vsub.f32 %v752, %v4709
    %v4711 = vand.u32 %v4710, 4294901760
    %4712 = vmatpush.msra.mxu0 %v4711
    %v4713 = vand.u32 %v751, 4294901760
    %v4714 = vsub.f32 %v751, %v4713
    %v4715 = vand.u32 %v4714, 4294901760
    %4716 = vmatpush.msra.mxu0 %v4715
    %v4717 = vand.u32 %v750, 4294901760
    %v4718 = vsub.f32 %v750, %v4717
    %v4719 = vand.u32 %v4718, 4294901760
    %4720 = vmatpush.msra.mxu0 %v4719
    %v4721 = vand.u32 %v749, 4294901760
    %v4722 = vsub.f32 %v749, %v4721
    %v4723 = vand.u32 %v4722, 4294901760
    %4724 = vmatpush.msra.mxu0 %v4723
    %v4725 = vand.u32 %v748, 4294901760
    %v4726 = vsub.f32 %v748, %v4725
    %v4727 = vand.u32 %v4726, 4294901760
    %4728 = vmatpush.msra.mxu0 %v4727
    %v4729 = vand.u32 %v747, 4294901760
    %v4730 = vsub.f32 %v747, %v4729
    %v4731 = vand.u32 %v4730, 4294901760
    %4732 = vmatpush.msra.mxu0 %v4731
    %v4733 = vand.u32 %v746, 4294901760
    %v4734 = vsub.f32 %v746, %v4733
    %v4735 = vand.u32 %v4734, 4294901760
    %4736 = vmatpush.msra.mxu0 %v4735
    %v4737 = vand.u32 %v745, 4294901760
    %v4738 = vsub.f32 %v745, %v4737
    %v4739 = vand.u32 %v4738, 4294901760
    %4740 = vmatpush.msra.mxu0 %v4739
    %v4741 = vand.u32 %v493, 4294901760
    %4742 = vmatmul.f32.gmra.mxu0 %v4741
    %v4743 = vpop.f32.mrf.mxu0
    %v4744 = vadd.f32 %v4585, %v4743
    %v4745 = vand.u32 %v505, 4294901760
    %4746 = vmatmul.f32.gmra.mxu0 %v4745
    %v4747 = vpop.f32.mrf.mxu0
    %v4748 = vadd.f32 %v4591, %v4747
    %v4749 = vand.u32 %v517, 4294901760
    %4750 = vmatmul.f32.gmra.mxu0 %v4749
    %v4751 = vpop.f32.mrf.mxu0
    %v4752 = vadd.f32 %v4597, %v4751
    %v4753 = vand.u32 %v529, 4294901760
    %4754 = vmatmul.f32.gmra.mxu0 %v4753
    %v4755 = vpop.f32.mrf.mxu0
    %v4756 = vadd.f32 %v4603, %v4755
    %v4757 = vand.u32 %v541, 4294901760
    %4758 = vmatmul.f32.gmra.mxu0 %v4757
    %v4759 = vpop.f32.mrf.mxu0
    %v4760 = vadd.f32 %v4609, %v4759
    %v4761 = vand.u32 %v553, 4294901760
    %4762 = vmatmul.f32.gmra.mxu0 %v4761
    %v4763 = vpop.f32.mrf.mxu0
    %v4764 = vadd.f32 %v4615, %v4763
    %v4765 = vand.u32 %v565, 4294901760
    %4766 = vmatmul.f32.gmra.mxu0 %v4765
    %v4767 = vpop.f32.mrf.mxu0
    %v4768 = vadd.f32 %v4621, %v4767
    %v4769 = vand.u32 %v577, 4294901760
    %4770 = vmatmul.f32.gmra.mxu0 %v4769
    %v4771 = vpop.f32.mrf.mxu0
    %v4772 = vadd.f32 %v4627, %v4771
    %v4773 = vand.u32 %v589, 4294901760
    %4774 = vmatmul.f32.gmra.mxu0 %v4773
    %v4775 = vpop.f32.mrf.mxu0
    %v4776 = vadd.f32 %v4633, %v4775
    %v4777 = vand.u32 %v601, 4294901760
    %4778 = vmatmul.f32.gmra.mxu0 %v4777
    %v4779 = vpop.f32.mrf.mxu0
    %v4780 = vadd.f32 %v4639, %v4779
    %v4781 = vand.u32 %v613, 4294901760
    %4782 = vmatmul.f32.gmra.mxu0 %v4781
    %v4783 = vpop.f32.mrf.mxu0
    %v4784 = vadd.f32 %v4645, %v4783
    %v4785 = vand.u32 %v625, 4294901760
    %4786 = vmatmul.f32.gmra.mxu0 %v4785
    %v4787 = vpop.f32.mrf.mxu0
    %v4788 = vadd.f32 %v4651, %v4787
    %v4789 = vand.u32 %v637, 4294901760
    %4790 = vmatmul.f32.gmra.mxu0 %v4789
    %v4791 = vpop.f32.mrf.mxu0
    %v4792 = vadd.f32 %v4657, %v4791
    %v4793 = vand.u32 %v649, 4294901760
    %4794 = vmatmul.f32.gmra.mxu0 %v4793
    %v4795 = vpop.f32.mrf.mxu0
    %v4796 = vadd.f32 %v4663, %v4795
    %v4797 = vand.u32 %v661, 4294901760
    %4798 = vmatmul.f32.gmra.mxu0 %v4797
    %v4799 = vpop.f32.mrf.mxu0
    %v4800 = vadd.f32 %v4669, %v4799
    %v4801 = vand.u32 %v673, 4294901760
    %4802 = vmatmul.f32.gmra.mxu0 %v4801
    %v4803 = vpop.f32.mrf.mxu0
    %v4804 = vadd.f32 %v4675, %v4803
    %4805 = vdwg.mxu0
    %v4806 = vand.u32 %v760, 4294901760
    %4807 = vmatpush.msra.mxu0 %v4806
    %v4808 = vand.u32 %v759, 4294901760
    %4809 = vmatpush.msra.mxu0 %v4808
    %v4810 = vand.u32 %v758, 4294901760
    %4811 = vmatpush.msra.mxu0 %v4810
    %v4812 = vand.u32 %v757, 4294901760
    %4813 = vmatpush.msra.mxu0 %v4812
    %v4814 = vand.u32 %v756, 4294901760
    %4815 = vmatpush.msra.mxu0 %v4814
    %v4816 = vand.u32 %v755, 4294901760
    %4817 = vmatpush.msra.mxu0 %v4816
    %v4818 = vand.u32 %v754, 4294901760
    %4819 = vmatpush.msra.mxu0 %v4818
    %v4820 = vand.u32 %v753, 4294901760
    %4821 = vmatpush.msra.mxu0 %v4820
    %v4822 = vand.u32 %v752, 4294901760
    %4823 = vmatpush.msra.mxu0 %v4822
    %v4824 = vand.u32 %v751, 4294901760
    %4825 = vmatpush.msra.mxu0 %v4824
    %v4826 = vand.u32 %v750, 4294901760
    %4827 = vmatpush.msra.mxu0 %v4826
    %v4828 = vand.u32 %v749, 4294901760
    %4829 = vmatpush.msra.mxu0 %v4828
    %v4830 = vand.u32 %v748, 4294901760
    %4831 = vmatpush.msra.mxu0 %v4830
    %v4832 = vand.u32 %v747, 4294901760
    %4833 = vmatpush.msra.mxu0 %v4832
    %v4834 = vand.u32 %v746, 4294901760
    %4835 = vmatpush.msra.mxu0 %v4834
    %v4836 = vand.u32 %v745, 4294901760
    %4837 = vmatpush.msra.mxu0 %v4836
    %v4838 = vand.u32 %v493, 4294901760
    %4839 = vmatmul.f32.gmra.mxu0 %v4838
    %v4840 = vpop.f32.mrf.mxu0
    %v4841 = vadd.f32 %v4744, %v4840
    %v4842 = vand.u32 %v505, 4294901760
    %4843 = vmatmul.f32.gmra.mxu0 %v4842
    %v4844 = vpop.f32.mrf.mxu0
    %v4845 = vadd.f32 %v4748, %v4844
    %v4846 = vand.u32 %v517, 4294901760
    %4847 = vmatmul.f32.gmra.mxu0 %v4846
    %v4848 = vpop.f32.mrf.mxu0
    %v4849 = vadd.f32 %v4752, %v4848
    %v4850 = vand.u32 %v529, 4294901760
    %4851 = vmatmul.f32.gmra.mxu0 %v4850
    %v4852 = vpop.f32.mrf.mxu0
    %v4853 = vadd.f32 %v4756, %v4852
    %v4854 = vand.u32 %v541, 4294901760
    %4855 = vmatmul.f32.gmra.mxu0 %v4854
    %v4856 = vpop.f32.mrf.mxu0
    %v4857 = vadd.f32 %v4760, %v4856
    %v4858 = vand.u32 %v553, 4294901760
    %4859 = vmatmul.f32.gmra.mxu0 %v4858
    %v4860 = vpop.f32.mrf.mxu0
    %v4861 = vadd.f32 %v4764, %v4860
    %v4862 = vand.u32 %v565, 4294901760
    %4863 = vmatmul.f32.gmra.mxu0 %v4862
    %v4864 = vpop.f32.mrf.mxu0
    %v4865 = vadd.f32 %v4768, %v4864
    %v4866 = vand.u32 %v577, 4294901760
    %4867 = vmatmul.f32.gmra.mxu0 %v4866
    %v4868 = vpop.f32.mrf.mxu0
    %v4869 = vadd.f32 %v4772, %v4868
    %v4870 = vand.u32 %v589, 4294901760
    %4871 = vmatmul.f32.gmra.mxu0 %v4870
    %v4872 = vpop.f32.mrf.mxu0
    %v4873 = vadd.f32 %v4776, %v4872
    %v4874 = vand.u32 %v601, 4294901760
    %4875 = vmatmul.f32.gmra.mxu0 %v4874
    %v4876 = vpop.f32.mrf.mxu0
    %v4877 = vadd.f32 %v4780, %v4876
    %v4878 = vand.u32 %v613, 4294901760
    %4879 = vmatmul.f32.gmra.mxu0 %v4878
    %v4880 = vpop.f32.mrf.mxu0
    %v4881 = vadd.f32 %v4784, %v4880
    %v4882 = vand.u32 %v625, 4294901760
    %4883 = vmatmul.f32.gmra.mxu0 %v4882
    %v4884 = vpop.f32.mrf.mxu0
    %v4885 = vadd.f32 %v4788, %v4884
    %v4886 = vand.u32 %v637, 4294901760
    %4887 = vmatmul.f32.gmra.mxu0 %v4886
    %v4888 = vpop.f32.mrf.mxu0
    %v4889 = vadd.f32 %v4792, %v4888
    %v4890 = vand.u32 %v649, 4294901760
    %4891 = vmatmul.f32.gmra.mxu0 %v4890
    %v4892 = vpop.f32.mrf.mxu0
    %v4893 = vadd.f32 %v4796, %v4892
    %v4894 = vand.u32 %v661, 4294901760
    %4895 = vmatmul.f32.gmra.mxu0 %v4894
    %v4896 = vpop.f32.mrf.mxu0
    %v4897 = vadd.f32 %v4800, %v4896
    %v4898 = vand.u32 %v673, 4294901760
    %4899 = vmatmul.f32.gmra.mxu0 %v4898
    %v4900 = vpop.f32.mrf.mxu0
    %v4901 = vadd.f32 %v4804, %v4900
    %4902 = vdwg.mxu0
    %v4903 = vand.u32 %v776, 4294901760
    %4904 = vmatpush.msra.mxu0 %v4903
    %v4905 = vand.u32 %v775, 4294901760
    %4906 = vmatpush.msra.mxu0 %v4905
    %v4907 = vand.u32 %v774, 4294901760
    %4908 = vmatpush.msra.mxu0 %v4907
    %v4909 = vand.u32 %v773, 4294901760
    %4910 = vmatpush.msra.mxu0 %v4909
    %v4911 = vand.u32 %v772, 4294901760
    %4912 = vmatpush.msra.mxu0 %v4911
    %v4913 = vand.u32 %v771, 4294901760
    %4914 = vmatpush.msra.mxu0 %v4913
    %v4915 = vand.u32 %v770, 4294901760
    %4916 = vmatpush.msra.mxu0 %v4915
    %v4917 = vand.u32 %v769, 4294901760
    %4918 = vmatpush.msra.mxu0 %v4917
    %v4919 = vand.u32 %v768, 4294901760
    %4920 = vmatpush.msra.mxu0 %v4919
    %v4921 = vand.u32 %v767, 4294901760
    %4922 = vmatpush.msra.mxu0 %v4921
    %v4923 = vand.u32 %v766, 4294901760
    %4924 = vmatpush.msra.mxu0 %v4923
    %v4925 = vand.u32 %v765, 4294901760
    %4926 = vmatpush.msra.mxu0 %v4925
    %v4927 = vand.u32 %v764, 4294901760
    %4928 = vmatpush.msra.mxu0 %v4927
    %v4929 = vand.u32 %v763, 4294901760
    %4930 = vmatpush.msra.mxu0 %v4929
    %v4931 = vand.u32 %v762, 4294901760
    %4932 = vmatpush.msra.mxu0 %v4931
    %v4933 = vand.u32 %v761, 4294901760
    %4934 = vmatpush.msra.mxu0 %v4933
    %v4935 = vand.u32 %v494, 4294901760
    %v4936 = vsub.f32 %v494, %v4935
    %v4937 = vand.u32 %v4936, 4294901760
    %v4938 = vsub.f32 %v4936, %v4937
    %v4939 = vand.u32 %v4938, 4294901760
    %4940 = vmatmul.f32.gmra.mxu0 %v4939
    %v4941 = vpop.f32.mrf.mxu0
    %v4942 = vadd.f32 %v4841, %v4941
    %v4943 = vand.u32 %v506, 4294901760
    %v4944 = vsub.f32 %v506, %v4943
    %v4945 = vand.u32 %v4944, 4294901760
    %v4946 = vsub.f32 %v4944, %v4945
    %v4947 = vand.u32 %v4946, 4294901760
    %4948 = vmatmul.f32.gmra.mxu0 %v4947
    %v4949 = vpop.f32.mrf.mxu0
    %v4950 = vadd.f32 %v4845, %v4949
    %v4951 = vand.u32 %v518, 4294901760
    %v4952 = vsub.f32 %v518, %v4951
    %v4953 = vand.u32 %v4952, 4294901760
    %v4954 = vsub.f32 %v4952, %v4953
    %v4955 = vand.u32 %v4954, 4294901760
    %4956 = vmatmul.f32.gmra.mxu0 %v4955
    %v4957 = vpop.f32.mrf.mxu0
    %v4958 = vadd.f32 %v4849, %v4957
    %v4959 = vand.u32 %v530, 4294901760
    %v4960 = vsub.f32 %v530, %v4959
    %v4961 = vand.u32 %v4960, 4294901760
    %v4962 = vsub.f32 %v4960, %v4961
    %v4963 = vand.u32 %v4962, 4294901760
    %4964 = vmatmul.f32.gmra.mxu0 %v4963
    %v4965 = vpop.f32.mrf.mxu0
    %v4966 = vadd.f32 %v4853, %v4965
    %v4967 = vand.u32 %v542, 4294901760
    %v4968 = vsub.f32 %v542, %v4967
    %v4969 = vand.u32 %v4968, 4294901760
    %v4970 = vsub.f32 %v4968, %v4969
    %v4971 = vand.u32 %v4970, 4294901760
    %4972 = vmatmul.f32.gmra.mxu0 %v4971
    %v4973 = vpop.f32.mrf.mxu0
    %v4974 = vadd.f32 %v4857, %v4973
    %v4975 = vand.u32 %v554, 4294901760
    %v4976 = vsub.f32 %v554, %v4975
    %v4977 = vand.u32 %v4976, 4294901760
    %v4978 = vsub.f32 %v4976, %v4977
    %v4979 = vand.u32 %v4978, 4294901760
    %4980 = vmatmul.f32.gmra.mxu0 %v4979
    %v4981 = vpop.f32.mrf.mxu0
    %v4982 = vadd.f32 %v4861, %v4981
    %v4983 = vand.u32 %v566, 4294901760
    %v4984 = vsub.f32 %v566, %v4983
    %v4985 = vand.u32 %v4984, 4294901760
    %v4986 = vsub.f32 %v4984, %v4985
    %v4987 = vand.u32 %v4986, 4294901760
    %4988 = vmatmul.f32.gmra.mxu0 %v4987
    %v4989 = vpop.f32.mrf.mxu0
    %v4990 = vadd.f32 %v4865, %v4989
    %v4991 = vand.u32 %v578, 4294901760
    %v4992 = vsub.f32 %v578, %v4991
    %v4993 = vand.u32 %v4992, 4294901760
    %v4994 = vsub.f32 %v4992, %v4993
    %v4995 = vand.u32 %v4994, 4294901760
    %4996 = vmatmul.f32.gmra.mxu0 %v4995
    %v4997 = vpop.f32.mrf.mxu0
    %v4998 = vadd.f32 %v4869, %v4997
    %v4999 = vand.u32 %v590, 4294901760
    %v5000 = vsub.f32 %v590, %v4999
    %v5001 = vand.u32 %v5000, 4294901760
    %v5002 = vsub.f32 %v5000, %v5001
    %v5003 = vand.u32 %v5002, 4294901760
    %5004 = vmatmul.f32.gmra.mxu0 %v5003
    %v5005 = vpop.f32.mrf.mxu0
    %v5006 = vadd.f32 %v4873, %v5005
    %v5007 = vand.u32 %v602, 4294901760
    %v5008 = vsub.f32 %v602, %v5007
    %v5009 = vand.u32 %v5008, 4294901760
    %v5010 = vsub.f32 %v5008, %v5009
    %v5011 = vand.u32 %v5010, 4294901760
    %5012 = vmatmul.f32.gmra.mxu0 %v5011
    %v5013 = vpop.f32.mrf.mxu0
    %v5014 = vadd.f32 %v4877, %v5013
    %v5015 = vand.u32 %v614, 4294901760
    %v5016 = vsub.f32 %v614, %v5015
    %v5017 = vand.u32 %v5016, 4294901760
    %v5018 = vsub.f32 %v5016, %v5017
    %v5019 = vand.u32 %v5018, 4294901760
    %5020 = vmatmul.f32.gmra.mxu0 %v5019
    %v5021 = vpop.f32.mrf.mxu0
    %v5022 = vadd.f32 %v4881, %v5021
    %v5023 = vand.u32 %v626, 4294901760
    %v5024 = vsub.f32 %v626, %v5023
    %v5025 = vand.u32 %v5024, 4294901760
    %v5026 = vsub.f32 %v5024, %v5025
    %v5027 = vand.u32 %v5026, 4294901760
    %5028 = vmatmul.f32.gmra.mxu0 %v5027
    %v5029 = vpop.f32.mrf.mxu0
    %v5030 = vadd.f32 %v4885, %v5029
    %v5031 = vand.u32 %v638, 4294901760
    %v5032 = vsub.f32 %v638, %v5031
    %v5033 = vand.u32 %v5032, 4294901760
    %v5034 = vsub.f32 %v5032, %v5033
    %v5035 = vand.u32 %v5034, 4294901760
    %5036 = vmatmul.f32.gmra.mxu0 %v5035
    %v5037 = vpop.f32.mrf.mxu0
    %v5038 = vadd.f32 %v4889, %v5037
    %v5039 = vand.u32 %v650, 4294901760
    %v5040 = vsub.f32 %v650, %v5039
    %v5041 = vand.u32 %v5040, 4294901760
    %v5042 = vsub.f32 %v5040, %v5041
    %v5043 = vand.u32 %v5042, 4294901760
    %5044 = vmatmul.f32.gmra.mxu0 %v5043
    %v5045 = vpop.f32.mrf.mxu0
    %v5046 = vadd.f32 %v4893, %v5045
    %v5047 = vand.u32 %v662, 4294901760
    %v5048 = vsub.f32 %v662, %v5047
    %v5049 = vand.u32 %v5048, 4294901760
    %v5050 = vsub.f32 %v5048, %v5049
    %v5051 = vand.u32 %v5050, 4294901760
    %5052 = vmatmul.f32.gmra.mxu0 %v5051
    %v5053 = vpop.f32.mrf.mxu0
    %v5054 = vadd.f32 %v4897, %v5053
    %v5055 = vand.u32 %v674, 4294901760
    %v5056 = vsub.f32 %v674, %v5055
    %v5057 = vand.u32 %v5056, 4294901760
    %v5058 = vsub.f32 %v5056, %v5057
    %v5059 = vand.u32 %v5058, 4294901760
    %5060 = vmatmul.f32.gmra.mxu0 %v5059
    %v5061 = vpop.f32.mrf.mxu0
    %v5062 = vadd.f32 %v4901, %v5061
    %5063 = vdwg.mxu0
    %v5064 = vand.u32 %v776, 4294901760
    %v5065 = vsub.f32 %v776, %v5064
    %v5066 = vand.u32 %v5065, 4294901760
    %v5067 = vsub.f32 %v5065, %v5066
    %v5068 = vand.u32 %v5067, 4294901760
    %5069 = vmatpush.msra.mxu0 %v5068
    %v5070 = vand.u32 %v775, 4294901760
    %v5071 = vsub.f32 %v775, %v5070
    %v5072 = vand.u32 %v5071, 4294901760
    %v5073 = vsub.f32 %v5071, %v5072
    %v5074 = vand.u32 %v5073, 4294901760
    %5075 = vmatpush.msra.mxu0 %v5074
    %v5076 = vand.u32 %v774, 4294901760
    %v5077 = vsub.f32 %v774, %v5076
    %v5078 = vand.u32 %v5077, 4294901760
    %v5079 = vsub.f32 %v5077, %v5078
    %v5080 = vand.u32 %v5079, 4294901760
    %5081 = vmatpush.msra.mxu0 %v5080
    %v5082 = vand.u32 %v773, 4294901760
    %v5083 = vsub.f32 %v773, %v5082
    %v5084 = vand.u32 %v5083, 4294901760
    %v5085 = vsub.f32 %v5083, %v5084
    %v5086 = vand.u32 %v5085, 4294901760
    %5087 = vmatpush.msra.mxu0 %v5086
    %v5088 = vand.u32 %v772, 4294901760
    %v5089 = vsub.f32 %v772, %v5088
    %v5090 = vand.u32 %v5089, 4294901760
    %v5091 = vsub.f32 %v5089, %v5090
    %v5092 = vand.u32 %v5091, 4294901760
    %5093 = vmatpush.msra.mxu0 %v5092
    %v5094 = vand.u32 %v771, 4294901760
    %v5095 = vsub.f32 %v771, %v5094
    %v5096 = vand.u32 %v5095, 4294901760
    %v5097 = vsub.f32 %v5095, %v5096
    %v5098 = vand.u32 %v5097, 4294901760
    %5099 = vmatpush.msra.mxu0 %v5098
    %v5100 = vand.u32 %v770, 4294901760
    %v5101 = vsub.f32 %v770, %v5100
    %v5102 = vand.u32 %v5101, 4294901760
    %v5103 = vsub.f32 %v5101, %v5102
    %v5104 = vand.u32 %v5103, 4294901760
    %5105 = vmatpush.msra.mxu0 %v5104
    %v5106 = vand.u32 %v769, 4294901760
    %v5107 = vsub.f32 %v769, %v5106
    %v5108 = vand.u32 %v5107, 4294901760
    %v5109 = vsub.f32 %v5107, %v5108
    %v5110 = vand.u32 %v5109, 4294901760
    %5111 = vmatpush.msra.mxu0 %v5110
    %v5112 = vand.u32 %v768, 4294901760
    %v5113 = vsub.f32 %v768, %v5112
    %v5114 = vand.u32 %v5113, 4294901760
    %v5115 = vsub.f32 %v5113, %v5114
    %v5116 = vand.u32 %v5115, 4294901760
    %5117 = vmatpush.msra.mxu0 %v5116
    %v5118 = vand.u32 %v767, 4294901760
    %v5119 = vsub.f32 %v767, %v5118
    %v5120 = vand.u32 %v5119, 4294901760
    %v5121 = vsub.f32 %v5119, %v5120
    %v5122 = vand.u32 %v5121, 4294901760
    %5123 = vmatpush.msra.mxu0 %v5122
    %v5124 = vand.u32 %v766, 4294901760
    %v5125 = vsub.f32 %v766, %v5124
    %v5126 = vand.u32 %v5125, 4294901760
    %v5127 = vsub.f32 %v5125, %v5126
    %v5128 = vand.u32 %v5127, 4294901760
    %5129 = vmatpush.msra.mxu0 %v5128
    %v5130 = vand.u32 %v765, 4294901760
    %v5131 = vsub.f32 %v765, %v5130
    %v5132 = vand.u32 %v5131, 4294901760
    %v5133 = vsub.f32 %v5131, %v5132
    %v5134 = vand.u32 %v5133, 4294901760
    %5135 = vmatpush.msra.mxu0 %v5134
    %v5136 = vand.u32 %v764, 4294901760
    %v5137 = vsub.f32 %v764, %v5136
    %v5138 = vand.u32 %v5137, 4294901760
    %v5139 = vsub.f32 %v5137, %v5138
    %v5140 = vand.u32 %v5139, 4294901760
    %5141 = vmatpush.msra.mxu0 %v5140
    %v5142 = vand.u32 %v763, 4294901760
    %v5143 = vsub.f32 %v763, %v5142
    %v5144 = vand.u32 %v5143, 4294901760
    %v5145 = vsub.f32 %v5143, %v5144
    %v5146 = vand.u32 %v5145, 4294901760
    %5147 = vmatpush.msra.mxu0 %v5146
    %v5148 = vand.u32 %v762, 4294901760
    %v5149 = vsub.f32 %v762, %v5148
    %v5150 = vand.u32 %v5149, 4294901760
    %v5151 = vsub.f32 %v5149, %v5150
    %v5152 = vand.u32 %v5151, 4294901760
    %5153 = vmatpush.msra.mxu0 %v5152
    %v5154 = vand.u32 %v761, 4294901760
    %v5155 = vsub.f32 %v761, %v5154
    %v5156 = vand.u32 %v5155, 4294901760
    %v5157 = vsub.f32 %v5155, %v5156
    %v5158 = vand.u32 %v5157, 4294901760
    %5159 = vmatpush.msra.mxu0 %v5158
    %v5160 = vand.u32 %v494, 4294901760
    %5161 = vmatmul.f32.gmra.mxu0 %v5160
    %v5162 = vpop.f32.mrf.mxu0
    %v5163 = vadd.f32 %v4942, %v5162
    %v5164 = vand.u32 %v506, 4294901760
    %5165 = vmatmul.f32.gmra.mxu0 %v5164
    %v5166 = vpop.f32.mrf.mxu0
    %v5167 = vadd.f32 %v4950, %v5166
    %v5168 = vand.u32 %v518, 4294901760
    %5169 = vmatmul.f32.gmra.mxu0 %v5168
    %v5170 = vpop.f32.mrf.mxu0
    %v5171 = vadd.f32 %v4958, %v5170
    %v5172 = vand.u32 %v530, 4294901760
    %5173 = vmatmul.f32.gmra.mxu0 %v5172
    %v5174 = vpop.f32.mrf.mxu0
    %v5175 = vadd.f32 %v4966, %v5174
    %v5176 = vand.u32 %v542, 4294901760
    %5177 = vmatmul.f32.gmra.mxu0 %v5176
    %v5178 = vpop.f32.mrf.mxu0
    %v5179 = vadd.f32 %v4974, %v5178
    %v5180 = vand.u32 %v554, 4294901760
    %5181 = vmatmul.f32.gmra.mxu0 %v5180
    %v5182 = vpop.f32.mrf.mxu0
    %v5183 = vadd.f32 %v4982, %v5182
    %v5184 = vand.u32 %v566, 4294901760
    %5185 = vmatmul.f32.gmra.mxu0 %v5184
    %v5186 = vpop.f32.mrf.mxu0
    %v5187 = vadd.f32 %v4990, %v5186
    %v5188 = vand.u32 %v578, 4294901760
    %5189 = vmatmul.f32.gmra.mxu0 %v5188
    %v5190 = vpop.f32.mrf.mxu0
    %v5191 = vadd.f32 %v4998, %v5190
    %v5192 = vand.u32 %v590, 4294901760
    %5193 = vmatmul.f32.gmra.mxu0 %v5192
    %v5194 = vpop.f32.mrf.mxu0
    %v5195 = vadd.f32 %v5006, %v5194
    %v5196 = vand.u32 %v602, 4294901760
    %5197 = vmatmul.f32.gmra.mxu0 %v5196
    %v5198 = vpop.f32.mrf.mxu0
    %v5199 = vadd.f32 %v5014, %v5198
    %v5200 = vand.u32 %v614, 4294901760
    %5201 = vmatmul.f32.gmra.mxu0 %v5200
    %v5202 = vpop.f32.mrf.mxu0
    %v5203 = vadd.f32 %v5022, %v5202
    %v5204 = vand.u32 %v626, 4294901760
    %5205 = vmatmul.f32.gmra.mxu0 %v5204
    %v5206 = vpop.f32.mrf.mxu0
    %v5207 = vadd.f32 %v5030, %v5206
    %v5208 = vand.u32 %v638, 4294901760
    %5209 = vmatmul.f32.gmra.mxu0 %v5208
    %v5210 = vpop.f32.mrf.mxu0
    %v5211 = vadd.f32 %v5038, %v5210
    %v5212 = vand.u32 %v650, 4294901760
    %5213 = vmatmul.f32.gmra.mxu0 %v5212
    %v5214 = vpop.f32.mrf.mxu0
    %v5215 = vadd.f32 %v5046, %v5214
    %v5216 = vand.u32 %v662, 4294901760
    %5217 = vmatmul.f32.gmra.mxu0 %v5216
    %v5218 = vpop.f32.mrf.mxu0
    %v5219 = vadd.f32 %v5054, %v5218
    %v5220 = vand.u32 %v674, 4294901760
    %5221 = vmatmul.f32.gmra.mxu0 %v5220
    %v5222 = vpop.f32.mrf.mxu0
    %v5223 = vadd.f32 %v5062, %v5222
    %5224 = vdwg.mxu0
    %v5225 = vand.u32 %v776, 4294901760
    %v5226 = vsub.f32 %v776, %v5225
    %5227 = vmatpush.msra.mxu0 %v5226
    %v5228 = vand.u32 %v775, 4294901760
    %v5229 = vsub.f32 %v775, %v5228
    %5230 = vmatpush.msra.mxu0 %v5229
    %v5231 = vand.u32 %v774, 4294901760
    %v5232 = vsub.f32 %v774, %v5231
    %5233 = vmatpush.msra.mxu0 %v5232
    %v5234 = vand.u32 %v773, 4294901760
    %v5235 = vsub.f32 %v773, %v5234
    %5236 = vmatpush.msra.mxu0 %v5235
    %v5237 = vand.u32 %v772, 4294901760
    %v5238 = vsub.f32 %v772, %v5237
    %5239 = vmatpush.msra.mxu0 %v5238
    %v5240 = vand.u32 %v771, 4294901760
    %v5241 = vsub.f32 %v771, %v5240
    %5242 = vmatpush.msra.mxu0 %v5241
    %v5243 = vand.u32 %v770, 4294901760
    %v5244 = vsub.f32 %v770, %v5243
    %5245 = vmatpush.msra.mxu0 %v5244
    %v5246 = vand.u32 %v769, 4294901760
    %v5247 = vsub.f32 %v769, %v5246
    %5248 = vmatpush.msra.mxu0 %v5247
    %v5249 = vand.u32 %v768, 4294901760
    %v5250 = vsub.f32 %v768, %v5249
    %5251 = vmatpush.msra.mxu0 %v5250
    %v5252 = vand.u32 %v767, 4294901760
    %v5253 = vsub.f32 %v767, %v5252
    %5254 = vmatpush.msra.mxu0 %v5253
    %v5255 = vand.u32 %v766, 4294901760
    %v5256 = vsub.f32 %v766, %v5255
    %5257 = vmatpush.msra.mxu0 %v5256
    %v5258 = vand.u32 %v765, 4294901760
    %v5259 = vsub.f32 %v765, %v5258
    %5260 = vmatpush.msra.mxu0 %v5259
    %v5261 = vand.u32 %v764, 4294901760
    %v5262 = vsub.f32 %v764, %v5261
    %5263 = vmatpush.msra.mxu0 %v5262
    %v5264 = vand.u32 %v763, 4294901760
    %v5265 = vsub.f32 %v763, %v5264
    %5266 = vmatpush.msra.mxu0 %v5265
    %v5267 = vand.u32 %v762, 4294901760
    %v5268 = vsub.f32 %v762, %v5267
    %5269 = vmatpush.msra.mxu0 %v5268
    %v5270 = vand.u32 %v761, 4294901760
    %v5271 = vsub.f32 %v761, %v5270
    %5272 = vmatpush.msra.mxu0 %v5271
    %v5273 = vand.u32 %v494, 4294901760
    %v5274 = vsub.f32 %v494, %v5273
    %5275 = vmatmul.f32.gmra.mxu0 %v5274
    %v5276 = vpop.f32.mrf.mxu0
    %v5277 = vadd.f32 %v5163, %v5276
    %v5278 = vand.u32 %v506, 4294901760
    %v5279 = vsub.f32 %v506, %v5278
    %5280 = vmatmul.f32.gmra.mxu0 %v5279
    %v5281 = vpop.f32.mrf.mxu0
    %v5282 = vadd.f32 %v5167, %v5281
    %v5283 = vand.u32 %v518, 4294901760
    %v5284 = vsub.f32 %v518, %v5283
    %5285 = vmatmul.f32.gmra.mxu0 %v5284
    %v5286 = vpop.f32.mrf.mxu0
    %v5287 = vadd.f32 %v5171, %v5286
    %v5288 = vand.u32 %v530, 4294901760
    %v5289 = vsub.f32 %v530, %v5288
    %5290 = vmatmul.f32.gmra.mxu0 %v5289
    %v5291 = vpop.f32.mrf.mxu0
    %v5292 = vadd.f32 %v5175, %v5291
    %v5293 = vand.u32 %v542, 4294901760
    %v5294 = vsub.f32 %v542, %v5293
    %5295 = vmatmul.f32.gmra.mxu0 %v5294
    %v5296 = vpop.f32.mrf.mxu0
    %v5297 = vadd.f32 %v5179, %v5296
    %v5298 = vand.u32 %v554, 4294901760
    %v5299 = vsub.f32 %v554, %v5298
    %5300 = vmatmul.f32.gmra.mxu0 %v5299
    %v5301 = vpop.f32.mrf.mxu0
    %v5302 = vadd.f32 %v5183, %v5301
    %v5303 = vand.u32 %v566, 4294901760
    %v5304 = vsub.f32 %v566, %v5303
    %5305 = vmatmul.f32.gmra.mxu0 %v5304
    %v5306 = vpop.f32.mrf.mxu0
    %v5307 = vadd.f32 %v5187, %v5306
    %v5308 = vand.u32 %v578, 4294901760
    %v5309 = vsub.f32 %v578, %v5308
    %5310 = vmatmul.f32.gmra.mxu0 %v5309
    %v5311 = vpop.f32.mrf.mxu0
    %v5312 = vadd.f32 %v5191, %v5311
    %v5313 = vand.u32 %v590, 4294901760
    %v5314 = vsub.f32 %v590, %v5313
    %5315 = vmatmul.f32.gmra.mxu0 %v5314
    %v5316 = vpop.f32.mrf.mxu0
    %v5317 = vadd.f32 %v5195, %v5316
    %v5318 = vand.u32 %v602, 4294901760
    %v5319 = vsub.f32 %v602, %v5318
    %5320 = vmatmul.f32.gmra.mxu0 %v5319
    %v5321 = vpop.f32.mrf.mxu0
    %v5322 = vadd.f32 %v5199, %v5321
    %v5323 = vand.u32 %v614, 4294901760
    %v5324 = vsub.f32 %v614, %v5323
    %5325 = vmatmul.f32.gmra.mxu0 %v5324
    %v5326 = vpop.f32.mrf.mxu0
    %v5327 = vadd.f32 %v5203, %v5326
    %v5328 = vand.u32 %v626, 4294901760
    %v5329 = vsub.f32 %v626, %v5328
    %5330 = vmatmul.f32.gmra.mxu0 %v5329
    %v5331 = vpop.f32.mrf.mxu0
    %v5332 = vadd.f32 %v5207, %v5331
    %v5333 = vand.u32 %v638, 4294901760
    %v5334 = vsub.f32 %v638, %v5333
    %5335 = vmatmul.f32.gmra.mxu0 %v5334
    %v5336 = vpop.f32.mrf.mxu0
    %v5337 = vadd.f32 %v5211, %v5336
    %v5338 = vand.u32 %v650, 4294901760
    %v5339 = vsub.f32 %v650, %v5338
    %5340 = vmatmul.f32.gmra.mxu0 %v5339
    %v5341 = vpop.f32.mrf.mxu0
    %v5342 = vadd.f32 %v5215, %v5341
    %v5343 = vand.u32 %v662, 4294901760
    %v5344 = vsub.f32 %v662, %v5343
    %5345 = vmatmul.f32.gmra.mxu0 %v5344
    %v5346 = vpop.f32.mrf.mxu0
    %v5347 = vadd.f32 %v5219, %v5346
    %v5348 = vand.u32 %v674, 4294901760
    %v5349 = vsub.f32 %v674, %v5348
    %5350 = vmatmul.f32.gmra.mxu0 %v5349
    %v5351 = vpop.f32.mrf.mxu0
    %v5352 = vadd.f32 %v5223, %v5351
    %5353 = vdwg.mxu0
    %v5354 = vand.u32 %v776, 4294901760
    %5355 = vmatpush.msra.mxu0 %v5354
    %v5356 = vand.u32 %v775, 4294901760
    %5357 = vmatpush.msra.mxu0 %v5356
    %v5358 = vand.u32 %v774, 4294901760
    %5359 = vmatpush.msra.mxu0 %v5358
    %v5360 = vand.u32 %v773, 4294901760
    %5361 = vmatpush.msra.mxu0 %v5360
    %v5362 = vand.u32 %v772, 4294901760
    %5363 = vmatpush.msra.mxu0 %v5362
    %v5364 = vand.u32 %v771, 4294901760
    %5365 = vmatpush.msra.mxu0 %v5364
    %v5366 = vand.u32 %v770, 4294901760
    %5367 = vmatpush.msra.mxu0 %v5366
    %v5368 = vand.u32 %v769, 4294901760
    %5369 = vmatpush.msra.mxu0 %v5368
    %v5370 = vand.u32 %v768, 4294901760
    %5371 = vmatpush.msra.mxu0 %v5370
    %v5372 = vand.u32 %v767, 4294901760
    %5373 = vmatpush.msra.mxu0 %v5372
    %v5374 = vand.u32 %v766, 4294901760
    %5375 = vmatpush.msra.mxu0 %v5374
    %v5376 = vand.u32 %v765, 4294901760
    %5377 = vmatpush.msra.mxu0 %v5376
    %v5378 = vand.u32 %v764, 4294901760
    %5379 = vmatpush.msra.mxu0 %v5378
    %v5380 = vand.u32 %v763, 4294901760
    %5381 = vmatpush.msra.mxu0 %v5380
    %v5382 = vand.u32 %v762, 4294901760
    %5383 = vmatpush.msra.mxu0 %v5382
    %v5384 = vand.u32 %v761, 4294901760
    %5385 = vmatpush.msra.mxu0 %v5384
    %v5386 = vand.u32 %v494, 4294901760
    %v5387 = vsub.f32 %v494, %v5386
    %v5388 = vand.u32 %v5387, 4294901760
    %5389 = vmatmul.f32.gmra.mxu0 %v5388
    %v5390 = vpop.f32.mrf.mxu0
    %v5391 = vadd.f32 %v5277, %v5390
    %v5392 = vand.u32 %v506, 4294901760
    %v5393 = vsub.f32 %v506, %v5392
    %v5394 = vand.u32 %v5393, 4294901760
    %5395 = vmatmul.f32.gmra.mxu0 %v5394
    %v5396 = vpop.f32.mrf.mxu0
    %v5397 = vadd.f32 %v5282, %v5396
    %v5398 = vand.u32 %v518, 4294901760
    %v5399 = vsub.f32 %v518, %v5398
    %v5400 = vand.u32 %v5399, 4294901760
    %5401 = vmatmul.f32.gmra.mxu0 %v5400
    %v5402 = vpop.f32.mrf.mxu0
    %v5403 = vadd.f32 %v5287, %v5402
    %v5404 = vand.u32 %v530, 4294901760
    %v5405 = vsub.f32 %v530, %v5404
    %v5406 = vand.u32 %v5405, 4294901760
    %5407 = vmatmul.f32.gmra.mxu0 %v5406
    %v5408 = vpop.f32.mrf.mxu0
    %v5409 = vadd.f32 %v5292, %v5408
    %v5410 = vand.u32 %v542, 4294901760
    %v5411 = vsub.f32 %v542, %v5410
    %v5412 = vand.u32 %v5411, 4294901760
    %5413 = vmatmul.f32.gmra.mxu0 %v5412
    %v5414 = vpop.f32.mrf.mxu0
    %v5415 = vadd.f32 %v5297, %v5414
    %v5416 = vand.u32 %v554, 4294901760
    %v5417 = vsub.f32 %v554, %v5416
    %v5418 = vand.u32 %v5417, 4294901760
    %5419 = vmatmul.f32.gmra.mxu0 %v5418
    %v5420 = vpop.f32.mrf.mxu0
    %v5421 = vadd.f32 %v5302, %v5420
    %v5422 = vand.u32 %v566, 4294901760
    %v5423 = vsub.f32 %v566, %v5422
    %v5424 = vand.u32 %v5423, 4294901760
    %5425 = vmatmul.f32.gmra.mxu0 %v5424
    %v5426 = vpop.f32.mrf.mxu0
    %v5427 = vadd.f32 %v5307, %v5426
    %v5428 = vand.u32 %v578, 4294901760
    %v5429 = vsub.f32 %v578, %v5428
    %v5430 = vand.u32 %v5429, 4294901760
    %5431 = vmatmul.f32.gmra.mxu0 %v5430
    %v5432 = vpop.f32.mrf.mxu0
    %v5433 = vadd.f32 %v5312, %v5432
    %v5434 = vand.u32 %v590, 4294901760
    %v5435 = vsub.f32 %v590, %v5434
    %v5436 = vand.u32 %v5435, 4294901760
    %5437 = vmatmul.f32.gmra.mxu0 %v5436
    %v5438 = vpop.f32.mrf.mxu0
    %v5439 = vadd.f32 %v5317, %v5438
    %v5440 = vand.u32 %v602, 4294901760
    %v5441 = vsub.f32 %v602, %v5440
    %v5442 = vand.u32 %v5441, 4294901760
    %5443 = vmatmul.f32.gmra.mxu0 %v5442
    %v5444 = vpop.f32.mrf.mxu0
    %v5445 = vadd.f32 %v5322, %v5444
    %v5446 = vand.u32 %v614, 4294901760
    %v5447 = vsub.f32 %v614, %v5446
    %v5448 = vand.u32 %v5447, 4294901760
    %5449 = vmatmul.f32.gmra.mxu0 %v5448
    %v5450 = vpop.f32.mrf.mxu0
    %v5451 = vadd.f32 %v5327, %v5450
    %v5452 = vand.u32 %v626, 4294901760
    %v5453 = vsub.f32 %v626, %v5452
    %v5454 = vand.u32 %v5453, 4294901760
    %5455 = vmatmul.f32.gmra.mxu0 %v5454
    %v5456 = vpop.f32.mrf.mxu0
    %v5457 = vadd.f32 %v5332, %v5456
    %v5458 = vand.u32 %v638, 4294901760
    %v5459 = vsub.f32 %v638, %v5458
    %v5460 = vand.u32 %v5459, 4294901760
    %5461 = vmatmul.f32.gmra.mxu0 %v5460
    %v5462 = vpop.f32.mrf.mxu0
    %v5463 = vadd.f32 %v5337, %v5462
    %v5464 = vand.u32 %v650, 4294901760
    %v5465 = vsub.f32 %v650, %v5464
    %v5466 = vand.u32 %v5465, 4294901760
    %5467 = vmatmul.f32.gmra.mxu0 %v5466
    %v5468 = vpop.f32.mrf.mxu0
    %v5469 = vadd.f32 %v5342, %v5468
    %v5470 = vand.u32 %v662, 4294901760
    %v5471 = vsub.f32 %v662, %v5470
    %v5472 = vand.u32 %v5471, 4294901760
    %5473 = vmatmul.f32.gmra.mxu0 %v5472
    %v5474 = vpop.f32.mrf.mxu0
    %v5475 = vadd.f32 %v5347, %v5474
    %v5476 = vand.u32 %v674, 4294901760
    %v5477 = vsub.f32 %v674, %v5476
    %v5478 = vand.u32 %v5477, 4294901760
    %5479 = vmatmul.f32.gmra.mxu0 %v5478
    %v5480 = vpop.f32.mrf.mxu0
    %v5481 = vadd.f32 %v5352, %v5480
    %5482 = vdwg.mxu0
    %v5483 = vand.u32 %v776, 4294901760
    %v5484 = vsub.f32 %v776, %v5483
    %v5485 = vand.u32 %v5484, 4294901760
    %5486 = vmatpush.msra.mxu0 %v5485
    %v5487 = vand.u32 %v775, 4294901760
    %v5488 = vsub.f32 %v775, %v5487
    %v5489 = vand.u32 %v5488, 4294901760
    %5490 = vmatpush.msra.mxu0 %v5489
    %v5491 = vand.u32 %v774, 4294901760
    %v5492 = vsub.f32 %v774, %v5491
    %v5493 = vand.u32 %v5492, 4294901760
    %5494 = vmatpush.msra.mxu0 %v5493
    %v5495 = vand.u32 %v773, 4294901760
    %v5496 = vsub.f32 %v773, %v5495
    %v5497 = vand.u32 %v5496, 4294901760
    %5498 = vmatpush.msra.mxu0 %v5497
    %v5499 = vand.u32 %v772, 4294901760
    %v5500 = vsub.f32 %v772, %v5499
    %v5501 = vand.u32 %v5500, 4294901760
    %5502 = vmatpush.msra.mxu0 %v5501
    %v5503 = vand.u32 %v771, 4294901760
    %v5504 = vsub.f32 %v771, %v5503
    %v5505 = vand.u32 %v5504, 4294901760
    %5506 = vmatpush.msra.mxu0 %v5505
    %v5507 = vand.u32 %v770, 4294901760
    %v5508 = vsub.f32 %v770, %v5507
    %v5509 = vand.u32 %v5508, 4294901760
    %5510 = vmatpush.msra.mxu0 %v5509
    %v5511 = vand.u32 %v769, 4294901760
    %v5512 = vsub.f32 %v769, %v5511
    %v5513 = vand.u32 %v5512, 4294901760
    %5514 = vmatpush.msra.mxu0 %v5513
    %v5515 = vand.u32 %v768, 4294901760
    %v5516 = vsub.f32 %v768, %v5515
    %v5517 = vand.u32 %v5516, 4294901760
    %5518 = vmatpush.msra.mxu0 %v5517
    %v5519 = vand.u32 %v767, 4294901760
    %v5520 = vsub.f32 %v767, %v5519
    %v5521 = vand.u32 %v5520, 4294901760
    %5522 = vmatpush.msra.mxu0 %v5521
    %v5523 = vand.u32 %v766, 4294901760
    %v5524 = vsub.f32 %v766, %v5523
    %v5525 = vand.u32 %v5524, 4294901760
    %5526 = vmatpush.msra.mxu0 %v5525
    %v5527 = vand.u32 %v765, 4294901760
    %v5528 = vsub.f32 %v765, %v5527
    %v5529 = vand.u32 %v5528, 4294901760
    %5530 = vmatpush.msra.mxu0 %v5529
    %v5531 = vand.u32 %v764, 4294901760
    %v5532 = vsub.f32 %v764, %v5531
    %v5533 = vand.u32 %v5532, 4294901760
    %5534 = vmatpush.msra.mxu0 %v5533
    %v5535 = vand.u32 %v763, 4294901760
    %v5536 = vsub.f32 %v763, %v5535
    %v5537 = vand.u32 %v5536, 4294901760
    %5538 = vmatpush.msra.mxu0 %v5537
    %v5539 = vand.u32 %v762, 4294901760
    %v5540 = vsub.f32 %v762, %v5539
    %v5541 = vand.u32 %v5540, 4294901760
    %5542 = vmatpush.msra.mxu0 %v5541
    %v5543 = vand.u32 %v761, 4294901760
    %v5544 = vsub.f32 %v761, %v5543
    %v5545 = vand.u32 %v5544, 4294901760
    %5546 = vmatpush.msra.mxu0 %v5545
    %v5547 = vand.u32 %v494, 4294901760
    %5548 = vmatmul.f32.gmra.mxu0 %v5547
    %v5549 = vpop.f32.mrf.mxu0
    %v5550 = vadd.f32 %v5391, %v5549
    %v5551 = vand.u32 %v506, 4294901760
    %5552 = vmatmul.f32.gmra.mxu0 %v5551
    %v5553 = vpop.f32.mrf.mxu0
    %v5554 = vadd.f32 %v5397, %v5553
    %v5555 = vand.u32 %v518, 4294901760
    %5556 = vmatmul.f32.gmra.mxu0 %v5555
    %v5557 = vpop.f32.mrf.mxu0
    %v5558 = vadd.f32 %v5403, %v5557
    %v5559 = vand.u32 %v530, 4294901760
    %5560 = vmatmul.f32.gmra.mxu0 %v5559
    %v5561 = vpop.f32.mrf.mxu0
    %v5562 = vadd.f32 %v5409, %v5561
    %v5563 = vand.u32 %v542, 4294901760
    %5564 = vmatmul.f32.gmra.mxu0 %v5563
    %v5565 = vpop.f32.mrf.mxu0
    %v5566 = vadd.f32 %v5415, %v5565
    %v5567 = vand.u32 %v554, 4294901760
    %5568 = vmatmul.f32.gmra.mxu0 %v5567
    %v5569 = vpop.f32.mrf.mxu0
    %v5570 = vadd.f32 %v5421, %v5569
    %v5571 = vand.u32 %v566, 4294901760
    %5572 = vmatmul.f32.gmra.mxu0 %v5571
    %v5573 = vpop.f32.mrf.mxu0
    %v5574 = vadd.f32 %v5427, %v5573
    %v5575 = vand.u32 %v578, 4294901760
    %5576 = vmatmul.f32.gmra.mxu0 %v5575
    %v5577 = vpop.f32.mrf.mxu0
    %v5578 = vadd.f32 %v5433, %v5577
    %v5579 = vand.u32 %v590, 4294901760
    %5580 = vmatmul.f32.gmra.mxu0 %v5579
    %v5581 = vpop.f32.mrf.mxu0
    %v5582 = vadd.f32 %v5439, %v5581
    %v5583 = vand.u32 %v602, 4294901760
    %5584 = vmatmul.f32.gmra.mxu0 %v5583
    %v5585 = vpop.f32.mrf.mxu0
    %v5586 = vadd.f32 %v5445, %v5585
    %v5587 = vand.u32 %v614, 4294901760
    %5588 = vmatmul.f32.gmra.mxu0 %v5587
    %v5589 = vpop.f32.mrf.mxu0
    %v5590 = vadd.f32 %v5451, %v5589
    %v5591 = vand.u32 %v626, 4294901760
    %5592 = vmatmul.f32.gmra.mxu0 %v5591
    %v5593 = vpop.f32.mrf.mxu0
    %v5594 = vadd.f32 %v5457, %v5593
    %v5595 = vand.u32 %v638, 4294901760
    %5596 = vmatmul.f32.gmra.mxu0 %v5595
    %v5597 = vpop.f32.mrf.mxu0
    %v5598 = vadd.f32 %v5463, %v5597
    %v5599 = vand.u32 %v650, 4294901760
    %5600 = vmatmul.f32.gmra.mxu0 %v5599
    %v5601 = vpop.f32.mrf.mxu0
    %v5602 = vadd.f32 %v5469, %v5601
    %v5603 = vand.u32 %v662, 4294901760
    %5604 = vmatmul.f32.gmra.mxu0 %v5603
    %v5605 = vpop.f32.mrf.mxu0
    %v5606 = vadd.f32 %v5475, %v5605
    %v5607 = vand.u32 %v674, 4294901760
    %5608 = vmatmul.f32.gmra.mxu0 %v5607
    %v5609 = vpop.f32.mrf.mxu0
    %v5610 = vadd.f32 %v5481, %v5609
    %5611 = vdwg.mxu0
    %v5612 = vand.u32 %v776, 4294901760
    %5613 = vmatpush.msra.mxu0 %v5612
    %v5614 = vand.u32 %v775, 4294901760
    %5615 = vmatpush.msra.mxu0 %v5614
    %v5616 = vand.u32 %v774, 4294901760
    %5617 = vmatpush.msra.mxu0 %v5616
    %v5618 = vand.u32 %v773, 4294901760
    %5619 = vmatpush.msra.mxu0 %v5618
    %v5620 = vand.u32 %v772, 4294901760
    %5621 = vmatpush.msra.mxu0 %v5620
    %v5622 = vand.u32 %v771, 4294901760
    %5623 = vmatpush.msra.mxu0 %v5622
    %v5624 = vand.u32 %v770, 4294901760
    %5625 = vmatpush.msra.mxu0 %v5624
    %v5626 = vand.u32 %v769, 4294901760
    %5627 = vmatpush.msra.mxu0 %v5626
    %v5628 = vand.u32 %v768, 4294901760
    %5629 = vmatpush.msra.mxu0 %v5628
    %v5630 = vand.u32 %v767, 4294901760
    %5631 = vmatpush.msra.mxu0 %v5630
    %v5632 = vand.u32 %v766, 4294901760
    %5633 = vmatpush.msra.mxu0 %v5632
    %v5634 = vand.u32 %v765, 4294901760
    %5635 = vmatpush.msra.mxu0 %v5634
    %v5636 = vand.u32 %v764, 4294901760
    %5637 = vmatpush.msra.mxu0 %v5636
    %v5638 = vand.u32 %v763, 4294901760
    %5639 = vmatpush.msra.mxu0 %v5638
    %v5640 = vand.u32 %v762, 4294901760
    %5641 = vmatpush.msra.mxu0 %v5640
    %v5642 = vand.u32 %v761, 4294901760
    %5643 = vmatpush.msra.mxu0 %v5642
    %v5644 = vand.u32 %v494, 4294901760
    %5645 = vmatmul.f32.gmra.mxu0 %v5644
    %v5646 = vpop.f32.mrf.mxu0
    %v5647 = vadd.f32 %v5550, %v5646
    %v5648 = vand.u32 %v506, 4294901760
    %5649 = vmatmul.f32.gmra.mxu0 %v5648
    %v5650 = vpop.f32.mrf.mxu0
    %v5651 = vadd.f32 %v5554, %v5650
    %v5652 = vand.u32 %v518, 4294901760
    %5653 = vmatmul.f32.gmra.mxu0 %v5652
    %v5654 = vpop.f32.mrf.mxu0
    %v5655 = vadd.f32 %v5558, %v5654
    %v5656 = vand.u32 %v530, 4294901760
    %5657 = vmatmul.f32.gmra.mxu0 %v5656
    %v5658 = vpop.f32.mrf.mxu0
    %v5659 = vadd.f32 %v5562, %v5658
    %v5660 = vand.u32 %v542, 4294901760
    %5661 = vmatmul.f32.gmra.mxu0 %v5660
    %v5662 = vpop.f32.mrf.mxu0
    %v5663 = vadd.f32 %v5566, %v5662
    %v5664 = vand.u32 %v554, 4294901760
    %5665 = vmatmul.f32.gmra.mxu0 %v5664
    %v5666 = vpop.f32.mrf.mxu0
    %v5667 = vadd.f32 %v5570, %v5666
    %v5668 = vand.u32 %v566, 4294901760
    %5669 = vmatmul.f32.gmra.mxu0 %v5668
    %v5670 = vpop.f32.mrf.mxu0
    %v5671 = vadd.f32 %v5574, %v5670
    %v5672 = vand.u32 %v578, 4294901760
    %5673 = vmatmul.f32.gmra.mxu0 %v5672
    %v5674 = vpop.f32.mrf.mxu0
    %v5675 = vadd.f32 %v5578, %v5674
    %v5676 = vand.u32 %v590, 4294901760
    %5677 = vmatmul.f32.gmra.mxu0 %v5676
    %v5678 = vpop.f32.mrf.mxu0
    %v5679 = vadd.f32 %v5582, %v5678
    %v5680 = vand.u32 %v602, 4294901760
    %5681 = vmatmul.f32.gmra.mxu0 %v5680
    %v5682 = vpop.f32.mrf.mxu0
    %v5683 = vadd.f32 %v5586, %v5682
    %v5684 = vand.u32 %v614, 4294901760
    %5685 = vmatmul.f32.gmra.mxu0 %v5684
    %v5686 = vpop.f32.mrf.mxu0
    %v5687 = vadd.f32 %v5590, %v5686
    %v5688 = vand.u32 %v626, 4294901760
    %5689 = vmatmul.f32.gmra.mxu0 %v5688
    %v5690 = vpop.f32.mrf.mxu0
    %v5691 = vadd.f32 %v5594, %v5690
    %v5692 = vand.u32 %v638, 4294901760
    %5693 = vmatmul.f32.gmra.mxu0 %v5692
    %v5694 = vpop.f32.mrf.mxu0
    %v5695 = vadd.f32 %v5598, %v5694
    %v5696 = vand.u32 %v650, 4294901760
    %5697 = vmatmul.f32.gmra.mxu0 %v5696
    %v5698 = vpop.f32.mrf.mxu0
    %v5699 = vadd.f32 %v5602, %v5698
    %v5700 = vand.u32 %v662, 4294901760
    %5701 = vmatmul.f32.gmra.mxu0 %v5700
    %v5702 = vpop.f32.mrf.mxu0
    %v5703 = vadd.f32 %v5606, %v5702
    %v5704 = vand.u32 %v674, 4294901760
    %5705 = vmatmul.f32.gmra.mxu0 %v5704
    %v5706 = vpop.f32.mrf.mxu0
    %v5707 = vadd.f32 %v5610, %v5706
    %5708 = vdwg.mxu0
    %v5709 = vand.u32 %v792, 4294901760
    %5710 = vmatpush.msra.mxu0 %v5709
    %v5711 = vand.u32 %v791, 4294901760
    %5712 = vmatpush.msra.mxu0 %v5711
    %v5713 = vand.u32 %v790, 4294901760
    %5714 = vmatpush.msra.mxu0 %v5713
    %v5715 = vand.u32 %v789, 4294901760
    %5716 = vmatpush.msra.mxu0 %v5715
    %v5717 = vand.u32 %v788, 4294901760
    %5718 = vmatpush.msra.mxu0 %v5717
    %v5719 = vand.u32 %v787, 4294901760
    %5720 = vmatpush.msra.mxu0 %v5719
    %v5721 = vand.u32 %v786, 4294901760
    %5722 = vmatpush.msra.mxu0 %v5721
    %v5723 = vand.u32 %v785, 4294901760
    %5724 = vmatpush.msra.mxu0 %v5723
    %v5725 = vand.u32 %v784, 4294901760
    %5726 = vmatpush.msra.mxu0 %v5725
    %v5727 = vand.u32 %v783, 4294901760
    %5728 = vmatpush.msra.mxu0 %v5727
    %v5729 = vand.u32 %v782, 4294901760
    %5730 = vmatpush.msra.mxu0 %v5729
    %v5731 = vand.u32 %v781, 4294901760
    %5732 = vmatpush.msra.mxu0 %v5731
    %v5733 = vand.u32 %v780, 4294901760
    %5734 = vmatpush.msra.mxu0 %v5733
    %v5735 = vand.u32 %v779, 4294901760
    %5736 = vmatpush.msra.mxu0 %v5735
    %v5737 = vand.u32 %v778, 4294901760
    %5738 = vmatpush.msra.mxu0 %v5737
    %v5739 = vand.u32 %v777, 4294901760
    %5740 = vmatpush.msra.mxu0 %v5739
    %v5741 = vand.u32 %v495, 4294901760
    %v5742 = vsub.f32 %v495, %v5741
    %v5743 = vand.u32 %v5742, 4294901760
    %v5744 = vsub.f32 %v5742, %v5743
    %v5745 = vand.u32 %v5744, 4294901760
    %5746 = vmatmul.f32.gmra.mxu0 %v5745
    %v5747 = vpop.f32.mrf.mxu0
    %v5748 = vadd.f32 %v5647, %v5747
    %v5749 = vand.u32 %v507, 4294901760
    %v5750 = vsub.f32 %v507, %v5749
    %v5751 = vand.u32 %v5750, 4294901760
    %v5752 = vsub.f32 %v5750, %v5751
    %v5753 = vand.u32 %v5752, 4294901760
    %5754 = vmatmul.f32.gmra.mxu0 %v5753
    %v5755 = vpop.f32.mrf.mxu0
    %v5756 = vadd.f32 %v5651, %v5755
    %v5757 = vand.u32 %v519, 4294901760
    %v5758 = vsub.f32 %v519, %v5757
    %v5759 = vand.u32 %v5758, 4294901760
    %v5760 = vsub.f32 %v5758, %v5759
    %v5761 = vand.u32 %v5760, 4294901760
    %5762 = vmatmul.f32.gmra.mxu0 %v5761
    %v5763 = vpop.f32.mrf.mxu0
    %v5764 = vadd.f32 %v5655, %v5763
    %v5765 = vand.u32 %v531, 4294901760
    %v5766 = vsub.f32 %v531, %v5765
    %v5767 = vand.u32 %v5766, 4294901760
    %v5768 = vsub.f32 %v5766, %v5767
    %v5769 = vand.u32 %v5768, 4294901760
    %5770 = vmatmul.f32.gmra.mxu0 %v5769
    %v5771 = vpop.f32.mrf.mxu0
    %v5772 = vadd.f32 %v5659, %v5771
    %v5773 = vand.u32 %v543, 4294901760
    %v5774 = vsub.f32 %v543, %v5773
    %v5775 = vand.u32 %v5774, 4294901760
    %v5776 = vsub.f32 %v5774, %v5775
    %v5777 = vand.u32 %v5776, 4294901760
    %5778 = vmatmul.f32.gmra.mxu0 %v5777
    %v5779 = vpop.f32.mrf.mxu0
    %v5780 = vadd.f32 %v5663, %v5779
    %v5781 = vand.u32 %v555, 4294901760
    %v5782 = vsub.f32 %v555, %v5781
    %v5783 = vand.u32 %v5782, 4294901760
    %v5784 = vsub.f32 %v5782, %v5783
    %v5785 = vand.u32 %v5784, 4294901760
    %5786 = vmatmul.f32.gmra.mxu0 %v5785
    %v5787 = vpop.f32.mrf.mxu0
    %v5788 = vadd.f32 %v5667, %v5787
    %v5789 = vand.u32 %v567, 4294901760
    %v5790 = vsub.f32 %v567, %v5789
    %v5791 = vand.u32 %v5790, 4294901760
    %v5792 = vsub.f32 %v5790, %v5791
    %v5793 = vand.u32 %v5792, 4294901760
    %5794 = vmatmul.f32.gmra.mxu0 %v5793
    %v5795 = vpop.f32.mrf.mxu0
    %v5796 = vadd.f32 %v5671, %v5795
    %v5797 = vand.u32 %v579, 4294901760
    %v5798 = vsub.f32 %v579, %v5797
    %v5799 = vand.u32 %v5798, 4294901760
    %v5800 = vsub.f32 %v5798, %v5799
    %v5801 = vand.u32 %v5800, 4294901760
    %5802 = vmatmul.f32.gmra.mxu0 %v5801
    %v5803 = vpop.f32.mrf.mxu0
    %v5804 = vadd.f32 %v5675, %v5803
    %v5805 = vand.u32 %v591, 4294901760
    %v5806 = vsub.f32 %v591, %v5805
    %v5807 = vand.u32 %v5806, 4294901760
    %v5808 = vsub.f32 %v5806, %v5807
    %v5809 = vand.u32 %v5808, 4294901760
    %5810 = vmatmul.f32.gmra.mxu0 %v5809
    %v5811 = vpop.f32.mrf.mxu0
    %v5812 = vadd.f32 %v5679, %v5811
    %v5813 = vand.u32 %v603, 4294901760
    %v5814 = vsub.f32 %v603, %v5813
    %v5815 = vand.u32 %v5814, 4294901760
    %v5816 = vsub.f32 %v5814, %v5815
    %v5817 = vand.u32 %v5816, 4294901760
    %5818 = vmatmul.f32.gmra.mxu0 %v5817
    %v5819 = vpop.f32.mrf.mxu0
    %v5820 = vadd.f32 %v5683, %v5819
    %v5821 = vand.u32 %v615, 4294901760
    %v5822 = vsub.f32 %v615, %v5821
    %v5823 = vand.u32 %v5822, 4294901760
    %v5824 = vsub.f32 %v5822, %v5823
    %v5825 = vand.u32 %v5824, 4294901760
    %5826 = vmatmul.f32.gmra.mxu0 %v5825
    %v5827 = vpop.f32.mrf.mxu0
    %v5828 = vadd.f32 %v5687, %v5827
    %v5829 = vand.u32 %v627, 4294901760
    %v5830 = vsub.f32 %v627, %v5829
    %v5831 = vand.u32 %v5830, 4294901760
    %v5832 = vsub.f32 %v5830, %v5831
    %v5833 = vand.u32 %v5832, 4294901760
    %5834 = vmatmul.f32.gmra.mxu0 %v5833
    %v5835 = vpop.f32.mrf.mxu0
    %v5836 = vadd.f32 %v5691, %v5835
    %v5837 = vand.u32 %v639, 4294901760
    %v5838 = vsub.f32 %v639, %v5837
    %v5839 = vand.u32 %v5838, 4294901760
    %v5840 = vsub.f32 %v5838, %v5839
    %v5841 = vand.u32 %v5840, 4294901760
    %5842 = vmatmul.f32.gmra.mxu0 %v5841
    %v5843 = vpop.f32.mrf.mxu0
    %v5844 = vadd.f32 %v5695, %v5843
    %v5845 = vand.u32 %v651, 4294901760
    %v5846 = vsub.f32 %v651, %v5845
    %v5847 = vand.u32 %v5846, 4294901760
    %v5848 = vsub.f32 %v5846, %v5847
    %v5849 = vand.u32 %v5848, 4294901760
    %5850 = vmatmul.f32.gmra.mxu0 %v5849
    %v5851 = vpop.f32.mrf.mxu0
    %v5852 = vadd.f32 %v5699, %v5851
    %v5853 = vand.u32 %v663, 4294901760
    %v5854 = vsub.f32 %v663, %v5853
    %v5855 = vand.u32 %v5854, 4294901760
    %v5856 = vsub.f32 %v5854, %v5855
    %v5857 = vand.u32 %v5856, 4294901760
    %5858 = vmatmul.f32.gmra.mxu0 %v5857
    %v5859 = vpop.f32.mrf.mxu0
    %v5860 = vadd.f32 %v5703, %v5859
    %v5861 = vand.u32 %v675, 4294901760
    %v5862 = vsub.f32 %v675, %v5861
    %v5863 = vand.u32 %v5862, 4294901760
    %v5864 = vsub.f32 %v5862, %v5863
    %v5865 = vand.u32 %v5864, 4294901760
    %5866 = vmatmul.f32.gmra.mxu0 %v5865
    %v5867 = vpop.f32.mrf.mxu0
    %v5868 = vadd.f32 %v5707, %v5867
    %5869 = vdwg.mxu0
    %v5870 = vand.u32 %v792, 4294901760
    %v5871 = vsub.f32 %v792, %v5870
    %v5872 = vand.u32 %v5871, 4294901760
    %v5873 = vsub.f32 %v5871, %v5872
    %v5874 = vand.u32 %v5873, 4294901760
    %5875 = vmatpush.msra.mxu0 %v5874
    %v5876 = vand.u32 %v791, 4294901760
    %v5877 = vsub.f32 %v791, %v5876
    %v5878 = vand.u32 %v5877, 4294901760
    %v5879 = vsub.f32 %v5877, %v5878
    %v5880 = vand.u32 %v5879, 4294901760
    %5881 = vmatpush.msra.mxu0 %v5880
    %v5882 = vand.u32 %v790, 4294901760
    %v5883 = vsub.f32 %v790, %v5882
    %v5884 = vand.u32 %v5883, 4294901760
    %v5885 = vsub.f32 %v5883, %v5884
    %v5886 = vand.u32 %v5885, 4294901760
    %5887 = vmatpush.msra.mxu0 %v5886
    %v5888 = vand.u32 %v789, 4294901760
    %v5889 = vsub.f32 %v789, %v5888
    %v5890 = vand.u32 %v5889, 4294901760
    %v5891 = vsub.f32 %v5889, %v5890
    %v5892 = vand.u32 %v5891, 4294901760
    %5893 = vmatpush.msra.mxu0 %v5892
    %v5894 = vand.u32 %v788, 4294901760
    %v5895 = vsub.f32 %v788, %v5894
    %v5896 = vand.u32 %v5895, 4294901760
    %v5897 = vsub.f32 %v5895, %v5896
    %v5898 = vand.u32 %v5897, 4294901760
    %5899 = vmatpush.msra.mxu0 %v5898
    %v5900 = vand.u32 %v787, 4294901760
    %v5901 = vsub.f32 %v787, %v5900
    %v5902 = vand.u32 %v5901, 4294901760
    %v5903 = vsub.f32 %v5901, %v5902
    %v5904 = vand.u32 %v5903, 4294901760
    %5905 = vmatpush.msra.mxu0 %v5904
    %v5906 = vand.u32 %v786, 4294901760
    %v5907 = vsub.f32 %v786, %v5906
    %v5908 = vand.u32 %v5907, 4294901760
    %v5909 = vsub.f32 %v5907, %v5908
    %v5910 = vand.u32 %v5909, 4294901760
    %5911 = vmatpush.msra.mxu0 %v5910
    %v5912 = vand.u32 %v785, 4294901760
    %v5913 = vsub.f32 %v785, %v5912
    %v5914 = vand.u32 %v5913, 4294901760
    %v5915 = vsub.f32 %v5913, %v5914
    %v5916 = vand.u32 %v5915, 4294901760
    %5917 = vmatpush.msra.mxu0 %v5916
    %v5918 = vand.u32 %v784, 4294901760
    %v5919 = vsub.f32 %v784, %v5918
    %v5920 = vand.u32 %v5919, 4294901760
    %v5921 = vsub.f32 %v5919, %v5920
    %v5922 = vand.u32 %v5921, 4294901760
    %5923 = vmatpush.msra.mxu0 %v5922
    %v5924 = vand.u32 %v783, 4294901760
    %v5925 = vsub.f32 %v783, %v5924
    %v5926 = vand.u32 %v5925, 4294901760
    %v5927 = vsub.f32 %v5925, %v5926
    %v5928 = vand.u32 %v5927, 4294901760
    %5929 = vmatpush.msra.mxu0 %v5928
    %v5930 = vand.u32 %v782, 4294901760
    %v5931 = vsub.f32 %v782, %v5930
    %v5932 = vand.u32 %v5931, 4294901760
    %v5933 = vsub.f32 %v5931, %v5932
    %v5934 = vand.u32 %v5933, 4294901760
    %5935 = vmatpush.msra.mxu0 %v5934
    %v5936 = vand.u32 %v781, 4294901760
    %v5937 = vsub.f32 %v781, %v5936
    %v5938 = vand.u32 %v5937, 4294901760
    %v5939 = vsub.f32 %v5937, %v5938
    %v5940 = vand.u32 %v5939, 4294901760
    %5941 = vmatpush.msra.mxu0 %v5940
    %v5942 = vand.u32 %v780, 4294901760
    %v5943 = vsub.f32 %v780, %v5942
    %v5944 = vand.u32 %v5943, 4294901760
    %v5945 = vsub.f32 %v5943, %v5944
    %v5946 = vand.u32 %v5945, 4294901760
    %5947 = vmatpush.msra.mxu0 %v5946
    %v5948 = vand.u32 %v779, 4294901760
    %v5949 = vsub.f32 %v779, %v5948
    %v5950 = vand.u32 %v5949, 4294901760
    %v5951 = vsub.f32 %v5949, %v5950
    %v5952 = vand.u32 %v5951, 4294901760
    %5953 = vmatpush.msra.mxu0 %v5952
    %v5954 = vand.u32 %v778, 4294901760
    %v5955 = vsub.f32 %v778, %v5954
    %v5956 = vand.u32 %v5955, 4294901760
    %v5957 = vsub.f32 %v5955, %v5956
    %v5958 = vand.u32 %v5957, 4294901760
    %5959 = vmatpush.msra.mxu0 %v5958
    %v5960 = vand.u32 %v777, 4294901760
    %v5961 = vsub.f32 %v777, %v5960
    %v5962 = vand.u32 %v5961, 4294901760
    %v5963 = vsub.f32 %v5961, %v5962
    %v5964 = vand.u32 %v5963, 4294901760
    %5965 = vmatpush.msra.mxu0 %v5964
    %v5966 = vand.u32 %v495, 4294901760
    %5967 = vmatmul.f32.gmra.mxu0 %v5966
    %v5968 = vpop.f32.mrf.mxu0
    %v5969 = vadd.f32 %v5748, %v5968
    %v5970 = vand.u32 %v507, 4294901760
    %5971 = vmatmul.f32.gmra.mxu0 %v5970
    %v5972 = vpop.f32.mrf.mxu0
    %v5973 = vadd.f32 %v5756, %v5972
    %v5974 = vand.u32 %v519, 4294901760
    %5975 = vmatmul.f32.gmra.mxu0 %v5974
    %v5976 = vpop.f32.mrf.mxu0
    %v5977 = vadd.f32 %v5764, %v5976
    %v5978 = vand.u32 %v531, 4294901760
    %5979 = vmatmul.f32.gmra.mxu0 %v5978
    %v5980 = vpop.f32.mrf.mxu0
    %v5981 = vadd.f32 %v5772, %v5980
    %v5982 = vand.u32 %v543, 4294901760
    %5983 = vmatmul.f32.gmra.mxu0 %v5982
    %v5984 = vpop.f32.mrf.mxu0
    %v5985 = vadd.f32 %v5780, %v5984
    %v5986 = vand.u32 %v555, 4294901760
    %5987 = vmatmul.f32.gmra.mxu0 %v5986
    %v5988 = vpop.f32.mrf.mxu0
    %v5989 = vadd.f32 %v5788, %v5988
    %v5990 = vand.u32 %v567, 4294901760
    %5991 = vmatmul.f32.gmra.mxu0 %v5990
    %v5992 = vpop.f32.mrf.mxu0
    %v5993 = vadd.f32 %v5796, %v5992
    %v5994 = vand.u32 %v579, 4294901760
    %5995 = vmatmul.f32.gmra.mxu0 %v5994
    %v5996 = vpop.f32.mrf.mxu0
    %v5997 = vadd.f32 %v5804, %v5996
    %v5998 = vand.u32 %v591, 4294901760
    %5999 = vmatmul.f32.gmra.mxu0 %v5998
    %v6000 = vpop.f32.mrf.mxu0
    %v6001 = vadd.f32 %v5812, %v6000
    %v6002 = vand.u32 %v603, 4294901760
    %6003 = vmatmul.f32.gmra.mxu0 %v6002
    %v6004 = vpop.f32.mrf.mxu0
    %v6005 = vadd.f32 %v5820, %v6004
    %v6006 = vand.u32 %v615, 4294901760
    %6007 = vmatmul.f32.gmra.mxu0 %v6006
    %v6008 = vpop.f32.mrf.mxu0
    %v6009 = vadd.f32 %v5828, %v6008
    %v6010 = vand.u32 %v627, 4294901760
    %6011 = vmatmul.f32.gmra.mxu0 %v6010
    %v6012 = vpop.f32.mrf.mxu0
    %v6013 = vadd.f32 %v5836, %v6012
    %v6014 = vand.u32 %v639, 4294901760
    %6015 = vmatmul.f32.gmra.mxu0 %v6014
    %v6016 = vpop.f32.mrf.mxu0
    %v6017 = vadd.f32 %v5844, %v6016
    %v6018 = vand.u32 %v651, 4294901760
    %6019 = vmatmul.f32.gmra.mxu0 %v6018
    %v6020 = vpop.f32.mrf.mxu0
    %v6021 = vadd.f32 %v5852, %v6020
    %v6022 = vand.u32 %v663, 4294901760
    %6023 = vmatmul.f32.gmra.mxu0 %v6022
    %v6024 = vpop.f32.mrf.mxu0
    %v6025 = vadd.f32 %v5860, %v6024
    %v6026 = vand.u32 %v675, 4294901760
    %6027 = vmatmul.f32.gmra.mxu0 %v6026
    %v6028 = vpop.f32.mrf.mxu0
    %v6029 = vadd.f32 %v5868, %v6028
    %6030 = vdwg.mxu0
    %v6031 = vand.u32 %v792, 4294901760
    %v6032 = vsub.f32 %v792, %v6031
    %6033 = vmatpush.msra.mxu0 %v6032
    %v6034 = vand.u32 %v791, 4294901760
    %v6035 = vsub.f32 %v791, %v6034
    %6036 = vmatpush.msra.mxu0 %v6035
    %v6037 = vand.u32 %v790, 4294901760
    %v6038 = vsub.f32 %v790, %v6037
    %6039 = vmatpush.msra.mxu0 %v6038
    %v6040 = vand.u32 %v789, 4294901760
    %v6041 = vsub.f32 %v789, %v6040
    %6042 = vmatpush.msra.mxu0 %v6041
    %v6043 = vand.u32 %v788, 4294901760
    %v6044 = vsub.f32 %v788, %v6043
    %6045 = vmatpush.msra.mxu0 %v6044
    %v6046 = vand.u32 %v787, 4294901760
    %v6047 = vsub.f32 %v787, %v6046
    %6048 = vmatpush.msra.mxu0 %v6047
    %v6049 = vand.u32 %v786, 4294901760
    %v6050 = vsub.f32 %v786, %v6049
    %6051 = vmatpush.msra.mxu0 %v6050
    %v6052 = vand.u32 %v785, 4294901760
    %v6053 = vsub.f32 %v785, %v6052
    %6054 = vmatpush.msra.mxu0 %v6053
    %v6055 = vand.u32 %v784, 4294901760
    %v6056 = vsub.f32 %v784, %v6055
    %6057 = vmatpush.msra.mxu0 %v6056
    %v6058 = vand.u32 %v783, 4294901760
    %v6059 = vsub.f32 %v783, %v6058
    %6060 = vmatpush.msra.mxu0 %v6059
    %v6061 = vand.u32 %v782, 4294901760
    %v6062 = vsub.f32 %v782, %v6061
    %6063 = vmatpush.msra.mxu0 %v6062
    %v6064 = vand.u32 %v781, 4294901760
    %v6065 = vsub.f32 %v781, %v6064
    %6066 = vmatpush.msra.mxu0 %v6065
    %v6067 = vand.u32 %v780, 4294901760
    %v6068 = vsub.f32 %v780, %v6067
    %6069 = vmatpush.msra.mxu0 %v6068
    %v6070 = vand.u32 %v779, 4294901760
    %v6071 = vsub.f32 %v779, %v6070
    %6072 = vmatpush.msra.mxu0 %v6071
    %v6073 = vand.u32 %v778, 4294901760
    %v6074 = vsub.f32 %v778, %v6073
    %6075 = vmatpush.msra.mxu0 %v6074
    %v6076 = vand.u32 %v777, 4294901760
    %v6077 = vsub.f32 %v777, %v6076
    %6078 = vmatpush.msra.mxu0 %v6077
    %v6079 = vand.u32 %v495, 4294901760
    %v6080 = vsub.f32 %v495, %v6079
    %6081 = vmatmul.f32.gmra.mxu0 %v6080
    %v6082 = vpop.f32.mrf.mxu0
    %v6083 = vadd.f32 %v5969, %v6082
    %v6084 = vand.u32 %v507, 4294901760
    %v6085 = vsub.f32 %v507, %v6084
    %6086 = vmatmul.f32.gmra.mxu0 %v6085
    %v6087 = vpop.f32.mrf.mxu0
    %v6088 = vadd.f32 %v5973, %v6087
    %v6089 = vand.u32 %v519, 4294901760
    %v6090 = vsub.f32 %v519, %v6089
    %6091 = vmatmul.f32.gmra.mxu0 %v6090
    %v6092 = vpop.f32.mrf.mxu0
    %v6093 = vadd.f32 %v5977, %v6092
    %v6094 = vand.u32 %v531, 4294901760
    %v6095 = vsub.f32 %v531, %v6094
    %6096 = vmatmul.f32.gmra.mxu0 %v6095
    %v6097 = vpop.f32.mrf.mxu0
    %v6098 = vadd.f32 %v5981, %v6097
    %v6099 = vand.u32 %v543, 4294901760
    %v6100 = vsub.f32 %v543, %v6099
    %6101 = vmatmul.f32.gmra.mxu0 %v6100
    %v6102 = vpop.f32.mrf.mxu0
    %v6103 = vadd.f32 %v5985, %v6102
    %v6104 = vand.u32 %v555, 4294901760
    %v6105 = vsub.f32 %v555, %v6104
    %6106 = vmatmul.f32.gmra.mxu0 %v6105
    %v6107 = vpop.f32.mrf.mxu0
    %v6108 = vadd.f32 %v5989, %v6107
    %v6109 = vand.u32 %v567, 4294901760
    %v6110 = vsub.f32 %v567, %v6109
    %6111 = vmatmul.f32.gmra.mxu0 %v6110
    %v6112 = vpop.f32.mrf.mxu0
    %v6113 = vadd.f32 %v5993, %v6112
    %v6114 = vand.u32 %v579, 4294901760
    %v6115 = vsub.f32 %v579, %v6114
    %6116 = vmatmul.f32.gmra.mxu0 %v6115
    %v6117 = vpop.f32.mrf.mxu0
    %v6118 = vadd.f32 %v5997, %v6117
    %v6119 = vand.u32 %v591, 4294901760
    %v6120 = vsub.f32 %v591, %v6119
    %6121 = vmatmul.f32.gmra.mxu0 %v6120
    %v6122 = vpop.f32.mrf.mxu0
    %v6123 = vadd.f32 %v6001, %v6122
    %v6124 = vand.u32 %v603, 4294901760
    %v6125 = vsub.f32 %v603, %v6124
    %6126 = vmatmul.f32.gmra.mxu0 %v6125
    %v6127 = vpop.f32.mrf.mxu0
    %v6128 = vadd.f32 %v6005, %v6127
    %v6129 = vand.u32 %v615, 4294901760
    %v6130 = vsub.f32 %v615, %v6129
    %6131 = vmatmul.f32.gmra.mxu0 %v6130
    %v6132 = vpop.f32.mrf.mxu0
    %v6133 = vadd.f32 %v6009, %v6132
    %v6134 = vand.u32 %v627, 4294901760
    %v6135 = vsub.f32 %v627, %v6134
    %6136 = vmatmul.f32.gmra.mxu0 %v6135
    %v6137 = vpop.f32.mrf.mxu0
    %v6138 = vadd.f32 %v6013, %v6137
    %v6139 = vand.u32 %v639, 4294901760
    %v6140 = vsub.f32 %v639, %v6139
    %6141 = vmatmul.f32.gmra.mxu0 %v6140
    %v6142 = vpop.f32.mrf.mxu0
    %v6143 = vadd.f32 %v6017, %v6142
    %v6144 = vand.u32 %v651, 4294901760
    %v6145 = vsub.f32 %v651, %v6144
    %6146 = vmatmul.f32.gmra.mxu0 %v6145
    %v6147 = vpop.f32.mrf.mxu0
    %v6148 = vadd.f32 %v6021, %v6147
    %v6149 = vand.u32 %v663, 4294901760
    %v6150 = vsub.f32 %v663, %v6149
    %6151 = vmatmul.f32.gmra.mxu0 %v6150
    %v6152 = vpop.f32.mrf.mxu0
    %v6153 = vadd.f32 %v6025, %v6152
    %v6154 = vand.u32 %v675, 4294901760
    %v6155 = vsub.f32 %v675, %v6154
    %6156 = vmatmul.f32.gmra.mxu0 %v6155
    %v6157 = vpop.f32.mrf.mxu0
    %v6158 = vadd.f32 %v6029, %v6157
    %6159 = vdwg.mxu0
    %v6160 = vand.u32 %v792, 4294901760
    %6161 = vmatpush.msra.mxu0 %v6160
    %v6162 = vand.u32 %v791, 4294901760
    %6163 = vmatpush.msra.mxu0 %v6162
    %v6164 = vand.u32 %v790, 4294901760
    %6165 = vmatpush.msra.mxu0 %v6164
    %v6166 = vand.u32 %v789, 4294901760
    %6167 = vmatpush.msra.mxu0 %v6166
    %v6168 = vand.u32 %v788, 4294901760
    %6169 = vmatpush.msra.mxu0 %v6168
    %v6170 = vand.u32 %v787, 4294901760
    %6171 = vmatpush.msra.mxu0 %v6170
    %v6172 = vand.u32 %v786, 4294901760
    %6173 = vmatpush.msra.mxu0 %v6172
    %v6174 = vand.u32 %v785, 4294901760
    %6175 = vmatpush.msra.mxu0 %v6174
    %v6176 = vand.u32 %v784, 4294901760
    %6177 = vmatpush.msra.mxu0 %v6176
    %v6178 = vand.u32 %v783, 4294901760
    %6179 = vmatpush.msra.mxu0 %v6178
    %v6180 = vand.u32 %v782, 4294901760
    %6181 = vmatpush.msra.mxu0 %v6180
    %v6182 = vand.u32 %v781, 4294901760
    %6183 = vmatpush.msra.mxu0 %v6182
    %v6184 = vand.u32 %v780, 4294901760
    %6185 = vmatpush.msra.mxu0 %v6184
    %v6186 = vand.u32 %v779, 4294901760
    %6187 = vmatpush.msra.mxu0 %v6186
    %v6188 = vand.u32 %v778, 4294901760
    %6189 = vmatpush.msra.mxu0 %v6188
    %v6190 = vand.u32 %v777, 4294901760
    %6191 = vmatpush.msra.mxu0 %v6190
    %v6192 = vand.u32 %v495, 4294901760
    %v6193 = vsub.f32 %v495, %v6192
    %v6194 = vand.u32 %v6193, 4294901760
    %6195 = vmatmul.f32.gmra.mxu0 %v6194
    %v6196 = vpop.f32.mrf.mxu0
    %v6197 = vadd.f32 %v6083, %v6196
    %v6198 = vand.u32 %v507, 4294901760
    %v6199 = vsub.f32 %v507, %v6198
    %v6200 = vand.u32 %v6199, 4294901760
    %6201 = vmatmul.f32.gmra.mxu0 %v6200
    %v6202 = vpop.f32.mrf.mxu0
    %v6203 = vadd.f32 %v6088, %v6202
    %v6204 = vand.u32 %v519, 4294901760
    %v6205 = vsub.f32 %v519, %v6204
    %v6206 = vand.u32 %v6205, 4294901760
    %6207 = vmatmul.f32.gmra.mxu0 %v6206
    %v6208 = vpop.f32.mrf.mxu0
    %v6209 = vadd.f32 %v6093, %v6208
    %v6210 = vand.u32 %v531, 4294901760
    %v6211 = vsub.f32 %v531, %v6210
    %v6212 = vand.u32 %v6211, 4294901760
    %6213 = vmatmul.f32.gmra.mxu0 %v6212
    %v6214 = vpop.f32.mrf.mxu0
    %v6215 = vadd.f32 %v6098, %v6214
    %v6216 = vand.u32 %v543, 4294901760
    %v6217 = vsub.f32 %v543, %v6216
    %v6218 = vand.u32 %v6217, 4294901760
    %6219 = vmatmul.f32.gmra.mxu0 %v6218
    %v6220 = vpop.f32.mrf.mxu0
    %v6221 = vadd.f32 %v6103, %v6220
    %v6222 = vand.u32 %v555, 4294901760
    %v6223 = vsub.f32 %v555, %v6222
    %v6224 = vand.u32 %v6223, 4294901760
    %6225 = vmatmul.f32.gmra.mxu0 %v6224
    %v6226 = vpop.f32.mrf.mxu0
    %v6227 = vadd.f32 %v6108, %v6226
    %v6228 = vand.u32 %v567, 4294901760
    %v6229 = vsub.f32 %v567, %v6228
    %v6230 = vand.u32 %v6229, 4294901760
    %6231 = vmatmul.f32.gmra.mxu0 %v6230
    %v6232 = vpop.f32.mrf.mxu0
    %v6233 = vadd.f32 %v6113, %v6232
    %v6234 = vand.u32 %v579, 4294901760
    %v6235 = vsub.f32 %v579, %v6234
    %v6236 = vand.u32 %v6235, 4294901760
    %6237 = vmatmul.f32.gmra.mxu0 %v6236
    %v6238 = vpop.f32.mrf.mxu0
    %v6239 = vadd.f32 %v6118, %v6238
    %v6240 = vand.u32 %v591, 4294901760
    %v6241 = vsub.f32 %v591, %v6240
    %v6242 = vand.u32 %v6241, 4294901760
    %6243 = vmatmul.f32.gmra.mxu0 %v6242
    %v6244 = vpop.f32.mrf.mxu0
    %v6245 = vadd.f32 %v6123, %v6244
    %v6246 = vand.u32 %v603, 4294901760
    %v6247 = vsub.f32 %v603, %v6246
    %v6248 = vand.u32 %v6247, 4294901760
    %6249 = vmatmul.f32.gmra.mxu0 %v6248
    %v6250 = vpop.f32.mrf.mxu0
    %v6251 = vadd.f32 %v6128, %v6250
    %v6252 = vand.u32 %v615, 4294901760
    %v6253 = vsub.f32 %v615, %v6252
    %v6254 = vand.u32 %v6253, 4294901760
    %6255 = vmatmul.f32.gmra.mxu0 %v6254
    %v6256 = vpop.f32.mrf.mxu0
    %v6257 = vadd.f32 %v6133, %v6256
    %v6258 = vand.u32 %v627, 4294901760
    %v6259 = vsub.f32 %v627, %v6258
    %v6260 = vand.u32 %v6259, 4294901760
    %6261 = vmatmul.f32.gmra.mxu0 %v6260
    %v6262 = vpop.f32.mrf.mxu0
    %v6263 = vadd.f32 %v6138, %v6262
    %v6264 = vand.u32 %v639, 4294901760
    %v6265 = vsub.f32 %v639, %v6264
    %v6266 = vand.u32 %v6265, 4294901760
    %6267 = vmatmul.f32.gmra.mxu0 %v6266
    %v6268 = vpop.f32.mrf.mxu0
    %v6269 = vadd.f32 %v6143, %v6268
    %v6270 = vand.u32 %v651, 4294901760
    %v6271 = vsub.f32 %v651, %v6270
    %v6272 = vand.u32 %v6271, 4294901760
    %6273 = vmatmul.f32.gmra.mxu0 %v6272
    %v6274 = vpop.f32.mrf.mxu0
    %v6275 = vadd.f32 %v6148, %v6274
    %v6276 = vand.u32 %v663, 4294901760
    %v6277 = vsub.f32 %v663, %v6276
    %v6278 = vand.u32 %v6277, 4294901760
    %6279 = vmatmul.f32.gmra.mxu0 %v6278
    %v6280 = vpop.f32.mrf.mxu0
    %v6281 = vadd.f32 %v6153, %v6280
    %v6282 = vand.u32 %v675, 4294901760
    %v6283 = vsub.f32 %v675, %v6282
    %v6284 = vand.u32 %v6283, 4294901760
    %6285 = vmatmul.f32.gmra.mxu0 %v6284
    %v6286 = vpop.f32.mrf.mxu0
    %v6287 = vadd.f32 %v6158, %v6286
    %6288 = vdwg.mxu0
    %v6289 = vand.u32 %v792, 4294901760
    %v6290 = vsub.f32 %v792, %v6289
    %v6291 = vand.u32 %v6290, 4294901760
    %6292 = vmatpush.msra.mxu0 %v6291
    %v6293 = vand.u32 %v791, 4294901760
    %v6294 = vsub.f32 %v791, %v6293
    %v6295 = vand.u32 %v6294, 4294901760
    %6296 = vmatpush.msra.mxu0 %v6295
    %v6297 = vand.u32 %v790, 4294901760
    %v6298 = vsub.f32 %v790, %v6297
    %v6299 = vand.u32 %v6298, 4294901760
    %6300 = vmatpush.msra.mxu0 %v6299
    %v6301 = vand.u32 %v789, 4294901760
    %v6302 = vsub.f32 %v789, %v6301
    %v6303 = vand.u32 %v6302, 4294901760
    %6304 = vmatpush.msra.mxu0 %v6303
    %v6305 = vand.u32 %v788, 4294901760
    %v6306 = vsub.f32 %v788, %v6305
    %v6307 = vand.u32 %v6306, 4294901760
    %6308 = vmatpush.msra.mxu0 %v6307
    %v6309 = vand.u32 %v787, 4294901760
    %v6310 = vsub.f32 %v787, %v6309
    %v6311 = vand.u32 %v6310, 4294901760
    %6312 = vmatpush.msra.mxu0 %v6311
    %v6313 = vand.u32 %v786, 4294901760
    %v6314 = vsub.f32 %v786, %v6313
    %v6315 = vand.u32 %v6314, 4294901760
    %6316 = vmatpush.msra.mxu0 %v6315
    %v6317 = vand.u32 %v785, 4294901760
    %v6318 = vsub.f32 %v785, %v6317
    %v6319 = vand.u32 %v6318, 4294901760
    %6320 = vmatpush.msra.mxu0 %v6319
    %v6321 = vand.u32 %v784, 4294901760
    %v6322 = vsub.f32 %v784, %v6321
    %v6323 = vand.u32 %v6322, 4294901760
    %6324 = vmatpush.msra.mxu0 %v6323
    %v6325 = vand.u32 %v783, 4294901760
    %v6326 = vsub.f32 %v783, %v6325
    %v6327 = vand.u32 %v6326, 4294901760
    %6328 = vmatpush.msra.mxu0 %v6327
    %v6329 = vand.u32 %v782, 4294901760
    %v6330 = vsub.f32 %v782, %v6329
    %v6331 = vand.u32 %v6330, 4294901760
    %6332 = vmatpush.msra.mxu0 %v6331
    %v6333 = vand.u32 %v781, 4294901760
    %v6334 = vsub.f32 %v781, %v6333
    %v6335 = vand.u32 %v6334, 4294901760
    %6336 = vmatpush.msra.mxu0 %v6335
    %v6337 = vand.u32 %v780, 4294901760
    %v6338 = vsub.f32 %v780, %v6337
    %v6339 = vand.u32 %v6338, 4294901760
    %6340 = vmatpush.msra.mxu0 %v6339
    %v6341 = vand.u32 %v779, 4294901760
    %v6342 = vsub.f32 %v779, %v6341
    %v6343 = vand.u32 %v6342, 4294901760
    %6344 = vmatpush.msra.mxu0 %v6343
    %v6345 = vand.u32 %v778, 4294901760
    %v6346 = vsub.f32 %v778, %v6345
    %v6347 = vand.u32 %v6346, 4294901760
    %6348 = vmatpush.msra.mxu0 %v6347
    %v6349 = vand.u32 %v777, 4294901760
    %v6350 = vsub.f32 %v777, %v6349
    %v6351 = vand.u32 %v6350, 4294901760
    %6352 = vmatpush.msra.mxu0 %v6351
    %v6353 = vand.u32 %v495, 4294901760
    %6354 = vmatmul.f32.gmra.mxu0 %v6353
    %v6355 = vpop.f32.mrf.mxu0
    %v6356 = vadd.f32 %v6197, %v6355
    %v6357 = vand.u32 %v507, 4294901760
    %6358 = vmatmul.f32.gmra.mxu0 %v6357
    %v6359 = vpop.f32.mrf.mxu0
    %v6360 = vadd.f32 %v6203, %v6359
    %v6361 = vand.u32 %v519, 4294901760
    %6362 = vmatmul.f32.gmra.mxu0 %v6361
    %v6363 = vpop.f32.mrf.mxu0
    %v6364 = vadd.f32 %v6209, %v6363
    %v6365 = vand.u32 %v531, 4294901760
    %6366 = vmatmul.f32.gmra.mxu0 %v6365
    %v6367 = vpop.f32.mrf.mxu0
    %v6368 = vadd.f32 %v6215, %v6367
    %v6369 = vand.u32 %v543, 4294901760
    %6370 = vmatmul.f32.gmra.mxu0 %v6369
    %v6371 = vpop.f32.mrf.mxu0
    %v6372 = vadd.f32 %v6221, %v6371
    %v6373 = vand.u32 %v555, 4294901760
    %6374 = vmatmul.f32.gmra.mxu0 %v6373
    %v6375 = vpop.f32.mrf.mxu0
    %v6376 = vadd.f32 %v6227, %v6375
    %v6377 = vand.u32 %v567, 4294901760
    %6378 = vmatmul.f32.gmra.mxu0 %v6377
    %v6379 = vpop.f32.mrf.mxu0
    %v6380 = vadd.f32 %v6233, %v6379
    %v6381 = vand.u32 %v579, 4294901760
    %6382 = vmatmul.f32.gmra.mxu0 %v6381
    %v6383 = vpop.f32.mrf.mxu0
    %v6384 = vadd.f32 %v6239, %v6383
    %v6385 = vand.u32 %v591, 4294901760
    %6386 = vmatmul.f32.gmra.mxu0 %v6385
    %v6387 = vpop.f32.mrf.mxu0
    %v6388 = vadd.f32 %v6245, %v6387
    %v6389 = vand.u32 %v603, 4294901760
    %6390 = vmatmul.f32.gmra.mxu0 %v6389
    %v6391 = vpop.f32.mrf.mxu0
    %v6392 = vadd.f32 %v6251, %v6391
    %v6393 = vand.u32 %v615, 4294901760
    %6394 = vmatmul.f32.gmra.mxu0 %v6393
    %v6395 = vpop.f32.mrf.mxu0
    %v6396 = vadd.f32 %v6257, %v6395
    %v6397 = vand.u32 %v627, 4294901760
    %6398 = vmatmul.f32.gmra.mxu0 %v6397
    %v6399 = vpop.f32.mrf.mxu0
    %v6400 = vadd.f32 %v6263, %v6399
    %v6401 = vand.u32 %v639, 4294901760
    %6402 = vmatmul.f32.gmra.mxu0 %v6401
    %v6403 = vpop.f32.mrf.mxu0
    %v6404 = vadd.f32 %v6269, %v6403
    %v6405 = vand.u32 %v651, 4294901760
    %6406 = vmatmul.f32.gmra.mxu0 %v6405
    %v6407 = vpop.f32.mrf.mxu0
    %v6408 = vadd.f32 %v6275, %v6407
    %v6409 = vand.u32 %v663, 4294901760
    %6410 = vmatmul.f32.gmra.mxu0 %v6409
    %v6411 = vpop.f32.mrf.mxu0
    %v6412 = vadd.f32 %v6281, %v6411
    %v6413 = vand.u32 %v675, 4294901760
    %6414 = vmatmul.f32.gmra.mxu0 %v6413
    %v6415 = vpop.f32.mrf.mxu0
    %v6416 = vadd.f32 %v6287, %v6415
    %6417 = vdwg.mxu0
    %v6418 = vand.u32 %v792, 4294901760
    %6419 = vmatpush.msra.mxu0 %v6418
    %v6420 = vand.u32 %v791, 4294901760
    %6421 = vmatpush.msra.mxu0 %v6420
    %v6422 = vand.u32 %v790, 4294901760
    %6423 = vmatpush.msra.mxu0 %v6422
    %v6424 = vand.u32 %v789, 4294901760
    %6425 = vmatpush.msra.mxu0 %v6424
    %v6426 = vand.u32 %v788, 4294901760
    %6427 = vmatpush.msra.mxu0 %v6426
    %v6428 = vand.u32 %v787, 4294901760
    %6429 = vmatpush.msra.mxu0 %v6428
    %v6430 = vand.u32 %v786, 4294901760
    %6431 = vmatpush.msra.mxu0 %v6430
    %v6432 = vand.u32 %v785, 4294901760
    %6433 = vmatpush.msra.mxu0 %v6432
    %v6434 = vand.u32 %v784, 4294901760
    %6435 = vmatpush.msra.mxu0 %v6434
    %v6436 = vand.u32 %v783, 4294901760
    %6437 = vmatpush.msra.mxu0 %v6436
    %v6438 = vand.u32 %v782, 4294901760
    %6439 = vmatpush.msra.mxu0 %v6438
    %v6440 = vand.u32 %v781, 4294901760
    %6441 = vmatpush.msra.mxu0 %v6440
    %v6442 = vand.u32 %v780, 4294901760
    %6443 = vmatpush.msra.mxu0 %v6442
    %v6444 = vand.u32 %v779, 4294901760
    %6445 = vmatpush.msra.mxu0 %v6444
    %v6446 = vand.u32 %v778, 4294901760
    %6447 = vmatpush.msra.mxu0 %v6446
    %v6448 = vand.u32 %v777, 4294901760
    %6449 = vmatpush.msra.mxu0 %v6448
    %v6450 = vand.u32 %v495, 4294901760
    %6451 = vmatmul.f32.gmra.mxu0 %v6450
    %v6452 = vpop.f32.mrf.mxu0
    %v6453 = vadd.f32 %v6356, %v6452
    %v6454 = vand.u32 %v507, 4294901760
    %6455 = vmatmul.f32.gmra.mxu0 %v6454
    %v6456 = vpop.f32.mrf.mxu0
    %v6457 = vadd.f32 %v6360, %v6456
    %v6458 = vand.u32 %v519, 4294901760
    %6459 = vmatmul.f32.gmra.mxu0 %v6458
    %v6460 = vpop.f32.mrf.mxu0
    %v6461 = vadd.f32 %v6364, %v6460
    %v6462 = vand.u32 %v531, 4294901760
    %6463 = vmatmul.f32.gmra.mxu0 %v6462
    %v6464 = vpop.f32.mrf.mxu0
    %v6465 = vadd.f32 %v6368, %v6464
    %v6466 = vand.u32 %v543, 4294901760
    %6467 = vmatmul.f32.gmra.mxu0 %v6466
    %v6468 = vpop.f32.mrf.mxu0
    %v6469 = vadd.f32 %v6372, %v6468
    %v6470 = vand.u32 %v555, 4294901760
    %6471 = vmatmul.f32.gmra.mxu0 %v6470
    %v6472 = vpop.f32.mrf.mxu0
    %v6473 = vadd.f32 %v6376, %v6472
    %v6474 = vand.u32 %v567, 4294901760
    %6475 = vmatmul.f32.gmra.mxu0 %v6474
    %v6476 = vpop.f32.mrf.mxu0
    %v6477 = vadd.f32 %v6380, %v6476
    %v6478 = vand.u32 %v579, 4294901760
    %6479 = vmatmul.f32.gmra.mxu0 %v6478
    %v6480 = vpop.f32.mrf.mxu0
    %v6481 = vadd.f32 %v6384, %v6480
    %v6482 = vand.u32 %v591, 4294901760
    %6483 = vmatmul.f32.gmra.mxu0 %v6482
    %v6484 = vpop.f32.mrf.mxu0
    %v6485 = vadd.f32 %v6388, %v6484
    %v6486 = vand.u32 %v603, 4294901760
    %6487 = vmatmul.f32.gmra.mxu0 %v6486
    %v6488 = vpop.f32.mrf.mxu0
    %v6489 = vadd.f32 %v6392, %v6488
    %v6490 = vand.u32 %v615, 4294901760
    %6491 = vmatmul.f32.gmra.mxu0 %v6490
    %v6492 = vpop.f32.mrf.mxu0
    %v6493 = vadd.f32 %v6396, %v6492
    %v6494 = vand.u32 %v627, 4294901760
    %6495 = vmatmul.f32.gmra.mxu0 %v6494
    %v6496 = vpop.f32.mrf.mxu0
    %v6497 = vadd.f32 %v6400, %v6496
    %v6498 = vand.u32 %v639, 4294901760
    %6499 = vmatmul.f32.gmra.mxu0 %v6498
    %v6500 = vpop.f32.mrf.mxu0
    %v6501 = vadd.f32 %v6404, %v6500
    %v6502 = vand.u32 %v651, 4294901760
    %6503 = vmatmul.f32.gmra.mxu0 %v6502
    %v6504 = vpop.f32.mrf.mxu0
    %v6505 = vadd.f32 %v6408, %v6504
    %v6506 = vand.u32 %v663, 4294901760
    %6507 = vmatmul.f32.gmra.mxu0 %v6506
    %v6508 = vpop.f32.mrf.mxu0
    %v6509 = vadd.f32 %v6412, %v6508
    %v6510 = vand.u32 %v675, 4294901760
    %6511 = vmatmul.f32.gmra.mxu0 %v6510
    %v6512 = vpop.f32.mrf.mxu0
    %v6513 = vadd.f32 %v6416, %v6512
    %6514 = vdwg.mxu0
    %v6515 = vand.u32 %v808, 4294901760
    %6516 = vmatpush.msra.mxu0 %v6515
    %v6517 = vand.u32 %v807, 4294901760
    %6518 = vmatpush.msra.mxu0 %v6517
    %v6519 = vand.u32 %v806, 4294901760
    %6520 = vmatpush.msra.mxu0 %v6519
    %v6521 = vand.u32 %v805, 4294901760
    %6522 = vmatpush.msra.mxu0 %v6521
    %v6523 = vand.u32 %v804, 4294901760
    %6524 = vmatpush.msra.mxu0 %v6523
    %v6525 = vand.u32 %v803, 4294901760
    %6526 = vmatpush.msra.mxu0 %v6525
    %v6527 = vand.u32 %v802, 4294901760
    %6528 = vmatpush.msra.mxu0 %v6527
    %v6529 = vand.u32 %v801, 4294901760
    %6530 = vmatpush.msra.mxu0 %v6529
    %v6531 = vand.u32 %v800, 4294901760
    %6532 = vmatpush.msra.mxu0 %v6531
    %v6533 = vand.u32 %v799, 4294901760
    %6534 = vmatpush.msra.mxu0 %v6533
    %v6535 = vand.u32 %v798, 4294901760
    %6536 = vmatpush.msra.mxu0 %v6535
    %v6537 = vand.u32 %v797, 4294901760
    %6538 = vmatpush.msra.mxu0 %v6537
    %v6539 = vand.u32 %v796, 4294901760
    %6540 = vmatpush.msra.mxu0 %v6539
    %v6541 = vand.u32 %v795, 4294901760
    %6542 = vmatpush.msra.mxu0 %v6541
    %v6543 = vand.u32 %v794, 4294901760
    %6544 = vmatpush.msra.mxu0 %v6543
    %v6545 = vand.u32 %v793, 4294901760
    %6546 = vmatpush.msra.mxu0 %v6545
    %v6547 = vand.u32 %v496, 4294901760
    %v6548 = vsub.f32 %v496, %v6547
    %v6549 = vand.u32 %v6548, 4294901760
    %v6550 = vsub.f32 %v6548, %v6549
    %v6551 = vand.u32 %v6550, 4294901760
    %6552 = vmatmul.f32.gmra.mxu0 %v6551
    %v6553 = vpop.f32.mrf.mxu0
    %v6554 = vadd.f32 %v6453, %v6553
    %v6555 = vand.u32 %v508, 4294901760
    %v6556 = vsub.f32 %v508, %v6555
    %v6557 = vand.u32 %v6556, 4294901760
    %v6558 = vsub.f32 %v6556, %v6557
    %v6559 = vand.u32 %v6558, 4294901760
    %6560 = vmatmul.f32.gmra.mxu0 %v6559
    %v6561 = vpop.f32.mrf.mxu0
    %v6562 = vadd.f32 %v6457, %v6561
    %v6563 = vand.u32 %v520, 4294901760
    %v6564 = vsub.f32 %v520, %v6563
    %v6565 = vand.u32 %v6564, 4294901760
    %v6566 = vsub.f32 %v6564, %v6565
    %v6567 = vand.u32 %v6566, 4294901760
    %6568 = vmatmul.f32.gmra.mxu0 %v6567
    %v6569 = vpop.f32.mrf.mxu0
    %v6570 = vadd.f32 %v6461, %v6569
    %v6571 = vand.u32 %v532, 4294901760
    %v6572 = vsub.f32 %v532, %v6571
    %v6573 = vand.u32 %v6572, 4294901760
    %v6574 = vsub.f32 %v6572, %v6573
    %v6575 = vand.u32 %v6574, 4294901760
    %6576 = vmatmul.f32.gmra.mxu0 %v6575
    %v6577 = vpop.f32.mrf.mxu0
    %v6578 = vadd.f32 %v6465, %v6577
    %v6579 = vand.u32 %v544, 4294901760
    %v6580 = vsub.f32 %v544, %v6579
    %v6581 = vand.u32 %v6580, 4294901760
    %v6582 = vsub.f32 %v6580, %v6581
    %v6583 = vand.u32 %v6582, 4294901760
    %6584 = vmatmul.f32.gmra.mxu0 %v6583
    %v6585 = vpop.f32.mrf.mxu0
    %v6586 = vadd.f32 %v6469, %v6585
    %v6587 = vand.u32 %v556, 4294901760
    %v6588 = vsub.f32 %v556, %v6587
    %v6589 = vand.u32 %v6588, 4294901760
    %v6590 = vsub.f32 %v6588, %v6589
    %v6591 = vand.u32 %v6590, 4294901760
    %6592 = vmatmul.f32.gmra.mxu0 %v6591
    %v6593 = vpop.f32.mrf.mxu0
    %v6594 = vadd.f32 %v6473, %v6593
    %v6595 = vand.u32 %v568, 4294901760
    %v6596 = vsub.f32 %v568, %v6595
    %v6597 = vand.u32 %v6596, 4294901760
    %v6598 = vsub.f32 %v6596, %v6597
    %v6599 = vand.u32 %v6598, 4294901760
    %6600 = vmatmul.f32.gmra.mxu0 %v6599
    %v6601 = vpop.f32.mrf.mxu0
    %v6602 = vadd.f32 %v6477, %v6601
    %v6603 = vand.u32 %v580, 4294901760
    %v6604 = vsub.f32 %v580, %v6603
    %v6605 = vand.u32 %v6604, 4294901760
    %v6606 = vsub.f32 %v6604, %v6605
    %v6607 = vand.u32 %v6606, 4294901760
    %6608 = vmatmul.f32.gmra.mxu0 %v6607
    %v6609 = vpop.f32.mrf.mxu0
    %v6610 = vadd.f32 %v6481, %v6609
    %v6611 = vand.u32 %v592, 4294901760
    %v6612 = vsub.f32 %v592, %v6611
    %v6613 = vand.u32 %v6612, 4294901760
    %v6614 = vsub.f32 %v6612, %v6613
    %v6615 = vand.u32 %v6614, 4294901760
    %6616 = vmatmul.f32.gmra.mxu0 %v6615
    %v6617 = vpop.f32.mrf.mxu0
    %v6618 = vadd.f32 %v6485, %v6617
    %v6619 = vand.u32 %v604, 4294901760
    %v6620 = vsub.f32 %v604, %v6619
    %v6621 = vand.u32 %v6620, 4294901760
    %v6622 = vsub.f32 %v6620, %v6621
    %v6623 = vand.u32 %v6622, 4294901760
    %6624 = vmatmul.f32.gmra.mxu0 %v6623
    %v6625 = vpop.f32.mrf.mxu0
    %v6626 = vadd.f32 %v6489, %v6625
    %v6627 = vand.u32 %v616, 4294901760
    %v6628 = vsub.f32 %v616, %v6627
    %v6629 = vand.u32 %v6628, 4294901760
    %v6630 = vsub.f32 %v6628, %v6629
    %v6631 = vand.u32 %v6630, 4294901760
    %6632 = vmatmul.f32.gmra.mxu0 %v6631
    %v6633 = vpop.f32.mrf.mxu0
    %v6634 = vadd.f32 %v6493, %v6633
    %v6635 = vand.u32 %v628, 4294901760
    %v6636 = vsub.f32 %v628, %v6635
    %v6637 = vand.u32 %v6636, 4294901760
    %v6638 = vsub.f32 %v6636, %v6637
    %v6639 = vand.u32 %v6638, 4294901760
    %6640 = vmatmul.f32.gmra.mxu0 %v6639
    %v6641 = vpop.f32.mrf.mxu0
    %v6642 = vadd.f32 %v6497, %v6641
    %v6643 = vand.u32 %v640, 4294901760
    %v6644 = vsub.f32 %v640, %v6643
    %v6645 = vand.u32 %v6644, 4294901760
    %v6646 = vsub.f32 %v6644, %v6645
    %v6647 = vand.u32 %v6646, 4294901760
    %6648 = vmatmul.f32.gmra.mxu0 %v6647
    %v6649 = vpop.f32.mrf.mxu0
    %v6650 = vadd.f32 %v6501, %v6649
    %v6651 = vand.u32 %v652, 4294901760
    %v6652 = vsub.f32 %v652, %v6651
    %v6653 = vand.u32 %v6652, 4294901760
    %v6654 = vsub.f32 %v6652, %v6653
    %v6655 = vand.u32 %v6654, 4294901760
    %6656 = vmatmul.f32.gmra.mxu0 %v6655
    %v6657 = vpop.f32.mrf.mxu0
    %v6658 = vadd.f32 %v6505, %v6657
    %v6659 = vand.u32 %v664, 4294901760
    %v6660 = vsub.f32 %v664, %v6659
    %v6661 = vand.u32 %v6660, 4294901760
    %v6662 = vsub.f32 %v6660, %v6661
    %v6663 = vand.u32 %v6662, 4294901760
    %6664 = vmatmul.f32.gmra.mxu0 %v6663
    %v6665 = vpop.f32.mrf.mxu0
    %v6666 = vadd.f32 %v6509, %v6665
    %v6667 = vand.u32 %v676, 4294901760
    %v6668 = vsub.f32 %v676, %v6667
    %v6669 = vand.u32 %v6668, 4294901760
    %v6670 = vsub.f32 %v6668, %v6669
    %v6671 = vand.u32 %v6670, 4294901760
    %6672 = vmatmul.f32.gmra.mxu0 %v6671
    %v6673 = vpop.f32.mrf.mxu0
    %v6674 = vadd.f32 %v6513, %v6673
    %6675 = vdwg.mxu0
    %v6676 = vand.u32 %v808, 4294901760
    %v6677 = vsub.f32 %v808, %v6676
    %v6678 = vand.u32 %v6677, 4294901760
    %v6679 = vsub.f32 %v6677, %v6678
    %v6680 = vand.u32 %v6679, 4294901760
    %6681 = vmatpush.msra.mxu0 %v6680
    %v6682 = vand.u32 %v807, 4294901760
    %v6683 = vsub.f32 %v807, %v6682
    %v6684 = vand.u32 %v6683, 4294901760
    %v6685 = vsub.f32 %v6683, %v6684
    %v6686 = vand.u32 %v6685, 4294901760
    %6687 = vmatpush.msra.mxu0 %v6686
    %v6688 = vand.u32 %v806, 4294901760
    %v6689 = vsub.f32 %v806, %v6688
    %v6690 = vand.u32 %v6689, 4294901760
    %v6691 = vsub.f32 %v6689, %v6690
    %v6692 = vand.u32 %v6691, 4294901760
    %6693 = vmatpush.msra.mxu0 %v6692
    %v6694 = vand.u32 %v805, 4294901760
    %v6695 = vsub.f32 %v805, %v6694
    %v6696 = vand.u32 %v6695, 4294901760
    %v6697 = vsub.f32 %v6695, %v6696
    %v6698 = vand.u32 %v6697, 4294901760
    %6699 = vmatpush.msra.mxu0 %v6698
    %v6700 = vand.u32 %v804, 4294901760
    %v6701 = vsub.f32 %v804, %v6700
    %v6702 = vand.u32 %v6701, 4294901760
    %v6703 = vsub.f32 %v6701, %v6702
    %v6704 = vand.u32 %v6703, 4294901760
    %6705 = vmatpush.msra.mxu0 %v6704
    %v6706 = vand.u32 %v803, 4294901760
    %v6707 = vsub.f32 %v803, %v6706
    %v6708 = vand.u32 %v6707, 4294901760
    %v6709 = vsub.f32 %v6707, %v6708
    %v6710 = vand.u32 %v6709, 4294901760
    %6711 = vmatpush.msra.mxu0 %v6710
    %v6712 = vand.u32 %v802, 4294901760
    %v6713 = vsub.f32 %v802, %v6712
    %v6714 = vand.u32 %v6713, 4294901760
    %v6715 = vsub.f32 %v6713, %v6714
    %v6716 = vand.u32 %v6715, 4294901760
    %6717 = vmatpush.msra.mxu0 %v6716
    %v6718 = vand.u32 %v801, 4294901760
    %v6719 = vsub.f32 %v801, %v6718
    %v6720 = vand.u32 %v6719, 4294901760
    %v6721 = vsub.f32 %v6719, %v6720
    %v6722 = vand.u32 %v6721, 4294901760
    %6723 = vmatpush.msra.mxu0 %v6722
    %v6724 = vand.u32 %v800, 4294901760
    %v6725 = vsub.f32 %v800, %v6724
    %v6726 = vand.u32 %v6725, 4294901760
    %v6727 = vsub.f32 %v6725, %v6726
    %v6728 = vand.u32 %v6727, 4294901760
    %6729 = vmatpush.msra.mxu0 %v6728
    %v6730 = vand.u32 %v799, 4294901760
    %v6731 = vsub.f32 %v799, %v6730
    %v6732 = vand.u32 %v6731, 4294901760
    %v6733 = vsub.f32 %v6731, %v6732
    %v6734 = vand.u32 %v6733, 4294901760
    %6735 = vmatpush.msra.mxu0 %v6734
    %v6736 = vand.u32 %v798, 4294901760
    %v6737 = vsub.f32 %v798, %v6736
    %v6738 = vand.u32 %v6737, 4294901760
    %v6739 = vsub.f32 %v6737, %v6738
    %v6740 = vand.u32 %v6739, 4294901760
    %6741 = vmatpush.msra.mxu0 %v6740
    %v6742 = vand.u32 %v797, 4294901760
    %v6743 = vsub.f32 %v797, %v6742
    %v6744 = vand.u32 %v6743, 4294901760
    %v6745 = vsub.f32 %v6743, %v6744
    %v6746 = vand.u32 %v6745, 4294901760
    %6747 = vmatpush.msra.mxu0 %v6746
    %v6748 = vand.u32 %v796, 4294901760
    %v6749 = vsub.f32 %v796, %v6748
    %v6750 = vand.u32 %v6749, 4294901760
    %v6751 = vsub.f32 %v6749, %v6750
    %v6752 = vand.u32 %v6751, 4294901760
    %6753 = vmatpush.msra.mxu0 %v6752
    %v6754 = vand.u32 %v795, 4294901760
    %v6755 = vsub.f32 %v795, %v6754
    %v6756 = vand.u32 %v6755, 4294901760
    %v6757 = vsub.f32 %v6755, %v6756
    %v6758 = vand.u32 %v6757, 4294901760
    %6759 = vmatpush.msra.mxu0 %v6758
    %v6760 = vand.u32 %v794, 4294901760
    %v6761 = vsub.f32 %v794, %v6760
    %v6762 = vand.u32 %v6761, 4294901760
    %v6763 = vsub.f32 %v6761, %v6762
    %v6764 = vand.u32 %v6763, 4294901760
    %6765 = vmatpush.msra.mxu0 %v6764
    %v6766 = vand.u32 %v793, 4294901760
    %v6767 = vsub.f32 %v793, %v6766
    %v6768 = vand.u32 %v6767, 4294901760
    %v6769 = vsub.f32 %v6767, %v6768
    %v6770 = vand.u32 %v6769, 4294901760
    %6771 = vmatpush.msra.mxu0 %v6770
    %v6772 = vand.u32 %v496, 4294901760
    %6773 = vmatmul.f32.gmra.mxu0 %v6772
    %v6774 = vpop.f32.mrf.mxu0
    %v6775 = vadd.f32 %v6554, %v6774
    %v6776 = vand.u32 %v508, 4294901760
    %6777 = vmatmul.f32.gmra.mxu0 %v6776
    %v6778 = vpop.f32.mrf.mxu0
    %v6779 = vadd.f32 %v6562, %v6778
    %v6780 = vand.u32 %v520, 4294901760
    %6781 = vmatmul.f32.gmra.mxu0 %v6780
    %v6782 = vpop.f32.mrf.mxu0
    %v6783 = vadd.f32 %v6570, %v6782
    %v6784 = vand.u32 %v532, 4294901760
    %6785 = vmatmul.f32.gmra.mxu0 %v6784
    %v6786 = vpop.f32.mrf.mxu0
    %v6787 = vadd.f32 %v6578, %v6786
    %v6788 = vand.u32 %v544, 4294901760
    %6789 = vmatmul.f32.gmra.mxu0 %v6788
    %v6790 = vpop.f32.mrf.mxu0
    %v6791 = vadd.f32 %v6586, %v6790
    %v6792 = vand.u32 %v556, 4294901760
    %6793 = vmatmul.f32.gmra.mxu0 %v6792
    %v6794 = vpop.f32.mrf.mxu0
    %v6795 = vadd.f32 %v6594, %v6794
    %v6796 = vand.u32 %v568, 4294901760
    %6797 = vmatmul.f32.gmra.mxu0 %v6796
    %v6798 = vpop.f32.mrf.mxu0
    %v6799 = vadd.f32 %v6602, %v6798
    %v6800 = vand.u32 %v580, 4294901760
    %6801 = vmatmul.f32.gmra.mxu0 %v6800
    %v6802 = vpop.f32.mrf.mxu0
    %v6803 = vadd.f32 %v6610, %v6802
    %v6804 = vand.u32 %v592, 4294901760
    %6805 = vmatmul.f32.gmra.mxu0 %v6804
    %v6806 = vpop.f32.mrf.mxu0
    %v6807 = vadd.f32 %v6618, %v6806
    %v6808 = vand.u32 %v604, 4294901760
    %6809 = vmatmul.f32.gmra.mxu0 %v6808
    %v6810 = vpop.f32.mrf.mxu0
    %v6811 = vadd.f32 %v6626, %v6810
    %v6812 = vand.u32 %v616, 4294901760
    %6813 = vmatmul.f32.gmra.mxu0 %v6812
    %v6814 = vpop.f32.mrf.mxu0
    %v6815 = vadd.f32 %v6634, %v6814
    %v6816 = vand.u32 %v628, 4294901760
    %6817 = vmatmul.f32.gmra.mxu0 %v6816
    %v6818 = vpop.f32.mrf.mxu0
    %v6819 = vadd.f32 %v6642, %v6818
    %v6820 = vand.u32 %v640, 4294901760
    %6821 = vmatmul.f32.gmra.mxu0 %v6820
    %v6822 = vpop.f32.mrf.mxu0
    %v6823 = vadd.f32 %v6650, %v6822
    %v6824 = vand.u32 %v652, 4294901760
    %6825 = vmatmul.f32.gmra.mxu0 %v6824
    %v6826 = vpop.f32.mrf.mxu0
    %v6827 = vadd.f32 %v6658, %v6826
    %v6828 = vand.u32 %v664, 4294901760
    %6829 = vmatmul.f32.gmra.mxu0 %v6828
    %v6830 = vpop.f32.mrf.mxu0
    %v6831 = vadd.f32 %v6666, %v6830
    %v6832 = vand.u32 %v676, 4294901760
    %6833 = vmatmul.f32.gmra.mxu0 %v6832
    %v6834 = vpop.f32.mrf.mxu0
    %v6835 = vadd.f32 %v6674, %v6834
    %6836 = vdwg.mxu0
    %v6837 = vand.u32 %v808, 4294901760
    %v6838 = vsub.f32 %v808, %v6837
    %6839 = vmatpush.msra.mxu0 %v6838
    %v6840 = vand.u32 %v807, 4294901760
    %v6841 = vsub.f32 %v807, %v6840
    %6842 = vmatpush.msra.mxu0 %v6841
    %v6843 = vand.u32 %v806, 4294901760
    %v6844 = vsub.f32 %v806, %v6843
    %6845 = vmatpush.msra.mxu0 %v6844
    %v6846 = vand.u32 %v805, 4294901760
    %v6847 = vsub.f32 %v805, %v6846
    %6848 = vmatpush.msra.mxu0 %v6847
    %v6849 = vand.u32 %v804, 4294901760
    %v6850 = vsub.f32 %v804, %v6849
    %6851 = vmatpush.msra.mxu0 %v6850
    %v6852 = vand.u32 %v803, 4294901760
    %v6853 = vsub.f32 %v803, %v6852
    %6854 = vmatpush.msra.mxu0 %v6853
    %v6855 = vand.u32 %v802, 4294901760
    %v6856 = vsub.f32 %v802, %v6855
    %6857 = vmatpush.msra.mxu0 %v6856
    %v6858 = vand.u32 %v801, 4294901760
    %v6859 = vsub.f32 %v801, %v6858
    %6860 = vmatpush.msra.mxu0 %v6859
    %v6861 = vand.u32 %v800, 4294901760
    %v6862 = vsub.f32 %v800, %v6861
    %6863 = vmatpush.msra.mxu0 %v6862
    %v6864 = vand.u32 %v799, 4294901760
    %v6865 = vsub.f32 %v799, %v6864
    %6866 = vmatpush.msra.mxu0 %v6865
    %v6867 = vand.u32 %v798, 4294901760
    %v6868 = vsub.f32 %v798, %v6867
    %6869 = vmatpush.msra.mxu0 %v6868
    %v6870 = vand.u32 %v797, 4294901760
    %v6871 = vsub.f32 %v797, %v6870
    %6872 = vmatpush.msra.mxu0 %v6871
    %v6873 = vand.u32 %v796, 4294901760
    %v6874 = vsub.f32 %v796, %v6873
    %6875 = vmatpush.msra.mxu0 %v6874
    %v6876 = vand.u32 %v795, 4294901760
    %v6877 = vsub.f32 %v795, %v6876
    %6878 = vmatpush.msra.mxu0 %v6877
    %v6879 = vand.u32 %v794, 4294901760
    %v6880 = vsub.f32 %v794, %v6879
    %6881 = vmatpush.msra.mxu0 %v6880
    %v6882 = vand.u32 %v793, 4294901760
    %v6883 = vsub.f32 %v793, %v6882
    %6884 = vmatpush.msra.mxu0 %v6883
    %v6885 = vand.u32 %v496, 4294901760
    %v6886 = vsub.f32 %v496, %v6885
    %6887 = vmatmul.f32.gmra.mxu0 %v6886
    %v6888 = vpop.f32.mrf.mxu0
    %v6889 = vadd.f32 %v6775, %v6888
    %v6890 = vand.u32 %v508, 4294901760
    %v6891 = vsub.f32 %v508, %v6890
    %6892 = vmatmul.f32.gmra.mxu0 %v6891
    %v6893 = vpop.f32.mrf.mxu0
    %v6894 = vadd.f32 %v6779, %v6893
    %v6895 = vand.u32 %v520, 4294901760
    %v6896 = vsub.f32 %v520, %v6895
    %6897 = vmatmul.f32.gmra.mxu0 %v6896
    %v6898 = vpop.f32.mrf.mxu0
    %v6899 = vadd.f32 %v6783, %v6898
    %v6900 = vand.u32 %v532, 4294901760
    %v6901 = vsub.f32 %v532, %v6900
    %6902 = vmatmul.f32.gmra.mxu0 %v6901
    %v6903 = vpop.f32.mrf.mxu0
    %v6904 = vadd.f32 %v6787, %v6903
    %v6905 = vand.u32 %v544, 4294901760
    %v6906 = vsub.f32 %v544, %v6905
    %6907 = vmatmul.f32.gmra.mxu0 %v6906
    %v6908 = vpop.f32.mrf.mxu0
    %v6909 = vadd.f32 %v6791, %v6908
    %v6910 = vand.u32 %v556, 4294901760
    %v6911 = vsub.f32 %v556, %v6910
    %6912 = vmatmul.f32.gmra.mxu0 %v6911
    %v6913 = vpop.f32.mrf.mxu0
    %v6914 = vadd.f32 %v6795, %v6913
    %v6915 = vand.u32 %v568, 4294901760
    %v6916 = vsub.f32 %v568, %v6915
    %6917 = vmatmul.f32.gmra.mxu0 %v6916
    %v6918 = vpop.f32.mrf.mxu0
    %v6919 = vadd.f32 %v6799, %v6918
    %v6920 = vand.u32 %v580, 4294901760
    %v6921 = vsub.f32 %v580, %v6920
    %6922 = vmatmul.f32.gmra.mxu0 %v6921
    %v6923 = vpop.f32.mrf.mxu0
    %v6924 = vadd.f32 %v6803, %v6923
    %v6925 = vand.u32 %v592, 4294901760
    %v6926 = vsub.f32 %v592, %v6925
    %6927 = vmatmul.f32.gmra.mxu0 %v6926
    %v6928 = vpop.f32.mrf.mxu0
    %v6929 = vadd.f32 %v6807, %v6928
    %v6930 = vand.u32 %v604, 4294901760
    %v6931 = vsub.f32 %v604, %v6930
    %6932 = vmatmul.f32.gmra.mxu0 %v6931
    %v6933 = vpop.f32.mrf.mxu0
    %v6934 = vadd.f32 %v6811, %v6933
    %v6935 = vand.u32 %v616, 4294901760
    %v6936 = vsub.f32 %v616, %v6935
    %6937 = vmatmul.f32.gmra.mxu0 %v6936
    %v6938 = vpop.f32.mrf.mxu0
    %v6939 = vadd.f32 %v6815, %v6938
    %v6940 = vand.u32 %v628, 4294901760
    %v6941 = vsub.f32 %v628, %v6940
    %6942 = vmatmul.f32.gmra.mxu0 %v6941
    %v6943 = vpop.f32.mrf.mxu0
    %v6944 = vadd.f32 %v6819, %v6943
    %v6945 = vand.u32 %v640, 4294901760
    %v6946 = vsub.f32 %v640, %v6945
    %6947 = vmatmul.f32.gmra.mxu0 %v6946
    %v6948 = vpop.f32.mrf.mxu0
    %v6949 = vadd.f32 %v6823, %v6948
    %v6950 = vand.u32 %v652, 4294901760
    %v6951 = vsub.f32 %v652, %v6950
    %6952 = vmatmul.f32.gmra.mxu0 %v6951
    %v6953 = vpop.f32.mrf.mxu0
    %v6954 = vadd.f32 %v6827, %v6953
    %v6955 = vand.u32 %v664, 4294901760
    %v6956 = vsub.f32 %v664, %v6955
    %6957 = vmatmul.f32.gmra.mxu0 %v6956
    %v6958 = vpop.f32.mrf.mxu0
    %v6959 = vadd.f32 %v6831, %v6958
    %v6960 = vand.u32 %v676, 4294901760
    %v6961 = vsub.f32 %v676, %v6960
    %6962 = vmatmul.f32.gmra.mxu0 %v6961
    %v6963 = vpop.f32.mrf.mxu0
    %v6964 = vadd.f32 %v6835, %v6963
    %6965 = vdwg.mxu0
    %v6966 = vand.u32 %v808, 4294901760
    %6967 = vmatpush.msra.mxu0 %v6966
    %v6968 = vand.u32 %v807, 4294901760
    %6969 = vmatpush.msra.mxu0 %v6968
    %v6970 = vand.u32 %v806, 4294901760
    %6971 = vmatpush.msra.mxu0 %v6970
    %v6972 = vand.u32 %v805, 4294901760
    %6973 = vmatpush.msra.mxu0 %v6972
    %v6974 = vand.u32 %v804, 4294901760
    %6975 = vmatpush.msra.mxu0 %v6974
    %v6976 = vand.u32 %v803, 4294901760
    %6977 = vmatpush.msra.mxu0 %v6976
    %v6978 = vand.u32 %v802, 4294901760
    %6979 = vmatpush.msra.mxu0 %v6978
    %v6980 = vand.u32 %v801, 4294901760
    %6981 = vmatpush.msra.mxu0 %v6980
    %v6982 = vand.u32 %v800, 4294901760
    %6983 = vmatpush.msra.mxu0 %v6982
    %v6984 = vand.u32 %v799, 4294901760
    %6985 = vmatpush.msra.mxu0 %v6984
    %v6986 = vand.u32 %v798, 4294901760
    %6987 = vmatpush.msra.mxu0 %v6986
    %v6988 = vand.u32 %v797, 4294901760
    %6989 = vmatpush.msra.mxu0 %v6988
    %v6990 = vand.u32 %v796, 4294901760
    %6991 = vmatpush.msra.mxu0 %v6990
    %v6992 = vand.u32 %v795, 4294901760
    %6993 = vmatpush.msra.mxu0 %v6992
    %v6994 = vand.u32 %v794, 4294901760
    %6995 = vmatpush.msra.mxu0 %v6994
    %v6996 = vand.u32 %v793, 4294901760
    %6997 = vmatpush.msra.mxu0 %v6996
    %v6998 = vand.u32 %v496, 4294901760
    %v6999 = vsub.f32 %v496, %v6998
    %v7000 = vand.u32 %v6999, 4294901760
    %7001 = vmatmul.f32.gmra.mxu0 %v7000
    %v7002 = vpop.f32.mrf.mxu0
    %v7003 = vadd.f32 %v6889, %v7002
    %v7004 = vand.u32 %v508, 4294901760
    %v7005 = vsub.f32 %v508, %v7004
    %v7006 = vand.u32 %v7005, 4294901760
    %7007 = vmatmul.f32.gmra.mxu0 %v7006
    %v7008 = vpop.f32.mrf.mxu0
    %v7009 = vadd.f32 %v6894, %v7008
    %v7010 = vand.u32 %v520, 4294901760
    %v7011 = vsub.f32 %v520, %v7010
    %v7012 = vand.u32 %v7011, 4294901760
    %7013 = vmatmul.f32.gmra.mxu0 %v7012
    %v7014 = vpop.f32.mrf.mxu0
    %v7015 = vadd.f32 %v6899, %v7014
    %v7016 = vand.u32 %v532, 4294901760
    %v7017 = vsub.f32 %v532, %v7016
    %v7018 = vand.u32 %v7017, 4294901760
    %7019 = vmatmul.f32.gmra.mxu0 %v7018
    %v7020 = vpop.f32.mrf.mxu0
    %v7021 = vadd.f32 %v6904, %v7020
    %v7022 = vand.u32 %v544, 4294901760
    %v7023 = vsub.f32 %v544, %v7022
    %v7024 = vand.u32 %v7023, 4294901760
    %7025 = vmatmul.f32.gmra.mxu0 %v7024
    %v7026 = vpop.f32.mrf.mxu0
    %v7027 = vadd.f32 %v6909, %v7026
    %v7028 = vand.u32 %v556, 4294901760
    %v7029 = vsub.f32 %v556, %v7028
    %v7030 = vand.u32 %v7029, 4294901760
    %7031 = vmatmul.f32.gmra.mxu0 %v7030
    %v7032 = vpop.f32.mrf.mxu0
    %v7033 = vadd.f32 %v6914, %v7032
    %v7034 = vand.u32 %v568, 4294901760
    %v7035 = vsub.f32 %v568, %v7034
    %v7036 = vand.u32 %v7035, 4294901760
    %7037 = vmatmul.f32.gmra.mxu0 %v7036
    %v7038 = vpop.f32.mrf.mxu0
    %v7039 = vadd.f32 %v6919, %v7038
    %v7040 = vand.u32 %v580, 4294901760
    %v7041 = vsub.f32 %v580, %v7040
    %v7042 = vand.u32 %v7041, 4294901760
    %7043 = vmatmul.f32.gmra.mxu0 %v7042
    %v7044 = vpop.f32.mrf.mxu0
    %v7045 = vadd.f32 %v6924, %v7044
    %v7046 = vand.u32 %v592, 4294901760
    %v7047 = vsub.f32 %v592, %v7046
    %v7048 = vand.u32 %v7047, 4294901760
    %7049 = vmatmul.f32.gmra.mxu0 %v7048
    %v7050 = vpop.f32.mrf.mxu0
    %v7051 = vadd.f32 %v6929, %v7050
    %v7052 = vand.u32 %v604, 4294901760
    %v7053 = vsub.f32 %v604, %v7052
    %v7054 = vand.u32 %v7053, 4294901760
    %7055 = vmatmul.f32.gmra.mxu0 %v7054
    %v7056 = vpop.f32.mrf.mxu0
    %v7057 = vadd.f32 %v6934, %v7056
    %v7058 = vand.u32 %v616, 4294901760
    %v7059 = vsub.f32 %v616, %v7058
    %v7060 = vand.u32 %v7059, 4294901760
    %7061 = vmatmul.f32.gmra.mxu0 %v7060
    %v7062 = vpop.f32.mrf.mxu0
    %v7063 = vadd.f32 %v6939, %v7062
    %v7064 = vand.u32 %v628, 4294901760
    %v7065 = vsub.f32 %v628, %v7064
    %v7066 = vand.u32 %v7065, 4294901760
    %7067 = vmatmul.f32.gmra.mxu0 %v7066
    %v7068 = vpop.f32.mrf.mxu0
    %v7069 = vadd.f32 %v6944, %v7068
    %v7070 = vand.u32 %v640, 4294901760
    %v7071 = vsub.f32 %v640, %v7070
    %v7072 = vand.u32 %v7071, 4294901760
    %7073 = vmatmul.f32.gmra.mxu0 %v7072
    %v7074 = vpop.f32.mrf.mxu0
    %v7075 = vadd.f32 %v6949, %v7074
    %v7076 = vand.u32 %v652, 4294901760
    %v7077 = vsub.f32 %v652, %v7076
    %v7078 = vand.u32 %v7077, 4294901760
    %7079 = vmatmul.f32.gmra.mxu0 %v7078
    %v7080 = vpop.f32.mrf.mxu0
    %v7081 = vadd.f32 %v6954, %v7080
    %v7082 = vand.u32 %v664, 4294901760
    %v7083 = vsub.f32 %v664, %v7082
    %v7084 = vand.u32 %v7083, 4294901760
    %7085 = vmatmul.f32.gmra.mxu0 %v7084
    %v7086 = vpop.f32.mrf.mxu0
    %v7087 = vadd.f32 %v6959, %v7086
    %v7088 = vand.u32 %v676, 4294901760
    %v7089 = vsub.f32 %v676, %v7088
    %v7090 = vand.u32 %v7089, 4294901760
    %7091 = vmatmul.f32.gmra.mxu0 %v7090
    %v7092 = vpop.f32.mrf.mxu0
    %v7093 = vadd.f32 %v6964, %v7092
    %7094 = vdwg.mxu0
    %v7095 = vand.u32 %v808, 4294901760
    %v7096 = vsub.f32 %v808, %v7095
    %v7097 = vand.u32 %v7096, 4294901760
    %7098 = vmatpush.msra.mxu0 %v7097
    %v7099 = vand.u32 %v807, 4294901760
    %v7100 = vsub.f32 %v807, %v7099
    %v7101 = vand.u32 %v7100, 4294901760
    %7102 = vmatpush.msra.mxu0 %v7101
    %v7103 = vand.u32 %v806, 4294901760
    %v7104 = vsub.f32 %v806, %v7103
    %v7105 = vand.u32 %v7104, 4294901760
    %7106 = vmatpush.msra.mxu0 %v7105
    %v7107 = vand.u32 %v805, 4294901760
    %v7108 = vsub.f32 %v805, %v7107
    %v7109 = vand.u32 %v7108, 4294901760
    %7110 = vmatpush.msra.mxu0 %v7109
    %v7111 = vand.u32 %v804, 4294901760
    %v7112 = vsub.f32 %v804, %v7111
    %v7113 = vand.u32 %v7112, 4294901760
    %7114 = vmatpush.msra.mxu0 %v7113
    %v7115 = vand.u32 %v803, 4294901760
    %v7116 = vsub.f32 %v803, %v7115
    %v7117 = vand.u32 %v7116, 4294901760
    %7118 = vmatpush.msra.mxu0 %v7117
    %v7119 = vand.u32 %v802, 4294901760
    %v7120 = vsub.f32 %v802, %v7119
    %v7121 = vand.u32 %v7120, 4294901760
    %7122 = vmatpush.msra.mxu0 %v7121
    %v7123 = vand.u32 %v801, 4294901760
    %v7124 = vsub.f32 %v801, %v7123
    %v7125 = vand.u32 %v7124, 4294901760
    %7126 = vmatpush.msra.mxu0 %v7125
    %v7127 = vand.u32 %v800, 4294901760
    %v7128 = vsub.f32 %v800, %v7127
    %v7129 = vand.u32 %v7128, 4294901760
    %7130 = vmatpush.msra.mxu0 %v7129
    %v7131 = vand.u32 %v799, 4294901760
    %v7132 = vsub.f32 %v799, %v7131
    %v7133 = vand.u32 %v7132, 4294901760
    %7134 = vmatpush.msra.mxu0 %v7133
    %v7135 = vand.u32 %v798, 4294901760
    %v7136 = vsub.f32 %v798, %v7135
    %v7137 = vand.u32 %v7136, 4294901760
    %7138 = vmatpush.msra.mxu0 %v7137
    %v7139 = vand.u32 %v797, 4294901760
    %v7140 = vsub.f32 %v797, %v7139
    %v7141 = vand.u32 %v7140, 4294901760
    %7142 = vmatpush.msra.mxu0 %v7141
    %v7143 = vand.u32 %v796, 4294901760
    %v7144 = vsub.f32 %v796, %v7143
    %v7145 = vand.u32 %v7144, 4294901760
    %7146 = vmatpush.msra.mxu0 %v7145
    %v7147 = vand.u32 %v795, 4294901760
    %v7148 = vsub.f32 %v795, %v7147
    %v7149 = vand.u32 %v7148, 4294901760
    %7150 = vmatpush.msra.mxu0 %v7149
    %v7151 = vand.u32 %v794, 4294901760
    %v7152 = vsub.f32 %v794, %v7151
    %v7153 = vand.u32 %v7152, 4294901760
    %7154 = vmatpush.msra.mxu0 %v7153
    %v7155 = vand.u32 %v793, 4294901760
    %v7156 = vsub.f32 %v793, %v7155
    %v7157 = vand.u32 %v7156, 4294901760
    %7158 = vmatpush.msra.mxu0 %v7157
    %v7159 = vand.u32 %v496, 4294901760
    %7160 = vmatmul.f32.gmra.mxu0 %v7159
    %v7161 = vpop.f32.mrf.mxu0
    %v7162 = vadd.f32 %v7003, %v7161
    %v7163 = vand.u32 %v508, 4294901760
    %7164 = vmatmul.f32.gmra.mxu0 %v7163
    %v7165 = vpop.f32.mrf.mxu0
    %v7166 = vadd.f32 %v7009, %v7165
    %v7167 = vand.u32 %v520, 4294901760
    %7168 = vmatmul.f32.gmra.mxu0 %v7167
    %v7169 = vpop.f32.mrf.mxu0
    %v7170 = vadd.f32 %v7015, %v7169
    %v7171 = vand.u32 %v532, 4294901760
    %7172 = vmatmul.f32.gmra.mxu0 %v7171
    %v7173 = vpop.f32.mrf.mxu0
    %v7174 = vadd.f32 %v7021, %v7173
    %v7175 = vand.u32 %v544, 4294901760
    %7176 = vmatmul.f32.gmra.mxu0 %v7175
    %v7177 = vpop.f32.mrf.mxu0
    %v7178 = vadd.f32 %v7027, %v7177
    %v7179 = vand.u32 %v556, 4294901760
    %7180 = vmatmul.f32.gmra.mxu0 %v7179
    %v7181 = vpop.f32.mrf.mxu0
    %v7182 = vadd.f32 %v7033, %v7181
    %v7183 = vand.u32 %v568, 4294901760
    %7184 = vmatmul.f32.gmra.mxu0 %v7183
    %v7185 = vpop.f32.mrf.mxu0
    %v7186 = vadd.f32 %v7039, %v7185
    %v7187 = vand.u32 %v580, 4294901760
    %7188 = vmatmul.f32.gmra.mxu0 %v7187
    %v7189 = vpop.f32.mrf.mxu0
    %v7190 = vadd.f32 %v7045, %v7189
    %v7191 = vand.u32 %v592, 4294901760
    %7192 = vmatmul.f32.gmra.mxu0 %v7191
    %v7193 = vpop.f32.mrf.mxu0
    %v7194 = vadd.f32 %v7051, %v7193
    %v7195 = vand.u32 %v604, 4294901760
    %7196 = vmatmul.f32.gmra.mxu0 %v7195
    %v7197 = vpop.f32.mrf.mxu0
    %v7198 = vadd.f32 %v7057, %v7197
    %v7199 = vand.u32 %v616, 4294901760
    %7200 = vmatmul.f32.gmra.mxu0 %v7199
    %v7201 = vpop.f32.mrf.mxu0
    %v7202 = vadd.f32 %v7063, %v7201
    %v7203 = vand.u32 %v628, 4294901760
    %7204 = vmatmul.f32.gmra.mxu0 %v7203
    %v7205 = vpop.f32.mrf.mxu0
    %v7206 = vadd.f32 %v7069, %v7205
    %v7207 = vand.u32 %v640, 4294901760
    %7208 = vmatmul.f32.gmra.mxu0 %v7207
    %v7209 = vpop.f32.mrf.mxu0
    %v7210 = vadd.f32 %v7075, %v7209
    %v7211 = vand.u32 %v652, 4294901760
    %7212 = vmatmul.f32.gmra.mxu0 %v7211
    %v7213 = vpop.f32.mrf.mxu0
    %v7214 = vadd.f32 %v7081, %v7213
    %v7215 = vand.u32 %v664, 4294901760
    %7216 = vmatmul.f32.gmra.mxu0 %v7215
    %v7217 = vpop.f32.mrf.mxu0
    %v7218 = vadd.f32 %v7087, %v7217
    %v7219 = vand.u32 %v676, 4294901760
    %7220 = vmatmul.f32.gmra.mxu0 %v7219
    %v7221 = vpop.f32.mrf.mxu0
    %v7222 = vadd.f32 %v7093, %v7221
    %7223 = vdwg.mxu0
    %v7224 = vand.u32 %v808, 4294901760
    %7225 = vmatpush.msra.mxu0 %v7224
    %v7226 = vand.u32 %v807, 4294901760
    %7227 = vmatpush.msra.mxu0 %v7226
    %v7228 = vand.u32 %v806, 4294901760
    %7229 = vmatpush.msra.mxu0 %v7228
    %v7230 = vand.u32 %v805, 4294901760
    %7231 = vmatpush.msra.mxu0 %v7230
    %v7232 = vand.u32 %v804, 4294901760
    %7233 = vmatpush.msra.mxu0 %v7232
    %v7234 = vand.u32 %v803, 4294901760
    %7235 = vmatpush.msra.mxu0 %v7234
    %v7236 = vand.u32 %v802, 4294901760
    %7237 = vmatpush.msra.mxu0 %v7236
    %v7238 = vand.u32 %v801, 4294901760
    %7239 = vmatpush.msra.mxu0 %v7238
    %v7240 = vand.u32 %v800, 4294901760
    %7241 = vmatpush.msra.mxu0 %v7240
    %v7242 = vand.u32 %v799, 4294901760
    %7243 = vmatpush.msra.mxu0 %v7242
    %v7244 = vand.u32 %v798, 4294901760
    %7245 = vmatpush.msra.mxu0 %v7244
    %v7246 = vand.u32 %v797, 4294901760
    %7247 = vmatpush.msra.mxu0 %v7246
    %v7248 = vand.u32 %v796, 4294901760
    %7249 = vmatpush.msra.mxu0 %v7248
    %v7250 = vand.u32 %v795, 4294901760
    %7251 = vmatpush.msra.mxu0 %v7250
    %v7252 = vand.u32 %v794, 4294901760
    %7253 = vmatpush.msra.mxu0 %v7252
    %v7254 = vand.u32 %v793, 4294901760
    %7255 = vmatpush.msra.mxu0 %v7254
    %v7256 = vand.u32 %v496, 4294901760
    %7257 = vmatmul.f32.gmra.mxu0 %v7256
    %v7258 = vpop.f32.mrf.mxu0
    %v7259 = vadd.f32 %v7162, %v7258
    %v7260 = vand.u32 %v508, 4294901760
    %7261 = vmatmul.f32.gmra.mxu0 %v7260
    %v7262 = vpop.f32.mrf.mxu0
    %v7263 = vadd.f32 %v7166, %v7262
    %v7264 = vand.u32 %v520, 4294901760
    %7265 = vmatmul.f32.gmra.mxu0 %v7264
    %v7266 = vpop.f32.mrf.mxu0
    %v7267 = vadd.f32 %v7170, %v7266
    %v7268 = vand.u32 %v532, 4294901760
    %7269 = vmatmul.f32.gmra.mxu0 %v7268
    %v7270 = vpop.f32.mrf.mxu0
    %v7271 = vadd.f32 %v7174, %v7270
    %v7272 = vand.u32 %v544, 4294901760
    %7273 = vmatmul.f32.gmra.mxu0 %v7272
    %v7274 = vpop.f32.mrf.mxu0
    %v7275 = vadd.f32 %v7178, %v7274
    %v7276 = vand.u32 %v556, 4294901760
    %7277 = vmatmul.f32.gmra.mxu0 %v7276
    %v7278 = vpop.f32.mrf.mxu0
    %v7279 = vadd.f32 %v7182, %v7278
    %v7280 = vand.u32 %v568, 4294901760
    %7281 = vmatmul.f32.gmra.mxu0 %v7280
    %v7282 = vpop.f32.mrf.mxu0
    %v7283 = vadd.f32 %v7186, %v7282
    %v7284 = vand.u32 %v580, 4294901760
    %7285 = vmatmul.f32.gmra.mxu0 %v7284
    %v7286 = vpop.f32.mrf.mxu0
    %v7287 = vadd.f32 %v7190, %v7286
    %v7288 = vand.u32 %v592, 4294901760
    %7289 = vmatmul.f32.gmra.mxu0 %v7288
    %v7290 = vpop.f32.mrf.mxu0
    %v7291 = vadd.f32 %v7194, %v7290
    %v7292 = vand.u32 %v604, 4294901760
    %7293 = vmatmul.f32.gmra.mxu0 %v7292
    %v7294 = vpop.f32.mrf.mxu0
    %v7295 = vadd.f32 %v7198, %v7294
    %v7296 = vand.u32 %v616, 4294901760
    %7297 = vmatmul.f32.gmra.mxu0 %v7296
    %v7298 = vpop.f32.mrf.mxu0
    %v7299 = vadd.f32 %v7202, %v7298
    %v7300 = vand.u32 %v628, 4294901760
    %7301 = vmatmul.f32.gmra.mxu0 %v7300
    %v7302 = vpop.f32.mrf.mxu0
    %v7303 = vadd.f32 %v7206, %v7302
    %v7304 = vand.u32 %v640, 4294901760
    %7305 = vmatmul.f32.gmra.mxu0 %v7304
    %v7306 = vpop.f32.mrf.mxu0
    %v7307 = vadd.f32 %v7210, %v7306
    %v7308 = vand.u32 %v652, 4294901760
    %7309 = vmatmul.f32.gmra.mxu0 %v7308
    %v7310 = vpop.f32.mrf.mxu0
    %v7311 = vadd.f32 %v7214, %v7310
    %v7312 = vand.u32 %v664, 4294901760
    %7313 = vmatmul.f32.gmra.mxu0 %v7312
    %v7314 = vpop.f32.mrf.mxu0
    %v7315 = vadd.f32 %v7218, %v7314
    %v7316 = vand.u32 %v676, 4294901760
    %7317 = vmatmul.f32.gmra.mxu0 %v7316
    %v7318 = vpop.f32.mrf.mxu0
    %v7319 = vadd.f32 %v7222, %v7318
    %7320 = vdwg.mxu0
    %v7321 = vand.u32 %v824, 4294901760
    %7322 = vmatpush.msra.mxu0 %v7321
    %v7323 = vand.u32 %v823, 4294901760
    %7324 = vmatpush.msra.mxu0 %v7323
    %v7325 = vand.u32 %v822, 4294901760
    %7326 = vmatpush.msra.mxu0 %v7325
    %v7327 = vand.u32 %v821, 4294901760
    %7328 = vmatpush.msra.mxu0 %v7327
    %v7329 = vand.u32 %v820, 4294901760
    %7330 = vmatpush.msra.mxu0 %v7329
    %v7331 = vand.u32 %v819, 4294901760
    %7332 = vmatpush.msra.mxu0 %v7331
    %v7333 = vand.u32 %v818, 4294901760
    %7334 = vmatpush.msra.mxu0 %v7333
    %v7335 = vand.u32 %v817, 4294901760
    %7336 = vmatpush.msra.mxu0 %v7335
    %v7337 = vand.u32 %v816, 4294901760
    %7338 = vmatpush.msra.mxu0 %v7337
    %v7339 = vand.u32 %v815, 4294901760
    %7340 = vmatpush.msra.mxu0 %v7339
    %v7341 = vand.u32 %v814, 4294901760
    %7342 = vmatpush.msra.mxu0 %v7341
    %v7343 = vand.u32 %v813, 4294901760
    %7344 = vmatpush.msra.mxu0 %v7343
    %v7345 = vand.u32 %v812, 4294901760
    %7346 = vmatpush.msra.mxu0 %v7345
    %v7347 = vand.u32 %v811, 4294901760
    %7348 = vmatpush.msra.mxu0 %v7347
    %v7349 = vand.u32 %v810, 4294901760
    %7350 = vmatpush.msra.mxu0 %v7349
    %v7351 = vand.u32 %v809, 4294901760
    %7352 = vmatpush.msra.mxu0 %v7351
    %v7353 = vand.u32 %v497, 4294901760
    %v7354 = vsub.f32 %v497, %v7353
    %v7355 = vand.u32 %v7354, 4294901760
    %v7356 = vsub.f32 %v7354, %v7355
    %v7357 = vand.u32 %v7356, 4294901760
    %7358 = vmatmul.f32.gmra.mxu0 %v7357
    %v7359 = vpop.f32.mrf.mxu0
    %v7360 = vadd.f32 %v7259, %v7359
    %v7361 = vand.u32 %v509, 4294901760
    %v7362 = vsub.f32 %v509, %v7361
    %v7363 = vand.u32 %v7362, 4294901760
    %v7364 = vsub.f32 %v7362, %v7363
    %v7365 = vand.u32 %v7364, 4294901760
    %7366 = vmatmul.f32.gmra.mxu0 %v7365
    %v7367 = vpop.f32.mrf.mxu0
    %v7368 = vadd.f32 %v7263, %v7367
    %v7369 = vand.u32 %v521, 4294901760
    %v7370 = vsub.f32 %v521, %v7369
    %v7371 = vand.u32 %v7370, 4294901760
    %v7372 = vsub.f32 %v7370, %v7371
    %v7373 = vand.u32 %v7372, 4294901760
    %7374 = vmatmul.f32.gmra.mxu0 %v7373
    %v7375 = vpop.f32.mrf.mxu0
    %v7376 = vadd.f32 %v7267, %v7375
    %v7377 = vand.u32 %v533, 4294901760
    %v7378 = vsub.f32 %v533, %v7377
    %v7379 = vand.u32 %v7378, 4294901760
    %v7380 = vsub.f32 %v7378, %v7379
    %v7381 = vand.u32 %v7380, 4294901760
    %7382 = vmatmul.f32.gmra.mxu0 %v7381
    %v7383 = vpop.f32.mrf.mxu0
    %v7384 = vadd.f32 %v7271, %v7383
    %v7385 = vand.u32 %v545, 4294901760
    %v7386 = vsub.f32 %v545, %v7385
    %v7387 = vand.u32 %v7386, 4294901760
    %v7388 = vsub.f32 %v7386, %v7387
    %v7389 = vand.u32 %v7388, 4294901760
    %7390 = vmatmul.f32.gmra.mxu0 %v7389
    %v7391 = vpop.f32.mrf.mxu0
    %v7392 = vadd.f32 %v7275, %v7391
    %v7393 = vand.u32 %v557, 4294901760
    %v7394 = vsub.f32 %v557, %v7393
    %v7395 = vand.u32 %v7394, 4294901760
    %v7396 = vsub.f32 %v7394, %v7395
    %v7397 = vand.u32 %v7396, 4294901760
    %7398 = vmatmul.f32.gmra.mxu0 %v7397
    %v7399 = vpop.f32.mrf.mxu0
    %v7400 = vadd.f32 %v7279, %v7399
    %v7401 = vand.u32 %v569, 4294901760
    %v7402 = vsub.f32 %v569, %v7401
    %v7403 = vand.u32 %v7402, 4294901760
    %v7404 = vsub.f32 %v7402, %v7403
    %v7405 = vand.u32 %v7404, 4294901760
    %7406 = vmatmul.f32.gmra.mxu0 %v7405
    %v7407 = vpop.f32.mrf.mxu0
    %v7408 = vadd.f32 %v7283, %v7407
    %v7409 = vand.u32 %v581, 4294901760
    %v7410 = vsub.f32 %v581, %v7409
    %v7411 = vand.u32 %v7410, 4294901760
    %v7412 = vsub.f32 %v7410, %v7411
    %v7413 = vand.u32 %v7412, 4294901760
    %7414 = vmatmul.f32.gmra.mxu0 %v7413
    %v7415 = vpop.f32.mrf.mxu0
    %v7416 = vadd.f32 %v7287, %v7415
    %v7417 = vand.u32 %v593, 4294901760
    %v7418 = vsub.f32 %v593, %v7417
    %v7419 = vand.u32 %v7418, 4294901760
    %v7420 = vsub.f32 %v7418, %v7419
    %v7421 = vand.u32 %v7420, 4294901760
    %7422 = vmatmul.f32.gmra.mxu0 %v7421
    %v7423 = vpop.f32.mrf.mxu0
    %v7424 = vadd.f32 %v7291, %v7423
    %v7425 = vand.u32 %v605, 4294901760
    %v7426 = vsub.f32 %v605, %v7425
    %v7427 = vand.u32 %v7426, 4294901760
    %v7428 = vsub.f32 %v7426, %v7427
    %v7429 = vand.u32 %v7428, 4294901760
    %7430 = vmatmul.f32.gmra.mxu0 %v7429
    %v7431 = vpop.f32.mrf.mxu0
    %v7432 = vadd.f32 %v7295, %v7431
    %v7433 = vand.u32 %v617, 4294901760
    %v7434 = vsub.f32 %v617, %v7433
    %v7435 = vand.u32 %v7434, 4294901760
    %v7436 = vsub.f32 %v7434, %v7435
    %v7437 = vand.u32 %v7436, 4294901760
    %7438 = vmatmul.f32.gmra.mxu0 %v7437
    %v7439 = vpop.f32.mrf.mxu0
    %v7440 = vadd.f32 %v7299, %v7439
    %v7441 = vand.u32 %v629, 4294901760
    %v7442 = vsub.f32 %v629, %v7441
    %v7443 = vand.u32 %v7442, 4294901760
    %v7444 = vsub.f32 %v7442, %v7443
    %v7445 = vand.u32 %v7444, 4294901760
    %7446 = vmatmul.f32.gmra.mxu0 %v7445
    %v7447 = vpop.f32.mrf.mxu0
    %v7448 = vadd.f32 %v7303, %v7447
    %v7449 = vand.u32 %v641, 4294901760
    %v7450 = vsub.f32 %v641, %v7449
    %v7451 = vand.u32 %v7450, 4294901760
    %v7452 = vsub.f32 %v7450, %v7451
    %v7453 = vand.u32 %v7452, 4294901760
    %7454 = vmatmul.f32.gmra.mxu0 %v7453
    %v7455 = vpop.f32.mrf.mxu0
    %v7456 = vadd.f32 %v7307, %v7455
    %v7457 = vand.u32 %v653, 4294901760
    %v7458 = vsub.f32 %v653, %v7457
    %v7459 = vand.u32 %v7458, 4294901760
    %v7460 = vsub.f32 %v7458, %v7459
    %v7461 = vand.u32 %v7460, 4294901760
    %7462 = vmatmul.f32.gmra.mxu0 %v7461
    %v7463 = vpop.f32.mrf.mxu0
    %v7464 = vadd.f32 %v7311, %v7463
    %v7465 = vand.u32 %v665, 4294901760
    %v7466 = vsub.f32 %v665, %v7465
    %v7467 = vand.u32 %v7466, 4294901760
    %v7468 = vsub.f32 %v7466, %v7467
    %v7469 = vand.u32 %v7468, 4294901760
    %7470 = vmatmul.f32.gmra.mxu0 %v7469
    %v7471 = vpop.f32.mrf.mxu0
    %v7472 = vadd.f32 %v7315, %v7471
    %v7473 = vand.u32 %v677, 4294901760
    %v7474 = vsub.f32 %v677, %v7473
    %v7475 = vand.u32 %v7474, 4294901760
    %v7476 = vsub.f32 %v7474, %v7475
    %v7477 = vand.u32 %v7476, 4294901760
    %7478 = vmatmul.f32.gmra.mxu0 %v7477
    %v7479 = vpop.f32.mrf.mxu0
    %v7480 = vadd.f32 %v7319, %v7479
    %7481 = vdwg.mxu0
    %v7482 = vand.u32 %v824, 4294901760
    %v7483 = vsub.f32 %v824, %v7482
    %v7484 = vand.u32 %v7483, 4294901760
    %v7485 = vsub.f32 %v7483, %v7484
    %v7486 = vand.u32 %v7485, 4294901760
    %7487 = vmatpush.msra.mxu0 %v7486
    %v7488 = vand.u32 %v823, 4294901760
    %v7489 = vsub.f32 %v823, %v7488
    %v7490 = vand.u32 %v7489, 4294901760
    %v7491 = vsub.f32 %v7489, %v7490
    %v7492 = vand.u32 %v7491, 4294901760
    %7493 = vmatpush.msra.mxu0 %v7492
    %v7494 = vand.u32 %v822, 4294901760
    %v7495 = vsub.f32 %v822, %v7494
    %v7496 = vand.u32 %v7495, 4294901760
    %v7497 = vsub.f32 %v7495, %v7496
    %v7498 = vand.u32 %v7497, 4294901760
    %7499 = vmatpush.msra.mxu0 %v7498
    %v7500 = vand.u32 %v821, 4294901760
    %v7501 = vsub.f32 %v821, %v7500
    %v7502 = vand.u32 %v7501, 4294901760
    %v7503 = vsub.f32 %v7501, %v7502
    %v7504 = vand.u32 %v7503, 4294901760
    %7505 = vmatpush.msra.mxu0 %v7504
    %v7506 = vand.u32 %v820, 4294901760
    %v7507 = vsub.f32 %v820, %v7506
    %v7508 = vand.u32 %v7507, 4294901760
    %v7509 = vsub.f32 %v7507, %v7508
    %v7510 = vand.u32 %v7509, 4294901760
    %7511 = vmatpush.msra.mxu0 %v7510
    %v7512 = vand.u32 %v819, 4294901760
    %v7513 = vsub.f32 %v819, %v7512
    %v7514 = vand.u32 %v7513, 4294901760
    %v7515 = vsub.f32 %v7513, %v7514
    %v7516 = vand.u32 %v7515, 4294901760
    %7517 = vmatpush.msra.mxu0 %v7516
    %v7518 = vand.u32 %v818, 4294901760
    %v7519 = vsub.f32 %v818, %v7518
    %v7520 = vand.u32 %v7519, 4294901760
    %v7521 = vsub.f32 %v7519, %v7520
    %v7522 = vand.u32 %v7521, 4294901760
    %7523 = vmatpush.msra.mxu0 %v7522
    %v7524 = vand.u32 %v817, 4294901760
    %v7525 = vsub.f32 %v817, %v7524
    %v7526 = vand.u32 %v7525, 4294901760
    %v7527 = vsub.f32 %v7525, %v7526
    %v7528 = vand.u32 %v7527, 4294901760
    %7529 = vmatpush.msra.mxu0 %v7528
    %v7530 = vand.u32 %v816, 4294901760
    %v7531 = vsub.f32 %v816, %v7530
    %v7532 = vand.u32 %v7531, 4294901760
    %v7533 = vsub.f32 %v7531, %v7532
    %v7534 = vand.u32 %v7533, 4294901760
    %7535 = vmatpush.msra.mxu0 %v7534
    %v7536 = vand.u32 %v815, 4294901760
    %v7537 = vsub.f32 %v815, %v7536
    %v7538 = vand.u32 %v7537, 4294901760
    %v7539 = vsub.f32 %v7537, %v7538
    %v7540 = vand.u32 %v7539, 4294901760
    %7541 = vmatpush.msra.mxu0 %v7540
    %v7542 = vand.u32 %v814, 4294901760
    %v7543 = vsub.f32 %v814, %v7542
    %v7544 = vand.u32 %v7543, 4294901760
    %v7545 = vsub.f32 %v7543, %v7544
    %v7546 = vand.u32 %v7545, 4294901760
    %7547 = vmatpush.msra.mxu0 %v7546
    %v7548 = vand.u32 %v813, 4294901760
    %v7549 = vsub.f32 %v813, %v7548
    %v7550 = vand.u32 %v7549, 4294901760
    %v7551 = vsub.f32 %v7549, %v7550
    %v7552 = vand.u32 %v7551, 4294901760
    %7553 = vmatpush.msra.mxu0 %v7552
    %v7554 = vand.u32 %v812, 4294901760
    %v7555 = vsub.f32 %v812, %v7554
    %v7556 = vand.u32 %v7555, 4294901760
    %v7557 = vsub.f32 %v7555, %v7556
    %v7558 = vand.u32 %v7557, 4294901760
    %7559 = vmatpush.msra.mxu0 %v7558
    %v7560 = vand.u32 %v811, 4294901760
    %v7561 = vsub.f32 %v811, %v7560
    %v7562 = vand.u32 %v7561, 4294901760
    %v7563 = vsub.f32 %v7561, %v7562
    %v7564 = vand.u32 %v7563, 4294901760
    %7565 = vmatpush.msra.mxu0 %v7564
    %v7566 = vand.u32 %v810, 4294901760
    %v7567 = vsub.f32 %v810, %v7566
    %v7568 = vand.u32 %v7567, 4294901760
    %v7569 = vsub.f32 %v7567, %v7568
    %v7570 = vand.u32 %v7569, 4294901760
    %7571 = vmatpush.msra.mxu0 %v7570
    %v7572 = vand.u32 %v809, 4294901760
    %v7573 = vsub.f32 %v809, %v7572
    %v7574 = vand.u32 %v7573, 4294901760
    %v7575 = vsub.f32 %v7573, %v7574
    %v7576 = vand.u32 %v7575, 4294901760
    %7577 = vmatpush.msra.mxu0 %v7576
    %v7578 = vand.u32 %v497, 4294901760
    %7579 = vmatmul.f32.gmra.mxu0 %v7578
    %v7580 = vpop.f32.mrf.mxu0
    %v7581 = vadd.f32 %v7360, %v7580
    %v7582 = vand.u32 %v509, 4294901760
    %7583 = vmatmul.f32.gmra.mxu0 %v7582
    %v7584 = vpop.f32.mrf.mxu0
    %v7585 = vadd.f32 %v7368, %v7584
    %v7586 = vand.u32 %v521, 4294901760
    %7587 = vmatmul.f32.gmra.mxu0 %v7586
    %v7588 = vpop.f32.mrf.mxu0
    %v7589 = vadd.f32 %v7376, %v7588
    %v7590 = vand.u32 %v533, 4294901760
    %7591 = vmatmul.f32.gmra.mxu0 %v7590
    %v7592 = vpop.f32.mrf.mxu0
    %v7593 = vadd.f32 %v7384, %v7592
    %v7594 = vand.u32 %v545, 4294901760
    %7595 = vmatmul.f32.gmra.mxu0 %v7594
    %v7596 = vpop.f32.mrf.mxu0
    %v7597 = vadd.f32 %v7392, %v7596
    %v7598 = vand.u32 %v557, 4294901760
    %7599 = vmatmul.f32.gmra.mxu0 %v7598
    %v7600 = vpop.f32.mrf.mxu0
    %v7601 = vadd.f32 %v7400, %v7600
    %v7602 = vand.u32 %v569, 4294901760
    %7603 = vmatmul.f32.gmra.mxu0 %v7602
    %v7604 = vpop.f32.mrf.mxu0
    %v7605 = vadd.f32 %v7408, %v7604
    %v7606 = vand.u32 %v581, 4294901760
    %7607 = vmatmul.f32.gmra.mxu0 %v7606
    %v7608 = vpop.f32.mrf.mxu0
    %v7609 = vadd.f32 %v7416, %v7608
    %v7610 = vand.u32 %v593, 4294901760
    %7611 = vmatmul.f32.gmra.mxu0 %v7610
    %v7612 = vpop.f32.mrf.mxu0
    %v7613 = vadd.f32 %v7424, %v7612
    %v7614 = vand.u32 %v605, 4294901760
    %7615 = vmatmul.f32.gmra.mxu0 %v7614
    %v7616 = vpop.f32.mrf.mxu0
    %v7617 = vadd.f32 %v7432, %v7616
    %v7618 = vand.u32 %v617, 4294901760
    %7619 = vmatmul.f32.gmra.mxu0 %v7618
    %v7620 = vpop.f32.mrf.mxu0
    %v7621 = vadd.f32 %v7440, %v7620
    %v7622 = vand.u32 %v629, 4294901760
    %7623 = vmatmul.f32.gmra.mxu0 %v7622
    %v7624 = vpop.f32.mrf.mxu0
    %v7625 = vadd.f32 %v7448, %v7624
    %v7626 = vand.u32 %v641, 4294901760
    %7627 = vmatmul.f32.gmra.mxu0 %v7626
    %v7628 = vpop.f32.mrf.mxu0
    %v7629 = vadd.f32 %v7456, %v7628
    %v7630 = vand.u32 %v653, 4294901760
    %7631 = vmatmul.f32.gmra.mxu0 %v7630
    %v7632 = vpop.f32.mrf.mxu0
    %v7633 = vadd.f32 %v7464, %v7632
    %v7634 = vand.u32 %v665, 4294901760
    %7635 = vmatmul.f32.gmra.mxu0 %v7634
    %v7636 = vpop.f32.mrf.mxu0
    %v7637 = vadd.f32 %v7472, %v7636
    %v7638 = vand.u32 %v677, 4294901760
    %7639 = vmatmul.f32.gmra.mxu0 %v7638
    %v7640 = vpop.f32.mrf.mxu0
    %v7641 = vadd.f32 %v7480, %v7640
    %7642 = vdwg.mxu0
    %v7643 = vand.u32 %v824, 4294901760
    %v7644 = vsub.f32 %v824, %v7643
    %7645 = vmatpush.msra.mxu0 %v7644
    %v7646 = vand.u32 %v823, 4294901760
    %v7647 = vsub.f32 %v823, %v7646
    %7648 = vmatpush.msra.mxu0 %v7647
    %v7649 = vand.u32 %v822, 4294901760
    %v7650 = vsub.f32 %v822, %v7649
    %7651 = vmatpush.msra.mxu0 %v7650
    %v7652 = vand.u32 %v821, 4294901760
    %v7653 = vsub.f32 %v821, %v7652
    %7654 = vmatpush.msra.mxu0 %v7653
    %v7655 = vand.u32 %v820, 4294901760
    %v7656 = vsub.f32 %v820, %v7655
    %7657 = vmatpush.msra.mxu0 %v7656
    %v7658 = vand.u32 %v819, 4294901760
    %v7659 = vsub.f32 %v819, %v7658
    %7660 = vmatpush.msra.mxu0 %v7659
    %v7661 = vand.u32 %v818, 4294901760
    %v7662 = vsub.f32 %v818, %v7661
    %7663 = vmatpush.msra.mxu0 %v7662
    %v7664 = vand.u32 %v817, 4294901760
    %v7665 = vsub.f32 %v817, %v7664
    %7666 = vmatpush.msra.mxu0 %v7665
    %v7667 = vand.u32 %v816, 4294901760
    %v7668 = vsub.f32 %v816, %v7667
    %7669 = vmatpush.msra.mxu0 %v7668
    %v7670 = vand.u32 %v815, 4294901760
    %v7671 = vsub.f32 %v815, %v7670
    %7672 = vmatpush.msra.mxu0 %v7671
    %v7673 = vand.u32 %v814, 4294901760
    %v7674 = vsub.f32 %v814, %v7673
    %7675 = vmatpush.msra.mxu0 %v7674
    %v7676 = vand.u32 %v813, 4294901760
    %v7677 = vsub.f32 %v813, %v7676
    %7678 = vmatpush.msra.mxu0 %v7677
    %v7679 = vand.u32 %v812, 4294901760
    %v7680 = vsub.f32 %v812, %v7679
    %7681 = vmatpush.msra.mxu0 %v7680
    %v7682 = vand.u32 %v811, 4294901760
    %v7683 = vsub.f32 %v811, %v7682
    %7684 = vmatpush.msra.mxu0 %v7683
    %v7685 = vand.u32 %v810, 4294901760
    %v7686 = vsub.f32 %v810, %v7685
    %7687 = vmatpush.msra.mxu0 %v7686
    %v7688 = vand.u32 %v809, 4294901760
    %v7689 = vsub.f32 %v809, %v7688
    %7690 = vmatpush.msra.mxu0 %v7689
    %v7691 = vand.u32 %v497, 4294901760
    %v7692 = vsub.f32 %v497, %v7691
    %7693 = vmatmul.f32.gmra.mxu0 %v7692
    %v7694 = vpop.f32.mrf.mxu0
    %v7695 = vadd.f32 %v7581, %v7694
    %v7696 = vand.u32 %v509, 4294901760
    %v7697 = vsub.f32 %v509, %v7696
    %7698 = vmatmul.f32.gmra.mxu0 %v7697
    %v7699 = vpop.f32.mrf.mxu0
    %v7700 = vadd.f32 %v7585, %v7699
    %v7701 = vand.u32 %v521, 4294901760
    %v7702 = vsub.f32 %v521, %v7701
    %7703 = vmatmul.f32.gmra.mxu0 %v7702
    %v7704 = vpop.f32.mrf.mxu0
    %v7705 = vadd.f32 %v7589, %v7704
    %v7706 = vand.u32 %v533, 4294901760
    %v7707 = vsub.f32 %v533, %v7706
    %7708 = vmatmul.f32.gmra.mxu0 %v7707
    %v7709 = vpop.f32.mrf.mxu0
    %v7710 = vadd.f32 %v7593, %v7709
    %v7711 = vand.u32 %v545, 4294901760
    %v7712 = vsub.f32 %v545, %v7711
    %7713 = vmatmul.f32.gmra.mxu0 %v7712
    %v7714 = vpop.f32.mrf.mxu0
    %v7715 = vadd.f32 %v7597, %v7714
    %v7716 = vand.u32 %v557, 4294901760
    %v7717 = vsub.f32 %v557, %v7716
    %7718 = vmatmul.f32.gmra.mxu0 %v7717
    %v7719 = vpop.f32.mrf.mxu0
    %v7720 = vadd.f32 %v7601, %v7719
    %v7721 = vand.u32 %v569, 4294901760
    %v7722 = vsub.f32 %v569, %v7721
    %7723 = vmatmul.f32.gmra.mxu0 %v7722
    %v7724 = vpop.f32.mrf.mxu0
    %v7725 = vadd.f32 %v7605, %v7724
    %v7726 = vand.u32 %v581, 4294901760
    %v7727 = vsub.f32 %v581, %v7726
    %7728 = vmatmul.f32.gmra.mxu0 %v7727
    %v7729 = vpop.f32.mrf.mxu0
    %v7730 = vadd.f32 %v7609, %v7729
    %v7731 = vand.u32 %v593, 4294901760
    %v7732 = vsub.f32 %v593, %v7731
    %7733 = vmatmul.f32.gmra.mxu0 %v7732
    %v7734 = vpop.f32.mrf.mxu0
    %v7735 = vadd.f32 %v7613, %v7734
    %v7736 = vand.u32 %v605, 4294901760
    %v7737 = vsub.f32 %v605, %v7736
    %7738 = vmatmul.f32.gmra.mxu0 %v7737
    %v7739 = vpop.f32.mrf.mxu0
    %v7740 = vadd.f32 %v7617, %v7739
    %v7741 = vand.u32 %v617, 4294901760
    %v7742 = vsub.f32 %v617, %v7741
    %7743 = vmatmul.f32.gmra.mxu0 %v7742
    %v7744 = vpop.f32.mrf.mxu0
    %v7745 = vadd.f32 %v7621, %v7744
    %v7746 = vand.u32 %v629, 4294901760
    %v7747 = vsub.f32 %v629, %v7746
    %7748 = vmatmul.f32.gmra.mxu0 %v7747
    %v7749 = vpop.f32.mrf.mxu0
    %v7750 = vadd.f32 %v7625, %v7749
    %v7751 = vand.u32 %v641, 4294901760
    %v7752 = vsub.f32 %v641, %v7751
    %7753 = vmatmul.f32.gmra.mxu0 %v7752
    %v7754 = vpop.f32.mrf.mxu0
    %v7755 = vadd.f32 %v7629, %v7754
    %v7756 = vand.u32 %v653, 4294901760
    %v7757 = vsub.f32 %v653, %v7756
    %7758 = vmatmul.f32.gmra.mxu0 %v7757
    %v7759 = vpop.f32.mrf.mxu0
    %v7760 = vadd.f32 %v7633, %v7759
    %v7761 = vand.u32 %v665, 4294901760
    %v7762 = vsub.f32 %v665, %v7761
    %7763 = vmatmul.f32.gmra.mxu0 %v7762
    %v7764 = vpop.f32.mrf.mxu0
    %v7765 = vadd.f32 %v7637, %v7764
    %v7766 = vand.u32 %v677, 4294901760
    %v7767 = vsub.f32 %v677, %v7766
    %7768 = vmatmul.f32.gmra.mxu0 %v7767
    %v7769 = vpop.f32.mrf.mxu0
    %v7770 = vadd.f32 %v7641, %v7769
    %7771 = vdwg.mxu0
    %v7772 = vand.u32 %v824, 4294901760
    %7773 = vmatpush.msra.mxu0 %v7772
    %v7774 = vand.u32 %v823, 4294901760
    %7775 = vmatpush.msra.mxu0 %v7774
    %v7776 = vand.u32 %v822, 4294901760
    %7777 = vmatpush.msra.mxu0 %v7776
    %v7778 = vand.u32 %v821, 4294901760
    %7779 = vmatpush.msra.mxu0 %v7778
    %v7780 = vand.u32 %v820, 4294901760
    %7781 = vmatpush.msra.mxu0 %v7780
    %v7782 = vand.u32 %v819, 4294901760
    %7783 = vmatpush.msra.mxu0 %v7782
    %v7784 = vand.u32 %v818, 4294901760
    %7785 = vmatpush.msra.mxu0 %v7784
    %v7786 = vand.u32 %v817, 4294901760
    %7787 = vmatpush.msra.mxu0 %v7786
    %v7788 = vand.u32 %v816, 4294901760
    %7789 = vmatpush.msra.mxu0 %v7788
    %v7790 = vand.u32 %v815, 4294901760
    %7791 = vmatpush.msra.mxu0 %v7790
    %v7792 = vand.u32 %v814, 4294901760
    %7793 = vmatpush.msra.mxu0 %v7792
    %v7794 = vand.u32 %v813, 4294901760
    %7795 = vmatpush.msra.mxu0 %v7794
    %v7796 = vand.u32 %v812, 4294901760
    %7797 = vmatpush.msra.mxu0 %v7796
    %v7798 = vand.u32 %v811, 4294901760
    %7799 = vmatpush.msra.mxu0 %v7798
    %v7800 = vand.u32 %v810, 4294901760
    %7801 = vmatpush.msra.mxu0 %v7800
    %v7802 = vand.u32 %v809, 4294901760
    %7803 = vmatpush.msra.mxu0 %v7802
    %v7804 = vand.u32 %v497, 4294901760
    %v7805 = vsub.f32 %v497, %v7804
    %v7806 = vand.u32 %v7805, 4294901760
    %7807 = vmatmul.f32.gmra.mxu0 %v7806
    %v7808 = vpop.f32.mrf.mxu0
    %v7809 = vadd.f32 %v7695, %v7808
    %v7810 = vand.u32 %v509, 4294901760
    %v7811 = vsub.f32 %v509, %v7810
    %v7812 = vand.u32 %v7811, 4294901760
    %7813 = vmatmul.f32.gmra.mxu0 %v7812
    %v7814 = vpop.f32.mrf.mxu0
    %v7815 = vadd.f32 %v7700, %v7814
    %v7816 = vand.u32 %v521, 4294901760
    %v7817 = vsub.f32 %v521, %v7816
    %v7818 = vand.u32 %v7817, 4294901760
    %7819 = vmatmul.f32.gmra.mxu0 %v7818
    %v7820 = vpop.f32.mrf.mxu0
    %v7821 = vadd.f32 %v7705, %v7820
    %v7822 = vand.u32 %v533, 4294901760
    %v7823 = vsub.f32 %v533, %v7822
    %v7824 = vand.u32 %v7823, 4294901760
    %7825 = vmatmul.f32.gmra.mxu0 %v7824
    %v7826 = vpop.f32.mrf.mxu0
    %v7827 = vadd.f32 %v7710, %v7826
    %v7828 = vand.u32 %v545, 4294901760
    %v7829 = vsub.f32 %v545, %v7828
    %v7830 = vand.u32 %v7829, 4294901760
    %7831 = vmatmul.f32.gmra.mxu0 %v7830
    %v7832 = vpop.f32.mrf.mxu0
    %v7833 = vadd.f32 %v7715, %v7832
    %v7834 = vand.u32 %v557, 4294901760
    %v7835 = vsub.f32 %v557, %v7834
    %v7836 = vand.u32 %v7835, 4294901760
    %7837 = vmatmul.f32.gmra.mxu0 %v7836
    %v7838 = vpop.f32.mrf.mxu0
    %v7839 = vadd.f32 %v7720, %v7838
    %v7840 = vand.u32 %v569, 4294901760
    %v7841 = vsub.f32 %v569, %v7840
    %v7842 = vand.u32 %v7841, 4294901760
    %7843 = vmatmul.f32.gmra.mxu0 %v7842
    %v7844 = vpop.f32.mrf.mxu0
    %v7845 = vadd.f32 %v7725, %v7844
    %v7846 = vand.u32 %v581, 4294901760
    %v7847 = vsub.f32 %v581, %v7846
    %v7848 = vand.u32 %v7847, 4294901760
    %7849 = vmatmul.f32.gmra.mxu0 %v7848
    %v7850 = vpop.f32.mrf.mxu0
    %v7851 = vadd.f32 %v7730, %v7850
    %v7852 = vand.u32 %v593, 4294901760
    %v7853 = vsub.f32 %v593, %v7852
    %v7854 = vand.u32 %v7853, 4294901760
    %7855 = vmatmul.f32.gmra.mxu0 %v7854
    %v7856 = vpop.f32.mrf.mxu0
    %v7857 = vadd.f32 %v7735, %v7856
    %v7858 = vand.u32 %v605, 4294901760
    %v7859 = vsub.f32 %v605, %v7858
    %v7860 = vand.u32 %v7859, 4294901760
    %7861 = vmatmul.f32.gmra.mxu0 %v7860
    %v7862 = vpop.f32.mrf.mxu0
    %v7863 = vadd.f32 %v7740, %v7862
    %v7864 = vand.u32 %v617, 4294901760
    %v7865 = vsub.f32 %v617, %v7864
    %v7866 = vand.u32 %v7865, 4294901760
    %7867 = vmatmul.f32.gmra.mxu0 %v7866
    %v7868 = vpop.f32.mrf.mxu0
    %v7869 = vadd.f32 %v7745, %v7868
    %v7870 = vand.u32 %v629, 4294901760
    %v7871 = vsub.f32 %v629, %v7870
    %v7872 = vand.u32 %v7871, 4294901760
    %7873 = vmatmul.f32.gmra.mxu0 %v7872
    %v7874 = vpop.f32.mrf.mxu0
    %v7875 = vadd.f32 %v7750, %v7874
    %v7876 = vand.u32 %v641, 4294901760
    %v7877 = vsub.f32 %v641, %v7876
    %v7878 = vand.u32 %v7877, 4294901760
    %7879 = vmatmul.f32.gmra.mxu0 %v7878
    %v7880 = vpop.f32.mrf.mxu0
    %v7881 = vadd.f32 %v7755, %v7880
    %v7882 = vand.u32 %v653, 4294901760
    %v7883 = vsub.f32 %v653, %v7882
    %v7884 = vand.u32 %v7883, 4294901760
    %7885 = vmatmul.f32.gmra.mxu0 %v7884
    %v7886 = vpop.f32.mrf.mxu0
    %v7887 = vadd.f32 %v7760, %v7886
    %v7888 = vand.u32 %v665, 4294901760
    %v7889 = vsub.f32 %v665, %v7888
    %v7890 = vand.u32 %v7889, 4294901760
    %7891 = vmatmul.f32.gmra.mxu0 %v7890
    %v7892 = vpop.f32.mrf.mxu0
    %v7893 = vadd.f32 %v7765, %v7892
    %v7894 = vand.u32 %v677, 4294901760
    %v7895 = vsub.f32 %v677, %v7894
    %v7896 = vand.u32 %v7895, 4294901760
    %7897 = vmatmul.f32.gmra.mxu0 %v7896
    %v7898 = vpop.f32.mrf.mxu0
    %v7899 = vadd.f32 %v7770, %v7898
    %7900 = vdwg.mxu0
    %v7901 = vand.u32 %v824, 4294901760
    %v7902 = vsub.f32 %v824, %v7901
    %v7903 = vand.u32 %v7902, 4294901760
    %7904 = vmatpush.msra.mxu0 %v7903
    %v7905 = vand.u32 %v823, 4294901760
    %v7906 = vsub.f32 %v823, %v7905
    %v7907 = vand.u32 %v7906, 4294901760
    %7908 = vmatpush.msra.mxu0 %v7907
    %v7909 = vand.u32 %v822, 4294901760
    %v7910 = vsub.f32 %v822, %v7909
    %v7911 = vand.u32 %v7910, 4294901760
    %7912 = vmatpush.msra.mxu0 %v7911
    %v7913 = vand.u32 %v821, 4294901760
    %v7914 = vsub.f32 %v821, %v7913
    %v7915 = vand.u32 %v7914, 4294901760
    %7916 = vmatpush.msra.mxu0 %v7915
    %v7917 = vand.u32 %v820, 4294901760
    %v7918 = vsub.f32 %v820, %v7917
    %v7919 = vand.u32 %v7918, 4294901760
    %7920 = vmatpush.msra.mxu0 %v7919
    %v7921 = vand.u32 %v819, 4294901760
    %v7922 = vsub.f32 %v819, %v7921
    %v7923 = vand.u32 %v7922, 4294901760
    %7924 = vmatpush.msra.mxu0 %v7923
    %v7925 = vand.u32 %v818, 4294901760
    %v7926 = vsub.f32 %v818, %v7925
    %v7927 = vand.u32 %v7926, 4294901760
    %7928 = vmatpush.msra.mxu0 %v7927
    %v7929 = vand.u32 %v817, 4294901760
    %v7930 = vsub.f32 %v817, %v7929
    %v7931 = vand.u32 %v7930, 4294901760
    %7932 = vmatpush.msra.mxu0 %v7931
    %v7933 = vand.u32 %v816, 4294901760
    %v7934 = vsub.f32 %v816, %v7933
    %v7935 = vand.u32 %v7934, 4294901760
    %7936 = vmatpush.msra.mxu0 %v7935
    %v7937 = vand.u32 %v815, 4294901760
    %v7938 = vsub.f32 %v815, %v7937
    %v7939 = vand.u32 %v7938, 4294901760
    %7940 = vmatpush.msra.mxu0 %v7939
    %v7941 = vand.u32 %v814, 4294901760
    %v7942 = vsub.f32 %v814, %v7941
    %v7943 = vand.u32 %v7942, 4294901760
    %7944 = vmatpush.msra.mxu0 %v7943
    %v7945 = vand.u32 %v813, 4294901760
    %v7946 = vsub.f32 %v813, %v7945
    %v7947 = vand.u32 %v7946, 4294901760
    %7948 = vmatpush.msra.mxu0 %v7947
    %v7949 = vand.u32 %v812, 4294901760
    %v7950 = vsub.f32 %v812, %v7949
    %v7951 = vand.u32 %v7950, 4294901760
    %7952 = vmatpush.msra.mxu0 %v7951
    %v7953 = vand.u32 %v811, 4294901760
    %v7954 = vsub.f32 %v811, %v7953
    %v7955 = vand.u32 %v7954, 4294901760
    %7956 = vmatpush.msra.mxu0 %v7955
    %v7957 = vand.u32 %v810, 4294901760
    %v7958 = vsub.f32 %v810, %v7957
    %v7959 = vand.u32 %v7958, 4294901760
    %7960 = vmatpush.msra.mxu0 %v7959
    %v7961 = vand.u32 %v809, 4294901760
    %v7962 = vsub.f32 %v809, %v7961
    %v7963 = vand.u32 %v7962, 4294901760
    %7964 = vmatpush.msra.mxu0 %v7963
    %v7965 = vand.u32 %v497, 4294901760
    %7966 = vmatmul.f32.gmra.mxu0 %v7965
    %v7967 = vpop.f32.mrf.mxu0
    %v7968 = vadd.f32 %v7809, %v7967
    %v7969 = vand.u32 %v509, 4294901760
    %7970 = vmatmul.f32.gmra.mxu0 %v7969
    %v7971 = vpop.f32.mrf.mxu0
    %v7972 = vadd.f32 %v7815, %v7971
    %v7973 = vand.u32 %v521, 4294901760
    %7974 = vmatmul.f32.gmra.mxu0 %v7973
    %v7975 = vpop.f32.mrf.mxu0
    %v7976 = vadd.f32 %v7821, %v7975
    %v7977 = vand.u32 %v533, 4294901760
    %7978 = vmatmul.f32.gmra.mxu0 %v7977
    %v7979 = vpop.f32.mrf.mxu0
    %v7980 = vadd.f32 %v7827, %v7979
    %v7981 = vand.u32 %v545, 4294901760
    %7982 = vmatmul.f32.gmra.mxu0 %v7981
    %v7983 = vpop.f32.mrf.mxu0
    %v7984 = vadd.f32 %v7833, %v7983
    %v7985 = vand.u32 %v557, 4294901760
    %7986 = vmatmul.f32.gmra.mxu0 %v7985
    %v7987 = vpop.f32.mrf.mxu0
    %v7988 = vadd.f32 %v7839, %v7987
    %v7989 = vand.u32 %v569, 4294901760
    %7990 = vmatmul.f32.gmra.mxu0 %v7989
    %v7991 = vpop.f32.mrf.mxu0
    %v7992 = vadd.f32 %v7845, %v7991
    %v7993 = vand.u32 %v581, 4294901760
    %7994 = vmatmul.f32.gmra.mxu0 %v7993
    %v7995 = vpop.f32.mrf.mxu0
    %v7996 = vadd.f32 %v7851, %v7995
    %v7997 = vand.u32 %v593, 4294901760
    %7998 = vmatmul.f32.gmra.mxu0 %v7997
    %v7999 = vpop.f32.mrf.mxu0
    %v8000 = vadd.f32 %v7857, %v7999
    %v8001 = vand.u32 %v605, 4294901760
    %8002 = vmatmul.f32.gmra.mxu0 %v8001
    %v8003 = vpop.f32.mrf.mxu0
    %v8004 = vadd.f32 %v7863, %v8003
    %v8005 = vand.u32 %v617, 4294901760
    %8006 = vmatmul.f32.gmra.mxu0 %v8005
    %v8007 = vpop.f32.mrf.mxu0
    %v8008 = vadd.f32 %v7869, %v8007
    %v8009 = vand.u32 %v629, 4294901760
    %8010 = vmatmul.f32.gmra.mxu0 %v8009
    %v8011 = vpop.f32.mrf.mxu0
    %v8012 = vadd.f32 %v7875, %v8011
    %v8013 = vand.u32 %v641, 4294901760
    %8014 = vmatmul.f32.gmra.mxu0 %v8013
    %v8015 = vpop.f32.mrf.mxu0
    %v8016 = vadd.f32 %v7881, %v8015
    %v8017 = vand.u32 %v653, 4294901760
    %8018 = vmatmul.f32.gmra.mxu0 %v8017
    %v8019 = vpop.f32.mrf.mxu0
    %v8020 = vadd.f32 %v7887, %v8019
    %v8021 = vand.u32 %v665, 4294901760
    %8022 = vmatmul.f32.gmra.mxu0 %v8021
    %v8023 = vpop.f32.mrf.mxu0
    %v8024 = vadd.f32 %v7893, %v8023
    %v8025 = vand.u32 %v677, 4294901760
    %8026 = vmatmul.f32.gmra.mxu0 %v8025
    %v8027 = vpop.f32.mrf.mxu0
    %v8028 = vadd.f32 %v7899, %v8027
    %8029 = vdwg.mxu0
    %v8030 = vand.u32 %v824, 4294901760
    %8031 = vmatpush.msra.mxu0 %v8030
    %v8032 = vand.u32 %v823, 4294901760
    %8033 = vmatpush.msra.mxu0 %v8032
    %v8034 = vand.u32 %v822, 4294901760
    %8035 = vmatpush.msra.mxu0 %v8034
    %v8036 = vand.u32 %v821, 4294901760
    %8037 = vmatpush.msra.mxu0 %v8036
    %v8038 = vand.u32 %v820, 4294901760
    %8039 = vmatpush.msra.mxu0 %v8038
    %v8040 = vand.u32 %v819, 4294901760
    %8041 = vmatpush.msra.mxu0 %v8040
    %v8042 = vand.u32 %v818, 4294901760
    %8043 = vmatpush.msra.mxu0 %v8042
    %v8044 = vand.u32 %v817, 4294901760
    %8045 = vmatpush.msra.mxu0 %v8044
    %v8046 = vand.u32 %v816, 4294901760
    %8047 = vmatpush.msra.mxu0 %v8046
    %v8048 = vand.u32 %v815, 4294901760
    %8049 = vmatpush.msra.mxu0 %v8048
    %v8050 = vand.u32 %v814, 4294901760
    %8051 = vmatpush.msra.mxu0 %v8050
    %v8052 = vand.u32 %v813, 4294901760
    %8053 = vmatpush.msra.mxu0 %v8052
    %v8054 = vand.u32 %v812, 4294901760
    %8055 = vmatpush.msra.mxu0 %v8054
    %v8056 = vand.u32 %v811, 4294901760
    %8057 = vmatpush.msra.mxu0 %v8056
    %v8058 = vand.u32 %v810, 4294901760
    %8059 = vmatpush.msra.mxu0 %v8058
    %v8060 = vand.u32 %v809, 4294901760
    %8061 = vmatpush.msra.mxu0 %v8060
    %v8062 = vand.u32 %v497, 4294901760
    %8063 = vmatmul.f32.gmra.mxu0 %v8062
    %v8064 = vpop.f32.mrf.mxu0
    %v8065 = vadd.f32 %v7968, %v8064
    %v8066 = vand.u32 %v509, 4294901760
    %8067 = vmatmul.f32.gmra.mxu0 %v8066
    %v8068 = vpop.f32.mrf.mxu0
    %v8069 = vadd.f32 %v7972, %v8068
    %v8070 = vand.u32 %v521, 4294901760
    %8071 = vmatmul.f32.gmra.mxu0 %v8070
    %v8072 = vpop.f32.mrf.mxu0
    %v8073 = vadd.f32 %v7976, %v8072
    %v8074 = vand.u32 %v533, 4294901760
    %8075 = vmatmul.f32.gmra.mxu0 %v8074
    %v8076 = vpop.f32.mrf.mxu0
    %v8077 = vadd.f32 %v7980, %v8076
    %v8078 = vand.u32 %v545, 4294901760
    %8079 = vmatmul.f32.gmra.mxu0 %v8078
    %v8080 = vpop.f32.mrf.mxu0
    %v8081 = vadd.f32 %v7984, %v8080
    %v8082 = vand.u32 %v557, 4294901760
    %8083 = vmatmul.f32.gmra.mxu0 %v8082
    %v8084 = vpop.f32.mrf.mxu0
    %v8085 = vadd.f32 %v7988, %v8084
    %v8086 = vand.u32 %v569, 4294901760
    %8087 = vmatmul.f32.gmra.mxu0 %v8086
    %v8088 = vpop.f32.mrf.mxu0
    %v8089 = vadd.f32 %v7992, %v8088
    %v8090 = vand.u32 %v581, 4294901760
    %8091 = vmatmul.f32.gmra.mxu0 %v8090
    %v8092 = vpop.f32.mrf.mxu0
    %v8093 = vadd.f32 %v7996, %v8092
    %v8094 = vand.u32 %v593, 4294901760
    %8095 = vmatmul.f32.gmra.mxu0 %v8094
    %v8096 = vpop.f32.mrf.mxu0
    %v8097 = vadd.f32 %v8000, %v8096
    %v8098 = vand.u32 %v605, 4294901760
    %8099 = vmatmul.f32.gmra.mxu0 %v8098
    %v8100 = vpop.f32.mrf.mxu0
    %v8101 = vadd.f32 %v8004, %v8100
    %v8102 = vand.u32 %v617, 4294901760
    %8103 = vmatmul.f32.gmra.mxu0 %v8102
    %v8104 = vpop.f32.mrf.mxu0
    %v8105 = vadd.f32 %v8008, %v8104
    %v8106 = vand.u32 %v629, 4294901760
    %8107 = vmatmul.f32.gmra.mxu0 %v8106
    %v8108 = vpop.f32.mrf.mxu0
    %v8109 = vadd.f32 %v8012, %v8108
    %v8110 = vand.u32 %v641, 4294901760
    %8111 = vmatmul.f32.gmra.mxu0 %v8110
    %v8112 = vpop.f32.mrf.mxu0
    %v8113 = vadd.f32 %v8016, %v8112
    %v8114 = vand.u32 %v653, 4294901760
    %8115 = vmatmul.f32.gmra.mxu0 %v8114
    %v8116 = vpop.f32.mrf.mxu0
    %v8117 = vadd.f32 %v8020, %v8116
    %v8118 = vand.u32 %v665, 4294901760
    %8119 = vmatmul.f32.gmra.mxu0 %v8118
    %v8120 = vpop.f32.mrf.mxu0
    %v8121 = vadd.f32 %v8024, %v8120
    %v8122 = vand.u32 %v677, 4294901760
    %8123 = vmatmul.f32.gmra.mxu0 %v8122
    %v8124 = vpop.f32.mrf.mxu0
    %v8125 = vadd.f32 %v8028, %v8124
    %8126 = vdwg.mxu0
    %v8127 = vand.u32 %v840, 4294901760
    %8128 = vmatpush.msra.mxu0 %v8127
    %v8129 = vand.u32 %v839, 4294901760
    %8130 = vmatpush.msra.mxu0 %v8129
    %v8131 = vand.u32 %v838, 4294901760
    %8132 = vmatpush.msra.mxu0 %v8131
    %v8133 = vand.u32 %v837, 4294901760
    %8134 = vmatpush.msra.mxu0 %v8133
    %v8135 = vand.u32 %v836, 4294901760
    %8136 = vmatpush.msra.mxu0 %v8135
    %v8137 = vand.u32 %v835, 4294901760
    %8138 = vmatpush.msra.mxu0 %v8137
    %v8139 = vand.u32 %v834, 4294901760
    %8140 = vmatpush.msra.mxu0 %v8139
    %v8141 = vand.u32 %v833, 4294901760
    %8142 = vmatpush.msra.mxu0 %v8141
    %v8143 = vand.u32 %v832, 4294901760
    %8144 = vmatpush.msra.mxu0 %v8143
    %v8145 = vand.u32 %v831, 4294901760
    %8146 = vmatpush.msra.mxu0 %v8145
    %v8147 = vand.u32 %v830, 4294901760
    %8148 = vmatpush.msra.mxu0 %v8147
    %v8149 = vand.u32 %v829, 4294901760
    %8150 = vmatpush.msra.mxu0 %v8149
    %v8151 = vand.u32 %v828, 4294901760
    %8152 = vmatpush.msra.mxu0 %v8151
    %v8153 = vand.u32 %v827, 4294901760
    %8154 = vmatpush.msra.mxu0 %v8153
    %v8155 = vand.u32 %v826, 4294901760
    %8156 = vmatpush.msra.mxu0 %v8155
    %v8157 = vand.u32 %v825, 4294901760
    %8158 = vmatpush.msra.mxu0 %v8157
    %v8159 = vand.u32 %v498, 4294901760
    %v8160 = vsub.f32 %v498, %v8159
    %v8161 = vand.u32 %v8160, 4294901760
    %v8162 = vsub.f32 %v8160, %v8161
    %v8163 = vand.u32 %v8162, 4294901760
    %8164 = vmatmul.f32.gmra.mxu0 %v8163
    %v8165 = vpop.f32.mrf.mxu0
    %v8166 = vadd.f32 %v8065, %v8165
    %v8167 = vand.u32 %v510, 4294901760
    %v8168 = vsub.f32 %v510, %v8167
    %v8169 = vand.u32 %v8168, 4294901760
    %v8170 = vsub.f32 %v8168, %v8169
    %v8171 = vand.u32 %v8170, 4294901760
    %8172 = vmatmul.f32.gmra.mxu0 %v8171
    %v8173 = vpop.f32.mrf.mxu0
    %v8174 = vadd.f32 %v8069, %v8173
    %v8175 = vand.u32 %v522, 4294901760
    %v8176 = vsub.f32 %v522, %v8175
    %v8177 = vand.u32 %v8176, 4294901760
    %v8178 = vsub.f32 %v8176, %v8177
    %v8179 = vand.u32 %v8178, 4294901760
    %8180 = vmatmul.f32.gmra.mxu0 %v8179
    %v8181 = vpop.f32.mrf.mxu0
    %v8182 = vadd.f32 %v8073, %v8181
    %v8183 = vand.u32 %v534, 4294901760
    %v8184 = vsub.f32 %v534, %v8183
    %v8185 = vand.u32 %v8184, 4294901760
    %v8186 = vsub.f32 %v8184, %v8185
    %v8187 = vand.u32 %v8186, 4294901760
    %8188 = vmatmul.f32.gmra.mxu0 %v8187
    %v8189 = vpop.f32.mrf.mxu0
    %v8190 = vadd.f32 %v8077, %v8189
    %v8191 = vand.u32 %v546, 4294901760
    %v8192 = vsub.f32 %v546, %v8191
    %v8193 = vand.u32 %v8192, 4294901760
    %v8194 = vsub.f32 %v8192, %v8193
    %v8195 = vand.u32 %v8194, 4294901760
    %8196 = vmatmul.f32.gmra.mxu0 %v8195
    %v8197 = vpop.f32.mrf.mxu0
    %v8198 = vadd.f32 %v8081, %v8197
    %v8199 = vand.u32 %v558, 4294901760
    %v8200 = vsub.f32 %v558, %v8199
    %v8201 = vand.u32 %v8200, 4294901760
    %v8202 = vsub.f32 %v8200, %v8201
    %v8203 = vand.u32 %v8202, 4294901760
    %8204 = vmatmul.f32.gmra.mxu0 %v8203
    %v8205 = vpop.f32.mrf.mxu0
    %v8206 = vadd.f32 %v8085, %v8205
    %v8207 = vand.u32 %v570, 4294901760
    %v8208 = vsub.f32 %v570, %v8207
    %v8209 = vand.u32 %v8208, 4294901760
    %v8210 = vsub.f32 %v8208, %v8209
    %v8211 = vand.u32 %v8210, 4294901760
    %8212 = vmatmul.f32.gmra.mxu0 %v8211
    %v8213 = vpop.f32.mrf.mxu0
    %v8214 = vadd.f32 %v8089, %v8213
    %v8215 = vand.u32 %v582, 4294901760
    %v8216 = vsub.f32 %v582, %v8215
    %v8217 = vand.u32 %v8216, 4294901760
    %v8218 = vsub.f32 %v8216, %v8217
    %v8219 = vand.u32 %v8218, 4294901760
    %8220 = vmatmul.f32.gmra.mxu0 %v8219
    %v8221 = vpop.f32.mrf.mxu0
    %v8222 = vadd.f32 %v8093, %v8221
    %v8223 = vand.u32 %v594, 4294901760
    %v8224 = vsub.f32 %v594, %v8223
    %v8225 = vand.u32 %v8224, 4294901760
    %v8226 = vsub.f32 %v8224, %v8225
    %v8227 = vand.u32 %v8226, 4294901760
    %8228 = vmatmul.f32.gmra.mxu0 %v8227
    %v8229 = vpop.f32.mrf.mxu0
    %v8230 = vadd.f32 %v8097, %v8229
    %v8231 = vand.u32 %v606, 4294901760
    %v8232 = vsub.f32 %v606, %v8231
    %v8233 = vand.u32 %v8232, 4294901760
    %v8234 = vsub.f32 %v8232, %v8233
    %v8235 = vand.u32 %v8234, 4294901760
    %8236 = vmatmul.f32.gmra.mxu0 %v8235
    %v8237 = vpop.f32.mrf.mxu0
    %v8238 = vadd.f32 %v8101, %v8237
    %v8239 = vand.u32 %v618, 4294901760
    %v8240 = vsub.f32 %v618, %v8239
    %v8241 = vand.u32 %v8240, 4294901760
    %v8242 = vsub.f32 %v8240, %v8241
    %v8243 = vand.u32 %v8242, 4294901760
    %8244 = vmatmul.f32.gmra.mxu0 %v8243
    %v8245 = vpop.f32.mrf.mxu0
    %v8246 = vadd.f32 %v8105, %v8245
    %v8247 = vand.u32 %v630, 4294901760
    %v8248 = vsub.f32 %v630, %v8247
    %v8249 = vand.u32 %v8248, 4294901760
    %v8250 = vsub.f32 %v8248, %v8249
    %v8251 = vand.u32 %v8250, 4294901760
    %8252 = vmatmul.f32.gmra.mxu0 %v8251
    %v8253 = vpop.f32.mrf.mxu0
    %v8254 = vadd.f32 %v8109, %v8253
    %v8255 = vand.u32 %v642, 4294901760
    %v8256 = vsub.f32 %v642, %v8255
    %v8257 = vand.u32 %v8256, 4294901760
    %v8258 = vsub.f32 %v8256, %v8257
    %v8259 = vand.u32 %v8258, 4294901760
    %8260 = vmatmul.f32.gmra.mxu0 %v8259
    %v8261 = vpop.f32.mrf.mxu0
    %v8262 = vadd.f32 %v8113, %v8261
    %v8263 = vand.u32 %v654, 4294901760
    %v8264 = vsub.f32 %v654, %v8263
    %v8265 = vand.u32 %v8264, 4294901760
    %v8266 = vsub.f32 %v8264, %v8265
    %v8267 = vand.u32 %v8266, 4294901760
    %8268 = vmatmul.f32.gmra.mxu0 %v8267
    %v8269 = vpop.f32.mrf.mxu0
    %v8270 = vadd.f32 %v8117, %v8269
    %v8271 = vand.u32 %v666, 4294901760
    %v8272 = vsub.f32 %v666, %v8271
    %v8273 = vand.u32 %v8272, 4294901760
    %v8274 = vsub.f32 %v8272, %v8273
    %v8275 = vand.u32 %v8274, 4294901760
    %8276 = vmatmul.f32.gmra.mxu0 %v8275
    %v8277 = vpop.f32.mrf.mxu0
    %v8278 = vadd.f32 %v8121, %v8277
    %v8279 = vand.u32 %v678, 4294901760
    %v8280 = vsub.f32 %v678, %v8279
    %v8281 = vand.u32 %v8280, 4294901760
    %v8282 = vsub.f32 %v8280, %v8281
    %v8283 = vand.u32 %v8282, 4294901760
    %8284 = vmatmul.f32.gmra.mxu0 %v8283
    %v8285 = vpop.f32.mrf.mxu0
    %v8286 = vadd.f32 %v8125, %v8285
    %8287 = vdwg.mxu0
    %v8288 = vand.u32 %v840, 4294901760
    %v8289 = vsub.f32 %v840, %v8288
    %v8290 = vand.u32 %v8289, 4294901760
    %v8291 = vsub.f32 %v8289, %v8290
    %v8292 = vand.u32 %v8291, 4294901760
    %8293 = vmatpush.msra.mxu0 %v8292
    %v8294 = vand.u32 %v839, 4294901760
    %v8295 = vsub.f32 %v839, %v8294
    %v8296 = vand.u32 %v8295, 4294901760
    %v8297 = vsub.f32 %v8295, %v8296
    %v8298 = vand.u32 %v8297, 4294901760
    %8299 = vmatpush.msra.mxu0 %v8298
    %v8300 = vand.u32 %v838, 4294901760
    %v8301 = vsub.f32 %v838, %v8300
    %v8302 = vand.u32 %v8301, 4294901760
    %v8303 = vsub.f32 %v8301, %v8302
    %v8304 = vand.u32 %v8303, 4294901760
    %8305 = vmatpush.msra.mxu0 %v8304
    %v8306 = vand.u32 %v837, 4294901760
    %v8307 = vsub.f32 %v837, %v8306
    %v8308 = vand.u32 %v8307, 4294901760
    %v8309 = vsub.f32 %v8307, %v8308
    %v8310 = vand.u32 %v8309, 4294901760
    %8311 = vmatpush.msra.mxu0 %v8310
    %v8312 = vand.u32 %v836, 4294901760
    %v8313 = vsub.f32 %v836, %v8312
    %v8314 = vand.u32 %v8313, 4294901760
    %v8315 = vsub.f32 %v8313, %v8314
    %v8316 = vand.u32 %v8315, 4294901760
    %8317 = vmatpush.msra.mxu0 %v8316
    %v8318 = vand.u32 %v835, 4294901760
    %v8319 = vsub.f32 %v835, %v8318
    %v8320 = vand.u32 %v8319, 4294901760
    %v8321 = vsub.f32 %v8319, %v8320
    %v8322 = vand.u32 %v8321, 4294901760
    %8323 = vmatpush.msra.mxu0 %v8322
    %v8324 = vand.u32 %v834, 4294901760
    %v8325 = vsub.f32 %v834, %v8324
    %v8326 = vand.u32 %v8325, 4294901760
    %v8327 = vsub.f32 %v8325, %v8326
    %v8328 = vand.u32 %v8327, 4294901760
    %8329 = vmatpush.msra.mxu0 %v8328
    %v8330 = vand.u32 %v833, 4294901760
    %v8331 = vsub.f32 %v833, %v8330
    %v8332 = vand.u32 %v8331, 4294901760
    %v8333 = vsub.f32 %v8331, %v8332
    %v8334 = vand.u32 %v8333, 4294901760
    %8335 = vmatpush.msra.mxu0 %v8334
    %v8336 = vand.u32 %v832, 4294901760
    %v8337 = vsub.f32 %v832, %v8336
    %v8338 = vand.u32 %v8337, 4294901760
    %v8339 = vsub.f32 %v8337, %v8338
    %v8340 = vand.u32 %v8339, 4294901760
    %8341 = vmatpush.msra.mxu0 %v8340
    %v8342 = vand.u32 %v831, 4294901760
    %v8343 = vsub.f32 %v831, %v8342
    %v8344 = vand.u32 %v8343, 4294901760
    %v8345 = vsub.f32 %v8343, %v8344
    %v8346 = vand.u32 %v8345, 4294901760
    %8347 = vmatpush.msra.mxu0 %v8346
    %v8348 = vand.u32 %v830, 4294901760
    %v8349 = vsub.f32 %v830, %v8348
    %v8350 = vand.u32 %v8349, 4294901760
    %v8351 = vsub.f32 %v8349, %v8350
    %v8352 = vand.u32 %v8351, 4294901760
    %8353 = vmatpush.msra.mxu0 %v8352
    %v8354 = vand.u32 %v829, 4294901760
    %v8355 = vsub.f32 %v829, %v8354
    %v8356 = vand.u32 %v8355, 4294901760
    %v8357 = vsub.f32 %v8355, %v8356
    %v8358 = vand.u32 %v8357, 4294901760
    %8359 = vmatpush.msra.mxu0 %v8358
    %v8360 = vand.u32 %v828, 4294901760
    %v8361 = vsub.f32 %v828, %v8360
    %v8362 = vand.u32 %v8361, 4294901760
    %v8363 = vsub.f32 %v8361, %v8362
    %v8364 = vand.u32 %v8363, 4294901760
    %8365 = vmatpush.msra.mxu0 %v8364
    %v8366 = vand.u32 %v827, 4294901760
    %v8367 = vsub.f32 %v827, %v8366
    %v8368 = vand.u32 %v8367, 4294901760
    %v8369 = vsub.f32 %v8367, %v8368
    %v8370 = vand.u32 %v8369, 4294901760
    %8371 = vmatpush.msra.mxu0 %v8370
    %v8372 = vand.u32 %v826, 4294901760
    %v8373 = vsub.f32 %v826, %v8372
    %v8374 = vand.u32 %v8373, 4294901760
    %v8375 = vsub.f32 %v8373, %v8374
    %v8376 = vand.u32 %v8375, 4294901760
    %8377 = vmatpush.msra.mxu0 %v8376
    %v8378 = vand.u32 %v825, 4294901760
    %v8379 = vsub.f32 %v825, %v8378
    %v8380 = vand.u32 %v8379, 4294901760
    %v8381 = vsub.f32 %v8379, %v8380
    %v8382 = vand.u32 %v8381, 4294901760
    %8383 = vmatpush.msra.mxu0 %v8382
    %v8384 = vand.u32 %v498, 4294901760
    %8385 = vmatmul.f32.gmra.mxu0 %v8384
    %v8386 = vpop.f32.mrf.mxu0
    %v8387 = vadd.f32 %v8166, %v8386
    %v8388 = vand.u32 %v510, 4294901760
    %8389 = vmatmul.f32.gmra.mxu0 %v8388
    %v8390 = vpop.f32.mrf.mxu0
    %v8391 = vadd.f32 %v8174, %v8390
    %v8392 = vand.u32 %v522, 4294901760
    %8393 = vmatmul.f32.gmra.mxu0 %v8392
    %v8394 = vpop.f32.mrf.mxu0
    %v8395 = vadd.f32 %v8182, %v8394
    %v8396 = vand.u32 %v534, 4294901760
    %8397 = vmatmul.f32.gmra.mxu0 %v8396
    %v8398 = vpop.f32.mrf.mxu0
    %v8399 = vadd.f32 %v8190, %v8398
    %v8400 = vand.u32 %v546, 4294901760
    %8401 = vmatmul.f32.gmra.mxu0 %v8400
    %v8402 = vpop.f32.mrf.mxu0
    %v8403 = vadd.f32 %v8198, %v8402
    %v8404 = vand.u32 %v558, 4294901760
    %8405 = vmatmul.f32.gmra.mxu0 %v8404
    %v8406 = vpop.f32.mrf.mxu0
    %v8407 = vadd.f32 %v8206, %v8406
    %v8408 = vand.u32 %v570, 4294901760
    %8409 = vmatmul.f32.gmra.mxu0 %v8408
    %v8410 = vpop.f32.mrf.mxu0
    %v8411 = vadd.f32 %v8214, %v8410
    %v8412 = vand.u32 %v582, 4294901760
    %8413 = vmatmul.f32.gmra.mxu0 %v8412
    %v8414 = vpop.f32.mrf.mxu0
    %v8415 = vadd.f32 %v8222, %v8414
    %v8416 = vand.u32 %v594, 4294901760
    %8417 = vmatmul.f32.gmra.mxu0 %v8416
    %v8418 = vpop.f32.mrf.mxu0
    %v8419 = vadd.f32 %v8230, %v8418
    %v8420 = vand.u32 %v606, 4294901760
    %8421 = vmatmul.f32.gmra.mxu0 %v8420
    %v8422 = vpop.f32.mrf.mxu0
    %v8423 = vadd.f32 %v8238, %v8422
    %v8424 = vand.u32 %v618, 4294901760
    %8425 = vmatmul.f32.gmra.mxu0 %v8424
    %v8426 = vpop.f32.mrf.mxu0
    %v8427 = vadd.f32 %v8246, %v8426
    %v8428 = vand.u32 %v630, 4294901760
    %8429 = vmatmul.f32.gmra.mxu0 %v8428
    %v8430 = vpop.f32.mrf.mxu0
    %v8431 = vadd.f32 %v8254, %v8430
    %v8432 = vand.u32 %v642, 4294901760
    %8433 = vmatmul.f32.gmra.mxu0 %v8432
    %v8434 = vpop.f32.mrf.mxu0
    %v8435 = vadd.f32 %v8262, %v8434
    %v8436 = vand.u32 %v654, 4294901760
    %8437 = vmatmul.f32.gmra.mxu0 %v8436
    %v8438 = vpop.f32.mrf.mxu0
    %v8439 = vadd.f32 %v8270, %v8438
    %v8440 = vand.u32 %v666, 4294901760
    %8441 = vmatmul.f32.gmra.mxu0 %v8440
    %v8442 = vpop.f32.mrf.mxu0
    %v8443 = vadd.f32 %v8278, %v8442
    %v8444 = vand.u32 %v678, 4294901760
    %8445 = vmatmul.f32.gmra.mxu0 %v8444
    %v8446 = vpop.f32.mrf.mxu0
    %v8447 = vadd.f32 %v8286, %v8446
    %8448 = vdwg.mxu0
    %v8449 = vand.u32 %v840, 4294901760
    %v8450 = vsub.f32 %v840, %v8449
    %8451 = vmatpush.msra.mxu0 %v8450
    %v8452 = vand.u32 %v839, 4294901760
    %v8453 = vsub.f32 %v839, %v8452
    %8454 = vmatpush.msra.mxu0 %v8453
    %v8455 = vand.u32 %v838, 4294901760
    %v8456 = vsub.f32 %v838, %v8455
    %8457 = vmatpush.msra.mxu0 %v8456
    %v8458 = vand.u32 %v837, 4294901760
    %v8459 = vsub.f32 %v837, %v8458
    %8460 = vmatpush.msra.mxu0 %v8459
    %v8461 = vand.u32 %v836, 4294901760
    %v8462 = vsub.f32 %v836, %v8461
    %8463 = vmatpush.msra.mxu0 %v8462
    %v8464 = vand.u32 %v835, 4294901760
    %v8465 = vsub.f32 %v835, %v8464
    %8466 = vmatpush.msra.mxu0 %v8465
    %v8467 = vand.u32 %v834, 4294901760
    %v8468 = vsub.f32 %v834, %v8467
    %8469 = vmatpush.msra.mxu0 %v8468
    %v8470 = vand.u32 %v833, 4294901760
    %v8471 = vsub.f32 %v833, %v8470
    %8472 = vmatpush.msra.mxu0 %v8471
    %v8473 = vand.u32 %v832, 4294901760
    %v8474 = vsub.f32 %v832, %v8473
    %8475 = vmatpush.msra.mxu0 %v8474
    %v8476 = vand.u32 %v831, 4294901760
    %v8477 = vsub.f32 %v831, %v8476
    %8478 = vmatpush.msra.mxu0 %v8477
    %v8479 = vand.u32 %v830, 4294901760
    %v8480 = vsub.f32 %v830, %v8479
    %8481 = vmatpush.msra.mxu0 %v8480
    %v8482 = vand.u32 %v829, 4294901760
    %v8483 = vsub.f32 %v829, %v8482
    %8484 = vmatpush.msra.mxu0 %v8483
    %v8485 = vand.u32 %v828, 4294901760
    %v8486 = vsub.f32 %v828, %v8485
    %8487 = vmatpush.msra.mxu0 %v8486
    %v8488 = vand.u32 %v827, 4294901760
    %v8489 = vsub.f32 %v827, %v8488
    %8490 = vmatpush.msra.mxu0 %v8489
    %v8491 = vand.u32 %v826, 4294901760
    %v8492 = vsub.f32 %v826, %v8491
    %8493 = vmatpush.msra.mxu0 %v8492
    %v8494 = vand.u32 %v825, 4294901760
    %v8495 = vsub.f32 %v825, %v8494
    %8496 = vmatpush.msra.mxu0 %v8495
    %v8497 = vand.u32 %v498, 4294901760
    %v8498 = vsub.f32 %v498, %v8497
    %8499 = vmatmul.f32.gmra.mxu0 %v8498
    %v8500 = vpop.f32.mrf.mxu0
    %v8501 = vadd.f32 %v8387, %v8500
    %v8502 = vand.u32 %v510, 4294901760
    %v8503 = vsub.f32 %v510, %v8502
    %8504 = vmatmul.f32.gmra.mxu0 %v8503
    %v8505 = vpop.f32.mrf.mxu0
    %v8506 = vadd.f32 %v8391, %v8505
    %v8507 = vand.u32 %v522, 4294901760
    %v8508 = vsub.f32 %v522, %v8507
    %8509 = vmatmul.f32.gmra.mxu0 %v8508
    %v8510 = vpop.f32.mrf.mxu0
    %v8511 = vadd.f32 %v8395, %v8510
    %v8512 = vand.u32 %v534, 4294901760
    %v8513 = vsub.f32 %v534, %v8512
    %8514 = vmatmul.f32.gmra.mxu0 %v8513
    %v8515 = vpop.f32.mrf.mxu0
    %v8516 = vadd.f32 %v8399, %v8515
    %v8517 = vand.u32 %v546, 4294901760
    %v8518 = vsub.f32 %v546, %v8517
    %8519 = vmatmul.f32.gmra.mxu0 %v8518
    %v8520 = vpop.f32.mrf.mxu0
    %v8521 = vadd.f32 %v8403, %v8520
    %v8522 = vand.u32 %v558, 4294901760
    %v8523 = vsub.f32 %v558, %v8522
    %8524 = vmatmul.f32.gmra.mxu0 %v8523
    %v8525 = vpop.f32.mrf.mxu0
    %v8526 = vadd.f32 %v8407, %v8525
    %v8527 = vand.u32 %v570, 4294901760
    %v8528 = vsub.f32 %v570, %v8527
    %8529 = vmatmul.f32.gmra.mxu0 %v8528
    %v8530 = vpop.f32.mrf.mxu0
    %v8531 = vadd.f32 %v8411, %v8530
    %v8532 = vand.u32 %v582, 4294901760
    %v8533 = vsub.f32 %v582, %v8532
    %8534 = vmatmul.f32.gmra.mxu0 %v8533
    %v8535 = vpop.f32.mrf.mxu0
    %v8536 = vadd.f32 %v8415, %v8535
    %v8537 = vand.u32 %v594, 4294901760
    %v8538 = vsub.f32 %v594, %v8537
    %8539 = vmatmul.f32.gmra.mxu0 %v8538
    %v8540 = vpop.f32.mrf.mxu0
    %v8541 = vadd.f32 %v8419, %v8540
    %v8542 = vand.u32 %v606, 4294901760
    %v8543 = vsub.f32 %v606, %v8542
    %8544 = vmatmul.f32.gmra.mxu0 %v8543
    %v8545 = vpop.f32.mrf.mxu0
    %v8546 = vadd.f32 %v8423, %v8545
    %v8547 = vand.u32 %v618, 4294901760
    %v8548 = vsub.f32 %v618, %v8547
    %8549 = vmatmul.f32.gmra.mxu0 %v8548
    %v8550 = vpop.f32.mrf.mxu0
    %v8551 = vadd.f32 %v8427, %v8550
    %v8552 = vand.u32 %v630, 4294901760
    %v8553 = vsub.f32 %v630, %v8552
    %8554 = vmatmul.f32.gmra.mxu0 %v8553
    %v8555 = vpop.f32.mrf.mxu0
    %v8556 = vadd.f32 %v8431, %v8555
    %v8557 = vand.u32 %v642, 4294901760
    %v8558 = vsub.f32 %v642, %v8557
    %8559 = vmatmul.f32.gmra.mxu0 %v8558
    %v8560 = vpop.f32.mrf.mxu0
    %v8561 = vadd.f32 %v8435, %v8560
    %v8562 = vand.u32 %v654, 4294901760
    %v8563 = vsub.f32 %v654, %v8562
    %8564 = vmatmul.f32.gmra.mxu0 %v8563
    %v8565 = vpop.f32.mrf.mxu0
    %v8566 = vadd.f32 %v8439, %v8565
    %v8567 = vand.u32 %v666, 4294901760
    %v8568 = vsub.f32 %v666, %v8567
    %8569 = vmatmul.f32.gmra.mxu0 %v8568
    %v8570 = vpop.f32.mrf.mxu0
    %v8571 = vadd.f32 %v8443, %v8570
    %v8572 = vand.u32 %v678, 4294901760
    %v8573 = vsub.f32 %v678, %v8572
    %8574 = vmatmul.f32.gmra.mxu0 %v8573
    %v8575 = vpop.f32.mrf.mxu0
    %v8576 = vadd.f32 %v8447, %v8575
    %8577 = vdwg.mxu0
    %v8578 = vand.u32 %v840, 4294901760
    %8579 = vmatpush.msra.mxu0 %v8578
    %v8580 = vand.u32 %v839, 4294901760
    %8581 = vmatpush.msra.mxu0 %v8580
    %v8582 = vand.u32 %v838, 4294901760
    %8583 = vmatpush.msra.mxu0 %v8582
    %v8584 = vand.u32 %v837, 4294901760
    %8585 = vmatpush.msra.mxu0 %v8584
    %v8586 = vand.u32 %v836, 4294901760
    %8587 = vmatpush.msra.mxu0 %v8586
    %v8588 = vand.u32 %v835, 4294901760
    %8589 = vmatpush.msra.mxu0 %v8588
    %v8590 = vand.u32 %v834, 4294901760
    %8591 = vmatpush.msra.mxu0 %v8590
    %v8592 = vand.u32 %v833, 4294901760
    %8593 = vmatpush.msra.mxu0 %v8592
    %v8594 = vand.u32 %v832, 4294901760
    %8595 = vmatpush.msra.mxu0 %v8594
    %v8596 = vand.u32 %v831, 4294901760
    %8597 = vmatpush.msra.mxu0 %v8596
    %v8598 = vand.u32 %v830, 4294901760
    %8599 = vmatpush.msra.mxu0 %v8598
    %v8600 = vand.u32 %v829, 4294901760
    %8601 = vmatpush.msra.mxu0 %v8600
    %v8602 = vand.u32 %v828, 4294901760
    %8603 = vmatpush.msra.mxu0 %v8602
    %v8604 = vand.u32 %v827, 4294901760
    %8605 = vmatpush.msra.mxu0 %v8604
    %v8606 = vand.u32 %v826, 4294901760
    %8607 = vmatpush.msra.mxu0 %v8606
    %v8608 = vand.u32 %v825, 4294901760
    %8609 = vmatpush.msra.mxu0 %v8608
    %v8610 = vand.u32 %v498, 4294901760
    %v8611 = vsub.f32 %v498, %v8610
    %v8612 = vand.u32 %v8611, 4294901760
    %8613 = vmatmul.f32.gmra.mxu0 %v8612
    %v8614 = vpop.f32.mrf.mxu0
    %v8615 = vadd.f32 %v8501, %v8614
    %v8616 = vand.u32 %v510, 4294901760
    %v8617 = vsub.f32 %v510, %v8616
    %v8618 = vand.u32 %v8617, 4294901760
    %8619 = vmatmul.f32.gmra.mxu0 %v8618
    %v8620 = vpop.f32.mrf.mxu0
    %v8621 = vadd.f32 %v8506, %v8620
    %v8622 = vand.u32 %v522, 4294901760
    %v8623 = vsub.f32 %v522, %v8622
    %v8624 = vand.u32 %v8623, 4294901760
    %8625 = vmatmul.f32.gmra.mxu0 %v8624
    %v8626 = vpop.f32.mrf.mxu0
    %v8627 = vadd.f32 %v8511, %v8626
    %v8628 = vand.u32 %v534, 4294901760
    %v8629 = vsub.f32 %v534, %v8628
    %v8630 = vand.u32 %v8629, 4294901760
    %8631 = vmatmul.f32.gmra.mxu0 %v8630
    %v8632 = vpop.f32.mrf.mxu0
    %v8633 = vadd.f32 %v8516, %v8632
    %v8634 = vand.u32 %v546, 4294901760
    %v8635 = vsub.f32 %v546, %v8634
    %v8636 = vand.u32 %v8635, 4294901760
    %8637 = vmatmul.f32.gmra.mxu0 %v8636
    %v8638 = vpop.f32.mrf.mxu0
    %v8639 = vadd.f32 %v8521, %v8638
    %v8640 = vand.u32 %v558, 4294901760
    %v8641 = vsub.f32 %v558, %v8640
    %v8642 = vand.u32 %v8641, 4294901760
    %8643 = vmatmul.f32.gmra.mxu0 %v8642
    %v8644 = vpop.f32.mrf.mxu0
    %v8645 = vadd.f32 %v8526, %v8644
    %v8646 = vand.u32 %v570, 4294901760
    %v8647 = vsub.f32 %v570, %v8646
    %v8648 = vand.u32 %v8647, 4294901760
    %8649 = vmatmul.f32.gmra.mxu0 %v8648
    %v8650 = vpop.f32.mrf.mxu0
    %v8651 = vadd.f32 %v8531, %v8650
    %v8652 = vand.u32 %v582, 4294901760
    %v8653 = vsub.f32 %v582, %v8652
    %v8654 = vand.u32 %v8653, 4294901760
    %8655 = vmatmul.f32.gmra.mxu0 %v8654
    %v8656 = vpop.f32.mrf.mxu0
    %v8657 = vadd.f32 %v8536, %v8656
    %v8658 = vand.u32 %v594, 4294901760
    %v8659 = vsub.f32 %v594, %v8658
    %v8660 = vand.u32 %v8659, 4294901760
    %8661 = vmatmul.f32.gmra.mxu0 %v8660
    %v8662 = vpop.f32.mrf.mxu0
    %v8663 = vadd.f32 %v8541, %v8662
    %v8664 = vand.u32 %v606, 4294901760
    %v8665 = vsub.f32 %v606, %v8664
    %v8666 = vand.u32 %v8665, 4294901760
    %8667 = vmatmul.f32.gmra.mxu0 %v8666
    %v8668 = vpop.f32.mrf.mxu0
    %v8669 = vadd.f32 %v8546, %v8668
    %v8670 = vand.u32 %v618, 4294901760
    %v8671 = vsub.f32 %v618, %v8670
    %v8672 = vand.u32 %v8671, 4294901760
    %8673 = vmatmul.f32.gmra.mxu0 %v8672
    %v8674 = vpop.f32.mrf.mxu0
    %v8675 = vadd.f32 %v8551, %v8674
    %v8676 = vand.u32 %v630, 4294901760
    %v8677 = vsub.f32 %v630, %v8676
    %v8678 = vand.u32 %v8677, 4294901760
    %8679 = vmatmul.f32.gmra.mxu0 %v8678
    %v8680 = vpop.f32.mrf.mxu0
    %v8681 = vadd.f32 %v8556, %v8680
    %v8682 = vand.u32 %v642, 4294901760
    %v8683 = vsub.f32 %v642, %v8682
    %v8684 = vand.u32 %v8683, 4294901760
    %8685 = vmatmul.f32.gmra.mxu0 %v8684
    %v8686 = vpop.f32.mrf.mxu0
    %v8687 = vadd.f32 %v8561, %v8686
    %v8688 = vand.u32 %v654, 4294901760
    %v8689 = vsub.f32 %v654, %v8688
    %v8690 = vand.u32 %v8689, 4294901760
    %8691 = vmatmul.f32.gmra.mxu0 %v8690
    %v8692 = vpop.f32.mrf.mxu0
    %v8693 = vadd.f32 %v8566, %v8692
    %v8694 = vand.u32 %v666, 4294901760
    %v8695 = vsub.f32 %v666, %v8694
    %v8696 = vand.u32 %v8695, 4294901760
    %8697 = vmatmul.f32.gmra.mxu0 %v8696
    %v8698 = vpop.f32.mrf.mxu0
    %v8699 = vadd.f32 %v8571, %v8698
    %v8700 = vand.u32 %v678, 4294901760
    %v8701 = vsub.f32 %v678, %v8700
    %v8702 = vand.u32 %v8701, 4294901760
    %8703 = vmatmul.f32.gmra.mxu0 %v8702
    %v8704 = vpop.f32.mrf.mxu0
    %v8705 = vadd.f32 %v8576, %v8704
    %8706 = vdwg.mxu0
    %v8707 = vand.u32 %v840, 4294901760
    %v8708 = vsub.f32 %v840, %v8707
    %v8709 = vand.u32 %v8708, 4294901760
    %8710 = vmatpush.msra.mxu0 %v8709
    %v8711 = vand.u32 %v839, 4294901760
    %v8712 = vsub.f32 %v839, %v8711
    %v8713 = vand.u32 %v8712, 4294901760
    %8714 = vmatpush.msra.mxu0 %v8713
    %v8715 = vand.u32 %v838, 4294901760
    %v8716 = vsub.f32 %v838, %v8715
    %v8717 = vand.u32 %v8716, 4294901760
    %8718 = vmatpush.msra.mxu0 %v8717
    %v8719 = vand.u32 %v837, 4294901760
    %v8720 = vsub.f32 %v837, %v8719
    %v8721 = vand.u32 %v8720, 4294901760
    %8722 = vmatpush.msra.mxu0 %v8721
    %v8723 = vand.u32 %v836, 4294901760
    %v8724 = vsub.f32 %v836, %v8723
    %v8725 = vand.u32 %v8724, 4294901760
    %8726 = vmatpush.msra.mxu0 %v8725
    %v8727 = vand.u32 %v835, 4294901760
    %v8728 = vsub.f32 %v835, %v8727
    %v8729 = vand.u32 %v8728, 4294901760
    %8730 = vmatpush.msra.mxu0 %v8729
    %v8731 = vand.u32 %v834, 4294901760
    %v8732 = vsub.f32 %v834, %v8731
    %v8733 = vand.u32 %v8732, 4294901760
    %8734 = vmatpush.msra.mxu0 %v8733
    %v8735 = vand.u32 %v833, 4294901760
    %v8736 = vsub.f32 %v833, %v8735
    %v8737 = vand.u32 %v8736, 4294901760
    %8738 = vmatpush.msra.mxu0 %v8737
    %v8739 = vand.u32 %v832, 4294901760
    %v8740 = vsub.f32 %v832, %v8739
    %v8741 = vand.u32 %v8740, 4294901760
    %8742 = vmatpush.msra.mxu0 %v8741
    %v8743 = vand.u32 %v831, 4294901760
    %v8744 = vsub.f32 %v831, %v8743
    %v8745 = vand.u32 %v8744, 4294901760
    %8746 = vmatpush.msra.mxu0 %v8745
    %v8747 = vand.u32 %v830, 4294901760
    %v8748 = vsub.f32 %v830, %v8747
    %v8749 = vand.u32 %v8748, 4294901760
    %8750 = vmatpush.msra.mxu0 %v8749
    %v8751 = vand.u32 %v829, 4294901760
    %v8752 = vsub.f32 %v829, %v8751
    %v8753 = vand.u32 %v8752, 4294901760
    %8754 = vmatpush.msra.mxu0 %v8753
    %v8755 = vand.u32 %v828, 4294901760
    %v8756 = vsub.f32 %v828, %v8755
    %v8757 = vand.u32 %v8756, 4294901760
    %8758 = vmatpush.msra.mxu0 %v8757
    %v8759 = vand.u32 %v827, 4294901760
    %v8760 = vsub.f32 %v827, %v8759
    %v8761 = vand.u32 %v8760, 4294901760
    %8762 = vmatpush.msra.mxu0 %v8761
    %v8763 = vand.u32 %v826, 4294901760
    %v8764 = vsub.f32 %v826, %v8763
    %v8765 = vand.u32 %v8764, 4294901760
    %8766 = vmatpush.msra.mxu0 %v8765
    %v8767 = vand.u32 %v825, 4294901760
    %v8768 = vsub.f32 %v825, %v8767
    %v8769 = vand.u32 %v8768, 4294901760
    %8770 = vmatpush.msra.mxu0 %v8769
    %v8771 = vand.u32 %v498, 4294901760
    %8772 = vmatmul.f32.gmra.mxu0 %v8771
    %v8773 = vpop.f32.mrf.mxu0
    %v8774 = vadd.f32 %v8615, %v8773
    %v8775 = vand.u32 %v510, 4294901760
    %8776 = vmatmul.f32.gmra.mxu0 %v8775
    %v8777 = vpop.f32.mrf.mxu0
    %v8778 = vadd.f32 %v8621, %v8777
    %v8779 = vand.u32 %v522, 4294901760
    %8780 = vmatmul.f32.gmra.mxu0 %v8779
    %v8781 = vpop.f32.mrf.mxu0
    %v8782 = vadd.f32 %v8627, %v8781
    %v8783 = vand.u32 %v534, 4294901760
    %8784 = vmatmul.f32.gmra.mxu0 %v8783
    %v8785 = vpop.f32.mrf.mxu0
    %v8786 = vadd.f32 %v8633, %v8785
    %v8787 = vand.u32 %v546, 4294901760
    %8788 = vmatmul.f32.gmra.mxu0 %v8787
    %v8789 = vpop.f32.mrf.mxu0
    %v8790 = vadd.f32 %v8639, %v8789
    %v8791 = vand.u32 %v558, 4294901760
    %8792 = vmatmul.f32.gmra.mxu0 %v8791
    %v8793 = vpop.f32.mrf.mxu0
    %v8794 = vadd.f32 %v8645, %v8793
    %v8795 = vand.u32 %v570, 4294901760
    %8796 = vmatmul.f32.gmra.mxu0 %v8795
    %v8797 = vpop.f32.mrf.mxu0
    %v8798 = vadd.f32 %v8651, %v8797
    %v8799 = vand.u32 %v582, 4294901760
    %8800 = vmatmul.f32.gmra.mxu0 %v8799
    %v8801 = vpop.f32.mrf.mxu0
    %v8802 = vadd.f32 %v8657, %v8801
    %v8803 = vand.u32 %v594, 4294901760
    %8804 = vmatmul.f32.gmra.mxu0 %v8803
    %v8805 = vpop.f32.mrf.mxu0
    %v8806 = vadd.f32 %v8663, %v8805
    %v8807 = vand.u32 %v606, 4294901760
    %8808 = vmatmul.f32.gmra.mxu0 %v8807
    %v8809 = vpop.f32.mrf.mxu0
    %v8810 = vadd.f32 %v8669, %v8809
    %v8811 = vand.u32 %v618, 4294901760
    %8812 = vmatmul.f32.gmra.mxu0 %v8811
    %v8813 = vpop.f32.mrf.mxu0
    %v8814 = vadd.f32 %v8675, %v8813
    %v8815 = vand.u32 %v630, 4294901760
    %8816 = vmatmul.f32.gmra.mxu0 %v8815
    %v8817 = vpop.f32.mrf.mxu0
    %v8818 = vadd.f32 %v8681, %v8817
    %v8819 = vand.u32 %v642, 4294901760
    %8820 = vmatmul.f32.gmra.mxu0 %v8819
    %v8821 = vpop.f32.mrf.mxu0
    %v8822 = vadd.f32 %v8687, %v8821
    %v8823 = vand.u32 %v654, 4294901760
    %8824 = vmatmul.f32.gmra.mxu0 %v8823
    %v8825 = vpop.f32.mrf.mxu0
    %v8826 = vadd.f32 %v8693, %v8825
    %v8827 = vand.u32 %v666, 4294901760
    %8828 = vmatmul.f32.gmra.mxu0 %v8827
    %v8829 = vpop.f32.mrf.mxu0
    %v8830 = vadd.f32 %v8699, %v8829
    %v8831 = vand.u32 %v678, 4294901760
    %8832 = vmatmul.f32.gmra.mxu0 %v8831
    %v8833 = vpop.f32.mrf.mxu0
    %v8834 = vadd.f32 %v8705, %v8833
    %8835 = vdwg.mxu0
    %v8836 = vand.u32 %v840, 4294901760
    %8837 = vmatpush.msra.mxu0 %v8836
    %v8838 = vand.u32 %v839, 4294901760
    %8839 = vmatpush.msra.mxu0 %v8838
    %v8840 = vand.u32 %v838, 4294901760
    %8841 = vmatpush.msra.mxu0 %v8840
    %v8842 = vand.u32 %v837, 4294901760
    %8843 = vmatpush.msra.mxu0 %v8842
    %v8844 = vand.u32 %v836, 4294901760
    %8845 = vmatpush.msra.mxu0 %v8844
    %v8846 = vand.u32 %v835, 4294901760
    %8847 = vmatpush.msra.mxu0 %v8846
    %v8848 = vand.u32 %v834, 4294901760
    %8849 = vmatpush.msra.mxu0 %v8848
    %v8850 = vand.u32 %v833, 4294901760
    %8851 = vmatpush.msra.mxu0 %v8850
    %v8852 = vand.u32 %v832, 4294901760
    %8853 = vmatpush.msra.mxu0 %v8852
    %v8854 = vand.u32 %v831, 4294901760
    %8855 = vmatpush.msra.mxu0 %v8854
    %v8856 = vand.u32 %v830, 4294901760
    %8857 = vmatpush.msra.mxu0 %v8856
    %v8858 = vand.u32 %v829, 4294901760
    %8859 = vmatpush.msra.mxu0 %v8858
    %v8860 = vand.u32 %v828, 4294901760
    %8861 = vmatpush.msra.mxu0 %v8860
    %v8862 = vand.u32 %v827, 4294901760
    %8863 = vmatpush.msra.mxu0 %v8862
    %v8864 = vand.u32 %v826, 4294901760
    %8865 = vmatpush.msra.mxu0 %v8864
    %v8866 = vand.u32 %v825, 4294901760
    %8867 = vmatpush.msra.mxu0 %v8866
    %v8868 = vand.u32 %v498, 4294901760
    %8869 = vmatmul.f32.gmra.mxu0 %v8868
    %v8870 = vpop.f32.mrf.mxu0
    %v8871 = vadd.f32 %v8774, %v8870
    %v8872 = vand.u32 %v510, 4294901760
    %8873 = vmatmul.f32.gmra.mxu0 %v8872
    %v8874 = vpop.f32.mrf.mxu0
    %v8875 = vadd.f32 %v8778, %v8874
    %v8876 = vand.u32 %v522, 4294901760
    %8877 = vmatmul.f32.gmra.mxu0 %v8876
    %v8878 = vpop.f32.mrf.mxu0
    %v8879 = vadd.f32 %v8782, %v8878
    %v8880 = vand.u32 %v534, 4294901760
    %8881 = vmatmul.f32.gmra.mxu0 %v8880
    %v8882 = vpop.f32.mrf.mxu0
    %v8883 = vadd.f32 %v8786, %v8882
    %v8884 = vand.u32 %v546, 4294901760
    %8885 = vmatmul.f32.gmra.mxu0 %v8884
    %v8886 = vpop.f32.mrf.mxu0
    %v8887 = vadd.f32 %v8790, %v8886
    %v8888 = vand.u32 %v558, 4294901760
    %8889 = vmatmul.f32.gmra.mxu0 %v8888
    %v8890 = vpop.f32.mrf.mxu0
    %v8891 = vadd.f32 %v8794, %v8890
    %v8892 = vand.u32 %v570, 4294901760
    %8893 = vmatmul.f32.gmra.mxu0 %v8892
    %v8894 = vpop.f32.mrf.mxu0
    %v8895 = vadd.f32 %v8798, %v8894
    %v8896 = vand.u32 %v582, 4294901760
    %8897 = vmatmul.f32.gmra.mxu0 %v8896
    %v8898 = vpop.f32.mrf.mxu0
    %v8899 = vadd.f32 %v8802, %v8898
    %v8900 = vand.u32 %v594, 4294901760
    %8901 = vmatmul.f32.gmra.mxu0 %v8900
    %v8902 = vpop.f32.mrf.mxu0
    %v8903 = vadd.f32 %v8806, %v8902
    %v8904 = vand.u32 %v606, 4294901760
    %8905 = vmatmul.f32.gmra.mxu0 %v8904
    %v8906 = vpop.f32.mrf.mxu0
    %v8907 = vadd.f32 %v8810, %v8906
    %v8908 = vand.u32 %v618, 4294901760
    %8909 = vmatmul.f32.gmra.mxu0 %v8908
    %v8910 = vpop.f32.mrf.mxu0
    %v8911 = vadd.f32 %v8814, %v8910
    %v8912 = vand.u32 %v630, 4294901760
    %8913 = vmatmul.f32.gmra.mxu0 %v8912
    %v8914 = vpop.f32.mrf.mxu0
    %v8915 = vadd.f32 %v8818, %v8914
    %v8916 = vand.u32 %v642, 4294901760
    %8917 = vmatmul.f32.gmra.mxu0 %v8916
    %v8918 = vpop.f32.mrf.mxu0
    %v8919 = vadd.f32 %v8822, %v8918
    %v8920 = vand.u32 %v654, 4294901760
    %8921 = vmatmul.f32.gmra.mxu0 %v8920
    %v8922 = vpop.f32.mrf.mxu0
    %v8923 = vadd.f32 %v8826, %v8922
    %v8924 = vand.u32 %v666, 4294901760
    %8925 = vmatmul.f32.gmra.mxu0 %v8924
    %v8926 = vpop.f32.mrf.mxu0
    %v8927 = vadd.f32 %v8830, %v8926
    %v8928 = vand.u32 %v678, 4294901760
    %8929 = vmatmul.f32.gmra.mxu0 %v8928
    %v8930 = vpop.f32.mrf.mxu0
    %v8931 = vadd.f32 %v8834, %v8930
    %8932 = vdwg.mxu0
    %v8933 = vand.u32 %v856, 4294901760
    %8934 = vmatpush.msra.mxu0 %v8933
    %v8935 = vand.u32 %v855, 4294901760
    %8936 = vmatpush.msra.mxu0 %v8935
    %v8937 = vand.u32 %v854, 4294901760
    %8938 = vmatpush.msra.mxu0 %v8937
    %v8939 = vand.u32 %v853, 4294901760
    %8940 = vmatpush.msra.mxu0 %v8939
    %v8941 = vand.u32 %v852, 4294901760
    %8942 = vmatpush.msra.mxu0 %v8941
    %v8943 = vand.u32 %v851, 4294901760
    %8944 = vmatpush.msra.mxu0 %v8943
    %v8945 = vand.u32 %v850, 4294901760
    %8946 = vmatpush.msra.mxu0 %v8945
    %v8947 = vand.u32 %v849, 4294901760
    %8948 = vmatpush.msra.mxu0 %v8947
    %v8949 = vand.u32 %v848, 4294901760
    %8950 = vmatpush.msra.mxu0 %v8949
    %v8951 = vand.u32 %v847, 4294901760
    %8952 = vmatpush.msra.mxu0 %v8951
    %v8953 = vand.u32 %v846, 4294901760
    %8954 = vmatpush.msra.mxu0 %v8953
    %v8955 = vand.u32 %v845, 4294901760
    %8956 = vmatpush.msra.mxu0 %v8955
    %v8957 = vand.u32 %v844, 4294901760
    %8958 = vmatpush.msra.mxu0 %v8957
    %v8959 = vand.u32 %v843, 4294901760
    %8960 = vmatpush.msra.mxu0 %v8959
    %v8961 = vand.u32 %v842, 4294901760
    %8962 = vmatpush.msra.mxu0 %v8961
    %v8963 = vand.u32 %v841, 4294901760
    %8964 = vmatpush.msra.mxu0 %v8963
    %v8965 = vand.u32 %v499, 4294901760
    %v8966 = vsub.f32 %v499, %v8965
    %v8967 = vand.u32 %v8966, 4294901760
    %v8968 = vsub.f32 %v8966, %v8967
    %v8969 = vand.u32 %v8968, 4294901760
    %8970 = vmatmul.f32.gmra.mxu0 %v8969
    %v8971 = vpop.f32.mrf.mxu0
    %v8972 = vadd.f32 %v8871, %v8971
    %v8973 = vand.u32 %v511, 4294901760
    %v8974 = vsub.f32 %v511, %v8973
    %v8975 = vand.u32 %v8974, 4294901760
    %v8976 = vsub.f32 %v8974, %v8975
    %v8977 = vand.u32 %v8976, 4294901760
    %8978 = vmatmul.f32.gmra.mxu0 %v8977
    %v8979 = vpop.f32.mrf.mxu0
    %v8980 = vadd.f32 %v8875, %v8979
    %v8981 = vand.u32 %v523, 4294901760
    %v8982 = vsub.f32 %v523, %v8981
    %v8983 = vand.u32 %v8982, 4294901760
    %v8984 = vsub.f32 %v8982, %v8983
    %v8985 = vand.u32 %v8984, 4294901760
    %8986 = vmatmul.f32.gmra.mxu0 %v8985
    %v8987 = vpop.f32.mrf.mxu0
    %v8988 = vadd.f32 %v8879, %v8987
    %v8989 = vand.u32 %v535, 4294901760
    %v8990 = vsub.f32 %v535, %v8989
    %v8991 = vand.u32 %v8990, 4294901760
    %v8992 = vsub.f32 %v8990, %v8991
    %v8993 = vand.u32 %v8992, 4294901760
    %8994 = vmatmul.f32.gmra.mxu0 %v8993
    %v8995 = vpop.f32.mrf.mxu0
    %v8996 = vadd.f32 %v8883, %v8995
    %v8997 = vand.u32 %v547, 4294901760
    %v8998 = vsub.f32 %v547, %v8997
    %v8999 = vand.u32 %v8998, 4294901760
    %v9000 = vsub.f32 %v8998, %v8999
    %v9001 = vand.u32 %v9000, 4294901760
    %9002 = vmatmul.f32.gmra.mxu0 %v9001
    %v9003 = vpop.f32.mrf.mxu0
    %v9004 = vadd.f32 %v8887, %v9003
    %v9005 = vand.u32 %v559, 4294901760
    %v9006 = vsub.f32 %v559, %v9005
    %v9007 = vand.u32 %v9006, 4294901760
    %v9008 = vsub.f32 %v9006, %v9007
    %v9009 = vand.u32 %v9008, 4294901760
    %9010 = vmatmul.f32.gmra.mxu0 %v9009
    %v9011 = vpop.f32.mrf.mxu0
    %v9012 = vadd.f32 %v8891, %v9011
    %v9013 = vand.u32 %v571, 4294901760
    %v9014 = vsub.f32 %v571, %v9013
    %v9015 = vand.u32 %v9014, 4294901760
    %v9016 = vsub.f32 %v9014, %v9015
    %v9017 = vand.u32 %v9016, 4294901760
    %9018 = vmatmul.f32.gmra.mxu0 %v9017
    %v9019 = vpop.f32.mrf.mxu0
    %v9020 = vadd.f32 %v8895, %v9019
    %v9021 = vand.u32 %v583, 4294901760
    %v9022 = vsub.f32 %v583, %v9021
    %v9023 = vand.u32 %v9022, 4294901760
    %v9024 = vsub.f32 %v9022, %v9023
    %v9025 = vand.u32 %v9024, 4294901760
    %9026 = vmatmul.f32.gmra.mxu0 %v9025
    %v9027 = vpop.f32.mrf.mxu0
    %v9028 = vadd.f32 %v8899, %v9027
    %v9029 = vand.u32 %v595, 4294901760
    %v9030 = vsub.f32 %v595, %v9029
    %v9031 = vand.u32 %v9030, 4294901760
    %v9032 = vsub.f32 %v9030, %v9031
    %v9033 = vand.u32 %v9032, 4294901760
    %9034 = vmatmul.f32.gmra.mxu0 %v9033
    %v9035 = vpop.f32.mrf.mxu0
    %v9036 = vadd.f32 %v8903, %v9035
    %v9037 = vand.u32 %v607, 4294901760
    %v9038 = vsub.f32 %v607, %v9037
    %v9039 = vand.u32 %v9038, 4294901760
    %v9040 = vsub.f32 %v9038, %v9039
    %v9041 = vand.u32 %v9040, 4294901760
    %9042 = vmatmul.f32.gmra.mxu0 %v9041
    %v9043 = vpop.f32.mrf.mxu0
    %v9044 = vadd.f32 %v8907, %v9043
    %v9045 = vand.u32 %v619, 4294901760
    %v9046 = vsub.f32 %v619, %v9045
    %v9047 = vand.u32 %v9046, 4294901760
    %v9048 = vsub.f32 %v9046, %v9047
    %v9049 = vand.u32 %v9048, 4294901760
    %9050 = vmatmul.f32.gmra.mxu0 %v9049
    %v9051 = vpop.f32.mrf.mxu0
    %v9052 = vadd.f32 %v8911, %v9051
    %v9053 = vand.u32 %v631, 4294901760
    %v9054 = vsub.f32 %v631, %v9053
    %v9055 = vand.u32 %v9054, 4294901760
    %v9056 = vsub.f32 %v9054, %v9055
    %v9057 = vand.u32 %v9056, 4294901760
    %9058 = vmatmul.f32.gmra.mxu0 %v9057
    %v9059 = vpop.f32.mrf.mxu0
    %v9060 = vadd.f32 %v8915, %v9059
    %v9061 = vand.u32 %v643, 4294901760
    %v9062 = vsub.f32 %v643, %v9061
    %v9063 = vand.u32 %v9062, 4294901760
    %v9064 = vsub.f32 %v9062, %v9063
    %v9065 = vand.u32 %v9064, 4294901760
    %9066 = vmatmul.f32.gmra.mxu0 %v9065
    %v9067 = vpop.f32.mrf.mxu0
    %v9068 = vadd.f32 %v8919, %v9067
    %v9069 = vand.u32 %v655, 4294901760
    %v9070 = vsub.f32 %v655, %v9069
    %v9071 = vand.u32 %v9070, 4294901760
    %v9072 = vsub.f32 %v9070, %v9071
    %v9073 = vand.u32 %v9072, 4294901760
    %9074 = vmatmul.f32.gmra.mxu0 %v9073
    %v9075 = vpop.f32.mrf.mxu0
    %v9076 = vadd.f32 %v8923, %v9075
    %v9077 = vand.u32 %v667, 4294901760
    %v9078 = vsub.f32 %v667, %v9077
    %v9079 = vand.u32 %v9078, 4294901760
    %v9080 = vsub.f32 %v9078, %v9079
    %v9081 = vand.u32 %v9080, 4294901760
    %9082 = vmatmul.f32.gmra.mxu0 %v9081
    %v9083 = vpop.f32.mrf.mxu0
    %v9084 = vadd.f32 %v8927, %v9083
    %v9085 = vand.u32 %v679, 4294901760
    %v9086 = vsub.f32 %v679, %v9085
    %v9087 = vand.u32 %v9086, 4294901760
    %v9088 = vsub.f32 %v9086, %v9087
    %v9089 = vand.u32 %v9088, 4294901760
    %9090 = vmatmul.f32.gmra.mxu0 %v9089
    %v9091 = vpop.f32.mrf.mxu0
    %v9092 = vadd.f32 %v8931, %v9091
    %9093 = vdwg.mxu0
    %v9094 = vand.u32 %v856, 4294901760
    %v9095 = vsub.f32 %v856, %v9094
    %v9096 = vand.u32 %v9095, 4294901760
    %v9097 = vsub.f32 %v9095, %v9096
    %v9098 = vand.u32 %v9097, 4294901760
    %9099 = vmatpush.msra.mxu0 %v9098
    %v9100 = vand.u32 %v855, 4294901760
    %v9101 = vsub.f32 %v855, %v9100
    %v9102 = vand.u32 %v9101, 4294901760
    %v9103 = vsub.f32 %v9101, %v9102
    %v9104 = vand.u32 %v9103, 4294901760
    %9105 = vmatpush.msra.mxu0 %v9104
    %v9106 = vand.u32 %v854, 4294901760
    %v9107 = vsub.f32 %v854, %v9106
    %v9108 = vand.u32 %v9107, 4294901760
    %v9109 = vsub.f32 %v9107, %v9108
    %v9110 = vand.u32 %v9109, 4294901760
    %9111 = vmatpush.msra.mxu0 %v9110
    %v9112 = vand.u32 %v853, 4294901760
    %v9113 = vsub.f32 %v853, %v9112
    %v9114 = vand.u32 %v9113, 4294901760
    %v9115 = vsub.f32 %v9113, %v9114
    %v9116 = vand.u32 %v9115, 4294901760
    %9117 = vmatpush.msra.mxu0 %v9116
    %v9118 = vand.u32 %v852, 4294901760
    %v9119 = vsub.f32 %v852, %v9118
    %v9120 = vand.u32 %v9119, 4294901760
    %v9121 = vsub.f32 %v9119, %v9120
    %v9122 = vand.u32 %v9121, 4294901760
    %9123 = vmatpush.msra.mxu0 %v9122
    %v9124 = vand.u32 %v851, 4294901760
    %v9125 = vsub.f32 %v851, %v9124
    %v9126 = vand.u32 %v9125, 4294901760
    %v9127 = vsub.f32 %v9125, %v9126
    %v9128 = vand.u32 %v9127, 4294901760
    %9129 = vmatpush.msra.mxu0 %v9128
    %v9130 = vand.u32 %v850, 4294901760
    %v9131 = vsub.f32 %v850, %v9130
    %v9132 = vand.u32 %v9131, 4294901760
    %v9133 = vsub.f32 %v9131, %v9132
    %v9134 = vand.u32 %v9133, 4294901760
    %9135 = vmatpush.msra.mxu0 %v9134
    %v9136 = vand.u32 %v849, 4294901760
    %v9137 = vsub.f32 %v849, %v9136
    %v9138 = vand.u32 %v9137, 4294901760
    %v9139 = vsub.f32 %v9137, %v9138
    %v9140 = vand.u32 %v9139, 4294901760
    %9141 = vmatpush.msra.mxu0 %v9140
    %v9142 = vand.u32 %v848, 4294901760
    %v9143 = vsub.f32 %v848, %v9142
    %v9144 = vand.u32 %v9143, 4294901760
    %v9145 = vsub.f32 %v9143, %v9144
    %v9146 = vand.u32 %v9145, 4294901760
    %9147 = vmatpush.msra.mxu0 %v9146
    %v9148 = vand.u32 %v847, 4294901760
    %v9149 = vsub.f32 %v847, %v9148
    %v9150 = vand.u32 %v9149, 4294901760
    %v9151 = vsub.f32 %v9149, %v9150
    %v9152 = vand.u32 %v9151, 4294901760
    %9153 = vmatpush.msra.mxu0 %v9152
    %v9154 = vand.u32 %v846, 4294901760
    %v9155 = vsub.f32 %v846, %v9154
    %v9156 = vand.u32 %v9155, 4294901760
    %v9157 = vsub.f32 %v9155, %v9156
    %v9158 = vand.u32 %v9157, 4294901760
    %9159 = vmatpush.msra.mxu0 %v9158
    %v9160 = vand.u32 %v845, 4294901760
    %v9161 = vsub.f32 %v845, %v9160
    %v9162 = vand.u32 %v9161, 4294901760
    %v9163 = vsub.f32 %v9161, %v9162
    %v9164 = vand.u32 %v9163, 4294901760
    %9165 = vmatpush.msra.mxu0 %v9164
    %v9166 = vand.u32 %v844, 4294901760
    %v9167 = vsub.f32 %v844, %v9166
    %v9168 = vand.u32 %v9167, 4294901760
    %v9169 = vsub.f32 %v9167, %v9168
    %v9170 = vand.u32 %v9169, 4294901760
    %9171 = vmatpush.msra.mxu0 %v9170
    %v9172 = vand.u32 %v843, 4294901760
    %v9173 = vsub.f32 %v843, %v9172
    %v9174 = vand.u32 %v9173, 4294901760
    %v9175 = vsub.f32 %v9173, %v9174
    %v9176 = vand.u32 %v9175, 4294901760
    %9177 = vmatpush.msra.mxu0 %v9176
    %v9178 = vand.u32 %v842, 4294901760
    %v9179 = vsub.f32 %v842, %v9178
    %v9180 = vand.u32 %v9179, 4294901760
    %v9181 = vsub.f32 %v9179, %v9180
    %v9182 = vand.u32 %v9181, 4294901760
    %9183 = vmatpush.msra.mxu0 %v9182
    %v9184 = vand.u32 %v841, 4294901760
    %v9185 = vsub.f32 %v841, %v9184
    %v9186 = vand.u32 %v9185, 4294901760
    %v9187 = vsub.f32 %v9185, %v9186
    %v9188 = vand.u32 %v9187, 4294901760
    %9189 = vmatpush.msra.mxu0 %v9188
    %v9190 = vand.u32 %v499, 4294901760
    %9191 = vmatmul.f32.gmra.mxu0 %v9190
    %v9192 = vpop.f32.mrf.mxu0
    %v9193 = vadd.f32 %v8972, %v9192
    %v9194 = vand.u32 %v511, 4294901760
    %9195 = vmatmul.f32.gmra.mxu0 %v9194
    %v9196 = vpop.f32.mrf.mxu0
    %v9197 = vadd.f32 %v8980, %v9196
    %v9198 = vand.u32 %v523, 4294901760
    %9199 = vmatmul.f32.gmra.mxu0 %v9198
    %v9200 = vpop.f32.mrf.mxu0
    %v9201 = vadd.f32 %v8988, %v9200
    %v9202 = vand.u32 %v535, 4294901760
    %9203 = vmatmul.f32.gmra.mxu0 %v9202
    %v9204 = vpop.f32.mrf.mxu0
    %v9205 = vadd.f32 %v8996, %v9204
    %v9206 = vand.u32 %v547, 4294901760
    %9207 = vmatmul.f32.gmra.mxu0 %v9206
    %v9208 = vpop.f32.mrf.mxu0
    %v9209 = vadd.f32 %v9004, %v9208
    %v9210 = vand.u32 %v559, 4294901760
    %9211 = vmatmul.f32.gmra.mxu0 %v9210
    %v9212 = vpop.f32.mrf.mxu0
    %v9213 = vadd.f32 %v9012, %v9212
    %v9214 = vand.u32 %v571, 4294901760
    %9215 = vmatmul.f32.gmra.mxu0 %v9214
    %v9216 = vpop.f32.mrf.mxu0
    %v9217 = vadd.f32 %v9020, %v9216
    %v9218 = vand.u32 %v583, 4294901760
    %9219 = vmatmul.f32.gmra.mxu0 %v9218
    %v9220 = vpop.f32.mrf.mxu0
    %v9221 = vadd.f32 %v9028, %v9220
    %v9222 = vand.u32 %v595, 4294901760
    %9223 = vmatmul.f32.gmra.mxu0 %v9222
    %v9224 = vpop.f32.mrf.mxu0
    %v9225 = vadd.f32 %v9036, %v9224
    %v9226 = vand.u32 %v607, 4294901760
    %9227 = vmatmul.f32.gmra.mxu0 %v9226
    %v9228 = vpop.f32.mrf.mxu0
    %v9229 = vadd.f32 %v9044, %v9228
    %v9230 = vand.u32 %v619, 4294901760
    %9231 = vmatmul.f32.gmra.mxu0 %v9230
    %v9232 = vpop.f32.mrf.mxu0
    %v9233 = vadd.f32 %v9052, %v9232
    %v9234 = vand.u32 %v631, 4294901760
    %9235 = vmatmul.f32.gmra.mxu0 %v9234
    %v9236 = vpop.f32.mrf.mxu0
    %v9237 = vadd.f32 %v9060, %v9236
    %v9238 = vand.u32 %v643, 4294901760
    %9239 = vmatmul.f32.gmra.mxu0 %v9238
    %v9240 = vpop.f32.mrf.mxu0
    %v9241 = vadd.f32 %v9068, %v9240
    %v9242 = vand.u32 %v655, 4294901760
    %9243 = vmatmul.f32.gmra.mxu0 %v9242
    %v9244 = vpop.f32.mrf.mxu0
    %v9245 = vadd.f32 %v9076, %v9244
    %v9246 = vand.u32 %v667, 4294901760
    %9247 = vmatmul.f32.gmra.mxu0 %v9246
    %v9248 = vpop.f32.mrf.mxu0
    %v9249 = vadd.f32 %v9084, %v9248
    %v9250 = vand.u32 %v679, 4294901760
    %9251 = vmatmul.f32.gmra.mxu0 %v9250
    %v9252 = vpop.f32.mrf.mxu0
    %v9253 = vadd.f32 %v9092, %v9252
    %9254 = vdwg.mxu0
    %v9255 = vand.u32 %v856, 4294901760
    %v9256 = vsub.f32 %v856, %v9255
    %9257 = vmatpush.msra.mxu0 %v9256
    %v9258 = vand.u32 %v855, 4294901760
    %v9259 = vsub.f32 %v855, %v9258
    %9260 = vmatpush.msra.mxu0 %v9259
    %v9261 = vand.u32 %v854, 4294901760
    %v9262 = vsub.f32 %v854, %v9261
    %9263 = vmatpush.msra.mxu0 %v9262
    %v9264 = vand.u32 %v853, 4294901760
    %v9265 = vsub.f32 %v853, %v9264
    %9266 = vmatpush.msra.mxu0 %v9265
    %v9267 = vand.u32 %v852, 4294901760
    %v9268 = vsub.f32 %v852, %v9267
    %9269 = vmatpush.msra.mxu0 %v9268
    %v9270 = vand.u32 %v851, 4294901760
    %v9271 = vsub.f32 %v851, %v9270
    %9272 = vmatpush.msra.mxu0 %v9271
    %v9273 = vand.u32 %v850, 4294901760
    %v9274 = vsub.f32 %v850, %v9273
    %9275 = vmatpush.msra.mxu0 %v9274
    %v9276 = vand.u32 %v849, 4294901760
    %v9277 = vsub.f32 %v849, %v9276
    %9278 = vmatpush.msra.mxu0 %v9277
    %v9279 = vand.u32 %v848, 4294901760
    %v9280 = vsub.f32 %v848, %v9279
    %9281 = vmatpush.msra.mxu0 %v9280
    %v9282 = vand.u32 %v847, 4294901760
    %v9283 = vsub.f32 %v847, %v9282
    %9284 = vmatpush.msra.mxu0 %v9283
    %v9285 = vand.u32 %v846, 4294901760
    %v9286 = vsub.f32 %v846, %v9285
    %9287 = vmatpush.msra.mxu0 %v9286
    %v9288 = vand.u32 %v845, 4294901760
    %v9289 = vsub.f32 %v845, %v9288
    %9290 = vmatpush.msra.mxu0 %v9289
    %v9291 = vand.u32 %v844, 4294901760
    %v9292 = vsub.f32 %v844, %v9291
    %9293 = vmatpush.msra.mxu0 %v9292
    %v9294 = vand.u32 %v843, 4294901760
    %v9295 = vsub.f32 %v843, %v9294
    %9296 = vmatpush.msra.mxu0 %v9295
    %v9297 = vand.u32 %v842, 4294901760
    %v9298 = vsub.f32 %v842, %v9297
    %9299 = vmatpush.msra.mxu0 %v9298
    %v9300 = vand.u32 %v841, 4294901760
    %v9301 = vsub.f32 %v841, %v9300
    %9302 = vmatpush.msra.mxu0 %v9301
    %v9303 = vand.u32 %v499, 4294901760
    %v9304 = vsub.f32 %v499, %v9303
    %9305 = vmatmul.f32.gmra.mxu0 %v9304
    %v9306 = vpop.f32.mrf.mxu0
    %v9307 = vadd.f32 %v9193, %v9306
    %v9308 = vand.u32 %v511, 4294901760
    %v9309 = vsub.f32 %v511, %v9308
    %9310 = vmatmul.f32.gmra.mxu0 %v9309
    %v9311 = vpop.f32.mrf.mxu0
    %v9312 = vadd.f32 %v9197, %v9311
    %v9313 = vand.u32 %v523, 4294901760
    %v9314 = vsub.f32 %v523, %v9313
    %9315 = vmatmul.f32.gmra.mxu0 %v9314
    %v9316 = vpop.f32.mrf.mxu0
    %v9317 = vadd.f32 %v9201, %v9316
    %v9318 = vand.u32 %v535, 4294901760
    %v9319 = vsub.f32 %v535, %v9318
    %9320 = vmatmul.f32.gmra.mxu0 %v9319
    %v9321 = vpop.f32.mrf.mxu0
    %v9322 = vadd.f32 %v9205, %v9321
    %v9323 = vand.u32 %v547, 4294901760
    %v9324 = vsub.f32 %v547, %v9323
    %9325 = vmatmul.f32.gmra.mxu0 %v9324
    %v9326 = vpop.f32.mrf.mxu0
    %v9327 = vadd.f32 %v9209, %v9326
    %v9328 = vand.u32 %v559, 4294901760
    %v9329 = vsub.f32 %v559, %v9328
    %9330 = vmatmul.f32.gmra.mxu0 %v9329
    %v9331 = vpop.f32.mrf.mxu0
    %v9332 = vadd.f32 %v9213, %v9331
    %v9333 = vand.u32 %v571, 4294901760
    %v9334 = vsub.f32 %v571, %v9333
    %9335 = vmatmul.f32.gmra.mxu0 %v9334
    %v9336 = vpop.f32.mrf.mxu0
    %v9337 = vadd.f32 %v9217, %v9336
    %v9338 = vand.u32 %v583, 4294901760
    %v9339 = vsub.f32 %v583, %v9338
    %9340 = vmatmul.f32.gmra.mxu0 %v9339
    %v9341 = vpop.f32.mrf.mxu0
    %v9342 = vadd.f32 %v9221, %v9341
    %v9343 = vand.u32 %v595, 4294901760
    %v9344 = vsub.f32 %v595, %v9343
    %9345 = vmatmul.f32.gmra.mxu0 %v9344
    %v9346 = vpop.f32.mrf.mxu0
    %v9347 = vadd.f32 %v9225, %v9346
    %v9348 = vand.u32 %v607, 4294901760
    %v9349 = vsub.f32 %v607, %v9348
    %9350 = vmatmul.f32.gmra.mxu0 %v9349
    %v9351 = vpop.f32.mrf.mxu0
    %v9352 = vadd.f32 %v9229, %v9351
    %v9353 = vand.u32 %v619, 4294901760
    %v9354 = vsub.f32 %v619, %v9353
    %9355 = vmatmul.f32.gmra.mxu0 %v9354
    %v9356 = vpop.f32.mrf.mxu0
    %v9357 = vadd.f32 %v9233, %v9356
    %v9358 = vand.u32 %v631, 4294901760
    %v9359 = vsub.f32 %v631, %v9358
    %9360 = vmatmul.f32.gmra.mxu0 %v9359
    %v9361 = vpop.f32.mrf.mxu0
    %v9362 = vadd.f32 %v9237, %v9361
    %v9363 = vand.u32 %v643, 4294901760
    %v9364 = vsub.f32 %v643, %v9363
    %9365 = vmatmul.f32.gmra.mxu0 %v9364
    %v9366 = vpop.f32.mrf.mxu0
    %v9367 = vadd.f32 %v9241, %v9366
    %v9368 = vand.u32 %v655, 4294901760
    %v9369 = vsub.f32 %v655, %v9368
    %9370 = vmatmul.f32.gmra.mxu0 %v9369
    %v9371 = vpop.f32.mrf.mxu0
    %v9372 = vadd.f32 %v9245, %v9371
    %v9373 = vand.u32 %v667, 4294901760
    %v9374 = vsub.f32 %v667, %v9373
    %9375 = vmatmul.f32.gmra.mxu0 %v9374
    %v9376 = vpop.f32.mrf.mxu0
    %v9377 = vadd.f32 %v9249, %v9376
    %v9378 = vand.u32 %v679, 4294901760
    %v9379 = vsub.f32 %v679, %v9378
    %9380 = vmatmul.f32.gmra.mxu0 %v9379
    %v9381 = vpop.f32.mrf.mxu0
    %v9382 = vadd.f32 %v9253, %v9381
    %9383 = vdwg.mxu0
    %v9384 = vand.u32 %v856, 4294901760
    %9385 = vmatpush.msra.mxu0 %v9384
    %v9386 = vand.u32 %v855, 4294901760
    %9387 = vmatpush.msra.mxu0 %v9386
    %v9388 = vand.u32 %v854, 4294901760
    %9389 = vmatpush.msra.mxu0 %v9388
    %v9390 = vand.u32 %v853, 4294901760
    %9391 = vmatpush.msra.mxu0 %v9390
    %v9392 = vand.u32 %v852, 4294901760
    %9393 = vmatpush.msra.mxu0 %v9392
    %v9394 = vand.u32 %v851, 4294901760
    %9395 = vmatpush.msra.mxu0 %v9394
    %v9396 = vand.u32 %v850, 4294901760
    %9397 = vmatpush.msra.mxu0 %v9396
    %v9398 = vand.u32 %v849, 4294901760
    %9399 = vmatpush.msra.mxu0 %v9398
    %v9400 = vand.u32 %v848, 4294901760
    %9401 = vmatpush.msra.mxu0 %v9400
    %v9402 = vand.u32 %v847, 4294901760
    %9403 = vmatpush.msra.mxu0 %v9402
    %v9404 = vand.u32 %v846, 4294901760
    %9405 = vmatpush.msra.mxu0 %v9404
    %v9406 = vand.u32 %v845, 4294901760
    %9407 = vmatpush.msra.mxu0 %v9406
    %v9408 = vand.u32 %v844, 4294901760
    %9409 = vmatpush.msra.mxu0 %v9408
    %v9410 = vand.u32 %v843, 4294901760
    %9411 = vmatpush.msra.mxu0 %v9410
    %v9412 = vand.u32 %v842, 4294901760
    %9413 = vmatpush.msra.mxu0 %v9412
    %v9414 = vand.u32 %v841, 4294901760
    %9415 = vmatpush.msra.mxu0 %v9414
    %v9416 = vand.u32 %v499, 4294901760
    %v9417 = vsub.f32 %v499, %v9416
    %v9418 = vand.u32 %v9417, 4294901760
    %9419 = vmatmul.f32.gmra.mxu0 %v9418
    %v9420 = vpop.f32.mrf.mxu0
    %v9421 = vadd.f32 %v9307, %v9420
    %v9422 = vand.u32 %v511, 4294901760
    %v9423 = vsub.f32 %v511, %v9422
    %v9424 = vand.u32 %v9423, 4294901760
    %9425 = vmatmul.f32.gmra.mxu0 %v9424
    %v9426 = vpop.f32.mrf.mxu0
    %v9427 = vadd.f32 %v9312, %v9426
    %v9428 = vand.u32 %v523, 4294901760
    %v9429 = vsub.f32 %v523, %v9428
    %v9430 = vand.u32 %v9429, 4294901760
    %9431 = vmatmul.f32.gmra.mxu0 %v9430
    %v9432 = vpop.f32.mrf.mxu0
    %v9433 = vadd.f32 %v9317, %v9432
    %v9434 = vand.u32 %v535, 4294901760
    %v9435 = vsub.f32 %v535, %v9434
    %v9436 = vand.u32 %v9435, 4294901760
    %9437 = vmatmul.f32.gmra.mxu0 %v9436
    %v9438 = vpop.f32.mrf.mxu0
    %v9439 = vadd.f32 %v9322, %v9438
    %v9440 = vand.u32 %v547, 4294901760
    %v9441 = vsub.f32 %v547, %v9440
    %v9442 = vand.u32 %v9441, 4294901760
    %9443 = vmatmul.f32.gmra.mxu0 %v9442
    %v9444 = vpop.f32.mrf.mxu0
    %v9445 = vadd.f32 %v9327, %v9444
    %v9446 = vand.u32 %v559, 4294901760
    %v9447 = vsub.f32 %v559, %v9446
    %v9448 = vand.u32 %v9447, 4294901760
    %9449 = vmatmul.f32.gmra.mxu0 %v9448
    %v9450 = vpop.f32.mrf.mxu0
    %v9451 = vadd.f32 %v9332, %v9450
    %v9452 = vand.u32 %v571, 4294901760
    %v9453 = vsub.f32 %v571, %v9452
    %v9454 = vand.u32 %v9453, 4294901760
    %9455 = vmatmul.f32.gmra.mxu0 %v9454
    %v9456 = vpop.f32.mrf.mxu0
    %v9457 = vadd.f32 %v9337, %v9456
    %v9458 = vand.u32 %v583, 4294901760
    %v9459 = vsub.f32 %v583, %v9458
    %v9460 = vand.u32 %v9459, 4294901760
    %9461 = vmatmul.f32.gmra.mxu0 %v9460
    %v9462 = vpop.f32.mrf.mxu0
    %v9463 = vadd.f32 %v9342, %v9462
    %v9464 = vand.u32 %v595, 4294901760
    %v9465 = vsub.f32 %v595, %v9464
    %v9466 = vand.u32 %v9465, 4294901760
    %9467 = vmatmul.f32.gmra.mxu0 %v9466
    %v9468 = vpop.f32.mrf.mxu0
    %v9469 = vadd.f32 %v9347, %v9468
    %v9470 = vand.u32 %v607, 4294901760
    %v9471 = vsub.f32 %v607, %v9470
    %v9472 = vand.u32 %v9471, 4294901760
    %9473 = vmatmul.f32.gmra.mxu0 %v9472
    %v9474 = vpop.f32.mrf.mxu0
    %v9475 = vadd.f32 %v9352, %v9474
    %v9476 = vand.u32 %v619, 4294901760
    %v9477 = vsub.f32 %v619, %v9476
    %v9478 = vand.u32 %v9477, 4294901760
    %9479 = vmatmul.f32.gmra.mxu0 %v9478
    %v9480 = vpop.f32.mrf.mxu0
    %v9481 = vadd.f32 %v9357, %v9480
    %v9482 = vand.u32 %v631, 4294901760
    %v9483 = vsub.f32 %v631, %v9482
    %v9484 = vand.u32 %v9483, 4294901760
    %9485 = vmatmul.f32.gmra.mxu0 %v9484
    %v9486 = vpop.f32.mrf.mxu0
    %v9487 = vadd.f32 %v9362, %v9486
    %v9488 = vand.u32 %v643, 4294901760
    %v9489 = vsub.f32 %v643, %v9488
    %v9490 = vand.u32 %v9489, 4294901760
    %9491 = vmatmul.f32.gmra.mxu0 %v9490
    %v9492 = vpop.f32.mrf.mxu0
    %v9493 = vadd.f32 %v9367, %v9492
    %v9494 = vand.u32 %v655, 4294901760
    %v9495 = vsub.f32 %v655, %v9494
    %v9496 = vand.u32 %v9495, 4294901760
    %9497 = vmatmul.f32.gmra.mxu0 %v9496
    %v9498 = vpop.f32.mrf.mxu0
    %v9499 = vadd.f32 %v9372, %v9498
    %v9500 = vand.u32 %v667, 4294901760
    %v9501 = vsub.f32 %v667, %v9500
    %v9502 = vand.u32 %v9501, 4294901760
    %9503 = vmatmul.f32.gmra.mxu0 %v9502
    %v9504 = vpop.f32.mrf.mxu0
    %v9505 = vadd.f32 %v9377, %v9504
    %v9506 = vand.u32 %v679, 4294901760
    %v9507 = vsub.f32 %v679, %v9506
    %v9508 = vand.u32 %v9507, 4294901760
    %9509 = vmatmul.f32.gmra.mxu0 %v9508
    %v9510 = vpop.f32.mrf.mxu0
    %v9511 = vadd.f32 %v9382, %v9510
    %9512 = vdwg.mxu0
    %v9513 = vand.u32 %v856, 4294901760
    %v9514 = vsub.f32 %v856, %v9513
    %v9515 = vand.u32 %v9514, 4294901760
    %9516 = vmatpush.msra.mxu0 %v9515
    %v9517 = vand.u32 %v855, 4294901760
    %v9518 = vsub.f32 %v855, %v9517
    %v9519 = vand.u32 %v9518, 4294901760
    %9520 = vmatpush.msra.mxu0 %v9519
    %v9521 = vand.u32 %v854, 4294901760
    %v9522 = vsub.f32 %v854, %v9521
    %v9523 = vand.u32 %v9522, 4294901760
    %9524 = vmatpush.msra.mxu0 %v9523
    %v9525 = vand.u32 %v853, 4294901760
    %v9526 = vsub.f32 %v853, %v9525
    %v9527 = vand.u32 %v9526, 4294901760
    %9528 = vmatpush.msra.mxu0 %v9527
    %v9529 = vand.u32 %v852, 4294901760
    %v9530 = vsub.f32 %v852, %v9529
    %v9531 = vand.u32 %v9530, 4294901760
    %9532 = vmatpush.msra.mxu0 %v9531
    %v9533 = vand.u32 %v851, 4294901760
    %v9534 = vsub.f32 %v851, %v9533
    %v9535 = vand.u32 %v9534, 4294901760
    %9536 = vmatpush.msra.mxu0 %v9535
    %v9537 = vand.u32 %v850, 4294901760
    %v9538 = vsub.f32 %v850, %v9537
    %v9539 = vand.u32 %v9538, 4294901760
    %9540 = vmatpush.msra.mxu0 %v9539
    %v9541 = vand.u32 %v849, 4294901760
    %v9542 = vsub.f32 %v849, %v9541
    %v9543 = vand.u32 %v9542, 4294901760
    %9544 = vmatpush.msra.mxu0 %v9543
    %v9545 = vand.u32 %v848, 4294901760
    %v9546 = vsub.f32 %v848, %v9545
    %v9547 = vand.u32 %v9546, 4294901760
    %9548 = vmatpush.msra.mxu0 %v9547
    %v9549 = vand.u32 %v847, 4294901760
    %v9550 = vsub.f32 %v847, %v9549
    %v9551 = vand.u32 %v9550, 4294901760
    %9552 = vmatpush.msra.mxu0 %v9551
    %v9553 = vand.u32 %v846, 4294901760
    %v9554 = vsub.f32 %v846, %v9553
    %v9555 = vand.u32 %v9554, 4294901760
    %9556 = vmatpush.msra.mxu0 %v9555
    %v9557 = vand.u32 %v845, 4294901760
    %v9558 = vsub.f32 %v845, %v9557
    %v9559 = vand.u32 %v9558, 4294901760
    %9560 = vmatpush.msra.mxu0 %v9559
    %v9561 = vand.u32 %v844, 4294901760
    %v9562 = vsub.f32 %v844, %v9561
    %v9563 = vand.u32 %v9562, 4294901760
    %9564 = vmatpush.msra.mxu0 %v9563
    %v9565 = vand.u32 %v843, 4294901760
    %v9566 = vsub.f32 %v843, %v9565
    %v9567 = vand.u32 %v9566, 4294901760
    %9568 = vmatpush.msra.mxu0 %v9567
    %v9569 = vand.u32 %v842, 4294901760
    %v9570 = vsub.f32 %v842, %v9569
    %v9571 = vand.u32 %v9570, 4294901760
    %9572 = vmatpush.msra.mxu0 %v9571
    %v9573 = vand.u32 %v841, 4294901760
    %v9574 = vsub.f32 %v841, %v9573
    %v9575 = vand.u32 %v9574, 4294901760
    %9576 = vmatpush.msra.mxu0 %v9575
    %v9577 = vand.u32 %v499, 4294901760
    %9578 = vmatmul.f32.gmra.mxu0 %v9577
    %v9579 = vpop.f32.mrf.mxu0
    %v9580 = vadd.f32 %v9421, %v9579
    %v9581 = vand.u32 %v511, 4294901760
    %9582 = vmatmul.f32.gmra.mxu0 %v9581
    %v9583 = vpop.f32.mrf.mxu0
    %v9584 = vadd.f32 %v9427, %v9583
    %v9585 = vand.u32 %v523, 4294901760
    %9586 = vmatmul.f32.gmra.mxu0 %v9585
    %v9587 = vpop.f32.mrf.mxu0
    %v9588 = vadd.f32 %v9433, %v9587
    %v9589 = vand.u32 %v535, 4294901760
    %9590 = vmatmul.f32.gmra.mxu0 %v9589
    %v9591 = vpop.f32.mrf.mxu0
    %v9592 = vadd.f32 %v9439, %v9591
    %v9593 = vand.u32 %v547, 4294901760
    %9594 = vmatmul.f32.gmra.mxu0 %v9593
    %v9595 = vpop.f32.mrf.mxu0
    %v9596 = vadd.f32 %v9445, %v9595
    %v9597 = vand.u32 %v559, 4294901760
    %9598 = vmatmul.f32.gmra.mxu0 %v9597
    %v9599 = vpop.f32.mrf.mxu0
    %v9600 = vadd.f32 %v9451, %v9599
    %v9601 = vand.u32 %v571, 4294901760
    %9602 = vmatmul.f32.gmra.mxu0 %v9601
    %v9603 = vpop.f32.mrf.mxu0
    %v9604 = vadd.f32 %v9457, %v9603
    %v9605 = vand.u32 %v583, 4294901760
    %9606 = vmatmul.f32.gmra.mxu0 %v9605
    %v9607 = vpop.f32.mrf.mxu0
    %v9608 = vadd.f32 %v9463, %v9607
    %v9609 = vand.u32 %v595, 4294901760
    %9610 = vmatmul.f32.gmra.mxu0 %v9609
    %v9611 = vpop.f32.mrf.mxu0
    %v9612 = vadd.f32 %v9469, %v9611
    %v9613 = vand.u32 %v607, 4294901760
    %9614 = vmatmul.f32.gmra.mxu0 %v9613
    %v9615 = vpop.f32.mrf.mxu0
    %v9616 = vadd.f32 %v9475, %v9615
    %v9617 = vand.u32 %v619, 4294901760
    %9618 = vmatmul.f32.gmra.mxu0 %v9617
    %v9619 = vpop.f32.mrf.mxu0
    %v9620 = vadd.f32 %v9481, %v9619
    %v9621 = vand.u32 %v631, 4294901760
    %9622 = vmatmul.f32.gmra.mxu0 %v9621
    %v9623 = vpop.f32.mrf.mxu0
    %v9624 = vadd.f32 %v9487, %v9623
    %v9625 = vand.u32 %v643, 4294901760
    %9626 = vmatmul.f32.gmra.mxu0 %v9625
    %v9627 = vpop.f32.mrf.mxu0
    %v9628 = vadd.f32 %v9493, %v9627
    %v9629 = vand.u32 %v655, 4294901760
    %9630 = vmatmul.f32.gmra.mxu0 %v9629
    %v9631 = vpop.f32.mrf.mxu0
    %v9632 = vadd.f32 %v9499, %v9631
    %v9633 = vand.u32 %v667, 4294901760
    %9634 = vmatmul.f32.gmra.mxu0 %v9633
    %v9635 = vpop.f32.mrf.mxu0
    %v9636 = vadd.f32 %v9505, %v9635
    %v9637 = vand.u32 %v679, 4294901760
    %9638 = vmatmul.f32.gmra.mxu0 %v9637
    %v9639 = vpop.f32.mrf.mxu0
    %v9640 = vadd.f32 %v9511, %v9639
    %9641 = vdwg.mxu0
    %v9642 = vand.u32 %v856, 4294901760
    %9643 = vmatpush.msra.mxu0 %v9642
    %v9644 = vand.u32 %v855, 4294901760
    %9645 = vmatpush.msra.mxu0 %v9644
    %v9646 = vand.u32 %v854, 4294901760
    %9647 = vmatpush.msra.mxu0 %v9646
    %v9648 = vand.u32 %v853, 4294901760
    %9649 = vmatpush.msra.mxu0 %v9648
    %v9650 = vand.u32 %v852, 4294901760
    %9651 = vmatpush.msra.mxu0 %v9650
    %v9652 = vand.u32 %v851, 4294901760
    %9653 = vmatpush.msra.mxu0 %v9652
    %v9654 = vand.u32 %v850, 4294901760
    %9655 = vmatpush.msra.mxu0 %v9654
    %v9656 = vand.u32 %v849, 4294901760
    %9657 = vmatpush.msra.mxu0 %v9656
    %v9658 = vand.u32 %v848, 4294901760
    %9659 = vmatpush.msra.mxu0 %v9658
    %v9660 = vand.u32 %v847, 4294901760
    %9661 = vmatpush.msra.mxu0 %v9660
    %v9662 = vand.u32 %v846, 4294901760
    %9663 = vmatpush.msra.mxu0 %v9662
    %v9664 = vand.u32 %v845, 4294901760
    %9665 = vmatpush.msra.mxu0 %v9664
    %v9666 = vand.u32 %v844, 4294901760
    %9667 = vmatpush.msra.mxu0 %v9666
    %v9668 = vand.u32 %v843, 4294901760
    %9669 = vmatpush.msra.mxu0 %v9668
    %v9670 = vand.u32 %v842, 4294901760
    %9671 = vmatpush.msra.mxu0 %v9670
    %v9672 = vand.u32 %v841, 4294901760
    %9673 = vmatpush.msra.mxu0 %v9672
    %v9674 = vand.u32 %v499, 4294901760
    %9675 = vmatmul.f32.gmra.mxu0 %v9674
    %v9676 = vpop.f32.mrf.mxu0
    %v9677 = vadd.f32 %v9580, %v9676
    %v9678 = vand.u32 %v511, 4294901760
    %9679 = vmatmul.f32.gmra.mxu0 %v9678
    %v9680 = vpop.f32.mrf.mxu0
    %v9681 = vadd.f32 %v9584, %v9680
    %v9682 = vand.u32 %v523, 4294901760
    %9683 = vmatmul.f32.gmra.mxu0 %v9682
    %v9684 = vpop.f32.mrf.mxu0
    %v9685 = vadd.f32 %v9588, %v9684
    %v9686 = vand.u32 %v535, 4294901760
    %9687 = vmatmul.f32.gmra.mxu0 %v9686
    %v9688 = vpop.f32.mrf.mxu0
    %v9689 = vadd.f32 %v9592, %v9688
    %v9690 = vand.u32 %v547, 4294901760
    %9691 = vmatmul.f32.gmra.mxu0 %v9690
    %v9692 = vpop.f32.mrf.mxu0
    %v9693 = vadd.f32 %v9596, %v9692
    %v9694 = vand.u32 %v559, 4294901760
    %9695 = vmatmul.f32.gmra.mxu0 %v9694
    %v9696 = vpop.f32.mrf.mxu0
    %v9697 = vadd.f32 %v9600, %v9696
    %v9698 = vand.u32 %v571, 4294901760
    %9699 = vmatmul.f32.gmra.mxu0 %v9698
    %v9700 = vpop.f32.mrf.mxu0
    %v9701 = vadd.f32 %v9604, %v9700
    %v9702 = vand.u32 %v583, 4294901760
    %9703 = vmatmul.f32.gmra.mxu0 %v9702
    %v9704 = vpop.f32.mrf.mxu0
    %v9705 = vadd.f32 %v9608, %v9704
    %v9706 = vand.u32 %v595, 4294901760
    %9707 = vmatmul.f32.gmra.mxu0 %v9706
    %v9708 = vpop.f32.mrf.mxu0
    %v9709 = vadd.f32 %v9612, %v9708
    %v9710 = vand.u32 %v607, 4294901760
    %9711 = vmatmul.f32.gmra.mxu0 %v9710
    %v9712 = vpop.f32.mrf.mxu0
    %v9713 = vadd.f32 %v9616, %v9712
    %v9714 = vand.u32 %v619, 4294901760
    %9715 = vmatmul.f32.gmra.mxu0 %v9714
    %v9716 = vpop.f32.mrf.mxu0
    %v9717 = vadd.f32 %v9620, %v9716
    %v9718 = vand.u32 %v631, 4294901760
    %9719 = vmatmul.f32.gmra.mxu0 %v9718
    %v9720 = vpop.f32.mrf.mxu0
    %v9721 = vadd.f32 %v9624, %v9720
    %v9722 = vand.u32 %v643, 4294901760
    %9723 = vmatmul.f32.gmra.mxu0 %v9722
    %v9724 = vpop.f32.mrf.mxu0
    %v9725 = vadd.f32 %v9628, %v9724
    %v9726 = vand.u32 %v655, 4294901760
    %9727 = vmatmul.f32.gmra.mxu0 %v9726
    %v9728 = vpop.f32.mrf.mxu0
    %v9729 = vadd.f32 %v9632, %v9728
    %v9730 = vand.u32 %v667, 4294901760
    %9731 = vmatmul.f32.gmra.mxu0 %v9730
    %v9732 = vpop.f32.mrf.mxu0
    %v9733 = vadd.f32 %v9636, %v9732
    %v9734 = vand.u32 %v679, 4294901760
    %9735 = vmatmul.f32.gmra.mxu0 %v9734
    %v9736 = vpop.f32.mrf.mxu0
    %v9737 = vadd.f32 %v9640, %v9736
    %9738 = vdwg.mxu0
    %v9739 = vand.u32 %v872, 4294901760
    %9740 = vmatpush.msra.mxu0 %v9739
    %v9741 = vand.u32 %v871, 4294901760
    %9742 = vmatpush.msra.mxu0 %v9741
    %v9743 = vand.u32 %v870, 4294901760
    %9744 = vmatpush.msra.mxu0 %v9743
    %v9745 = vand.u32 %v869, 4294901760
    %9746 = vmatpush.msra.mxu0 %v9745
    %v9747 = vand.u32 %v868, 4294901760
    %9748 = vmatpush.msra.mxu0 %v9747
    %v9749 = vand.u32 %v867, 4294901760
    %9750 = vmatpush.msra.mxu0 %v9749
    %v9751 = vand.u32 %v866, 4294901760
    %9752 = vmatpush.msra.mxu0 %v9751
    %v9753 = vand.u32 %v865, 4294901760
    %9754 = vmatpush.msra.mxu0 %v9753
    %v9755 = vand.u32 %v864, 4294901760
    %9756 = vmatpush.msra.mxu0 %v9755
    %v9757 = vand.u32 %v863, 4294901760
    %9758 = vmatpush.msra.mxu0 %v9757
    %v9759 = vand.u32 %v862, 4294901760
    %9760 = vmatpush.msra.mxu0 %v9759
    %v9761 = vand.u32 %v861, 4294901760
    %9762 = vmatpush.msra.mxu0 %v9761
    %v9763 = vand.u32 %v860, 4294901760
    %9764 = vmatpush.msra.mxu0 %v9763
    %v9765 = vand.u32 %v859, 4294901760
    %9766 = vmatpush.msra.mxu0 %v9765
    %v9767 = vand.u32 %v858, 4294901760
    %9768 = vmatpush.msra.mxu0 %v9767
    %v9769 = vand.u32 %v857, 4294901760
    %9770 = vmatpush.msra.mxu0 %v9769
    %v9771 = vand.u32 %v500, 4294901760
    %v9772 = vsub.f32 %v500, %v9771
    %v9773 = vand.u32 %v9772, 4294901760
    %v9774 = vsub.f32 %v9772, %v9773
    %v9775 = vand.u32 %v9774, 4294901760
    %9776 = vmatmul.f32.gmra.mxu0 %v9775
    %v9777 = vpop.f32.mrf.mxu0
    %v9778 = vadd.f32 %v9677, %v9777
    %v9779 = vand.u32 %v512, 4294901760
    %v9780 = vsub.f32 %v512, %v9779
    %v9781 = vand.u32 %v9780, 4294901760
    %v9782 = vsub.f32 %v9780, %v9781
    %v9783 = vand.u32 %v9782, 4294901760
    %9784 = vmatmul.f32.gmra.mxu0 %v9783
    %v9785 = vpop.f32.mrf.mxu0
    %v9786 = vadd.f32 %v9681, %v9785
    %v9787 = vand.u32 %v524, 4294901760
    %v9788 = vsub.f32 %v524, %v9787
    %v9789 = vand.u32 %v9788, 4294901760
    %v9790 = vsub.f32 %v9788, %v9789
    %v9791 = vand.u32 %v9790, 4294901760
    %9792 = vmatmul.f32.gmra.mxu0 %v9791
    %v9793 = vpop.f32.mrf.mxu0
    %v9794 = vadd.f32 %v9685, %v9793
    %v9795 = vand.u32 %v536, 4294901760
    %v9796 = vsub.f32 %v536, %v9795
    %v9797 = vand.u32 %v9796, 4294901760
    %v9798 = vsub.f32 %v9796, %v9797
    %v9799 = vand.u32 %v9798, 4294901760
    %9800 = vmatmul.f32.gmra.mxu0 %v9799
    %v9801 = vpop.f32.mrf.mxu0
    %v9802 = vadd.f32 %v9689, %v9801
    %v9803 = vand.u32 %v548, 4294901760
    %v9804 = vsub.f32 %v548, %v9803
    %v9805 = vand.u32 %v9804, 4294901760
    %v9806 = vsub.f32 %v9804, %v9805
    %v9807 = vand.u32 %v9806, 4294901760
    %9808 = vmatmul.f32.gmra.mxu0 %v9807
    %v9809 = vpop.f32.mrf.mxu0
    %v9810 = vadd.f32 %v9693, %v9809
    %v9811 = vand.u32 %v560, 4294901760
    %v9812 = vsub.f32 %v560, %v9811
    %v9813 = vand.u32 %v9812, 4294901760
    %v9814 = vsub.f32 %v9812, %v9813
    %v9815 = vand.u32 %v9814, 4294901760
    %9816 = vmatmul.f32.gmra.mxu0 %v9815
    %v9817 = vpop.f32.mrf.mxu0
    %v9818 = vadd.f32 %v9697, %v9817
    %v9819 = vand.u32 %v572, 4294901760
    %v9820 = vsub.f32 %v572, %v9819
    %v9821 = vand.u32 %v9820, 4294901760
    %v9822 = vsub.f32 %v9820, %v9821
    %v9823 = vand.u32 %v9822, 4294901760
    %9824 = vmatmul.f32.gmra.mxu0 %v9823
    %v9825 = vpop.f32.mrf.mxu0
    %v9826 = vadd.f32 %v9701, %v9825
    %v9827 = vand.u32 %v584, 4294901760
    %v9828 = vsub.f32 %v584, %v9827
    %v9829 = vand.u32 %v9828, 4294901760
    %v9830 = vsub.f32 %v9828, %v9829
    %v9831 = vand.u32 %v9830, 4294901760
    %9832 = vmatmul.f32.gmra.mxu0 %v9831
    %v9833 = vpop.f32.mrf.mxu0
    %v9834 = vadd.f32 %v9705, %v9833
    %v9835 = vand.u32 %v596, 4294901760
    %v9836 = vsub.f32 %v596, %v9835
    %v9837 = vand.u32 %v9836, 4294901760
    %v9838 = vsub.f32 %v9836, %v9837
    %v9839 = vand.u32 %v9838, 4294901760
    %9840 = vmatmul.f32.gmra.mxu0 %v9839
    %v9841 = vpop.f32.mrf.mxu0
    %v9842 = vadd.f32 %v9709, %v9841
    %v9843 = vand.u32 %v608, 4294901760
    %v9844 = vsub.f32 %v608, %v9843
    %v9845 = vand.u32 %v9844, 4294901760
    %v9846 = vsub.f32 %v9844, %v9845
    %v9847 = vand.u32 %v9846, 4294901760
    %9848 = vmatmul.f32.gmra.mxu0 %v9847
    %v9849 = vpop.f32.mrf.mxu0
    %v9850 = vadd.f32 %v9713, %v9849
    %v9851 = vand.u32 %v620, 4294901760
    %v9852 = vsub.f32 %v620, %v9851
    %v9853 = vand.u32 %v9852, 4294901760
    %v9854 = vsub.f32 %v9852, %v9853
    %v9855 = vand.u32 %v9854, 4294901760
    %9856 = vmatmul.f32.gmra.mxu0 %v9855
    %v9857 = vpop.f32.mrf.mxu0
    %v9858 = vadd.f32 %v9717, %v9857
    %v9859 = vand.u32 %v632, 4294901760
    %v9860 = vsub.f32 %v632, %v9859
    %v9861 = vand.u32 %v9860, 4294901760
    %v9862 = vsub.f32 %v9860, %v9861
    %v9863 = vand.u32 %v9862, 4294901760
    %9864 = vmatmul.f32.gmra.mxu0 %v9863
    %v9865 = vpop.f32.mrf.mxu0
    %v9866 = vadd.f32 %v9721, %v9865
    %v9867 = vand.u32 %v644, 4294901760
    %v9868 = vsub.f32 %v644, %v9867
    %v9869 = vand.u32 %v9868, 4294901760
    %v9870 = vsub.f32 %v9868, %v9869
    %v9871 = vand.u32 %v9870, 4294901760
    %9872 = vmatmul.f32.gmra.mxu0 %v9871
    %v9873 = vpop.f32.mrf.mxu0
    %v9874 = vadd.f32 %v9725, %v9873
    %v9875 = vand.u32 %v656, 4294901760
    %v9876 = vsub.f32 %v656, %v9875
    %v9877 = vand.u32 %v9876, 4294901760
    %v9878 = vsub.f32 %v9876, %v9877
    %v9879 = vand.u32 %v9878, 4294901760
    %9880 = vmatmul.f32.gmra.mxu0 %v9879
    %v9881 = vpop.f32.mrf.mxu0
    %v9882 = vadd.f32 %v9729, %v9881
    %v9883 = vand.u32 %v668, 4294901760
    %v9884 = vsub.f32 %v668, %v9883
    %v9885 = vand.u32 %v9884, 4294901760
    %v9886 = vsub.f32 %v9884, %v9885
    %v9887 = vand.u32 %v9886, 4294901760
    %9888 = vmatmul.f32.gmra.mxu0 %v9887
    %v9889 = vpop.f32.mrf.mxu0
    %v9890 = vadd.f32 %v9733, %v9889
    %v9891 = vand.u32 %v680, 4294901760
    %v9892 = vsub.f32 %v680, %v9891
    %v9893 = vand.u32 %v9892, 4294901760
    %v9894 = vsub.f32 %v9892, %v9893
    %v9895 = vand.u32 %v9894, 4294901760
    %9896 = vmatmul.f32.gmra.mxu0 %v9895
    %v9897 = vpop.f32.mrf.mxu0
    %v9898 = vadd.f32 %v9737, %v9897
    %9899 = vdwg.mxu0
    %v9900 = vand.u32 %v872, 4294901760
    %v9901 = vsub.f32 %v872, %v9900
    %v9902 = vand.u32 %v9901, 4294901760
    %v9903 = vsub.f32 %v9901, %v9902
    %v9904 = vand.u32 %v9903, 4294901760
    %9905 = vmatpush.msra.mxu0 %v9904
    %v9906 = vand.u32 %v871, 4294901760
    %v9907 = vsub.f32 %v871, %v9906
    %v9908 = vand.u32 %v9907, 4294901760
    %v9909 = vsub.f32 %v9907, %v9908
    %v9910 = vand.u32 %v9909, 4294901760
    %9911 = vmatpush.msra.mxu0 %v9910
    %v9912 = vand.u32 %v870, 4294901760
    %v9913 = vsub.f32 %v870, %v9912
    %v9914 = vand.u32 %v9913, 4294901760
    %v9915 = vsub.f32 %v9913, %v9914
    %v9916 = vand.u32 %v9915, 4294901760
    %9917 = vmatpush.msra.mxu0 %v9916
    %v9918 = vand.u32 %v869, 4294901760
    %v9919 = vsub.f32 %v869, %v9918
    %v9920 = vand.u32 %v9919, 4294901760
    %v9921 = vsub.f32 %v9919, %v9920
    %v9922 = vand.u32 %v9921, 4294901760
    %9923 = vmatpush.msra.mxu0 %v9922
    %v9924 = vand.u32 %v868, 4294901760
    %v9925 = vsub.f32 %v868, %v9924
    %v9926 = vand.u32 %v9925, 4294901760
    %v9927 = vsub.f32 %v9925, %v9926
    %v9928 = vand.u32 %v9927, 4294901760
    %9929 = vmatpush.msra.mxu0 %v9928
    %v9930 = vand.u32 %v867, 4294901760
    %v9931 = vsub.f32 %v867, %v9930
    %v9932 = vand.u32 %v9931, 4294901760
    %v9933 = vsub.f32 %v9931, %v9932
    %v9934 = vand.u32 %v9933, 4294901760
    %9935 = vmatpush.msra.mxu0 %v9934
    %v9936 = vand.u32 %v866, 4294901760
    %v9937 = vsub.f32 %v866, %v9936
    %v9938 = vand.u32 %v9937, 4294901760
    %v9939 = vsub.f32 %v9937, %v9938
    %v9940 = vand.u32 %v9939, 4294901760
    %9941 = vmatpush.msra.mxu0 %v9940
    %v9942 = vand.u32 %v865, 4294901760
    %v9943 = vsub.f32 %v865, %v9942
    %v9944 = vand.u32 %v9943, 4294901760
    %v9945 = vsub.f32 %v9943, %v9944
    %v9946 = vand.u32 %v9945, 4294901760
    %9947 = vmatpush.msra.mxu0 %v9946
    %v9948 = vand.u32 %v864, 4294901760
    %v9949 = vsub.f32 %v864, %v9948
    %v9950 = vand.u32 %v9949, 4294901760
    %v9951 = vsub.f32 %v9949, %v9950
    %v9952 = vand.u32 %v9951, 4294901760
    %9953 = vmatpush.msra.mxu0 %v9952
    %v9954 = vand.u32 %v863, 4294901760
    %v9955 = vsub.f32 %v863, %v9954
    %v9956 = vand.u32 %v9955, 4294901760
    %v9957 = vsub.f32 %v9955, %v9956
    %v9958 = vand.u32 %v9957, 4294901760
    %9959 = vmatpush.msra.mxu0 %v9958
    %v9960 = vand.u32 %v862, 4294901760
    %v9961 = vsub.f32 %v862, %v9960
    %v9962 = vand.u32 %v9961, 4294901760
    %v9963 = vsub.f32 %v9961, %v9962
    %v9964 = vand.u32 %v9963, 4294901760
    %9965 = vmatpush.msra.mxu0 %v9964
    %v9966 = vand.u32 %v861, 4294901760
    %v9967 = vsub.f32 %v861, %v9966
    %v9968 = vand.u32 %v9967, 4294901760
    %v9969 = vsub.f32 %v9967, %v9968
    %v9970 = vand.u32 %v9969, 4294901760
    %9971 = vmatpush.msra.mxu0 %v9970
    %v9972 = vand.u32 %v860, 4294901760
    %v9973 = vsub.f32 %v860, %v9972
    %v9974 = vand.u32 %v9973, 4294901760
    %v9975 = vsub.f32 %v9973, %v9974
    %v9976 = vand.u32 %v9975, 4294901760
    %9977 = vmatpush.msra.mxu0 %v9976
    %v9978 = vand.u32 %v859, 4294901760
    %v9979 = vsub.f32 %v859, %v9978
    %v9980 = vand.u32 %v9979, 4294901760
    %v9981 = vsub.f32 %v9979, %v9980
    %v9982 = vand.u32 %v9981, 4294901760
    %9983 = vmatpush.msra.mxu0 %v9982
    %v9984 = vand.u32 %v858, 4294901760
    %v9985 = vsub.f32 %v858, %v9984
    %v9986 = vand.u32 %v9985, 4294901760
    %v9987 = vsub.f32 %v9985, %v9986
    %v9988 = vand.u32 %v9987, 4294901760
    %9989 = vmatpush.msra.mxu0 %v9988
    %v9990 = vand.u32 %v857, 4294901760
    %v9991 = vsub.f32 %v857, %v9990
    %v9992 = vand.u32 %v9991, 4294901760
    %v9993 = vsub.f32 %v9991, %v9992
    %v9994 = vand.u32 %v9993, 4294901760
    %9995 = vmatpush.msra.mxu0 %v9994
    %v9996 = vand.u32 %v500, 4294901760
    %9997 = vmatmul.f32.gmra.mxu0 %v9996
    %v9998 = vpop.f32.mrf.mxu0
    %v9999 = vadd.f32 %v9778, %v9998
    %v10000 = vand.u32 %v512, 4294901760
    %10001 = vmatmul.f32.gmra.mxu0 %v10000
    %v10002 = vpop.f32.mrf.mxu0
    %v10003 = vadd.f32 %v9786, %v10002
    %v10004 = vand.u32 %v524, 4294901760
    %10005 = vmatmul.f32.gmra.mxu0 %v10004
    %v10006 = vpop.f32.mrf.mxu0
    %v10007 = vadd.f32 %v9794, %v10006
    %v10008 = vand.u32 %v536, 4294901760
    %10009 = vmatmul.f32.gmra.mxu0 %v10008
    %v10010 = vpop.f32.mrf.mxu0
    %v10011 = vadd.f32 %v9802, %v10010
    %v10012 = vand.u32 %v548, 4294901760
    %10013 = vmatmul.f32.gmra.mxu0 %v10012
    %v10014 = vpop.f32.mrf.mxu0
    %v10015 = vadd.f32 %v9810, %v10014
    %v10016 = vand.u32 %v560, 4294901760
    %10017 = vmatmul.f32.gmra.mxu0 %v10016
    %v10018 = vpop.f32.mrf.mxu0
    %v10019 = vadd.f32 %v9818, %v10018
    %v10020 = vand.u32 %v572, 4294901760
    %10021 = vmatmul.f32.gmra.mxu0 %v10020
    %v10022 = vpop.f32.mrf.mxu0
    %v10023 = vadd.f32 %v9826, %v10022
    %v10024 = vand.u32 %v584, 4294901760
    %10025 = vmatmul.f32.gmra.mxu0 %v10024
    %v10026 = vpop.f32.mrf.mxu0
    %v10027 = vadd.f32 %v9834, %v10026
    %v10028 = vand.u32 %v596, 4294901760
    %10029 = vmatmul.f32.gmra.mxu0 %v10028
    %v10030 = vpop.f32.mrf.mxu0
    %v10031 = vadd.f32 %v9842, %v10030
    %v10032 = vand.u32 %v608, 4294901760
    %10033 = vmatmul.f32.gmra.mxu0 %v10032
    %v10034 = vpop.f32.mrf.mxu0
    %v10035 = vadd.f32 %v9850, %v10034
    %v10036 = vand.u32 %v620, 4294901760
    %10037 = vmatmul.f32.gmra.mxu0 %v10036
    %v10038 = vpop.f32.mrf.mxu0
    %v10039 = vadd.f32 %v9858, %v10038
    %v10040 = vand.u32 %v632, 4294901760
    %10041 = vmatmul.f32.gmra.mxu0 %v10040
    %v10042 = vpop.f32.mrf.mxu0
    %v10043 = vadd.f32 %v9866, %v10042
    %v10044 = vand.u32 %v644, 4294901760
    %10045 = vmatmul.f32.gmra.mxu0 %v10044
    %v10046 = vpop.f32.mrf.mxu0
    %v10047 = vadd.f32 %v9874, %v10046
    %v10048 = vand.u32 %v656, 4294901760
    %10049 = vmatmul.f32.gmra.mxu0 %v10048
    %v10050 = vpop.f32.mrf.mxu0
    %v10051 = vadd.f32 %v9882, %v10050
    %v10052 = vand.u32 %v668, 4294901760
    %10053 = vmatmul.f32.gmra.mxu0 %v10052
    %v10054 = vpop.f32.mrf.mxu0
    %v10055 = vadd.f32 %v9890, %v10054
    %v10056 = vand.u32 %v680, 4294901760
    %10057 = vmatmul.f32.gmra.mxu0 %v10056
    %v10058 = vpop.f32.mrf.mxu0
    %v10059 = vadd.f32 %v9898, %v10058
    %10060 = vdwg.mxu0
    %v10061 = vand.u32 %v872, 4294901760
    %v10062 = vsub.f32 %v872, %v10061
    %10063 = vmatpush.msra.mxu0 %v10062
    %v10064 = vand.u32 %v871, 4294901760
    %v10065 = vsub.f32 %v871, %v10064
    %10066 = vmatpush.msra.mxu0 %v10065
    %v10067 = vand.u32 %v870, 4294901760
    %v10068 = vsub.f32 %v870, %v10067
    %10069 = vmatpush.msra.mxu0 %v10068
    %v10070 = vand.u32 %v869, 4294901760
    %v10071 = vsub.f32 %v869, %v10070
    %10072 = vmatpush.msra.mxu0 %v10071
    %v10073 = vand.u32 %v868, 4294901760
    %v10074 = vsub.f32 %v868, %v10073
    %10075 = vmatpush.msra.mxu0 %v10074
    %v10076 = vand.u32 %v867, 4294901760
    %v10077 = vsub.f32 %v867, %v10076
    %10078 = vmatpush.msra.mxu0 %v10077
    %v10079 = vand.u32 %v866, 4294901760
    %v10080 = vsub.f32 %v866, %v10079
    %10081 = vmatpush.msra.mxu0 %v10080
    %v10082 = vand.u32 %v865, 4294901760
    %v10083 = vsub.f32 %v865, %v10082
    %10084 = vmatpush.msra.mxu0 %v10083
    %v10085 = vand.u32 %v864, 4294901760
    %v10086 = vsub.f32 %v864, %v10085
    %10087 = vmatpush.msra.mxu0 %v10086
    %v10088 = vand.u32 %v863, 4294901760
    %v10089 = vsub.f32 %v863, %v10088
    %10090 = vmatpush.msra.mxu0 %v10089
    %v10091 = vand.u32 %v862, 4294901760
    %v10092 = vsub.f32 %v862, %v10091
    %10093 = vmatpush.msra.mxu0 %v10092
    %v10094 = vand.u32 %v861, 4294901760
    %v10095 = vsub.f32 %v861, %v10094
    %10096 = vmatpush.msra.mxu0 %v10095
    %v10097 = vand.u32 %v860, 4294901760
    %v10098 = vsub.f32 %v860, %v10097
    %10099 = vmatpush.msra.mxu0 %v10098
    %v10100 = vand.u32 %v859, 4294901760
    %v10101 = vsub.f32 %v859, %v10100
    %10102 = vmatpush.msra.mxu0 %v10101
    %v10103 = vand.u32 %v858, 4294901760
    %v10104 = vsub.f32 %v858, %v10103
    %10105 = vmatpush.msra.mxu0 %v10104
    %v10106 = vand.u32 %v857, 4294901760
    %v10107 = vsub.f32 %v857, %v10106
    %10108 = vmatpush.msra.mxu0 %v10107
    %v10109 = vand.u32 %v500, 4294901760
    %v10110 = vsub.f32 %v500, %v10109
    %10111 = vmatmul.f32.gmra.mxu0 %v10110
    %v10112 = vpop.f32.mrf.mxu0
    %v10113 = vadd.f32 %v9999, %v10112
    %v10114 = vand.u32 %v512, 4294901760
    %v10115 = vsub.f32 %v512, %v10114
    %10116 = vmatmul.f32.gmra.mxu0 %v10115
    %v10117 = vpop.f32.mrf.mxu0
    %v10118 = vadd.f32 %v10003, %v10117
    %v10119 = vand.u32 %v524, 4294901760
    %v10120 = vsub.f32 %v524, %v10119
    %10121 = vmatmul.f32.gmra.mxu0 %v10120
    %v10122 = vpop.f32.mrf.mxu0
    %v10123 = vadd.f32 %v10007, %v10122
    %v10124 = vand.u32 %v536, 4294901760
    %v10125 = vsub.f32 %v536, %v10124
    %10126 = vmatmul.f32.gmra.mxu0 %v10125
    %v10127 = vpop.f32.mrf.mxu0
    %v10128 = vadd.f32 %v10011, %v10127
    %v10129 = vand.u32 %v548, 4294901760
    %v10130 = vsub.f32 %v548, %v10129
    %10131 = vmatmul.f32.gmra.mxu0 %v10130
    %v10132 = vpop.f32.mrf.mxu0
    %v10133 = vadd.f32 %v10015, %v10132
    %v10134 = vand.u32 %v560, 4294901760
    %v10135 = vsub.f32 %v560, %v10134
    %10136 = vmatmul.f32.gmra.mxu0 %v10135
    %v10137 = vpop.f32.mrf.mxu0
    %v10138 = vadd.f32 %v10019, %v10137
    %v10139 = vand.u32 %v572, 4294901760
    %v10140 = vsub.f32 %v572, %v10139
    %10141 = vmatmul.f32.gmra.mxu0 %v10140
    %v10142 = vpop.f32.mrf.mxu0
    %v10143 = vadd.f32 %v10023, %v10142
    %v10144 = vand.u32 %v584, 4294901760
    %v10145 = vsub.f32 %v584, %v10144
    %10146 = vmatmul.f32.gmra.mxu0 %v10145
    %v10147 = vpop.f32.mrf.mxu0
    %v10148 = vadd.f32 %v10027, %v10147
    %v10149 = vand.u32 %v596, 4294901760
    %v10150 = vsub.f32 %v596, %v10149
    %10151 = vmatmul.f32.gmra.mxu0 %v10150
    %v10152 = vpop.f32.mrf.mxu0
    %v10153 = vadd.f32 %v10031, %v10152
    %v10154 = vand.u32 %v608, 4294901760
    %v10155 = vsub.f32 %v608, %v10154
    %10156 = vmatmul.f32.gmra.mxu0 %v10155
    %v10157 = vpop.f32.mrf.mxu0
    %v10158 = vadd.f32 %v10035, %v10157
    %v10159 = vand.u32 %v620, 4294901760
    %v10160 = vsub.f32 %v620, %v10159
    %10161 = vmatmul.f32.gmra.mxu0 %v10160
    %v10162 = vpop.f32.mrf.mxu0
    %v10163 = vadd.f32 %v10039, %v10162
    %v10164 = vand.u32 %v632, 4294901760
    %v10165 = vsub.f32 %v632, %v10164
    %10166 = vmatmul.f32.gmra.mxu0 %v10165
    %v10167 = vpop.f32.mrf.mxu0
    %v10168 = vadd.f32 %v10043, %v10167
    %v10169 = vand.u32 %v644, 4294901760
    %v10170 = vsub.f32 %v644, %v10169
    %10171 = vmatmul.f32.gmra.mxu0 %v10170
    %v10172 = vpop.f32.mrf.mxu0
    %v10173 = vadd.f32 %v10047, %v10172
    %v10174 = vand.u32 %v656, 4294901760
    %v10175 = vsub.f32 %v656, %v10174
    %10176 = vmatmul.f32.gmra.mxu0 %v10175
    %v10177 = vpop.f32.mrf.mxu0
    %v10178 = vadd.f32 %v10051, %v10177
    %v10179 = vand.u32 %v668, 4294901760
    %v10180 = vsub.f32 %v668, %v10179
    %10181 = vmatmul.f32.gmra.mxu0 %v10180
    %v10182 = vpop.f32.mrf.mxu0
    %v10183 = vadd.f32 %v10055, %v10182
    %v10184 = vand.u32 %v680, 4294901760
    %v10185 = vsub.f32 %v680, %v10184
    %10186 = vmatmul.f32.gmra.mxu0 %v10185
    %v10187 = vpop.f32.mrf.mxu0
    %v10188 = vadd.f32 %v10059, %v10187
    %10189 = vdwg.mxu0
    %v10190 = vand.u32 %v872, 4294901760
    %10191 = vmatpush.msra.mxu0 %v10190
    %v10192 = vand.u32 %v871, 4294901760
    %10193 = vmatpush.msra.mxu0 %v10192
    %v10194 = vand.u32 %v870, 4294901760
    %10195 = vmatpush.msra.mxu0 %v10194
    %v10196 = vand.u32 %v869, 4294901760
    %10197 = vmatpush.msra.mxu0 %v10196
    %v10198 = vand.u32 %v868, 4294901760
    %10199 = vmatpush.msra.mxu0 %v10198
    %v10200 = vand.u32 %v867, 4294901760
    %10201 = vmatpush.msra.mxu0 %v10200
    %v10202 = vand.u32 %v866, 4294901760
    %10203 = vmatpush.msra.mxu0 %v10202
    %v10204 = vand.u32 %v865, 4294901760
    %10205 = vmatpush.msra.mxu0 %v10204
    %v10206 = vand.u32 %v864, 4294901760
    %10207 = vmatpush.msra.mxu0 %v10206
    %v10208 = vand.u32 %v863, 4294901760
    %10209 = vmatpush.msra.mxu0 %v10208
    %v10210 = vand.u32 %v862, 4294901760
    %10211 = vmatpush.msra.mxu0 %v10210
    %v10212 = vand.u32 %v861, 4294901760
    %10213 = vmatpush.msra.mxu0 %v10212
    %v10214 = vand.u32 %v860, 4294901760
    %10215 = vmatpush.msra.mxu0 %v10214
    %v10216 = vand.u32 %v859, 4294901760
    %10217 = vmatpush.msra.mxu0 %v10216
    %v10218 = vand.u32 %v858, 4294901760
    %10219 = vmatpush.msra.mxu0 %v10218
    %v10220 = vand.u32 %v857, 4294901760
    %10221 = vmatpush.msra.mxu0 %v10220
    %v10222 = vand.u32 %v500, 4294901760
    %v10223 = vsub.f32 %v500, %v10222
    %v10224 = vand.u32 %v10223, 4294901760
    %10225 = vmatmul.f32.gmra.mxu0 %v10224
    %v10226 = vpop.f32.mrf.mxu0
    %v10227 = vadd.f32 %v10113, %v10226
    %v10228 = vand.u32 %v512, 4294901760
    %v10229 = vsub.f32 %v512, %v10228
    %v10230 = vand.u32 %v10229, 4294901760
    %10231 = vmatmul.f32.gmra.mxu0 %v10230
    %v10232 = vpop.f32.mrf.mxu0
    %v10233 = vadd.f32 %v10118, %v10232
    %v10234 = vand.u32 %v524, 4294901760
    %v10235 = vsub.f32 %v524, %v10234
    %v10236 = vand.u32 %v10235, 4294901760
    %10237 = vmatmul.f32.gmra.mxu0 %v10236
    %v10238 = vpop.f32.mrf.mxu0
    %v10239 = vadd.f32 %v10123, %v10238
    %v10240 = vand.u32 %v536, 4294901760
    %v10241 = vsub.f32 %v536, %v10240
    %v10242 = vand.u32 %v10241, 4294901760
    %10243 = vmatmul.f32.gmra.mxu0 %v10242
    %v10244 = vpop.f32.mrf.mxu0
    %v10245 = vadd.f32 %v10128, %v10244
    %v10246 = vand.u32 %v548, 4294901760
    %v10247 = vsub.f32 %v548, %v10246
    %v10248 = vand.u32 %v10247, 4294901760
    %10249 = vmatmul.f32.gmra.mxu0 %v10248
    %v10250 = vpop.f32.mrf.mxu0
    %v10251 = vadd.f32 %v10133, %v10250
    %v10252 = vand.u32 %v560, 4294901760
    %v10253 = vsub.f32 %v560, %v10252
    %v10254 = vand.u32 %v10253, 4294901760
    %10255 = vmatmul.f32.gmra.mxu0 %v10254
    %v10256 = vpop.f32.mrf.mxu0
    %v10257 = vadd.f32 %v10138, %v10256
    %v10258 = vand.u32 %v572, 4294901760
    %v10259 = vsub.f32 %v572, %v10258
    %v10260 = vand.u32 %v10259, 4294901760
    %10261 = vmatmul.f32.gmra.mxu0 %v10260
    %v10262 = vpop.f32.mrf.mxu0
    %v10263 = vadd.f32 %v10143, %v10262
    %v10264 = vand.u32 %v584, 4294901760
    %v10265 = vsub.f32 %v584, %v10264
    %v10266 = vand.u32 %v10265, 4294901760
    %10267 = vmatmul.f32.gmra.mxu0 %v10266
    %v10268 = vpop.f32.mrf.mxu0
    %v10269 = vadd.f32 %v10148, %v10268
    %v10270 = vand.u32 %v596, 4294901760
    %v10271 = vsub.f32 %v596, %v10270
    %v10272 = vand.u32 %v10271, 4294901760
    %10273 = vmatmul.f32.gmra.mxu0 %v10272
    %v10274 = vpop.f32.mrf.mxu0
    %v10275 = vadd.f32 %v10153, %v10274
    %v10276 = vand.u32 %v608, 4294901760
    %v10277 = vsub.f32 %v608, %v10276
    %v10278 = vand.u32 %v10277, 4294901760
    %10279 = vmatmul.f32.gmra.mxu0 %v10278
    %v10280 = vpop.f32.mrf.mxu0
    %v10281 = vadd.f32 %v10158, %v10280
    %v10282 = vand.u32 %v620, 4294901760
    %v10283 = vsub.f32 %v620, %v10282
    %v10284 = vand.u32 %v10283, 4294901760
    %10285 = vmatmul.f32.gmra.mxu0 %v10284
    %v10286 = vpop.f32.mrf.mxu0
    %v10287 = vadd.f32 %v10163, %v10286
    %v10288 = vand.u32 %v632, 4294901760
    %v10289 = vsub.f32 %v632, %v10288
    %v10290 = vand.u32 %v10289, 4294901760
    %10291 = vmatmul.f32.gmra.mxu0 %v10290
    %v10292 = vpop.f32.mrf.mxu0
    %v10293 = vadd.f32 %v10168, %v10292
    %v10294 = vand.u32 %v644, 4294901760
    %v10295 = vsub.f32 %v644, %v10294
    %v10296 = vand.u32 %v10295, 4294901760
    %10297 = vmatmul.f32.gmra.mxu0 %v10296
    %v10298 = vpop.f32.mrf.mxu0
    %v10299 = vadd.f32 %v10173, %v10298
    %v10300 = vand.u32 %v656, 4294901760
    %v10301 = vsub.f32 %v656, %v10300
    %v10302 = vand.u32 %v10301, 4294901760
    %10303 = vmatmul.f32.gmra.mxu0 %v10302
    %v10304 = vpop.f32.mrf.mxu0
    %v10305 = vadd.f32 %v10178, %v10304
    %v10306 = vand.u32 %v668, 4294901760
    %v10307 = vsub.f32 %v668, %v10306
    %v10308 = vand.u32 %v10307, 4294901760
    %10309 = vmatmul.f32.gmra.mxu0 %v10308
    %v10310 = vpop.f32.mrf.mxu0
    %v10311 = vadd.f32 %v10183, %v10310
    %v10312 = vand.u32 %v680, 4294901760
    %v10313 = vsub.f32 %v680, %v10312
    %v10314 = vand.u32 %v10313, 4294901760
    %10315 = vmatmul.f32.gmra.mxu0 %v10314
    %v10316 = vpop.f32.mrf.mxu0
    %v10317 = vadd.f32 %v10188, %v10316
    %10318 = vdwg.mxu0
    %v10319 = vand.u32 %v872, 4294901760
    %v10320 = vsub.f32 %v872, %v10319
    %v10321 = vand.u32 %v10320, 4294901760
    %10322 = vmatpush.msra.mxu0 %v10321
    %v10323 = vand.u32 %v871, 4294901760
    %v10324 = vsub.f32 %v871, %v10323
    %v10325 = vand.u32 %v10324, 4294901760
    %10326 = vmatpush.msra.mxu0 %v10325
    %v10327 = vand.u32 %v870, 4294901760
    %v10328 = vsub.f32 %v870, %v10327
    %v10329 = vand.u32 %v10328, 4294901760
    %10330 = vmatpush.msra.mxu0 %v10329
    %v10331 = vand.u32 %v869, 4294901760
    %v10332 = vsub.f32 %v869, %v10331
    %v10333 = vand.u32 %v10332, 4294901760
    %10334 = vmatpush.msra.mxu0 %v10333
    %v10335 = vand.u32 %v868, 4294901760
    %v10336 = vsub.f32 %v868, %v10335
    %v10337 = vand.u32 %v10336, 4294901760
    %10338 = vmatpush.msra.mxu0 %v10337
    %v10339 = vand.u32 %v867, 4294901760
    %v10340 = vsub.f32 %v867, %v10339
    %v10341 = vand.u32 %v10340, 4294901760
    %10342 = vmatpush.msra.mxu0 %v10341
    %v10343 = vand.u32 %v866, 4294901760
    %v10344 = vsub.f32 %v866, %v10343
    %v10345 = vand.u32 %v10344, 4294901760
    %10346 = vmatpush.msra.mxu0 %v10345
    %v10347 = vand.u32 %v865, 4294901760
    %v10348 = vsub.f32 %v865, %v10347
    %v10349 = vand.u32 %v10348, 4294901760
    %10350 = vmatpush.msra.mxu0 %v10349
    %v10351 = vand.u32 %v864, 4294901760
    %v10352 = vsub.f32 %v864, %v10351
    %v10353 = vand.u32 %v10352, 4294901760
    %10354 = vmatpush.msra.mxu0 %v10353
    %v10355 = vand.u32 %v863, 4294901760
    %v10356 = vsub.f32 %v863, %v10355
    %v10357 = vand.u32 %v10356, 4294901760
    %10358 = vmatpush.msra.mxu0 %v10357
    %v10359 = vand.u32 %v862, 4294901760
    %v10360 = vsub.f32 %v862, %v10359
    %v10361 = vand.u32 %v10360, 4294901760
    %10362 = vmatpush.msra.mxu0 %v10361
    %v10363 = vand.u32 %v861, 4294901760
    %v10364 = vsub.f32 %v861, %v10363
    %v10365 = vand.u32 %v10364, 4294901760
    %10366 = vmatpush.msra.mxu0 %v10365
    %v10367 = vand.u32 %v860, 4294901760
    %v10368 = vsub.f32 %v860, %v10367
    %v10369 = vand.u32 %v10368, 4294901760
    %10370 = vmatpush.msra.mxu0 %v10369
    %v10371 = vand.u32 %v859, 4294901760
    %v10372 = vsub.f32 %v859, %v10371
    %v10373 = vand.u32 %v10372, 4294901760
    %10374 = vmatpush.msra.mxu0 %v10373
    %v10375 = vand.u32 %v858, 4294901760
    %v10376 = vsub.f32 %v858, %v10375
    %v10377 = vand.u32 %v10376, 4294901760
    %10378 = vmatpush.msra.mxu0 %v10377
    %v10379 = vand.u32 %v857, 4294901760
    %v10380 = vsub.f32 %v857, %v10379
    %v10381 = vand.u32 %v10380, 4294901760
    %10382 = vmatpush.msra.mxu0 %v10381
    %v10383 = vand.u32 %v500, 4294901760
    %10384 = vmatmul.f32.gmra.mxu0 %v10383
    %v10385 = vpop.f32.mrf.mxu0
    %v10386 = vadd.f32 %v10227, %v10385
    %v10387 = vand.u32 %v512, 4294901760
    %10388 = vmatmul.f32.gmra.mxu0 %v10387
    %v10389 = vpop.f32.mrf.mxu0
    %v10390 = vadd.f32 %v10233, %v10389
    %v10391 = vand.u32 %v524, 4294901760
    %10392 = vmatmul.f32.gmra.mxu0 %v10391
    %v10393 = vpop.f32.mrf.mxu0
    %v10394 = vadd.f32 %v10239, %v10393
    %v10395 = vand.u32 %v536, 4294901760
    %10396 = vmatmul.f32.gmra.mxu0 %v10395
    %v10397 = vpop.f32.mrf.mxu0
    %v10398 = vadd.f32 %v10245, %v10397
    %v10399 = vand.u32 %v548, 4294901760
    %10400 = vmatmul.f32.gmra.mxu0 %v10399
    %v10401 = vpop.f32.mrf.mxu0
    %v10402 = vadd.f32 %v10251, %v10401
    %v10403 = vand.u32 %v560, 4294901760
    %10404 = vmatmul.f32.gmra.mxu0 %v10403
    %v10405 = vpop.f32.mrf.mxu0
    %v10406 = vadd.f32 %v10257, %v10405
    %v10407 = vand.u32 %v572, 4294901760
    %10408 = vmatmul.f32.gmra.mxu0 %v10407
    %v10409 = vpop.f32.mrf.mxu0
    %v10410 = vadd.f32 %v10263, %v10409
    %v10411 = vand.u32 %v584, 4294901760
    %10412 = vmatmul.f32.gmra.mxu0 %v10411
    %v10413 = vpop.f32.mrf.mxu0
    %v10414 = vadd.f32 %v10269, %v10413
    %v10415 = vand.u32 %v596, 4294901760
    %10416 = vmatmul.f32.gmra.mxu0 %v10415
    %v10417 = vpop.f32.mrf.mxu0
    %v10418 = vadd.f32 %v10275, %v10417
    %v10419 = vand.u32 %v608, 4294901760
    %10420 = vmatmul.f32.gmra.mxu0 %v10419
    %v10421 = vpop.f32.mrf.mxu0
    %v10422 = vadd.f32 %v10281, %v10421
    %v10423 = vand.u32 %v620, 4294901760
    %10424 = vmatmul.f32.gmra.mxu0 %v10423
    %v10425 = vpop.f32.mrf.mxu0
    %v10426 = vadd.f32 %v10287, %v10425
    %v10427 = vand.u32 %v632, 4294901760
    %10428 = vmatmul.f32.gmra.mxu0 %v10427
    %v10429 = vpop.f32.mrf.mxu0
    %v10430 = vadd.f32 %v10293, %v10429
    %v10431 = vand.u32 %v644, 4294901760
    %10432 = vmatmul.f32.gmra.mxu0 %v10431
    %v10433 = vpop.f32.mrf.mxu0
    %v10434 = vadd.f32 %v10299, %v10433
    %v10435 = vand.u32 %v656, 4294901760
    %10436 = vmatmul.f32.gmra.mxu0 %v10435
    %v10437 = vpop.f32.mrf.mxu0
    %v10438 = vadd.f32 %v10305, %v10437
    %v10439 = vand.u32 %v668, 4294901760
    %10440 = vmatmul.f32.gmra.mxu0 %v10439
    %v10441 = vpop.f32.mrf.mxu0
    %v10442 = vadd.f32 %v10311, %v10441
    %v10443 = vand.u32 %v680, 4294901760
    %10444 = vmatmul.f32.gmra.mxu0 %v10443
    %v10445 = vpop.f32.mrf.mxu0
    %v10446 = vadd.f32 %v10317, %v10445
    %10447 = vdwg.mxu0
    %v10448 = vand.u32 %v872, 4294901760
    %10449 = vmatpush.msra.mxu0 %v10448
    %v10450 = vand.u32 %v871, 4294901760
    %10451 = vmatpush.msra.mxu0 %v10450
    %v10452 = vand.u32 %v870, 4294901760
    %10453 = vmatpush.msra.mxu0 %v10452
    %v10454 = vand.u32 %v869, 4294901760
    %10455 = vmatpush.msra.mxu0 %v10454
    %v10456 = vand.u32 %v868, 4294901760
    %10457 = vmatpush.msra.mxu0 %v10456
    %v10458 = vand.u32 %v867, 4294901760
    %10459 = vmatpush.msra.mxu0 %v10458
    %v10460 = vand.u32 %v866, 4294901760
    %10461 = vmatpush.msra.mxu0 %v10460
    %v10462 = vand.u32 %v865, 4294901760
    %10463 = vmatpush.msra.mxu0 %v10462
    %v10464 = vand.u32 %v864, 4294901760
    %10465 = vmatpush.msra.mxu0 %v10464
    %v10466 = vand.u32 %v863, 4294901760
    %10467 = vmatpush.msra.mxu0 %v10466
    %v10468 = vand.u32 %v862, 4294901760
    %10469 = vmatpush.msra.mxu0 %v10468
    %v10470 = vand.u32 %v861, 4294901760
    %10471 = vmatpush.msra.mxu0 %v10470
    %v10472 = vand.u32 %v860, 4294901760
    %10473 = vmatpush.msra.mxu0 %v10472
    %v10474 = vand.u32 %v859, 4294901760
    %10475 = vmatpush.msra.mxu0 %v10474
    %v10476 = vand.u32 %v858, 4294901760
    %10477 = vmatpush.msra.mxu0 %v10476
    %v10478 = vand.u32 %v857, 4294901760
    %10479 = vmatpush.msra.mxu0 %v10478
    %v10480 = vand.u32 %v500, 4294901760
    %10481 = vmatmul.f32.gmra.mxu0 %v10480
    %v10482 = vpop.f32.mrf.mxu0
    %v10483 = vadd.f32 %v10386, %v10482
    %v10484 = vand.u32 %v512, 4294901760
    %10485 = vmatmul.f32.gmra.mxu0 %v10484
    %v10486 = vpop.f32.mrf.mxu0
    %v10487 = vadd.f32 %v10390, %v10486
    %v10488 = vand.u32 %v524, 4294901760
    %10489 = vmatmul.f32.gmra.mxu0 %v10488
    %v10490 = vpop.f32.mrf.mxu0
    %v10491 = vadd.f32 %v10394, %v10490
    %v10492 = vand.u32 %v536, 4294901760
    %10493 = vmatmul.f32.gmra.mxu0 %v10492
    %v10494 = vpop.f32.mrf.mxu0
    %v10495 = vadd.f32 %v10398, %v10494
    %v10496 = vand.u32 %v548, 4294901760
    %10497 = vmatmul.f32.gmra.mxu0 %v10496
    %v10498 = vpop.f32.mrf.mxu0
    %v10499 = vadd.f32 %v10402, %v10498
    %v10500 = vand.u32 %v560, 4294901760
    %10501 = vmatmul.f32.gmra.mxu0 %v10500
    %v10502 = vpop.f32.mrf.mxu0
    %v10503 = vadd.f32 %v10406, %v10502
    %v10504 = vand.u32 %v572, 4294901760
    %10505 = vmatmul.f32.gmra.mxu0 %v10504
    %v10506 = vpop.f32.mrf.mxu0
    %v10507 = vadd.f32 %v10410, %v10506
    %v10508 = vand.u32 %v584, 4294901760
    %10509 = vmatmul.f32.gmra.mxu0 %v10508
    %v10510 = vpop.f32.mrf.mxu0
    %v10511 = vadd.f32 %v10414, %v10510
    %v10512 = vand.u32 %v596, 4294901760
    %10513 = vmatmul.f32.gmra.mxu0 %v10512
    %v10514 = vpop.f32.mrf.mxu0
    %v10515 = vadd.f32 %v10418, %v10514
    %v10516 = vand.u32 %v608, 4294901760
    %10517 = vmatmul.f32.gmra.mxu0 %v10516
    %v10518 = vpop.f32.mrf.mxu0
    %v10519 = vadd.f32 %v10422, %v10518
    %v10520 = vand.u32 %v620, 4294901760
    %10521 = vmatmul.f32.gmra.mxu0 %v10520
    %v10522 = vpop.f32.mrf.mxu0
    %v10523 = vadd.f32 %v10426, %v10522
    %v10524 = vand.u32 %v632, 4294901760
    %10525 = vmatmul.f32.gmra.mxu0 %v10524
    %v10526 = vpop.f32.mrf.mxu0
    %v10527 = vadd.f32 %v10430, %v10526
    %v10528 = vand.u32 %v644, 4294901760
    %10529 = vmatmul.f32.gmra.mxu0 %v10528
    %v10530 = vpop.f32.mrf.mxu0
    %v10531 = vadd.f32 %v10434, %v10530
    %v10532 = vand.u32 %v656, 4294901760
    %10533 = vmatmul.f32.gmra.mxu0 %v10532
    %v10534 = vpop.f32.mrf.mxu0
    %v10535 = vadd.f32 %v10438, %v10534
    %v10536 = vand.u32 %v668, 4294901760
    %10537 = vmatmul.f32.gmra.mxu0 %v10536
    %v10538 = vpop.f32.mrf.mxu0
    %v10539 = vadd.f32 %v10442, %v10538
    %v10540 = vand.u32 %v680, 4294901760
    %10541 = vmatmul.f32.gmra.mxu0 %v10540
    %v10542 = vpop.f32.mrf.mxu0
    %v10543 = vadd.f32 %v10446, %v10542
    %10544 = vdwg.mxu0
    %v10545 = vmul.f32 %v10483, 11.313708
    %v10546 = vmul.f32 %v10487, 11.313708
    %v10547 = vmul.f32 %v10491, 11.313708
    %v10548 = vmul.f32 %v10495, 11.313708
    %v10549 = vmul.f32 %v10499, 11.313708
    %v10550 = vmul.f32 %v10503, 11.313708
    %v10551 = vmul.f32 %v10507, 11.313708
    %v10552 = vmul.f32 %v10511, 11.313708
    %v10553 = vmul.f32 %v10515, 11.313708
    %v10554 = vmul.f32 %v10519, 11.313708
    %v10555 = vmul.f32 %v10523, 11.313708
    %v10556 = vmul.f32 %v10527, 11.313708
    %v10557 = vmul.f32 %v10531, 11.313708
    %v10558 = vmul.f32 %v10535, 11.313708
    %v10559 = vmul.f32 %v10539, 11.313708
    %v10560 = vmul.f32 %v10543, 11.313708
    %10561 = vst [vmem:[#allocation5] sm:$0xff] %v10545
    %10562 = vst [vmem:[#allocation5 + $0x8] sm:$0xff] %v10546
    %10563 = vst [vmem:[#allocation5 + $0x10] sm:$0xff] %v10547
    %10564 = vst [vmem:[#allocation5 + $0x18] sm:$0xff] %v10548
    %10565 = vst [vmem:[#allocation5 + $0x20] sm:$0xff] %v10549
    %10566 = vst [vmem:[#allocation5 + $0x28] sm:$0xff] %v10550
    %10567 = vst [vmem:[#allocation5 + $0x30] sm:$0xff] %v10551
    %10568 = vst [vmem:[#allocation5 + $0x38] sm:$0xff] %v10552
    %10569 = vst [vmem:[#allocation5 + $0x40] sm:$0xff] %v10553
    %10570 = vst [vmem:[#allocation5 + $0x48] sm:$0xff] %v10554
    %10571 = vst [vmem:[#allocation5 + $0x50] sm:$0xff] %v10555
    %10572 = vst [vmem:[#allocation5 + $0x58] sm:$0xff] %v10556
    %10573 = vst [vmem:[#allocation5 + $0x60] sm:$0xff] %v10557
    %10574 = vst [vmem:[#allocation5 + $0x68] sm:$0xff] %v10558
    %10575 = vst [vmem:[#allocation5 + $0x70] sm:$0xff] %v10559
    %10576 = vst [vmem:[#allocation5 + $0x78] sm:$0xff] %v10560
    // Predicated region
    $region14: #{tpu_custom_call.1} parent=1 // pred_check
      _
    $region15: #{tpu_custom_call.1} parent=1 // pred_check_branch
      %10578 = sbr.rel (0) target = $region17
    $region16: #{tpu_custom_call.1} parent=1 // pred_region
      %10580 = vsyncadd [#allocation4], 0
      %s10581 = sshll.u32 [#allocation5], 4
      %s10582 = int_to_ptr.vmem [resolvable:$true] %s10581
      %s10583 = sshll.u32 %s2, 4
      %s10584 = int_to_ptr.hbm [resolvable:$true] %s10583
      %10589 = dma.vmem_to_hbm [thread:$0]  %s10582, 2048, %s10584, [#allocation4], 128, 128, 8
    $region17: #{tpu_custom_call.1} parent=1 // pred_fallthru
      _
    // Predicated region
    $region18: #{tpu_custom_call.1} parent=1 // pred_check
      _
    $region19: #{tpu_custom_call.1} parent=1 // pred_check_branch
      %10591 = sbr.rel (0) target = $region21
    $region20: #{tpu_custom_call.1} parent=1 // pred_region
      %10593 = dma.done [#allocation4], 2048
    $region21: #{tpu_custom_call.1} parent=1 // pred_fallthru
      _
    %10594 = vsyncpa [#allocation3], 1
    %10595 = vsyncpa [#allocation4], 1

</llo_original>
